<compile_context>
chip_gen: v6e
topology: v6e:2x2x1
jax: 0.10.0
libtpu: 0.0.40
codegen_flags: <defaults>
</compile_context>

<pallas_src>
import functools

import jax
import jax.numpy as jnp
from jax.experimental import pallas as pl
from jax.experimental.pallas import tpu as pltpu


_VMEM_LIMIT = 48 * 1024 * 1024
_TK_MAX = 4096           # cap on K-tile so double-buffered blocks stay small
_M_MIN_PALLAS = 128      # below this, XLA handles the degenerate GEMM better


def _round_up(x, m):
    return (x + m - 1) // m * m


# ------------------- fused conv-as-GEMM + BN/ReLU/residual -------------------

def _fmm_kernel(a_ref, b_ref, s_ref, t_ref, o_ref, acc_ref, *, relu):
    k = pl.program_id(2)

    @pl.when(k == 0)
    def _():
        acc_ref[...] = jnp.zeros_like(acc_ref)

    acc_ref[...] += jnp.dot(a_ref[...], b_ref[...],
                            preferred_element_type=jnp.float32)

    @pl.when(k == pl.num_programs(2) - 1)
    def _():
        y = acc_ref[...] * s_ref[...] + t_ref[...]        # f32 epilogue math
        if relu:
            y = jnp.maximum(y, 0.0)
        o_ref[...] = y.astype(o_ref.dtype)                # bf16 store


def _fmm_res_kernel(a_ref, b_ref, s_ref, t_ref, r_ref, o_ref, acc_ref, *, relu):
    k = pl.program_id(2)

    @pl.when(k == 0)
    def _():
        acc_ref[...] = jnp.zeros_like(acc_ref)

    acc_ref[...] += jnp.dot(a_ref[...], b_ref[...],
                            preferred_element_type=jnp.float32)

    @pl.when(k == pl.num_programs(2) - 1)
    def _():
        y = (acc_ref[...] * s_ref[...] + t_ref[...]
             + r_ref[...].astype(jnp.float32))            # bf16 residual, f32 add
        if relu:
            y = jnp.maximum(y, 0.0)
        o_ref[...] = y.astype(o_ref.dtype)


def fused_matmul_bn_act(a, w, scale, shift, residual, relu, n_out):
    """(M, K) bf16 @ (Kp, Np) bf16 on the MXU, f32 accumulate in VMEM scratch,
    fused folded-BN scale/shift + optional residual + ReLU epilogue, bf16 out."""
    M, K = a.shape
    Kp, Np = w.shape

    # Tiny-M GEMMs: pallas_call / padding overhead > matmul; let XLA handle it.
    if M < _M_MIN_PALLAS:
        y = jnp.dot(a, w[:K, :n_out], preferred_element_type=jnp.float32)
        y = y * scale[0, :n_out] + shift[0, :n_out]
        if residual is not None:
            y = y + residual.astype(jnp.float32)
        if relu:
            y = jnp.maximum(y, 0.0)
        return y.astype(jnp.bfloat16)

    # Tiles: TN keeps >=2 parallel j tiles for 512-wide layers; TK = largest
    # 128-multiple divisor of Kp up to _TK_MAX (full-K for this net).
    TN = 128 if Np <= 128 else 256
    q = Kp // 128
    tk_q = 1
    for d in range(min(q, _TK_MAX // 128), 0, -1):
        if q % d == 0:
            tk_q = d
            break
    TK = tk_q * 128
    TM = 256 if M >= 512 else 128
    Mp = _round_up(M, TM)

    a_p = a
    if Mp != M or Kp != K:
        a_p = jnp.pad(a_p, ((0, Mp - M), (0, Kp - K)))

    grid = (Mp // TM, Np // TN, Kp // TK)
    a_spec = pl.BlockSpec((TM, TK), lambda i, j, k: (i, k))
    b_spec = pl.BlockSpec((TK, TN), lambda i, j, k: (k, j))
    v_spec = pl.BlockSpec((1, TN), lambda i, j, k: (0, j))
    o_spec = pl.BlockSpec((TM, TN), lambda i, j, k: (i, j))

    if residual is None:
        kernel = functools.partial(_fmm_kernel, relu=relu)
        in_specs = [a_spec, b_spec, v_spec, v_spec]
        args = (a_p, w, scale, shift)
    else:
        r_p = residual.astype(jnp.bfloat16)
        if Mp != M or Np != n_out:
            r_p = jnp.pad(r_p, ((0, Mp - M), (0, Np - n_out)))
        kernel = functools.partial(_fmm_res_kernel, relu=relu)
        in_specs = [a_spec, b_spec, v_spec, v_spec, o_spec]
        args = (a_p, w, scale, shift, r_p)

    out = pl.pallas_call(
        kernel,
        out_shape=jax.ShapeDtypeStruct((Mp, Np), jnp.bfloat16),
        grid=grid,
        in_specs=in_specs,
        out_specs=o_spec,
        scratch_shapes=[pltpu.VMEM((TM, TN), jnp.float32)],
        compiler_params=pltpu.CompilerParams(
            dimension_semantics=("parallel", "parallel", "arbitrary"),
            vmem_limit_bytes=_VMEM_LIMIT),
    )(*args)
    return out[:M, :n_out]


# ------------------------------- conv wrapper -------------------------------

def _im2col(x, ksize, stride, pad):
    """x: (N, D, H, W, C) bf16 -> (M, KD*KH*KW*C) bf16 patch matrix
    (tap-major, C minor). TODO(synk): replace with implicit GEMM."""
    N, D, H, W, C = x.shape
    KD, KH, KW = ksize
    s = stride
    if pad:
        x = jnp.pad(x, ((0, 0), (pad, pad), (pad, pad), (pad, pad), (0, 0)))
    Do = (D + 2 * pad - KD) // s + 1
    Ho = (H + 2 * pad - KH) // s + 1
    Wo = (W + 2 * pad - KW) // s + 1
    taps = []
    for kd in range(KD):
        for kh in range(KH):
            for kw in range(KW):
                taps.append(x[:, kd:kd + s * Do:s,
                              kh:kh + s * Ho:s,
                              kw:kw + s * Wo:s, :])
    p = jnp.stack(taps, axis=4)                     # (N, Do, Ho, Wo, T, C)
    return p.reshape(N * Do * Ho * Wo, KD * KH * KW * C), (N, Do, Ho, Wo)


def conv_bn_act(x, cp, ksize, stride, pad, cout, relu, residual=None):
    a, (N, Do, Ho, Wo) = _im2col(x, ksize, stride, pad)
    M = a.shape[0]
    res2 = None if residual is None else residual.reshape(M, cout)
    out = fused_matmul_bn_act(a, cp['w'], cp['scale'], cp['shift'],
                              res2, relu, cout)
    return out.reshape(N, Do, Ho, Wo, cout)


# --------------------------------- maxpool ---------------------------------

def _pool3_kernel(x_ref, o_ref, *, lo, f):
    # x_ref: (TR, Lh, 2*f) bf16 -- padded axis folded pairwise into lanes.
    # out[o] = max(x[2o], x[2o+1], x[2o+2]) over the padded axis.
    x = x_ref[...]
    a = x[:, :lo, :]            # rows o   -> taps 2o (lanes :f), 2o+1 (lanes f:)
    b = x[:, 1:lo + 1, :]       # rows o+1 -> tap 2o+2 (lanes :f)
    o_ref[...] = jnp.maximum(jnp.maximum(a[..., :f], a[..., f:]), b[..., :f])


def _pool_stage(x, axis):
    """Max-pool (window 3, stride 2) along `axis`; x is already padded by one
    -inf element on each side of `axis`.  Single Pallas pass, no tap copies."""
    shape = x.shape
    Lp = shape[axis]                    # padded length = L + 2
    L = Lp - 2
    Lo = (L - 1) // 2 + 1
    if Lp % 2:                          # make pairwise fold possible
        pad = [(0, 0)] * x.ndim
        pad[axis] = (0, 1)
        x = jnp.pad(x, pad, constant_values=-jnp.inf)
        Lp += 1
    Lh = Lp // 2

    lead = 1
    for s in shape[:axis]:
        lead *= s
    trail = 1
    for s in shape[axis + 1:]:
        trail *= s

    xv = x.reshape(lead, Lh, 2 * trail)         # free (contiguous) reshape
    R = lead
    TR = max(1, min(R, (4 * 1024 * 1024) // max(1, Lh * 2 * trail * 2)))
    Rp = _round_up(R, TR)
    if Rp != R:
        xv = jnp.pad(xv, ((0, Rp - R), (0, 0), (0, 0)))

    out = pl.pallas_call(
        functools.partial(_pool3_kernel, lo=Lo, f=trail),
        out_shape=jax.ShapeDtypeStruct((Rp, Lo, trail), x.dtype),
        grid=(Rp // TR,),
        in_specs=[pl.BlockSpec((TR, Lh, 2 * trail), lambda i: (i, 0, 0))],
        out_specs=pl.BlockSpec((TR, Lo, trail), lambda i: (i, 0, 0)),
        compiler_params=pltpu.CompilerParams(
            dimension_semantics=("parallel",),
            vmem_limit_bytes=_VMEM_LIMIT),
    )(xv)
    out = out[:R]
    return out.reshape(shape[:axis] + (Lo,) + shape[axis + 1:])


def maxpool3d_pallas(x):
    """MaxPool3d(kernel=3, stride=2, padding=1) on (N, D, H, W, C) bf16.
    One -inf pad of all spatial axes, then three in-kernel pooled stages."""
    x = jnp.pad(x, ((0, 0), (1, 1), (1, 1), (1, 1), (0, 0)),
                constant_values=-jnp.inf)
    x = _pool_stage(x, axis=3)   # W
    x = _pool_stage(x, axis=2)   # H
    x = _pool_stage(x, axis=1)   # D
    return x


# ------------------------------ model (r3d18) ------------------------------

LAYER_CFG = ((64, 64, False, 2), (64, 128, True, 2),
             (128, 256, True, 2), (256, 512, True, 2))


def resnet_encoder3d_forward(packed, x_ncdhw):
    # NCDHW -> NDHWC (channels-last so C maps to the 128-wide lane axis), bf16.
    x = jnp.transpose(x_ncdhw, (0, 2, 3, 4, 1)).astype(jnp.bfloat16)
    x = conv_bn_act(x, packed['stem'], (7, 7, 7), stride=2, pad=3,
                    cout=64, relu=True)
    x = maxpool3d_pallas(x)
    for li, (_ic, oc, ds, nb) in enumerate(LAYER_CFG):
        for bi in range(nb):
            bp = packed['layers'][li][bi]
            stride = 2 if (ds and bi == 0) else 1
            identity = x
            y = conv_bn_act(x, bp['conv1'], (3, 3, 3), stride=stride, pad=1,
                            cout=oc, relu=True)          # drop_block: identity
            if ds and bi == 0:
                identity = conv_bn_act(x, bp['ds'], (1, 1, 1), stride=2,
                                       pad=0, cout=oc, relu=False)
            # conv2 + bn2 (+drop_path identity) + residual add + relu, fused
            x = conv_bn_act(y, bp['conv2'], (3, 3, 3), stride=1, pad=1,
                            cout=oc, relu=True, residual=identity)
    return jnp.transpose(x, (0, 4, 1, 2, 3)).astype(jnp.float32)   # NCDHW f32


# -------------------- init (deterministic) + weight packing --------------------

def _bn_init(key, c):
    k1, k2, k3, k4 = jax.random.split(key, 4)
    return dict(gamma=1.0 + 0.1 * jax.random.normal(k1, (c,), jnp.float32),
                beta=0.1 * jax.random.normal(k2, (c,), jnp.float32),
                mean=0.1 * jax.random.normal(k3, (c,), jnp.float32),
                var=1.0 + 0.1 * jax.random.uniform(k4, (c,), jnp.float32))


def _conv_init(key, oc, ic, k):
    fan_in = ic * k[0] * k[1] * k[2]
    std = (2.0 / fan_in) ** 0.5
    return std * jax.random.normal(key, (oc, ic) + tuple(k), jnp.float32)


def init_params(key, in_chans=3):
    keys = iter(jax.random.split(key, 128))
    params = {}
    # Stem: Conv3d(3, 64, 7, stride 2, pad 3, bias=False); _update_input_channels:
    # w = w.sum(dim=1, keepdim=True)/ic, tiled ic times.
    w = _conv_init(next(keys), 64, 3, (7, 7, 7))
    w = jnp.sum(w, axis=1, keepdims=True) / in_chans
    params['conv1_w'] = jnp.tile(w, (1, in_chans, 1, 1, 1))
    params['bn1'] = _bn_init(next(keys), 64)

    layers = []
    for ic, oc, downsample, n_blocks in LAYER_CFG:
        blocks = []
        for bi in range(n_blocks):
            bic = ic if bi == 0 else oc
            bp = dict(conv1_w=_conv_init(next(keys), oc, bic, (3, 3, 3)),
                      bn1=_bn_init(next(keys), oc),
                      conv2_w=_conv_init(next(keys), oc, oc, (3, 3, 3)),
                      bn2=_bn_init(next(keys), oc))
            if downsample and bi == 0:
                bp['ds_w'] = _conv_init(next(keys), oc, bic, (1, 1, 1))
                bp['ds_bn'] = _bn_init(next(keys), oc)
            blocks.append(bp)
        layers.append(blocks)
    params['layers'] = layers
    return params


def _pack_conv_bn(w, bn, eps=1e-5):
    """Pre-pack conv weight to (Kp, Np) bf16 and fold inference BN to scale/shift."""
    cout, cin, kd, kh, kw = w.shape
    K = kd * kh * kw * cin
    Kp = _round_up(K, 128)
    Np = _round_up(cout, 128)
    b = jnp.transpose(w, (2, 3, 4, 1, 0)).reshape(K, cout)
    b = jnp.pad(b, ((0, Kp - K), (0, Np - cout))).astype(jnp.bfloat16)
    scale = bn['gamma'] / jnp.sqrt(bn['var'] + eps)
    shift = bn['beta'] - bn['mean'] * scale
    return dict(w=b,
                scale=jnp.pad(scale, (0, Np - cout)).reshape(1, Np).astype(jnp.float32),
                shift=jnp.pad(shift, (0, Np - cout)).reshape(1, Np).astype(jnp.float32))


def pack_params(raw):
    packed = {'stem': _pack_conv_bn(raw['conv1_w'], raw['bn1']), 'layers': []}
    for blocks in raw['layers']:
        pblocks = []
        for bp in blocks:
            pb = {'conv1': _pack_conv_bn(bp['conv1_w'], bp['bn1']),
                  'conv2': _pack_conv_bn(bp['conv2_w'], bp['bn2'])}
            if 'ds_w' in bp:
                pb['ds'] = _pack_conv_bn(bp['ds_w'], bp['ds_bn'])
            pblocks.append(pb)
        packed['layers'].append(pblocks)
    return packed


# ----------------------------------- main -----------------------------------

if __name__ == "__main__":
    key = jax.random.PRNGKey(0)
    kp, kx = jax.random.split(key)
    in_chans = 3
    raw = init_params(kp, in_chans=in_chans)
    packed = pack_params(raw)       # one-time weight pack, outside the forward
    # small NCDHW input: (batch=2, chans=3, D=8, H=32, W=32) — large enough
    # that the stem, maxpool and layer1 exercise the Pallas paths.
    x = jax.random.normal(kx, (2, in_chans, 8, 32, 32), jnp.float32)

    fwd = jax.jit(resnet_encoder3d_forward)
    out = jax.block_until_ready(fwd(packed, x))

    # conv1(s=2) -> maxpool(s=2) -> layer2..4 (s=2 each): (2, 512, 1, 1, 1)
    assert out.shape == (2, 512, 1, 1, 1), out.shape
    assert bool(jnp.all(jnp.isfinite(out)))
    print("KERNEL_OK")
</pallas_src>

<mosaic_0001>
module attributes {stable_mosaic.version = 11 : i64} {
  func.func @_fmm_kernel(%arg0: i32, %arg1: i32, %arg2: i32, %arg3: memref<256x1152xbf16, #tpu.memory_space<vmem>>, %arg4: memref<1152x128xbf16, #tpu.memory_space<vmem>>, %arg5: memref<1x128xf32, #tpu.memory_space<vmem>>, %arg6: memref<1x128xf32, #tpu.memory_space<vmem>>, %arg7: memref<256x128xbf16, #tpu.memory_space<vmem>>, %arg8: memref<256x128xf32, #tpu.memory_space<vmem>>) attributes {dimension_semantics = [#tpu.dimension_semantics<parallel>, #tpu.dimension_semantics<parallel>, #tpu.dimension_semantics<arbitrary>], iteration_bounds = array<i64: 8, 1, 1>, scalar_prefetch = 0 : i64, scratch_operands = 1 : i64, tpu.core_type = #tpu.core_type<tc>, window_params = [{transform_indices = @transform_0, window_bounds = array<i64: 256, 1152>}, {transform_indices = @transform_1, window_bounds = array<i64: 1152, 128>}, {transform_indices = @transform_2, window_bounds = array<i64: 1, 128>}, {transform_indices = @transform_3, window_bounds = array<i64: 1, 128>}, {transform_indices = @transform_4, window_bounds = array<i64: 256, 128>}]} {
    %c0_i32 = arith.constant 0 : i32
    %0 = arith.cmpi eq, %arg2, %c0_i32 : i32
    %1 = arith.extui %0 : i1 to i32
    %c0_i32_0 = arith.constant 0 : i32
    %2 = arith.cmpi ne, %1, %c0_i32_0 : i32
    scf.if %2 {
      %cst_10 = arith.constant 0.000000e+00 : f32
      %12 = vector.broadcast %cst_10 : f32 to vector<256x128xf32>
      %c0_11 = arith.constant 0 : index
      %c0_12 = arith.constant 0 : index
      %13 = vector.load %arg8[%c0_11, %c0_12] : memref<256x128xf32, #tpu.memory_space<vmem>>, vector<256x128xf32>
      tpu.vector_store %arg8[%c0_11, %c0_12], %12 {strides = array<i32>} : memref<256x128xf32, #tpu.memory_space<vmem>>, vector<256x128xf32>,
    } else {
    }
    %c0 = arith.constant 0 : index
    %c0_1 = arith.constant 0 : index
    %3 = vector.load %arg8[%c0, %c0_1] : memref<256x128xf32, #tpu.memory_space<vmem>>, vector<256x128xf32>
    %c0_2 = arith.constant 0 : index
    %c0_3 = arith.constant 0 : index
    %4 = vector.load %arg3[%c0_2, %c0_3] : memref<256x1152xbf16, #tpu.memory_space<vmem>>, vector<256x1152xbf16>
    %c0_4 = arith.constant 0 : index
    %c0_5 = arith.constant 0 : index
    %5 = vector.load %arg4[%c0_4, %c0_5] : memref<1152x128xbf16, #tpu.memory_space<vmem>>, vector<1152x128xbf16>
    %cst = arith.constant dense<0.000000e+00> : vector<256x128xf32>
    %6 = tpu.matmul %4, %5, %cst {dimension_numbers = #tpu.dot_dimension_numbers<[1], [0], [0], [1], [0, 0, 1, 1], [], []>} : vector<256x1152xbf16>, vector<1152x128xbf16>, vector<256x128xf32> -> vector<256x128xf32>
    %7 = arith.addf %3, %6 : vector<256x128xf32>
    %c0_6 = arith.constant 0 : index
    %c0_7 = arith.constant 0 : index
    %8 = vector.load %arg8[%c0_6, %c0_7] : memref<256x128xf32, #tpu.memory_space<vmem>>, vector<256x128xf32>
    tpu.vector_store %arg8[%c0_6, %c0_7], %7 {strides = array<i32>} : memref<256x128xf32, #tpu.memory_space<vmem>>, vector<256x128xf32>,
    %c0_i32_8 = arith.constant 0 : i32
    %9 = arith.cmpi eq, %arg2, %c0_i32_8 : i32
    %10 = arith.extui %9 : i1 to i32
    %c0_i32_9 = arith.constant 0 : i32
    %11 = arith.cmpi ne, %10, %c0_i32_9 : i32
    scf.if %11 {
      %c0_10 = arith.constant 0 : index
      %c0_11 = arith.constant 0 : index
      %12 = vector.load %arg8[%c0_10, %c0_11] : memref<256x128xf32, #tpu.memory_space<vmem>>, vector<256x128xf32>
      %c0_12 = arith.constant 0 : index
      %c0_13 = arith.constant 0 : index
      %13 = vector.load %arg5[%c0_12, %c0_13] : memref<1x128xf32, #tpu.memory_space<vmem>>, vector<1x128xf32>
      %14 = vector.broadcast %13 : vector<1x128xf32> to vector<256x128xf32>
      %15 = arith.mulf %12, %14 : vector<256x128xf32>
      %c0_14 = arith.constant 0 : index
      %c0_15 = arith.constant 0 : index
      %16 = vector.load %arg6[%c0_14, %c0_15] : memref<1x128xf32, #tpu.memory_space<vmem>>, vector<1x128xf32>
      %17 = vector.broadcast %16 : vector<1x128xf32> to vector<256x128xf32>
      %18 = arith.addf %15, %17 : vector<256x128xf32>
      %cst_16 = arith.constant 0.000000e+00 : f32
      %19 = vector.broadcast %cst_16 : f32 to vector<256x128xf32>
      %20 = arith.maximumf %18, %19 : vector<256x128xf32>
      %21 = arith.truncf %20 : vector<256x128xf32> to vector<256x128xbf16>
      %c0_17 = arith.constant 0 : index
      %c0_18 = arith.constant 0 : index
      %22 = vector.load %arg7[%c0_17, %c0_18] : memref<256x128xbf16, #tpu.memory_space<vmem>>, vector<256x128xbf16>
      tpu.vector_store %arg7[%c0_17, %c0_18], %21 {strides = array<i32>} : memref<256x128xbf16, #tpu.memory_space<vmem>>, vector<256x128xbf16>,
    } else {
    }
    return
  }
  func.func @transform_0(%arg0: i32, %arg1: i32, %arg2: i32) -> (i32, i32) {
    %c0_i32 = arith.constant 0 : i32
    return %arg0, %arg2 : i32, i32
  }
  func.func @transform_1(%arg0: i32, %arg1: i32, %arg2: i32) -> (i32, i32) {
    %c0_i32 = arith.constant 0 : i32
    return %arg2, %arg1 : i32, i32
  }
  func.func @transform_2(%arg0: i32, %arg1: i32, %arg2: i32) -> (i32, i32) {
    %c0_i32 = arith.constant 0 : i32
    %c0_i32_0 = arith.constant 0 : i32
    return %c0_i32, %arg1 : i32, i32
  }
  func.func @transform_3(%arg0: i32, %arg1: i32, %arg2: i32) -> (i32, i32) {
    %c0_i32 = arith.constant 0 : i32
    %c0_i32_0 = arith.constant 0 : i32
    return %c0_i32, %arg1 : i32, i32
  }
  func.func @transform_4(%arg0: i32, %arg1: i32, %arg2: i32) -> (i32, i32) {
    %c0_i32 = arith.constant 0 : i32
    return %arg0, %arg1 : i32, i32
  }
}

module attributes {stable_mosaic.version = 11 : i64} {
  func.func @_pool3_kernel(%arg0: i32, %arg1: memref<216x9x128xbf16, #tpu.memory_space<vmem>>, %arg2: memref<216x8x64xbf16, #tpu.memory_space<vmem>>) attributes {dimension_semantics = [#tpu.dimension_semantics<parallel>], iteration_bounds = array<i64: 1>, scalar_prefetch = 0 : i64, scratch_operands = 0 : i64, tpu.core_type = #tpu.core_type<tc>, window_params = [{transform_indices = @transform_0, window_bounds = array<i64: 216, 9, 128>}, {transform_indices = @transform_1, window_bounds = array<i64: 216, 8, 64>}]} {
    %c0 = arith.constant 0 : index
    %c0_0 = arith.constant 0 : index
    %c0_1 = arith.constant 0 : index
    %0 = vector.load %arg1[%c0, %c0_0, %c0_1] : memref<216x9x128xbf16, #tpu.memory_space<vmem>>, vector<216x9x128xbf16>
    %1 = vector.extract_strided_slice %0 {offsets = [0, 0, 0], sizes = [216, 8, 128], strides = [1, 1, 1]} : vector<216x9x128xbf16> to vector<216x8x128xbf16>
    %2 = vector.extract_strided_slice %0 {offsets = [0, 1, 0], sizes = [216, 8, 128], strides = [1, 1, 1]} : vector<216x9x128xbf16> to vector<216x8x128xbf16>
    %3 = vector.extract_strided_slice %1 {offsets = [0, 0, 0], sizes = [216, 8, 64], strides = [1, 1, 1]} : vector<216x8x128xbf16> to vector<216x8x64xbf16>
    %4 = vector.extract_strided_slice %1 {offsets = [0, 0, 64], sizes = [216, 8, 64], strides = [1, 1, 1]} : vector<216x8x128xbf16> to vector<216x8x64xbf16>
    %5 = arith.maximumf %3, %4 : vector<216x8x64xbf16>
    %6 = vector.extract_strided_slice %2 {offsets = [0, 0, 0], sizes = [216, 8, 64], strides = [1, 1, 1]} : vector<216x8x128xbf16> to vector<216x8x64xbf16>
    %7 = arith.maximumf %5, %6 : vector<216x8x64xbf16>
    %c0_2 = arith.constant 0 : index
    %c0_3 = arith.constant 0 : index
    %c0_4 = arith.constant 0 : index
    %8 = vector.load %arg2[%c0_2, %c0_3, %c0_4] : memref<216x8x64xbf16, #tpu.memory_space<vmem>>, vector<216x8x64xbf16>
    tpu.vector_store %arg2[%c0_2, %c0_3, %c0_4], %7 {strides = array<i32>} : memref<216x8x64xbf16, #tpu.memory_space<vmem>>, vector<216x8x64xbf16>,
    return
  }
  func.func @transform_0(%arg0: i32) -> (i32, i32, i32) {
    %c0_i32 = arith.constant 0 : i32
    %c0_i32_0 = arith.constant 0 : i32
    %c0_i32_1 = arith.constant 0 : i32
    return %arg0, %c0_i32, %c0_i32_0 : i32, i32, i32
  }
  func.func @transform_1(%arg0: i32) -> (i32, i32, i32) {
    %c0_i32 = arith.constant 0 : i32
    %c0_i32_0 = arith.constant 0 : i32
    %c0_i32_1 = arith.constant 0 : i32
    return %arg0, %c0_i32, %c0_i32_0 : i32, i32, i32
  }
}

module attributes {stable_mosaic.version = 11 : i64} {
  func.func @_pool3_kernel(%arg0: i32, %arg1: memref<12x9x1024xbf16, #tpu.memory_space<vmem>>, %arg2: memref<12x8x512xbf16, #tpu.memory_space<vmem>>) attributes {dimension_semantics = [#tpu.dimension_semantics<parallel>], iteration_bounds = array<i64: 1>, scalar_prefetch = 0 : i64, scratch_operands = 0 : i64, tpu.core_type = #tpu.core_type<tc>, window_params = [{transform_indices = @transform_0, window_bounds = array<i64: 12, 9, 1024>}, {transform_indices = @transform_1, window_bounds = array<i64: 12, 8, 512>}]} {
    %c0 = arith.constant 0 : index
    %c0_0 = arith.constant 0 : index
    %c0_1 = arith.constant 0 : index
    %0 = vector.load %arg1[%c0, %c0_0, %c0_1] : memref<12x9x1024xbf16, #tpu.memory_space<vmem>>, vector<12x9x1024xbf16>
    %1 = vector.extract_strided_slice %0 {offsets = [0, 0, 0], sizes = [12, 8, 1024], strides = [1, 1, 1]} : vector<12x9x1024xbf16> to vector<12x8x1024xbf16>
    %2 = vector.extract_strided_slice %0 {offsets = [0, 1, 0], sizes = [12, 8, 1024], strides = [1, 1, 1]} : vector<12x9x1024xbf16> to vector<12x8x1024xbf16>
    %3 = vector.extract_strided_slice %1 {offsets = [0, 0, 0], sizes = [12, 8, 512], strides = [1, 1, 1]} : vector<12x8x1024xbf16> to vector<12x8x512xbf16>
    %4 = vector.extract_strided_slice %1 {offsets = [0, 0, 512], sizes = [12, 8, 512], strides = [1, 1, 1]} : vector<12x8x1024xbf16> to vector<12x8x512xbf16>
    %5 = arith.maximumf %3, %4 : vector<12x8x512xbf16>
    %6 = vector.extract_strided_slice %2 {offsets = [0, 0, 0], sizes = [12, 8, 512], strides = [1, 1, 1]} : vector<12x8x1024xbf16> to vector<12x8x512xbf16>
    %7 = arith.maximumf %5, %6 : vector<12x8x512xbf16>
    %c0_2 = arith.constant 0 : index
    %c0_3 = arith.constant 0 : index
    %c0_4 = arith.constant 0 : index
    %8 = vector.load %arg2[%c0_2, %c0_3, %c0_4] : memref<12x8x512xbf16, #tpu.memory_space<vmem>>, vector<12x8x512xbf16>
    tpu.vector_store %arg2[%c0_2, %c0_3, %c0_4], %7 {strides = array<i32>} : memref<12x8x512xbf16, #tpu.memory_space<vmem>>, vector<12x8x512xbf16>,
    return
  }
  func.func @transform_0(%arg0: i32) -> (i32, i32, i32) {
    %c0_i32 = arith.constant 0 : i32
    %c0_i32_0 = arith.constant 0 : i32
    %c0_i32_1 = arith.constant 0 : i32
    return %arg0, %c0_i32, %c0_i32_0 : i32, i32, i32
  }
  func.func @transform_1(%arg0: i32) -> (i32, i32, i32) {
    %c0_i32 = arith.constant 0 : i32
    %c0_i32_0 = arith.constant 0 : i32
    %c0_i32_1 = arith.constant 0 : i32
    return %arg0, %c0_i32, %c0_i32_0 : i32, i32, i32
  }
}

module attributes {stable_mosaic.version = 11 : i64} {
  func.func @_pool3_kernel(%arg0: i32, %arg1: memref<2x3x8192xbf16, #tpu.memory_space<vmem>>, %arg2: memref<2x2x4096xbf16, #tpu.memory_space<vmem>>) attributes {dimension_semantics = [#tpu.dimension_semantics<parallel>], iteration_bounds = array<i64: 1>, scalar_prefetch = 0 : i64, scratch_operands = 0 : i64, tpu.core_type = #tpu.core_type<tc>, window_params = [{transform_indices = @transform_0, window_bounds = array<i64: 2, 3, 8192>}, {transform_indices = @transform_1, window_bounds = array<i64: 2, 2, 4096>}]} {
    %c0 = arith.constant 0 : index
    %c0_0 = arith.constant 0 : index
    %c0_1 = arith.constant 0 : index
    %0 = vector.load %arg1[%c0, %c0_0, %c0_1] : memref<2x3x8192xbf16, #tpu.memory_space<vmem>>, vector<2x3x8192xbf16>
    %1 = vector.extract_strided_slice %0 {offsets = [0, 0, 0], sizes = [2, 2, 8192], strides = [1, 1, 1]} : vector<2x3x8192xbf16> to vector<2x2x8192xbf16>
    %2 = vector.extract_strided_slice %0 {offsets = [0, 1, 0], sizes = [2, 2, 8192], strides = [1, 1, 1]} : vector<2x3x8192xbf16> to vector<2x2x8192xbf16>
    %3 = vector.extract_strided_slice %1 {offsets = [0, 0, 0], sizes = [2, 2, 4096], strides = [1, 1, 1]} : vector<2x2x8192xbf16> to vector<2x2x4096xbf16>
    %4 = vector.extract_strided_slice %1 {offsets = [0, 0, 4096], sizes = [2, 2, 4096], strides = [1, 1, 1]} : vector<2x2x8192xbf16> to vector<2x2x4096xbf16>
    %5 = arith.maximumf %3, %4 : vector<2x2x4096xbf16>
    %6 = vector.extract_strided_slice %2 {offsets = [0, 0, 0], sizes = [2, 2, 4096], strides = [1, 1, 1]} : vector<2x2x8192xbf16> to vector<2x2x4096xbf16>
    %7 = arith.maximumf %5, %6 : vector<2x2x4096xbf16>
    %c0_2 = arith.constant 0 : index
    %c0_3 = arith.constant 0 : index
    %c0_4 = arith.constant 0 : index
    %8 = vector.load %arg2[%c0_2, %c0_3, %c0_4] : memref<2x2x4096xbf16, #tpu.memory_space<vmem>>, vector<2x2x4096xbf16>
    tpu.vector_store %arg2[%c0_2, %c0_3, %c0_4], %7 {strides = array<i32>} : memref<2x2x4096xbf16, #tpu.memory_space<vmem>>, vector<2x2x4096xbf16>,
    return
  }
  func.func @transform_0(%arg0: i32) -> (i32, i32, i32) {
    %c0_i32 = arith.constant 0 : i32
    %c0_i32_0 = arith.constant 0 : i32
    %c0_i32_1 = arith.constant 0 : i32
    return %arg0, %c0_i32, %c0_i32_0 : i32, i32, i32
  }
  func.func @transform_1(%arg0: i32) -> (i32, i32, i32) {
    %c0_i32 = arith.constant 0 : i32
    %c0_i32_0 = arith.constant 0 : i32
    %c0_i32_1 = arith.constant 0 : i32
    return %arg0, %c0_i32, %c0_i32_0 : i32, i32, i32
  }
}

module attributes {stable_mosaic.version = 11 : i64} {
  func.func @_fmm_kernel(%arg0: i32, %arg1: i32, %arg2: i32, %arg3: memref<128x1792xbf16, #tpu.memory_space<vmem>>, %arg4: memref<1792x128xbf16, #tpu.memory_space<vmem>>, %arg5: memref<1x128xf32, #tpu.memory_space<vmem>>, %arg6: memref<1x128xf32, #tpu.memory_space<vmem>>, %arg7: memref<128x128xbf16, #tpu.memory_space<vmem>>, %arg8: memref<128x128xf32, #tpu.memory_space<vmem>>) attributes {dimension_semantics = [#tpu.dimension_semantics<parallel>, #tpu.dimension_semantics<parallel>, #tpu.dimension_semantics<arbitrary>], iteration_bounds = array<i64: 2, 1, 1>, scalar_prefetch = 0 : i64, scratch_operands = 1 : i64, tpu.core_type = #tpu.core_type<tc>, window_params = [{transform_indices = @transform_0, window_bounds = array<i64: 128, 1792>}, {transform_indices = @transform_1, window_bounds = array<i64: 1792, 128>}, {transform_indices = @transform_2, window_bounds = array<i64: 1, 128>}, {transform_indices = @transform_3, window_bounds = array<i64: 1, 128>}, {transform_indices = @transform_4, window_bounds = array<i64: 128, 128>}]} {
    %c0_i32 = arith.constant 0 : i32
    %0 = arith.cmpi eq, %arg2, %c0_i32 : i32
    %1 = arith.extui %0 : i1 to i32
    %c0_i32_0 = arith.constant 0 : i32
    %2 = arith.cmpi ne, %1, %c0_i32_0 : i32
    scf.if %2 {
      %cst_10 = arith.constant 0.000000e+00 : f32
      %12 = vector.broadcast %cst_10 : f32 to vector<128x128xf32>
      %c0_11 = arith.constant 0 : index
      %c0_12 = arith.constant 0 : index
      %13 = vector.load %arg8[%c0_11, %c0_12] : memref<128x128xf32, #tpu.memory_space<vmem>>, vector<128x128xf32>
      tpu.vector_store %arg8[%c0_11, %c0_12], %12 {strides = array<i32>} : memref<128x128xf32, #tpu.memory_space<vmem>>, vector<128x128xf32>,
    } else {
    }
    %c0 = arith.constant 0 : index
    %c0_1 = arith.constant 0 : index
    %3 = vector.load %arg8[%c0, %c0_1] : memref<128x128xf32, #tpu.memory_space<vmem>>, vector<128x128xf32>
    %c0_2 = arith.constant 0 : index
    %c0_3 = arith.constant 0 : index
    %4 = vector.load %arg3[%c0_2, %c0_3] : memref<128x1792xbf16, #tpu.memory_space<vmem>>, vector<128x1792xbf16>
    %c0_4 = arith.constant 0 : index
    %c0_5 = arith.constant 0 : index
    %5 = vector.load %arg4[%c0_4, %c0_5] : memref<1792x128xbf16, #tpu.memory_space<vmem>>, vector<1792x128xbf16>
    %cst = arith.constant dense<0.000000e+00> : vector<128x128xf32>
    %6 = tpu.matmul %4, %5, %cst {dimension_numbers = #tpu.dot_dimension_numbers<[1], [0], [0], [1], [0, 0, 1, 1], [], []>} : vector<128x1792xbf16>, vector<1792x128xbf16>, vector<128x128xf32> -> vector<128x128xf32>
    %7 = arith.addf %3, %6 : vector<128x128xf32>
    %c0_6 = arith.constant 0 : index
    %c0_7 = arith.constant 0 : index
    %8 = vector.load %arg8[%c0_6, %c0_7] : memref<128x128xf32, #tpu.memory_space<vmem>>, vector<128x128xf32>
    tpu.vector_store %arg8[%c0_6, %c0_7], %7 {strides = array<i32>} : memref<128x128xf32, #tpu.memory_space<vmem>>, vector<128x128xf32>,
    %c0_i32_8 = arith.constant 0 : i32
    %9 = arith.cmpi eq, %arg2, %c0_i32_8 : i32
    %10 = arith.extui %9 : i1 to i32
    %c0_i32_9 = arith.constant 0 : i32
    %11 = arith.cmpi ne, %10, %c0_i32_9 : i32
    scf.if %11 {
      %c0_10 = arith.constant 0 : index
      %c0_11 = arith.constant 0 : index
      %12 = vector.load %arg8[%c0_10, %c0_11] : memref<128x128xf32, #tpu.memory_space<vmem>>, vector<128x128xf32>
      %c0_12 = arith.constant 0 : index
      %c0_13 = arith.constant 0 : index
      %13 = vector.load %arg5[%c0_12, %c0_13] : memref<1x128xf32, #tpu.memory_space<vmem>>, vector<1x128xf32>
      %14 = vector.broadcast %13 : vector<1x128xf32> to vector<128x128xf32>
      %15 = arith.mulf %12, %14 : vector<128x128xf32>
      %c0_14 = arith.constant 0 : index
      %c0_15 = arith.constant 0 : index
      %16 = vector.load %arg6[%c0_14, %c0_15] : memref<1x128xf32, #tpu.memory_space<vmem>>, vector<1x128xf32>
      %17 = vector.broadcast %16 : vector<1x128xf32> to vector<128x128xf32>
      %18 = arith.addf %15, %17 : vector<128x128xf32>
      %cst_16 = arith.constant 0.000000e+00 : f32
      %19 = vector.broadcast %cst_16 : f32 to vector<128x128xf32>
      %20 = arith.maximumf %18, %19 : vector<128x128xf32>
      %21 = arith.truncf %20 : vector<128x128xf32> to vector<128x128xbf16>
      %c0_17 = arith.constant 0 : index
      %c0_18 = arith.constant 0 : index
      %22 = vector.load %arg7[%c0_17, %c0_18] : memref<128x128xbf16, #tpu.memory_space<vmem>>, vector<128x128xbf16>
      tpu.vector_store %arg7[%c0_17, %c0_18], %21 {strides = array<i32>} : memref<128x128xbf16, #tpu.memory_space<vmem>>, vector<128x128xbf16>,
    } else {
    }
    return
  }
  func.func @transform_0(%arg0: i32, %arg1: i32, %arg2: i32) -> (i32, i32) {
    %c0_i32 = arith.constant 0 : i32
    return %arg0, %arg2 : i32, i32
  }
  func.func @transform_1(%arg0: i32, %arg1: i32, %arg2: i32) -> (i32, i32) {
    %c0_i32 = arith.constant 0 : i32
    return %arg2, %arg1 : i32, i32
  }
  func.func @transform_2(%arg0: i32, %arg1: i32, %arg2: i32) -> (i32, i32) {
    %c0_i32 = arith.constant 0 : i32
    %c0_i32_0 = arith.constant 0 : i32
    return %c0_i32, %arg1 : i32, i32
  }
  func.func @transform_3(%arg0: i32, %arg1: i32, %arg2: i32) -> (i32, i32) {
    %c0_i32 = arith.constant 0 : i32
    %c0_i32_0 = arith.constant 0 : i32
    return %c0_i32, %arg1 : i32, i32
  }
  func.func @transform_4(%arg0: i32, %arg1: i32, %arg2: i32) -> (i32, i32) {
    %c0_i32 = arith.constant 0 : i32
    return %arg0, %arg1 : i32, i32
  }
}

module attributes {stable_mosaic.version = 11 : i64} {
  func.func @_fmm_res_kernel(%arg0: i32, %arg1: i32, %arg2: i32, %arg3: memref<128x1792xbf16, #tpu.memory_space<vmem>>, %arg4: memref<1792x128xbf16, #tpu.memory_space<vmem>>, %arg5: memref<1x128xf32, #tpu.memory_space<vmem>>, %arg6: memref<1x128xf32, #tpu.memory_space<vmem>>, %arg7: memref<128x128xbf16, #tpu.memory_space<vmem>>, %arg8: memref<128x128xbf16, #tpu.memory_space<vmem>>, %arg9: memref<128x128xf32, #tpu.memory_space<vmem>>) attributes {dimension_semantics = [#tpu.dimension_semantics<parallel>, #tpu.dimension_semantics<parallel>, #tpu.dimension_semantics<arbitrary>], iteration_bounds = array<i64: 2, 1, 1>, scalar_prefetch = 0 : i64, scratch_operands = 1 : i64, tpu.core_type = #tpu.core_type<tc>, window_params = [{transform_indices = @transform_0, window_bounds = array<i64: 128, 1792>}, {transform_indices = @transform_1, window_bounds = array<i64: 1792, 128>}, {transform_indices = @transform_2, window_bounds = array<i64: 1, 128>}, {transform_indices = @transform_3, window_bounds = array<i64: 1, 128>}, {transform_indices = @transform_4, window_bounds = array<i64: 128, 128>}, {transform_indices = @transform_5, window_bounds = array<i64: 128, 128>}]} {
    %c0_i32 = arith.constant 0 : i32
    %0 = arith.cmpi eq, %arg2, %c0_i32 : i32
    %1 = arith.extui %0 : i1 to i32
    %c0_i32_0 = arith.constant 0 : i32
    %2 = arith.cmpi ne, %1, %c0_i32_0 : i32
    scf.if %2 {
      %cst_10 = arith.constant 0.000000e+00 : f32
      %12 = vector.broadcast %cst_10 : f32 to vector<128x128xf32>
      %c0_11 = arith.constant 0 : index
      %c0_12 = arith.constant 0 : index
      %13 = vector.load %arg9[%c0_11, %c0_12] : memref<128x128xf32, #tpu.memory_space<vmem>>, vector<128x128xf32>
      tpu.vector_store %arg9[%c0_11, %c0_12], %12 {strides = array<i32>} : memref<128x128xf32, #tpu.memory_space<vmem>>, vector<128x128xf32>,
    } else {
    }
    %c0 = arith.constant 0 : index
    %c0_1 = arith.constant 0 : index
    %3 = vector.load %arg9[%c0, %c0_1] : memref<128x128xf32, #tpu.memory_space<vmem>>, vector<128x128xf32>
    %c0_2 = arith.constant 0 : index
    %c0_3 = arith.constant 0 : index
    %4 = vector.load %arg3[%c0_2, %c0_3] : memref<128x1792xbf16, #tpu.memory_space<vmem>>, vector<128x1792xbf16>
    %c0_4 = arith.constant 0 : index
    %c0_5 = arith.constant 0 : index
    %5 = vector.load %arg4[%c0_4, %c0_5] : memref<1792x128xbf16, #tpu.memory_space<vmem>>, vector<1792x128xbf16>
    %cst = arith.constant dense<0.000000e+00> : vector<128x128xf32>
    %6 = tpu.matmul %4, %5, %cst {dimension_numbers = #tpu.dot_dimension_numbers<[1], [0], [0], [1], [0, 0, 1, 1], [], []>} : vector<128x1792xbf16>, vector<1792x128xbf16>, vector<128x128xf32> -> vector<128x128xf32>
    %7 = arith.addf %3, %6 : vector<128x128xf32>
    %c0_6 = arith.constant 0 : index
    %c0_7 = arith.constant 0 : index
    %8 = vector.load %arg9[%c0_6, %c0_7] : memref<128x128xf32, #tpu.memory_space<vmem>>, vector<128x128xf32>
    tpu.vector_store %arg9[%c0_6, %c0_7], %7 {strides = array<i32>} : memref<128x128xf32, #tpu.memory_space<vmem>>, vector<128x128xf32>,
    %c0_i32_8 = arith.constant 0 : i32
    %9 = arith.cmpi eq, %arg2, %c0_i32_8 : i32
    %10 = arith.extui %9 : i1 to i32
    %c0_i32_9 = arith.constant 0 : i32
    %11 = arith.cmpi ne, %10, %c0_i32_9 : i32
    scf.if %11 {
      %c0_10 = arith.constant 0 : index
      %c0_11 = arith.constant 0 : index
      %12 = vector.load %arg9[%c0_10, %c0_11] : memref<128x128xf32, #tpu.memory_space<vmem>>, vector<128x128xf32>
      %c0_12 = arith.constant 0 : index
      %c0_13 = arith.constant 0 : index
      %13 = vector.load %arg5[%c0_12, %c0_13] : memref<1x128xf32, #tpu.memory_space<vmem>>, vector<1x128xf32>
      %14 = vector.broadcast %13 : vector<1x128xf32> to vector<128x128xf32>
      %15 = arith.mulf %12, %14 : vector<128x128xf32>
      %c0_14 = arith.constant 0 : index
      %c0_15 = arith.constant 0 : index
      %16 = vector.load %arg6[%c0_14, %c0_15] : memref<1x128xf32, #tpu.memory_space<vmem>>, vector<1x128xf32>
      %17 = vector.broadcast %16 : vector<1x128xf32> to vector<128x128xf32>
      %18 = arith.addf %15, %17 : vector<128x128xf32>
      %c0_16 = arith.constant 0 : index
      %c0_17 = arith.constant 0 : index
      %19 = vector.load %arg7[%c0_16, %c0_17] : memref<128x128xbf16, #tpu.memory_space<vmem>>, vector<128x128xbf16>
      %20 = arith.extf %19 : vector<128x128xbf16> to vector<128x128xf32>
      %21 = arith.addf %18, %20 : vector<128x128xf32>
      %cst_18 = arith.constant 0.000000e+00 : f32
      %22 = vector.broadcast %cst_18 : f32 to vector<128x128xf32>
      %23 = arith.maximumf %21, %22 : vector<128x128xf32>
      %24 = arith.truncf %23 : vector<128x128xf32> to vector<128x128xbf16>
      %c0_19 = arith.constant 0 : index
      %c0_20 = arith.constant 0 : index
      %25 = vector.load %arg8[%c0_19, %c0_20] : memref<128x128xbf16, #tpu.memory_space<vmem>>, vector<128x128xbf16>
      tpu.vector_store %arg8[%c0_19, %c0_20], %24 {strides = array<i32>} : memref<128x128xbf16, #tpu.memory_space<vmem>>, vector<128x128xbf16>,
    } else {
    }
    return
  }
  func.func @transform_0(%arg0: i32, %arg1: i32, %arg2: i32) -> (i32, i32) {
    %c0_i32 = arith.constant 0 : i32
    return %arg0, %arg2 : i32, i32
  }
  func.func @transform_1(%arg0: i32, %arg1: i32, %arg2: i32) -> (i32, i32) {
    %c0_i32 = arith.constant 0 : i32
    return %arg2, %arg1 : i32, i32
  }
  func.func @transform_2(%arg0: i32, %arg1: i32, %arg2: i32) -> (i32, i32) {
    %c0_i32 = arith.constant 0 : i32
    %c0_i32_0 = arith.constant 0 : i32
    return %c0_i32, %arg1 : i32, i32
  }
  func.func @transform_3(%arg0: i32, %arg1: i32, %arg2: i32) -> (i32, i32) {
    %c0_i32 = arith.constant 0 : i32
    %c0_i32_0 = arith.constant 0 : i32
    return %c0_i32, %arg1 : i32, i32
  }
  func.func @transform_4(%arg0: i32, %arg1: i32, %arg2: i32) -> (i32, i32) {
    %c0_i32 = arith.constant 0 : i32
    return %arg0, %arg1 : i32, i32
  }
  func.func @transform_5(%arg0: i32, %arg1: i32, %arg2: i32) -> (i32, i32) {
    %c0_i32 = arith.constant 0 : i32
    return %arg0, %arg1 : i32, i32
  }
}

</mosaic_0001>

<llo_original>
// kernel: resnet_encoder3d_forward.8
$region0: #{resnet_encoder3d_forward.8}
  #allocation0 [shape = 'u32[]', space=smem, size = 0x4, offset = 0x4, fixed_abs, tag = 'smem constant byte address 0x4 - core index']
  #allocation1 [shape = 'u32[144,128]{1,0:T(1,128)}', space=vmem, size = 0x12000, scoped, tag = 'internal scratch']
  #allocation2 [shape = 'f32[256,128]{1,0:T(8,128)}', space=vmem, size = 0x20000, scoped, tag = 'scratch operand']
  %s0 = inlined_call_operand.vmem [shape: bf16[2048,1152], index: 0, kind: input, shape index: {}]
  %s1 = inlined_call_operand.vmem [shape: bf16[1152,128], index: 1, kind: input, shape index: {}]
  %s2 = inlined_call_operand.vmem [shape: f32[1,128], index: 2, kind: input, shape index: {}]
  %s3 = inlined_call_operand.vmem [shape: f32[1,128], index: 3, kind: input, shape index: {}]
  %s4 = inlined_call_operand.vmem [shape: bf16[2048,128], index: 4, kind: output, shape index: {}]
  %s5 = sld [smem:[#allocation0]]
  $region57: #{resnet_encoder3d_forward.8} parent=0
    _
  %s7 = ssub.s32 1, %s5
  %s8 = scalar_select 0, %s7, %s5
  loop: start=0, step=1, limit=10
  $region2: #{resnet_encoder3d_forward.8} parent=0 // loop_pre_header
    _
  $region3: #{resnet_encoder3d_forward.8} parent=0 // loop_header
    %s10 = sphi 0, %s14
    %p11 = scmp.ge.s32.totalorder %s10, 10
    %s17 = sphi 0, %s36
    %s18 = sphi 0, %s32
    %s19 = sphi 0, %s28
    %s20 = sphi 0, %s17
    %s21 = sphi 0, %s18
    %s22 = sphi 0, %s19
    %s23 = sphi 0, %s20
    %s24 = sphi 0, %s21
    %s25 = sphi 0, %s22
    %s41 = sphi 0, %s43
    %s44 = sphi 0, %s41
    %s45 = sphi 0, %s44
    %s61 = sphi 0, %s45
    %s69 = sphi 0, %s71
    %s72 = sphi 0, %s69
    %s73 = sphi 0, %s72
    %s89 = sphi 0, %s73
    %s95 = sphi 0, %s97
    %s98 = sphi 0, %s95
    %s99 = sphi 0, %s98
    %s115 = sphi 0, %s99
    %s121 = sphi 0, %s123
    %s124 = sphi 0, %s121
    %s125 = sphi 0, %s124
    %s141 = sphi 0, %s125
    %s149 = sphi 0, %s151
    %s152 = sphi 0, %s149
    %s153 = sphi 0, %s152
    %s169 = sphi 0, %s153
  $region4: #{resnet_encoder3d_forward.8} parent=0 // loop_header_branch
    %13 = sbr.rel (%p11) target = $region8
  $region5: #{resnet_encoder3d_forward.8} parent=0 // loop_body
    %s15 = ssub.s32 %s10, 1
    %s16 = ssub.s32 %s10, 2
    %s26 = sadd.s32 1, %s19
    %p27 = scmp.ge.s32.totalorder %s26, 1
    %s28 = scalar_select %p27, 0, %s26
    %s29 = sadd.s32 1, %s18
    %s30 = scalar_select %p27, %s29, %s18
    %p31 = scmp.ge.s32.totalorder %s30, 1
    %s32 = scalar_select %p31, 0, %s30
    %s33 = sadd.s32 1, %s17
    %s34 = scalar_select %p31, %s33, %s17
    %p35 = scmp.ge.s32.totalorder %s34, 8
    %s36 = scalar_select %p35, 0, %s34
    %s37 = ssub.s32 %s17, %s36
    %s38 = ssub.s32 %s19, %s28
    %s39 = sor.u32 %s37, %s38
    %p40 = scmp.eq.s32.totalorder %s39, 0
    %s42 = sadd.s32 %s41, 1
    %s43 = scalar_select %p40, %s41, %s42
    %p46 = pneg %p40
    %p47 = scmp.eq.s32.totalorder %s10, 7
    %p48 = por %p46, %p47
    %p49 = scmp.ne.s32.totalorder %s41, %s44
    %p50 = scmp.eq.s32.totalorder %s10, 0
    %p51 = por %p49, %p50
    %p52 = scmp.ne.s32.totalorder %s41, %s44
    %p53 = scmp.eq.s32.totalorder %s15, 7
    %p54 = por %p52, %p53
    %p55 = scmp.ne.s32.totalorder %s44, %s45
    %p56 = scmp.eq.s32.totalorder %s15, 0
    %p57 = por %p55, %p56
    %p58 = scmp.ne.s32.totalorder %s44, %s45
    %p59 = scmp.eq.s32.totalorder %s16, 7
    %p60 = por %p58, %p59
    %p62 = scmp.ne.s32.totalorder %s45, %s61
    %p63 = scmp.eq.s32.totalorder %s16, 0
    %p64 = por %p62, %p63
    %s65 = ssub.s32 %s19, %s28
    %s66 = ssub.s32 %s18, %s32
    %s67 = sor.u32 %s65, %s66
    %p68 = scmp.eq.s32.totalorder %s67, 0
    %s70 = sadd.s32 %s69, 1
    %s71 = scalar_select %p68, %s69, %s70
    %p74 = pneg %p68
    %p75 = scmp.eq.s32.totalorder %s10, 7
    %p76 = por %p74, %p75
    %p77 = scmp.ne.s32.totalorder %s69, %s72
    %p78 = scmp.eq.s32.totalorder %s10, 0
    %p79 = por %p77, %p78
    %p80 = scmp.ne.s32.totalorder %s69, %s72
    %p81 = scmp.eq.s32.totalorder %s15, 7
    %p82 = por %p80, %p81
    %p83 = scmp.ne.s32.totalorder %s72, %s73
    %p84 = scmp.eq.s32.totalorder %s15, 0
    %p85 = por %p83, %p84
    %p86 = scmp.ne.s32.totalorder %s72, %s73
    %p87 = scmp.eq.s32.totalorder %s16, 7
    %p88 = por %p86, %p87
    %p90 = scmp.ne.s32.totalorder %s73, %s89
    %p91 = scmp.eq.s32.totalorder %s16, 0
    %p92 = por %p90, %p91
    %s93 = ssub.s32 %s18, %s32
    %p94 = scmp.eq.s32.totalorder %s93, 0
    %s96 = sadd.s32 %s95, 1
    %s97 = scalar_select %p94, %s95, %s96
    %p100 = pneg %p94
    %p101 = scmp.eq.s32.totalorder %s10, 7
    %p102 = por %p100, %p101
    %p103 = scmp.ne.s32.totalorder %s95, %s98
    %p104 = scmp.eq.s32.totalorder %s10, 0
    %p105 = por %p103, %p104
    %p106 = scmp.ne.s32.totalorder %s95, %s98
    %p107 = scmp.eq.s32.totalorder %s15, 7
    %p108 = por %p106, %p107
    %p109 = scmp.ne.s32.totalorder %s98, %s99
    %p110 = scmp.eq.s32.totalorder %s15, 0
    %p111 = por %p109, %p110
    %p112 = scmp.ne.s32.totalorder %s98, %s99
    %p113 = scmp.eq.s32.totalorder %s16, 7
    %p114 = por %p112, %p113
    %p116 = scmp.ne.s32.totalorder %s99, %s115
    %p117 = scmp.eq.s32.totalorder %s16, 0
    %p118 = por %p116, %p117
    %s119 = ssub.s32 %s18, %s32
    %p120 = scmp.eq.s32.totalorder %s119, 0
    %s122 = sadd.s32 %s121, 1
    %s123 = scalar_select %p120, %s121, %s122
    %p126 = pneg %p120
    %p127 = scmp.eq.s32.totalorder %s10, 7
    %p128 = por %p126, %p127
    %p129 = scmp.ne.s32.totalorder %s121, %s124
    %p130 = scmp.eq.s32.totalorder %s10, 0
    %p131 = por %p129, %p130
    %p132 = scmp.ne.s32.totalorder %s121, %s124
    %p133 = scmp.eq.s32.totalorder %s15, 7
    %p134 = por %p132, %p133
    %p135 = scmp.ne.s32.totalorder %s124, %s125
    %p136 = scmp.eq.s32.totalorder %s15, 0
    %p137 = por %p135, %p136
    %p138 = scmp.ne.s32.totalorder %s124, %s125
    %p139 = scmp.eq.s32.totalorder %s16, 7
    %p140 = por %p138, %p139
    %p142 = scmp.ne.s32.totalorder %s125, %s141
    %p143 = scmp.eq.s32.totalorder %s16, 0
    %p144 = por %p142, %p143
    %s145 = ssub.s32 %s17, %s36
    %s146 = ssub.s32 %s18, %s32
    %s147 = sor.u32 %s145, %s146
    %p148 = scmp.eq.s32.totalorder %s147, 0
    %s150 = sadd.s32 %s149, 1
    %s151 = scalar_select %p148, %s149, %s150
    %p154 = pneg %p148
    %p155 = scmp.eq.s32.totalorder %s10, 7
    %p156 = por %p154, %p155
    %p157 = scmp.ne.s32.totalorder %s149, %s152
    %p158 = scmp.eq.s32.totalorder %s10, 0
    %p159 = por %p157, %p158
    %p160 = scmp.ne.s32.totalorder %s149, %s152
    %p161 = scmp.eq.s32.totalorder %s15, 7
    %p162 = por %p160, %p161
    %p163 = scmp.ne.s32.totalorder %s152, %s153
    %p164 = scmp.eq.s32.totalorder %s15, 0
    %p165 = por %p163, %p164
    %p166 = scmp.ne.s32.totalorder %s152, %s153
    %p167 = scmp.eq.s32.totalorder %s16, 7
    %p168 = por %p166, %p167
    %p170 = scmp.ne.s32.totalorder %s153, %s169
    %p171 = scmp.eq.s32.totalorder %s16, 0
    %p172 = por %p170, %p171
    %p173 = scmp.le.s32.totalorder 1, %s10
    %p174 = scmp.lt.s32.totalorder %s10, 9
    %p175 = pnand %p173, %p174
    %p176 = pneg %p175
    // Predicated region
    $region9: #{resnet_encoder3d_forward.8} parent=5 // pred_check
      _
    $region10: #{resnet_encoder3d_forward.8} parent=5 // pred_check_branch
      %178 = sbr.rel (%p175) target = $region12
    $region11: #{resnet_encoder3d_forward.8} parent=5 // pred_region
      %s179 = ssub.s32 %s10, 1
      // Predicated region
      $region13: #{resnet_encoder3d_forward.8} parent=11 // pred_check
        %p180 = pneg %p85
      $region14: #{resnet_encoder3d_forward.8} parent=11 // pred_check_branch
        %182 = sbr.rel (%p180) target = $region16
      $region15: #{resnet_encoder3d_forward.8} parent=11 // pred_region
        %s183 = smul.u32 144, %s22
        %p184 = scmp.lt.s32.totalorder %s183, 143
        %s185 = scalar_select %p184, %s183, 143
        %p186 = scmp.lt.s32.totalorder %s21, 0
        %s187 = scalar_select %p186, %s21, 0
        %s188 = sadd.s32 %s187, %s185
        %s189 = smul.addr %s188, 4
        %s190 = scalar_lea.vmem %s1, %s189
        %s191 = smul.u32 144, %s22
      $region16: #{resnet_encoder3d_forward.8} parent=11 // pred_fallthru
        _
      // Predicated region
      $region17: #{resnet_encoder3d_forward.8} parent=11 // pred_check
        %p192 = pneg %p111
      $region18: #{resnet_encoder3d_forward.8} parent=11 // pred_check_branch
        %194 = sbr.rel (%p192) target = $region20
      $region19: #{resnet_encoder3d_forward.8} parent=11 // pred_region
        %p195 = scmp.lt.s32.totalorder %s21, 0
        %s196 = scalar_select %p195, %s21, 0
        %s197 = scalar_lea.vmem %s2, %s196
      $region20: #{resnet_encoder3d_forward.8} parent=11 // pred_fallthru
        _
      // Predicated region
      $region21: #{resnet_encoder3d_forward.8} parent=11 // pred_check
        %p198 = pneg %p137
      $region22: #{resnet_encoder3d_forward.8} parent=11 // pred_check_branch
        %200 = sbr.rel (%p198) target = $region24
      $region23: #{resnet_encoder3d_forward.8} parent=11 // pred_region
        %p201 = scmp.lt.s32.totalorder %s21, 0
        %s202 = scalar_select %p201, %s21, 0
        %s203 = scalar_lea.vmem %s3, %s202
      $region24: #{resnet_encoder3d_forward.8} parent=11 // pred_fallthru
        _
    $region12: #{resnet_encoder3d_forward.8} parent=5 // pred_fallthru
      _
    %p204 = scmp.lt.s32.totalorder %s10, 8
    // Predicated region
    $region25: #{resnet_encoder3d_forward.8} parent=5 // pred_check
      %p205 = pneg %p204
    $region26: #{resnet_encoder3d_forward.8} parent=5 // pred_check_branch
      %207 = sbr.rel (%p205) target = $region28
    $region27: #{resnet_encoder3d_forward.8} parent=5 // pred_region
      // Predicated region
      $region29: #{resnet_encoder3d_forward.8} parent=27 // pred_check
        %p208 = pneg %p51
      $region30: #{resnet_encoder3d_forward.8} parent=27 // pred_check_branch
        %210 = sbr.rel (%p208) target = $region32
      $region31: #{resnet_encoder3d_forward.8} parent=27 // pred_region
        %s211 = smul.u32 32, %s17
        %s212 = smul.u32 9, %s19
        %p213 = scmp.lt.s32.totalorder %s211, 255
        %s214 = scalar_select %p213, %s211, 255
        %p215 = scmp.lt.s32.totalorder %s212, 8
        %s216 = scalar_select %p215, %s212, 8
        %s217 = smul.addr %s214, 9
        %s218 = sadd.s32 %s216, %s217
        %s219 = smul.addr %s218, 4
        %s220 = scalar_lea.vmem %s0, %s219
        %s221 = smul.u32 32, %s17
        %s222 = smul.u32 9, %s19
      $region32: #{resnet_encoder3d_forward.8} parent=27 // pred_fallthru
        _
    $region28: #{resnet_encoder3d_forward.8} parent=5 // pred_fallthru
      _
    %p223 = scmp.le.s32.totalorder 1, %s10
    %p224 = scmp.lt.s32.totalorder %s10, 9
    %p225 = pnand %p223, %p224
    %p226 = pneg %p225
    // Predicated region
    $region33: #{resnet_encoder3d_forward.8} parent=5 // pred_check
      _
    $region34: #{resnet_encoder3d_forward.8} parent=5 // pred_check_branch
      %228 = sbr.rel (%p225) target = $region36
    $region35: #{resnet_encoder3d_forward.8} parent=5 // pred_region
      %s229 = ssub.s32 %s10, 1
      %s230 = smul.u32 32, %s20
      %s231 = smul.u32 9, %s22
      %p232 = scmp.lt.s32.totalorder %s230, 255
      %s233 = scalar_select %p232, %s230, 255
      %p234 = scmp.lt.s32.totalorder %s231, 8
      %s235 = scalar_select %p234, %s231, 8
      %s236 = smul.addr %s233, 9
      %s237 = sadd.s32 %s235, %s236
      %s238 = smul.addr %s237, 4
      %s239 = scalar_lea.vmem %s0, %s238
      %p240 = pneg %p57
      %p241 = pneg %p54
      %s242 = smul.u32 144, %s22
      %p243 = scmp.lt.s32.totalorder %s242, 143
      %s244 = scalar_select %p243, %s242, 143
      %p245 = scmp.lt.s32.totalorder %s21, 0
      %s246 = scalar_select %p245, %s21, 0
      %s247 = sadd.s32 %s246, %s244
      %s248 = smul.addr %s247, 4
      %s249 = scalar_lea.vmem %s1, %s248
      %p250 = pneg %p85
      %p251 = pneg %p82
      %p252 = scmp.lt.s32.totalorder %s21, 0
      %s253 = scalar_select %p252, %s21, 0
      %s254 = scalar_lea.vmem %s2, %s253
      %p255 = pneg %p111
      %p256 = pneg %p108
      %p257 = scmp.lt.s32.totalorder %s21, 0
      %s258 = scalar_select %p257, %s21, 0
      %s259 = scalar_lea.vmem %s3, %s258
      %p260 = pneg %p137
      %p261 = pneg %p134
      %p262 = pneg %p165
      %p263 = pneg %p162
      %s264 = smul.u32 32, %s20
      %p265 = scmp.lt.s32.totalorder %s264, 255
      %s266 = scalar_select %p265, %s264, 255
      %p267 = scmp.lt.s32.totalorder %s21, 0
      %s268 = scalar_select %p267, %s21, 0
      %s269 = sadd.s32 %s268, %s266
      %s270 = smul.addr %s269, 4
      %s271 = scalar_lea.vmem %s4, %s270
      %s272 = smul.u32 32, %s20
      %s273 = smul.u32 9, %s22
      %p274 = scmp.lt.s32.totalorder %s272, 255
      %s275 = scalar_select %p274, %s272, 255
      %p276 = scmp.lt.s32.totalorder %s273, 8
      %s277 = scalar_select %p276, %s273, 8
      %s278 = smul.addr %s275, 9
      %s279 = sadd.s32 %s277, %s278
      %s280 = smul.addr %s279, 4
      %s281 = scalar_lea.vmem %s0, %s280
      %s282 = smul.u32 32, %s20
      %s283 = smul.u32 9, %s22
      %s284 = smul.u32 144, %s22
      %p285 = scmp.lt.s32.totalorder %s284, 143
      %s286 = scalar_select %p285, %s284, 143
      %p287 = scmp.lt.s32.totalorder %s21, 0
      %s288 = scalar_select %p287, %s21, 0
      %s289 = sadd.s32 %s288, %s286
      %s290 = smul.addr %s289, 4
      %s291 = scalar_lea.vmem %s1, %s290
      %s292 = smul.u32 144, %s22
      %p293 = scmp.lt.s32.totalorder %s21, 0
      %s294 = scalar_select %p293, %s21, 0
      %s295 = scalar_lea.vmem %s2, %s294
      %p296 = scmp.lt.s32.totalorder %s21, 0
      %s297 = scalar_select %p296, %s21, 0
      %s298 = scalar_lea.vmem %s3, %s297
      %s299 = smul.u32 32, %s20
      %p300 = scmp.lt.s32.totalorder %s299, 255
      %s301 = scalar_select %p300, %s299, 255
      %p302 = scmp.lt.s32.totalorder %s21, 0
      %s303 = scalar_select %p302, %s21, 0
      %s304 = sadd.s32 %s303, %s301
      %s305 = smul.addr %s304, 4
      %s306 = scalar_lea.vmem %s4, %s305
      %s307 = smul.u32 32, %s20
      %p309 = scmp.eq.s32.totalorder %s22, 0
      // Predicated region
      $region37: #{resnet_encoder3d_forward.8} parent=35 // pred_check
        %p310 = pneg %p309
      $region38: #{resnet_encoder3d_forward.8} parent=35 // pred_check_branch
        %312 = sbr.rel (%p310) target = $region40
      $region39: #{resnet_encoder3d_forward.8} parent=35 // pred_region
        %313 = vst [vmem:[#allocation2] sm:$0xff] 0.0
        %314 = vst [vmem:[#allocation2 + $0x8] sm:$0xff] 0.0
        %315 = vst [vmem:[#allocation2 + $0x10] sm:$0xff] 0.0
        %316 = vst [vmem:[#allocation2 + $0x18] sm:$0xff] 0.0
        %317 = vst [vmem:[#allocation2 + $0x20] sm:$0xff] 0.0
        %318 = vst [vmem:[#allocation2 + $0x28] sm:$0xff] 0.0
        %319 = vst [vmem:[#allocation2 + $0x30] sm:$0xff] 0.0
        %320 = vst [vmem:[#allocation2 + $0x38] sm:$0xff] 0.0
        %321 = vst [vmem:[#allocation2 + $0x40] sm:$0xff] 0.0
        %322 = vst [vmem:[#allocation2 + $0x48] sm:$0xff] 0.0
        %323 = vst [vmem:[#allocation2 + $0x50] sm:$0xff] 0.0
        %324 = vst [vmem:[#allocation2 + $0x58] sm:$0xff] 0.0
        %325 = vst [vmem:[#allocation2 + $0x60] sm:$0xff] 0.0
        %326 = vst [vmem:[#allocation2 + $0x68] sm:$0xff] 0.0
        %327 = vst [vmem:[#allocation2 + $0x70] sm:$0xff] 0.0
        %328 = vst [vmem:[#allocation2 + $0x78] sm:$0xff] 0.0
        %329 = vst [vmem:[#allocation2 + $0x80] sm:$0xff] 0.0
        %330 = vst [vmem:[#allocation2 + $0x88] sm:$0xff] 0.0
        %331 = vst [vmem:[#allocation2 + $0x90] sm:$0xff] 0.0
        %332 = vst [vmem:[#allocation2 + $0x98] sm:$0xff] 0.0
        %333 = vst [vmem:[#allocation2 + $0xa0] sm:$0xff] 0.0
        %334 = vst [vmem:[#allocation2 + $0xa8] sm:$0xff] 0.0
        %335 = vst [vmem:[#allocation2 + $0xb0] sm:$0xff] 0.0
        %336 = vst [vmem:[#allocation2 + $0xb8] sm:$0xff] 0.0
        %337 = vst [vmem:[#allocation2 + $0xc0] sm:$0xff] 0.0
        %338 = vst [vmem:[#allocation2 + $0xc8] sm:$0xff] 0.0
        %339 = vst [vmem:[#allocation2 + $0xd0] sm:$0xff] 0.0
        %340 = vst [vmem:[#allocation2 + $0xd8] sm:$0xff] 0.0
        %341 = vst [vmem:[#allocation2 + $0xe0] sm:$0xff] 0.0
        %342 = vst [vmem:[#allocation2 + $0xe8] sm:$0xff] 0.0
        %343 = vst [vmem:[#allocation2 + $0xf0] sm:$0xff] 0.0
        %344 = vst [vmem:[#allocation2 + $0xf8] sm:$0xff] 0.0
      $region40: #{resnet_encoder3d_forward.8} parent=35 // pred_fallthru
        _
      %v345 = vld [vmem:[#allocation2] sm:$0xff]
      %v346 = vld [vmem:[#allocation2 + $0x8] sm:$0xff]
      %v347 = vld [vmem:[#allocation2 + $0x10] sm:$0xff]
      %v348 = vld [vmem:[#allocation2 + $0x18] sm:$0xff]
      %v349 = vld [vmem:[#allocation2 + $0x20] sm:$0xff]
      %v350 = vld [vmem:[#allocation2 + $0x28] sm:$0xff]
      %v351 = vld [vmem:[#allocation2 + $0x30] sm:$0xff]
      %v352 = vld [vmem:[#allocation2 + $0x38] sm:$0xff]
      %v353 = vld [vmem:[#allocation2 + $0x40] sm:$0xff]
      %v354 = vld [vmem:[#allocation2 + $0x48] sm:$0xff]
      %v355 = vld [vmem:[#allocation2 + $0x50] sm:$0xff]
      %v356 = vld [vmem:[#allocation2 + $0x58] sm:$0xff]
      %v357 = vld [vmem:[#allocation2 + $0x60] sm:$0xff]
      %v358 = vld [vmem:[#allocation2 + $0x68] sm:$0xff]
      %v359 = vld [vmem:[#allocation2 + $0x70] sm:$0xff]
      %v360 = vld [vmem:[#allocation2 + $0x78] sm:$0xff]
      %v361 = vld [vmem:[#allocation2 + $0x80] sm:$0xff]
      %v362 = vld [vmem:[#allocation2 + $0x88] sm:$0xff]
      %v363 = vld [vmem:[#allocation2 + $0x90] sm:$0xff]
      %v364 = vld [vmem:[#allocation2 + $0x98] sm:$0xff]
      %v365 = vld [vmem:[#allocation2 + $0xa0] sm:$0xff]
      %v366 = vld [vmem:[#allocation2 + $0xa8] sm:$0xff]
      %v367 = vld [vmem:[#allocation2 + $0xb0] sm:$0xff]
      %v368 = vld [vmem:[#allocation2 + $0xb8] sm:$0xff]
      %v369 = vld [vmem:[#allocation2 + $0xc0] sm:$0xff]
      %v370 = vld [vmem:[#allocation2 + $0xc8] sm:$0xff]
      %v371 = vld [vmem:[#allocation2 + $0xd0] sm:$0xff]
      %v372 = vld [vmem:[#allocation2 + $0xd8] sm:$0xff]
      %v373 = vld [vmem:[#allocation2 + $0xe0] sm:$0xff]
      %v374 = vld [vmem:[#allocation2 + $0xe8] sm:$0xff]
      %v375 = vld [vmem:[#allocation2 + $0xf0] sm:$0xff]
      %v376 = vld [vmem:[#allocation2 + $0xf8] sm:$0xff]
      %v377 = vld [vmem:[%s281] sm:$0xff]
      %v378 = vld [vmem:[%s281 + $0x8] sm:$0xff]
      %v379 = vld [vmem:[%s281 + $0x10] sm:$0xff]
      %v380 = vld [vmem:[%s281 + $0x18] sm:$0xff]
      %v381 = vld [vmem:[%s281 + $0x20] sm:$0xf]
      %v382 = vld [vmem:[%s281 + $0x24] sm:$0xff]
      %v383 = vld [vmem:[%s281 + $0x2c] sm:$0xff]
      %v384 = vld [vmem:[%s281 + $0x34] sm:$0xff]
      %v385 = vld [vmem:[%s281 + $0x3c] sm:$0xff]
      %v386 = vld [vmem:[%s281 + $0x44] sm:$0xf]
      %v387 = vld [vmem:[%s281 + $0x48] sm:$0xff]
      %v388 = vld [vmem:[%s281 + $0x50] sm:$0xff]
      %v389 = vld [vmem:[%s281 + $0x58] sm:$0xff]
      %v390 = vld [vmem:[%s281 + $0x60] sm:$0xff]
      %v391 = vld [vmem:[%s281 + $0x68] sm:$0xf]
      %v392 = vld [vmem:[%s281 + $0x6c] sm:$0xff]
      %v393 = vld [vmem:[%s281 + $0x74] sm:$0xff]
      %v394 = vld [vmem:[%s281 + $0x7c] sm:$0xff]
      %v395 = vld [vmem:[%s281 + $0x84] sm:$0xff]
      %v396 = vld [vmem:[%s281 + $0x8c] sm:$0xf]
      %v397 = vld [vmem:[%s281 + $0x90] sm:$0xff]
      %v398 = vld [vmem:[%s281 + $0x98] sm:$0xff]
      %v399 = vld [vmem:[%s281 + $0xa0] sm:$0xff]
      %v400 = vld [vmem:[%s281 + $0xa8] sm:$0xff]
      %v401 = vld [vmem:[%s281 + $0xb0] sm:$0xf]
      %v402 = vld [vmem:[%s281 + $0xb4] sm:$0xff]
      %v403 = vld [vmem:[%s281 + $0xbc] sm:$0xff]
      %v404 = vld [vmem:[%s281 + $0xc4] sm:$0xff]
      %v405 = vld [vmem:[%s281 + $0xcc] sm:$0xff]
      %v406 = vld [vmem:[%s281 + $0xd4] sm:$0xf]
      %v407 = vld [vmem:[%s281 + $0xd8] sm:$0xff]
      %v408 = vld [vmem:[%s281 + $0xe0] sm:$0xff]
      %v409 = vld [vmem:[%s281 + $0xe8] sm:$0xff]
      %v410 = vld [vmem:[%s281 + $0xf0] sm:$0xff]
      %v411 = vld [vmem:[%s281 + $0xf8] sm:$0xf]
      %v412 = vld [vmem:[%s281 + $0xfc] sm:$0xff]
      %v413 = vld [vmem:[%s281 + $0x104] sm:$0xff]
      %v414 = vld [vmem:[%s281 + $0x10c] sm:$0xff]
      %v415 = vld [vmem:[%s281 + $0x114] sm:$0xff]
      %v416 = vld [vmem:[%s281 + $0x11c] sm:$0xf]
      %v417 = vld [vmem:[%s281 + $0x120] sm:$0xff]
      %v418 = vld [vmem:[%s281 + $0x128] sm:$0xff]
      %v419 = vld [vmem:[%s281 + $0x130] sm:$0xff]
      %v420 = vld [vmem:[%s281 + $0x138] sm:$0xff]
      %v421 = vld [vmem:[%s281 + $0x140] sm:$0xf]
      %v422 = vld [vmem:[%s281 + $0x144] sm:$0xff]
      %v423 = vld [vmem:[%s281 + $0x14c] sm:$0xff]
      %v424 = vld [vmem:[%s281 + $0x154] sm:$0xff]
      %v425 = vld [vmem:[%s281 + $0x15c] sm:$0xff]
      %v426 = vld [vmem:[%s281 + $0x164] sm:$0xf]
      %v427 = vld [vmem:[%s281 + $0x168] sm:$0xff]
      %v428 = vld [vmem:[%s281 + $0x170] sm:$0xff]
      %v429 = vld [vmem:[%s281 + $0x178] sm:$0xff]
      %v430 = vld [vmem:[%s281 + $0x180] sm:$0xff]
      %v431 = vld [vmem:[%s281 + $0x188] sm:$0xf]
      %v432 = vld [vmem:[%s281 + $0x18c] sm:$0xff]
      %v433 = vld [vmem:[%s281 + $0x194] sm:$0xff]
      %v434 = vld [vmem:[%s281 + $0x19c] sm:$0xff]
      %v435 = vld [vmem:[%s281 + $0x1a4] sm:$0xff]
      %v436 = vld [vmem:[%s281 + $0x1ac] sm:$0xf]
      %v437 = vld [vmem:[%s281 + $0x1b0] sm:$0xff]
      %v438 = vld [vmem:[%s281 + $0x1b8] sm:$0xff]
      %v439 = vld [vmem:[%s281 + $0x1c0] sm:$0xff]
      %v440 = vld [vmem:[%s281 + $0x1c8] sm:$0xff]
      %v441 = vld [vmem:[%s281 + $0x1d0] sm:$0xf]
      %v442 = vld [vmem:[%s281 + $0x1d4] sm:$0xff]
      %v443 = vld [vmem:[%s281 + $0x1dc] sm:$0xff]
      %v444 = vld [vmem:[%s281 + $0x1e4] sm:$0xff]
      %v445 = vld [vmem:[%s281 + $0x1ec] sm:$0xff]
      %v446 = vld [vmem:[%s281 + $0x1f4] sm:$0xf]
      %v447 = vld [vmem:[%s281 + $0x1f8] sm:$0xff]
      %v448 = vld [vmem:[%s281 + $0x200] sm:$0xff]
      %v449 = vld [vmem:[%s281 + $0x208] sm:$0xff]
      %v450 = vld [vmem:[%s281 + $0x210] sm:$0xff]
      %v451 = vld [vmem:[%s281 + $0x218] sm:$0xf]
      %v452 = vld [vmem:[%s281 + $0x21c] sm:$0xff]
      %v453 = vld [vmem:[%s281 + $0x224] sm:$0xff]
      %v454 = vld [vmem:[%s281 + $0x22c] sm:$0xff]
      %v455 = vld [vmem:[%s281 + $0x234] sm:$0xff]
      %v456 = vld [vmem:[%s281 + $0x23c] sm:$0xf]
      %v457 = vld [vmem:[%s281 + $0x240] sm:$0xff]
      %v458 = vld [vmem:[%s281 + $0x248] sm:$0xff]
      %v459 = vld [vmem:[%s281 + $0x250] sm:$0xff]
      %v460 = vld [vmem:[%s281 + $0x258] sm:$0xff]
      %v461 = vld [vmem:[%s281 + $0x260] sm:$0xf]
      %v462 = vld [vmem:[%s281 + $0x264] sm:$0xff]
      %v463 = vld [vmem:[%s281 + $0x26c] sm:$0xff]
      %v464 = vld [vmem:[%s281 + $0x274] sm:$0xff]
      %v465 = vld [vmem:[%s281 + $0x27c] sm:$0xff]
      %v466 = vld [vmem:[%s281 + $0x284] sm:$0xf]
      %v467 = vld [vmem:[%s281 + $0x288] sm:$0xff]
      %v468 = vld [vmem:[%s281 + $0x290] sm:$0xff]
      %v469 = vld [vmem:[%s281 + $0x298] sm:$0xff]
      %v470 = vld [vmem:[%s281 + $0x2a0] sm:$0xff]
      %v471 = vld [vmem:[%s281 + $0x2a8] sm:$0xf]
      %v472 = vld [vmem:[%s281 + $0x2ac] sm:$0xff]
      %v473 = vld [vmem:[%s281 + $0x2b4] sm:$0xff]
      %v474 = vld [vmem:[%s281 + $0x2bc] sm:$0xff]
      %v475 = vld [vmem:[%s281 + $0x2c4] sm:$0xff]
      %v476 = vld [vmem:[%s281 + $0x2cc] sm:$0xf]
      %v477 = vld [vmem:[%s281 + $0x2d0] sm:$0xff]
      %v478 = vld [vmem:[%s281 + $0x2d8] sm:$0xff]
      %v479 = vld [vmem:[%s281 + $0x2e0] sm:$0xff]
      %v480 = vld [vmem:[%s281 + $0x2e8] sm:$0xff]
      %v481 = vld [vmem:[%s281 + $0x2f0] sm:$0xf]
      %v482 = vld [vmem:[%s281 + $0x2f4] sm:$0xff]
      %v483 = vld [vmem:[%s281 + $0x2fc] sm:$0xff]
      %v484 = vld [vmem:[%s281 + $0x304] sm:$0xff]
      %v485 = vld [vmem:[%s281 + $0x30c] sm:$0xff]
      %v486 = vld [vmem:[%s281 + $0x314] sm:$0xf]
      %v487 = vld [vmem:[%s281 + $0x318] sm:$0xff]
      %v488 = vld [vmem:[%s281 + $0x320] sm:$0xff]
      %v489 = vld [vmem:[%s281 + $0x328] sm:$0xff]
      %v490 = vld [vmem:[%s281 + $0x330] sm:$0xff]
      %v491 = vld [vmem:[%s281 + $0x338] sm:$0xf]
      %v492 = vld [vmem:[%s281 + $0x33c] sm:$0xff]
      %v493 = vld [vmem:[%s281 + $0x344] sm:$0xff]
      %v494 = vld [vmem:[%s281 + $0x34c] sm:$0xff]
      %v495 = vld [vmem:[%s281 + $0x354] sm:$0xff]
      %v496 = vld [vmem:[%s281 + $0x35c] sm:$0xf]
      %v497 = vld [vmem:[%s281 + $0x360] sm:$0xff]
      %v498 = vld [vmem:[%s281 + $0x368] sm:$0xff]
      %v499 = vld [vmem:[%s281 + $0x370] sm:$0xff]
      %v500 = vld [vmem:[%s281 + $0x378] sm:$0xff]
      %v501 = vld [vmem:[%s281 + $0x380] sm:$0xf]
      %v502 = vld [vmem:[%s281 + $0x384] sm:$0xff]
      %v503 = vld [vmem:[%s281 + $0x38c] sm:$0xff]
      %v504 = vld [vmem:[%s281 + $0x394] sm:$0xff]
      %v505 = vld [vmem:[%s281 + $0x39c] sm:$0xff]
      %v506 = vld [vmem:[%s281 + $0x3a4] sm:$0xf]
      %v507 = vld [vmem:[%s281 + $0x3a8] sm:$0xff]
      %v508 = vld [vmem:[%s281 + $0x3b0] sm:$0xff]
      %v509 = vld [vmem:[%s281 + $0x3b8] sm:$0xff]
      %v510 = vld [vmem:[%s281 + $0x3c0] sm:$0xff]
      %v511 = vld [vmem:[%s281 + $0x3c8] sm:$0xf]
      %v512 = vld [vmem:[%s281 + $0x3cc] sm:$0xff]
      %v513 = vld [vmem:[%s281 + $0x3d4] sm:$0xff]
      %v514 = vld [vmem:[%s281 + $0x3dc] sm:$0xff]
      %v515 = vld [vmem:[%s281 + $0x3e4] sm:$0xff]
      %v516 = vld [vmem:[%s281 + $0x3ec] sm:$0xf]
      %v517 = vld [vmem:[%s281 + $0x3f0] sm:$0xff]
      %v518 = vld [vmem:[%s281 + $0x3f8] sm:$0xff]
      %v519 = vld [vmem:[%s281 + $0x400] sm:$0xff]
      %v520 = vld [vmem:[%s281 + $0x408] sm:$0xff]
      %v521 = vld [vmem:[%s281 + $0x410] sm:$0xf]
      %v522 = vld [vmem:[%s281 + $0x414] sm:$0xff]
      %v523 = vld [vmem:[%s281 + $0x41c] sm:$0xff]
      %v524 = vld [vmem:[%s281 + $0x424] sm:$0xff]
      %v525 = vld [vmem:[%s281 + $0x42c] sm:$0xff]
      %v526 = vld [vmem:[%s281 + $0x434] sm:$0xf]
      %v527 = vld [vmem:[%s281 + $0x438] sm:$0xff]
      %v528 = vld [vmem:[%s281 + $0x440] sm:$0xff]
      %v529 = vld [vmem:[%s281 + $0x448] sm:$0xff]
      %v530 = vld [vmem:[%s281 + $0x450] sm:$0xff]
      %v531 = vld [vmem:[%s281 + $0x458] sm:$0xf]
      %v532 = vld [vmem:[%s281 + $0x45c] sm:$0xff]
      %v533 = vld [vmem:[%s281 + $0x464] sm:$0xff]
      %v534 = vld [vmem:[%s281 + $0x46c] sm:$0xff]
      %v535 = vld [vmem:[%s281 + $0x474] sm:$0xff]
      %v536 = vld [vmem:[%s281 + $0x47c] sm:$0xf]
      %v537 = vld [vmem:[%s291] sm:$0xf]
      %v538 = vld [vmem:[%s291 + $0x4] sm:$0xf]
      %v539 = vld [vmem:[%s291 + $0x8] sm:$0xf]
      %v540 = vld [vmem:[%s291 + $0xc] sm:$0xf]
      %v541 = vld [vmem:[%s291 + $0x10] sm:$0xf]
      %v542 = vld [vmem:[%s291 + $0x14] sm:$0xf]
      %v543 = vld [vmem:[%s291 + $0x18] sm:$0xf]
      %v544 = vld [vmem:[%s291 + $0x1c] sm:$0xf]
      %v545 = vld [vmem:[%s291 + $0x20] sm:$0xf]
      %v546 = vld [vmem:[%s291 + $0x24] sm:$0xf]
      %v547 = vld [vmem:[%s291 + $0x28] sm:$0xf]
      %v548 = vld [vmem:[%s291 + $0x2c] sm:$0xf]
      %v549 = vld [vmem:[%s291 + $0x30] sm:$0xf]
      %v550 = vld [vmem:[%s291 + $0x34] sm:$0xf]
      %v551 = vld [vmem:[%s291 + $0x38] sm:$0xf]
      %v552 = vld [vmem:[%s291 + $0x3c] sm:$0xf]
      %v553 = vld [vmem:[%s291 + $0x40] sm:$0xf]
      %v554 = vld [vmem:[%s291 + $0x44] sm:$0xf]
      %v555 = vld [vmem:[%s291 + $0x48] sm:$0xf]
      %v556 = vld [vmem:[%s291 + $0x4c] sm:$0xf]
      %v557 = vld [vmem:[%s291 + $0x50] sm:$0xf]
      %v558 = vld [vmem:[%s291 + $0x54] sm:$0xf]
      %v559 = vld [vmem:[%s291 + $0x58] sm:$0xf]
      %v560 = vld [vmem:[%s291 + $0x5c] sm:$0xf]
      %v561 = vld [vmem:[%s291 + $0x60] sm:$0xf]
      %v562 = vld [vmem:[%s291 + $0x64] sm:$0xf]
      %v563 = vld [vmem:[%s291 + $0x68] sm:$0xf]
      %v564 = vld [vmem:[%s291 + $0x6c] sm:$0xf]
      %v565 = vld [vmem:[%s291 + $0x70] sm:$0xf]
      %v566 = vld [vmem:[%s291 + $0x74] sm:$0xf]
      %v567 = vld [vmem:[%s291 + $0x78] sm:$0xf]
      %v568 = vld [vmem:[%s291 + $0x7c] sm:$0xf]
      %v569 = vld [vmem:[%s291 + $0x80] sm:$0xf]
      %v570 = vld [vmem:[%s291 + $0x84] sm:$0xf]
      %v571 = vld [vmem:[%s291 + $0x88] sm:$0xf]
      %v572 = vld [vmem:[%s291 + $0x8c] sm:$0xf]
      %v573 = vld [vmem:[%s291 + $0x90] sm:$0xf]
      %v574 = vld [vmem:[%s291 + $0x94] sm:$0xf]
      %v575 = vld [vmem:[%s291 + $0x98] sm:$0xf]
      %v576 = vld [vmem:[%s291 + $0x9c] sm:$0xf]
      %v577 = vld [vmem:[%s291 + $0xa0] sm:$0xf]
      %v578 = vld [vmem:[%s291 + $0xa4] sm:$0xf]
      %v579 = vld [vmem:[%s291 + $0xa8] sm:$0xf]
      %v580 = vld [vmem:[%s291 + $0xac] sm:$0xf]
      %v581 = vld [vmem:[%s291 + $0xb0] sm:$0xf]
      %v582 = vld [vmem:[%s291 + $0xb4] sm:$0xf]
      %v583 = vld [vmem:[%s291 + $0xb8] sm:$0xf]
      %v584 = vld [vmem:[%s291 + $0xbc] sm:$0xf]
      %v585 = vld [vmem:[%s291 + $0xc0] sm:$0xf]
      %v586 = vld [vmem:[%s291 + $0xc4] sm:$0xf]
      %v587 = vld [vmem:[%s291 + $0xc8] sm:$0xf]
      %v588 = vld [vmem:[%s291 + $0xcc] sm:$0xf]
      %v589 = vld [vmem:[%s291 + $0xd0] sm:$0xf]
      %v590 = vld [vmem:[%s291 + $0xd4] sm:$0xf]
      %v591 = vld [vmem:[%s291 + $0xd8] sm:$0xf]
      %v592 = vld [vmem:[%s291 + $0xdc] sm:$0xf]
      %v593 = vld [vmem:[%s291 + $0xe0] sm:$0xf]
      %v594 = vld [vmem:[%s291 + $0xe4] sm:$0xf]
      %v595 = vld [vmem:[%s291 + $0xe8] sm:$0xf]
      %v596 = vld [vmem:[%s291 + $0xec] sm:$0xf]
      %v597 = vld [vmem:[%s291 + $0xf0] sm:$0xf]
      %v598 = vld [vmem:[%s291 + $0xf4] sm:$0xf]
      %v599 = vld [vmem:[%s291 + $0xf8] sm:$0xf]
      %v600 = vld [vmem:[%s291 + $0xfc] sm:$0xf]
      %v601 = vld [vmem:[%s291 + $0x100] sm:$0xf]
      %v602 = vld [vmem:[%s291 + $0x104] sm:$0xf]
      %v603 = vld [vmem:[%s291 + $0x108] sm:$0xf]
      %v604 = vld [vmem:[%s291 + $0x10c] sm:$0xf]
      %v605 = vld [vmem:[%s291 + $0x110] sm:$0xf]
      %v606 = vld [vmem:[%s291 + $0x114] sm:$0xf]
      %v607 = vld [vmem:[%s291 + $0x118] sm:$0xf]
      %v608 = vld [vmem:[%s291 + $0x11c] sm:$0xf]
      %v609 = vld [vmem:[%s291 + $0x120] sm:$0xf]
      %v610 = vld [vmem:[%s291 + $0x124] sm:$0xf]
      %v611 = vld [vmem:[%s291 + $0x128] sm:$0xf]
      %v612 = vld [vmem:[%s291 + $0x12c] sm:$0xf]
      %v613 = vld [vmem:[%s291 + $0x130] sm:$0xf]
      %v614 = vld [vmem:[%s291 + $0x134] sm:$0xf]
      %v615 = vld [vmem:[%s291 + $0x138] sm:$0xf]
      %v616 = vld [vmem:[%s291 + $0x13c] sm:$0xf]
      %v617 = vld [vmem:[%s291 + $0x140] sm:$0xf]
      %v618 = vld [vmem:[%s291 + $0x144] sm:$0xf]
      %v619 = vld [vmem:[%s291 + $0x148] sm:$0xf]
      %v620 = vld [vmem:[%s291 + $0x14c] sm:$0xf]
      %v621 = vld [vmem:[%s291 + $0x150] sm:$0xf]
      %v622 = vld [vmem:[%s291 + $0x154] sm:$0xf]
      %v623 = vld [vmem:[%s291 + $0x158] sm:$0xf]
      %v624 = vld [vmem:[%s291 + $0x15c] sm:$0xf]
      %v625 = vld [vmem:[%s291 + $0x160] sm:$0xf]
      %v626 = vld [vmem:[%s291 + $0x164] sm:$0xf]
      %v627 = vld [vmem:[%s291 + $0x168] sm:$0xf]
      %v628 = vld [vmem:[%s291 + $0x16c] sm:$0xf]
      %v629 = vld [vmem:[%s291 + $0x170] sm:$0xf]
      %v630 = vld [vmem:[%s291 + $0x174] sm:$0xf]
      %v631 = vld [vmem:[%s291 + $0x178] sm:$0xf]
      %v632 = vld [vmem:[%s291 + $0x17c] sm:$0xf]
      %v633 = vld [vmem:[%s291 + $0x180] sm:$0xf]
      %v634 = vld [vmem:[%s291 + $0x184] sm:$0xf]
      %v635 = vld [vmem:[%s291 + $0x188] sm:$0xf]
      %v636 = vld [vmem:[%s291 + $0x18c] sm:$0xf]
      %v637 = vld [vmem:[%s291 + $0x190] sm:$0xf]
      %v638 = vld [vmem:[%s291 + $0x194] sm:$0xf]
      %v639 = vld [vmem:[%s291 + $0x198] sm:$0xf]
      %v640 = vld [vmem:[%s291 + $0x19c] sm:$0xf]
      %v641 = vld [vmem:[%s291 + $0x1a0] sm:$0xf]
      %v642 = vld [vmem:[%s291 + $0x1a4] sm:$0xf]
      %v643 = vld [vmem:[%s291 + $0x1a8] sm:$0xf]
      %v644 = vld [vmem:[%s291 + $0x1ac] sm:$0xf]
      %v645 = vld [vmem:[%s291 + $0x1b0] sm:$0xf]
      %v646 = vld [vmem:[%s291 + $0x1b4] sm:$0xf]
      %v647 = vld [vmem:[%s291 + $0x1b8] sm:$0xf]
      %v648 = vld [vmem:[%s291 + $0x1bc] sm:$0xf]
      %v649 = vld [vmem:[%s291 + $0x1c0] sm:$0xf]
      %v650 = vld [vmem:[%s291 + $0x1c4] sm:$0xf]
      %v651 = vld [vmem:[%s291 + $0x1c8] sm:$0xf]
      %v652 = vld [vmem:[%s291 + $0x1cc] sm:$0xf]
      %v653 = vld [vmem:[%s291 + $0x1d0] sm:$0xf]
      %v654 = vld [vmem:[%s291 + $0x1d4] sm:$0xf]
      %v655 = vld [vmem:[%s291 + $0x1d8] sm:$0xf]
      %v656 = vld [vmem:[%s291 + $0x1dc] sm:$0xf]
      %v657 = vld [vmem:[%s291 + $0x1e0] sm:$0xf]
      %v658 = vld [vmem:[%s291 + $0x1e4] sm:$0xf]
      %v659 = vld [vmem:[%s291 + $0x1e8] sm:$0xf]
      %v660 = vld [vmem:[%s291 + $0x1ec] sm:$0xf]
      %v661 = vld [vmem:[%s291 + $0x1f0] sm:$0xf]
      %v662 = vld [vmem:[%s291 + $0x1f4] sm:$0xf]
      %v663 = vld [vmem:[%s291 + $0x1f8] sm:$0xf]
      %v664 = vld [vmem:[%s291 + $0x1fc] sm:$0xf]
      %v665 = vld [vmem:[%s291 + $0x200] sm:$0xf]
      %v666 = vld [vmem:[%s291 + $0x204] sm:$0xf]
      %v667 = vld [vmem:[%s291 + $0x208] sm:$0xf]
      %v668 = vld [vmem:[%s291 + $0x20c] sm:$0xf]
      %v669 = vld [vmem:[%s291 + $0x210] sm:$0xf]
      %v670 = vld [vmem:[%s291 + $0x214] sm:$0xf]
      %v671 = vld [vmem:[%s291 + $0x218] sm:$0xf]
      %v672 = vld [vmem:[%s291 + $0x21c] sm:$0xf]
      %v673 = vld [vmem:[%s291 + $0x220] sm:$0xf]
      %v674 = vld [vmem:[%s291 + $0x224] sm:$0xf]
      %v675 = vld [vmem:[%s291 + $0x228] sm:$0xf]
      %v676 = vld [vmem:[%s291 + $0x22c] sm:$0xf]
      %v677 = vld [vmem:[%s291 + $0x230] sm:$0xf]
      %v678 = vld [vmem:[%s291 + $0x234] sm:$0xf]
      %v679 = vld [vmem:[%s291 + $0x238] sm:$0xf]
      %v680 = vld [vmem:[%s291 + $0x23c] sm:$0xf]
      %v841 = vunpack.c.l.b16 %v377
      %v842 = vunpack.c.h.b16 %v377
      %v843 = vunpack.c.l.b16 %v378
      %v844 = vunpack.c.h.b16 %v378
      %v845 = vunpack.c.l.b16 %v379
      %v846 = vunpack.c.h.b16 %v379
      %v847 = vunpack.c.l.b16 %v380
      %v848 = vunpack.c.h.b16 %v380
      %v849 = vunpack.c.l.b16 %v381
      %v850 = vunpack.c.l.b16 %v382
      %v851 = vunpack.c.h.b16 %v382
      %v852 = vunpack.c.l.b16 %v383
      %v853 = vunpack.c.h.b16 %v383
      %v854 = vunpack.c.l.b16 %v384
      %v855 = vunpack.c.h.b16 %v384
      %v856 = vunpack.c.l.b16 %v385
      %v857 = vunpack.c.h.b16 %v385
      %v858 = vunpack.c.l.b16 %v386
      %v859 = vunpack.c.l.b16 %v387
      %v860 = vunpack.c.h.b16 %v387
      %v861 = vunpack.c.l.b16 %v388
      %v862 = vunpack.c.h.b16 %v388
      %v863 = vunpack.c.l.b16 %v389
      %v864 = vunpack.c.h.b16 %v389
      %v865 = vunpack.c.l.b16 %v390
      %v866 = vunpack.c.h.b16 %v390
      %v867 = vunpack.c.l.b16 %v391
      %v868 = vunpack.c.l.b16 %v392
      %v869 = vunpack.c.h.b16 %v392
      %v870 = vunpack.c.l.b16 %v393
      %v871 = vunpack.c.h.b16 %v393
      %v872 = vunpack.c.l.b16 %v394
      %v873 = vunpack.c.h.b16 %v394
      %v874 = vunpack.c.l.b16 %v395
      %v875 = vunpack.c.h.b16 %v395
      %v876 = vunpack.c.l.b16 %v396
      %v877 = vunpack.c.l.b16 %v397
      %v878 = vunpack.c.h.b16 %v397
      %v879 = vunpack.c.l.b16 %v398
      %v880 = vunpack.c.h.b16 %v398
      %v881 = vunpack.c.l.b16 %v399
      %v882 = vunpack.c.h.b16 %v399
      %v883 = vunpack.c.l.b16 %v400
      %v884 = vunpack.c.h.b16 %v400
      %v885 = vunpack.c.l.b16 %v401
      %v886 = vunpack.c.l.b16 %v402
      %v887 = vunpack.c.h.b16 %v402
      %v888 = vunpack.c.l.b16 %v403
      %v889 = vunpack.c.h.b16 %v403
      %v890 = vunpack.c.l.b16 %v404
      %v891 = vunpack.c.h.b16 %v404
      %v892 = vunpack.c.l.b16 %v405
      %v893 = vunpack.c.h.b16 %v405
      %v894 = vunpack.c.l.b16 %v406
      %v895 = vunpack.c.l.b16 %v407
      %v896 = vunpack.c.h.b16 %v407
      %v897 = vunpack.c.l.b16 %v408
      %v898 = vunpack.c.h.b16 %v408
      %v899 = vunpack.c.l.b16 %v409
      %v900 = vunpack.c.h.b16 %v409
      %v901 = vunpack.c.l.b16 %v410
      %v902 = vunpack.c.h.b16 %v410
      %v903 = vunpack.c.l.b16 %v411
      %v904 = vunpack.c.l.b16 %v412
      %v905 = vunpack.c.h.b16 %v412
      %v906 = vunpack.c.l.b16 %v413
      %v907 = vunpack.c.h.b16 %v413
      %v908 = vunpack.c.l.b16 %v414
      %v909 = vunpack.c.h.b16 %v414
      %v910 = vunpack.c.l.b16 %v415
      %v911 = vunpack.c.h.b16 %v415
      %v912 = vunpack.c.l.b16 %v416
      %v913 = vunpack.c.l.b16 %v417
      %v914 = vunpack.c.h.b16 %v417
      %v915 = vunpack.c.l.b16 %v418
      %v916 = vunpack.c.h.b16 %v418
      %v917 = vunpack.c.l.b16 %v419
      %v918 = vunpack.c.h.b16 %v419
      %v919 = vunpack.c.l.b16 %v420
      %v920 = vunpack.c.h.b16 %v420
      %v921 = vunpack.c.l.b16 %v421
      %v922 = vunpack.c.l.b16 %v422
      %v923 = vunpack.c.h.b16 %v422
      %v924 = vunpack.c.l.b16 %v423
      %v925 = vunpack.c.h.b16 %v423
      %v926 = vunpack.c.l.b16 %v424
      %v927 = vunpack.c.h.b16 %v424
      %v928 = vunpack.c.l.b16 %v425
      %v929 = vunpack.c.h.b16 %v425
      %v930 = vunpack.c.l.b16 %v426
      %v931 = vunpack.c.l.b16 %v427
      %v932 = vunpack.c.h.b16 %v427
      %v933 = vunpack.c.l.b16 %v428
      %v934 = vunpack.c.h.b16 %v428
      %v935 = vunpack.c.l.b16 %v429
      %v936 = vunpack.c.h.b16 %v429
      %v937 = vunpack.c.l.b16 %v430
      %v938 = vunpack.c.h.b16 %v430
      %v939 = vunpack.c.l.b16 %v431
      %v940 = vunpack.c.l.b16 %v432
      %v941 = vunpack.c.h.b16 %v432
      %v942 = vunpack.c.l.b16 %v433
      %v943 = vunpack.c.h.b16 %v433
      %v944 = vunpack.c.l.b16 %v434
      %v945 = vunpack.c.h.b16 %v434
      %v946 = vunpack.c.l.b16 %v435
      %v947 = vunpack.c.h.b16 %v435
      %v948 = vunpack.c.l.b16 %v436
      %v949 = vunpack.c.l.b16 %v437
      %v950 = vunpack.c.h.b16 %v437
      %v951 = vunpack.c.l.b16 %v438
      %v952 = vunpack.c.h.b16 %v438
      %v953 = vunpack.c.l.b16 %v439
      %v954 = vunpack.c.h.b16 %v439
      %v955 = vunpack.c.l.b16 %v440
      %v956 = vunpack.c.h.b16 %v440
      %v957 = vunpack.c.l.b16 %v441
      %v958 = vunpack.c.l.b16 %v442
      %v959 = vunpack.c.h.b16 %v442
      %v960 = vunpack.c.l.b16 %v443
      %v961 = vunpack.c.h.b16 %v443
      %v962 = vunpack.c.l.b16 %v444
      %v963 = vunpack.c.h.b16 %v444
      %v964 = vunpack.c.l.b16 %v445
      %v965 = vunpack.c.h.b16 %v445
      %v966 = vunpack.c.l.b16 %v446
      %v967 = vunpack.c.l.b16 %v447
      %v968 = vunpack.c.h.b16 %v447
      %v969 = vunpack.c.l.b16 %v448
      %v970 = vunpack.c.h.b16 %v448
      %v971 = vunpack.c.l.b16 %v449
      %v972 = vunpack.c.h.b16 %v449
      %v973 = vunpack.c.l.b16 %v450
      %v974 = vunpack.c.h.b16 %v450
      %v975 = vunpack.c.l.b16 %v451
      %v976 = vunpack.c.l.b16 %v452
      %v977 = vunpack.c.h.b16 %v452
      %v978 = vunpack.c.l.b16 %v453
      %v979 = vunpack.c.h.b16 %v453
      %v980 = vunpack.c.l.b16 %v454
      %v981 = vunpack.c.h.b16 %v454
      %v982 = vunpack.c.l.b16 %v455
      %v983 = vunpack.c.h.b16 %v455
      %v984 = vunpack.c.l.b16 %v456
      %v985 = vunpack.c.l.b16 %v457
      %v986 = vunpack.c.h.b16 %v457
      %v987 = vunpack.c.l.b16 %v458
      %v988 = vunpack.c.h.b16 %v458
      %v989 = vunpack.c.l.b16 %v459
      %v990 = vunpack.c.h.b16 %v459
      %v991 = vunpack.c.l.b16 %v460
      %v992 = vunpack.c.h.b16 %v460
      %v993 = vunpack.c.l.b16 %v461
      %v994 = vunpack.c.l.b16 %v462
      %v995 = vunpack.c.h.b16 %v462
      %v996 = vunpack.c.l.b16 %v463
      %v997 = vunpack.c.h.b16 %v463
      %v998 = vunpack.c.l.b16 %v464
      %v999 = vunpack.c.h.b16 %v464
      %v1000 = vunpack.c.l.b16 %v465
      %v1001 = vunpack.c.h.b16 %v465
      %v1002 = vunpack.c.l.b16 %v466
      %v1003 = vunpack.c.l.b16 %v467
      %v1004 = vunpack.c.h.b16 %v467
      %v1005 = vunpack.c.l.b16 %v468
      %v1006 = vunpack.c.h.b16 %v468
      %v1007 = vunpack.c.l.b16 %v469
      %v1008 = vunpack.c.h.b16 %v469
      %v1009 = vunpack.c.l.b16 %v470
      %v1010 = vunpack.c.h.b16 %v470
      %v1011 = vunpack.c.l.b16 %v471
      %v1012 = vunpack.c.l.b16 %v472
      %v1013 = vunpack.c.h.b16 %v472
      %v1014 = vunpack.c.l.b16 %v473
      %v1015 = vunpack.c.h.b16 %v473
      %v1016 = vunpack.c.l.b16 %v474
      %v1017 = vunpack.c.h.b16 %v474
      %v1018 = vunpack.c.l.b16 %v475
      %v1019 = vunpack.c.h.b16 %v475
      %v1020 = vunpack.c.l.b16 %v476
      %v1021 = vunpack.c.l.b16 %v477
      %v1022 = vunpack.c.h.b16 %v477
      %v1023 = vunpack.c.l.b16 %v478
      %v1024 = vunpack.c.h.b16 %v478
      %v1025 = vunpack.c.l.b16 %v479
      %v1026 = vunpack.c.h.b16 %v479
      %v1027 = vunpack.c.l.b16 %v480
      %v1028 = vunpack.c.h.b16 %v480
      %v1029 = vunpack.c.l.b16 %v481
      %v1030 = vunpack.c.l.b16 %v482
      %v1031 = vunpack.c.h.b16 %v482
      %v1032 = vunpack.c.l.b16 %v483
      %v1033 = vunpack.c.h.b16 %v483
      %v1034 = vunpack.c.l.b16 %v484
      %v1035 = vunpack.c.h.b16 %v484
      %v1036 = vunpack.c.l.b16 %v485
      %v1037 = vunpack.c.h.b16 %v485
      %v1038 = vunpack.c.l.b16 %v486
      %v1039 = vunpack.c.l.b16 %v487
      %v1040 = vunpack.c.h.b16 %v487
      %v1041 = vunpack.c.l.b16 %v488
      %v1042 = vunpack.c.h.b16 %v488
      %v1043 = vunpack.c.l.b16 %v489
      %v1044 = vunpack.c.h.b16 %v489
      %v1045 = vunpack.c.l.b16 %v490
      %v1046 = vunpack.c.h.b16 %v490
      %v1047 = vunpack.c.l.b16 %v491
      %v1048 = vunpack.c.l.b16 %v492
      %v1049 = vunpack.c.h.b16 %v492
      %v1050 = vunpack.c.l.b16 %v493
      %v1051 = vunpack.c.h.b16 %v493
      %v1052 = vunpack.c.l.b16 %v494
      %v1053 = vunpack.c.h.b16 %v494
      %v1054 = vunpack.c.l.b16 %v495
      %v1055 = vunpack.c.h.b16 %v495
      %v1056 = vunpack.c.l.b16 %v496
      %v1057 = vunpack.c.l.b16 %v497
      %v1058 = vunpack.c.h.b16 %v497
      %v1059 = vunpack.c.l.b16 %v498
      %v1060 = vunpack.c.h.b16 %v498
      %v1061 = vunpack.c.l.b16 %v499
      %v1062 = vunpack.c.h.b16 %v499
      %v1063 = vunpack.c.l.b16 %v500
      %v1064 = vunpack.c.h.b16 %v500
      %v1065 = vunpack.c.l.b16 %v501
      %v1066 = vunpack.c.l.b16 %v502
      %v1067 = vunpack.c.h.b16 %v502
      %v1068 = vunpack.c.l.b16 %v503
      %v1069 = vunpack.c.h.b16 %v503
      %v1070 = vunpack.c.l.b16 %v504
      %v1071 = vunpack.c.h.b16 %v504
      %v1072 = vunpack.c.l.b16 %v505
      %v1073 = vunpack.c.h.b16 %v505
      %v1074 = vunpack.c.l.b16 %v506
      %v1075 = vunpack.c.l.b16 %v507
      %v1076 = vunpack.c.h.b16 %v507
      %v1077 = vunpack.c.l.b16 %v508
      %v1078 = vunpack.c.h.b16 %v508
      %v1079 = vunpack.c.l.b16 %v509
      %v1080 = vunpack.c.h.b16 %v509
      %v1081 = vunpack.c.l.b16 %v510
      %v1082 = vunpack.c.h.b16 %v510
      %v1083 = vunpack.c.l.b16 %v511
      %v1084 = vunpack.c.l.b16 %v512
      %v1085 = vunpack.c.h.b16 %v512
      %v1086 = vunpack.c.l.b16 %v513
      %v1087 = vunpack.c.h.b16 %v513
      %v1088 = vunpack.c.l.b16 %v514
      %v1089 = vunpack.c.h.b16 %v514
      %v1090 = vunpack.c.l.b16 %v515
      %v1091 = vunpack.c.h.b16 %v515
      %v1092 = vunpack.c.l.b16 %v516
      %v1093 = vunpack.c.l.b16 %v517
      %v1094 = vunpack.c.h.b16 %v517
      %v1095 = vunpack.c.l.b16 %v518
      %v1096 = vunpack.c.h.b16 %v518
      %v1097 = vunpack.c.l.b16 %v519
      %v1098 = vunpack.c.h.b16 %v519
      %v1099 = vunpack.c.l.b16 %v520
      %v1100 = vunpack.c.h.b16 %v520
      %v1101 = vunpack.c.l.b16 %v521
      %v1102 = vunpack.c.l.b16 %v522
      %v1103 = vunpack.c.h.b16 %v522
      %v1104 = vunpack.c.l.b16 %v523
      %v1105 = vunpack.c.h.b16 %v523
      %v1106 = vunpack.c.l.b16 %v524
      %v1107 = vunpack.c.h.b16 %v524
      %v1108 = vunpack.c.l.b16 %v525
      %v1109 = vunpack.c.h.b16 %v525
      %v1110 = vunpack.c.l.b16 %v526
      %v1111 = vunpack.c.l.b16 %v527
      %v1112 = vunpack.c.h.b16 %v527
      %v1113 = vunpack.c.l.b16 %v528
      %v1114 = vunpack.c.h.b16 %v528
      %v1115 = vunpack.c.l.b16 %v529
      %v1116 = vunpack.c.h.b16 %v529
      %v1117 = vunpack.c.l.b16 %v530
      %v1118 = vunpack.c.h.b16 %v530
      %v1119 = vunpack.c.l.b16 %v531
      %v1120 = vunpack.c.l.b16 %v532
      %v1121 = vunpack.c.h.b16 %v532
      %v1122 = vunpack.c.l.b16 %v533
      %v1123 = vunpack.c.h.b16 %v533
      %v1124 = vunpack.c.l.b16 %v534
      %v1125 = vunpack.c.h.b16 %v534
      %v1126 = vunpack.c.l.b16 %v535
      %v1127 = vunpack.c.h.b16 %v535
      %v1128 = vunpack.c.l.b16 %v536
      %v1129 = vpack.c.b16 %v850, %v841
      %v1130 = vpack.c.b16 %v851, %v842
      %v1131 = vpack.c.b16 %v852, %v843
      %v1132 = vpack.c.b16 %v853, %v844
      %v1133 = vpack.c.b16 %v854, %v845
      %v1134 = vpack.c.b16 %v855, %v846
      %v1135 = vpack.c.b16 %v856, %v847
      %v1136 = vpack.c.b16 %v857, %v848
      %v1137 = vpack.c.b16 %v858, %v849
      %v1138 = vpack.c.b16 %v868, %v859
      %v1139 = vpack.c.b16 %v869, %v860
      %v1140 = vpack.c.b16 %v870, %v861
      %v1141 = vpack.c.b16 %v871, %v862
      %v1142 = vpack.c.b16 %v872, %v863
      %v1143 = vpack.c.b16 %v873, %v864
      %v1144 = vpack.c.b16 %v874, %v865
      %v1145 = vpack.c.b16 %v875, %v866
      %v1146 = vpack.c.b16 %v876, %v867
      %v1147 = vpack.c.b16 %v886, %v877
      %v1148 = vpack.c.b16 %v887, %v878
      %v1149 = vpack.c.b16 %v888, %v879
      %v1150 = vpack.c.b16 %v889, %v880
      %v1151 = vpack.c.b16 %v890, %v881
      %v1152 = vpack.c.b16 %v891, %v882
      %v1153 = vpack.c.b16 %v892, %v883
      %v1154 = vpack.c.b16 %v893, %v884
      %v1155 = vpack.c.b16 %v894, %v885
      %v1156 = vpack.c.b16 %v904, %v895
      %v1157 = vpack.c.b16 %v905, %v896
      %v1158 = vpack.c.b16 %v906, %v897
      %v1159 = vpack.c.b16 %v907, %v898
      %v1160 = vpack.c.b16 %v908, %v899
      %v1161 = vpack.c.b16 %v909, %v900
      %v1162 = vpack.c.b16 %v910, %v901
      %v1163 = vpack.c.b16 %v911, %v902
      %v1164 = vpack.c.b16 %v912, %v903
      %v1165 = vpack.c.b16 %v922, %v913
      %v1166 = vpack.c.b16 %v923, %v914
      %v1167 = vpack.c.b16 %v924, %v915
      %v1168 = vpack.c.b16 %v925, %v916
      %v1169 = vpack.c.b16 %v926, %v917
      %v1170 = vpack.c.b16 %v927, %v918
      %v1171 = vpack.c.b16 %v928, %v919
      %v1172 = vpack.c.b16 %v929, %v920
      %v1173 = vpack.c.b16 %v930, %v921
      %v1174 = vpack.c.b16 %v940, %v931
      %v1175 = vpack.c.b16 %v941, %v932
      %v1176 = vpack.c.b16 %v942, %v933
      %v1177 = vpack.c.b16 %v943, %v934
      %v1178 = vpack.c.b16 %v944, %v935
      %v1179 = vpack.c.b16 %v945, %v936
      %v1180 = vpack.c.b16 %v946, %v937
      %v1181 = vpack.c.b16 %v947, %v938
      %v1182 = vpack.c.b16 %v948, %v939
      %v1183 = vpack.c.b16 %v958, %v949
      %v1184 = vpack.c.b16 %v959, %v950
      %v1185 = vpack.c.b16 %v960, %v951
      %v1186 = vpack.c.b16 %v961, %v952
      %v1187 = vpack.c.b16 %v962, %v953
      %v1188 = vpack.c.b16 %v963, %v954
      %v1189 = vpack.c.b16 %v964, %v955
      %v1190 = vpack.c.b16 %v965, %v956
      %v1191 = vpack.c.b16 %v966, %v957
      %v1192 = vpack.c.b16 %v976, %v967
      %v1193 = vpack.c.b16 %v977, %v968
      %v1194 = vpack.c.b16 %v978, %v969
      %v1195 = vpack.c.b16 %v979, %v970
      %v1196 = vpack.c.b16 %v980, %v971
      %v1197 = vpack.c.b16 %v981, %v972
      %v1198 = vpack.c.b16 %v982, %v973
      %v1199 = vpack.c.b16 %v983, %v974
      %v1200 = vpack.c.b16 %v984, %v975
      %v1201 = vpack.c.b16 %v994, %v985
      %v1202 = vpack.c.b16 %v995, %v986
      %v1203 = vpack.c.b16 %v996, %v987
      %v1204 = vpack.c.b16 %v997, %v988
      %v1205 = vpack.c.b16 %v998, %v989
      %v1206 = vpack.c.b16 %v999, %v990
      %v1207 = vpack.c.b16 %v1000, %v991
      %v1208 = vpack.c.b16 %v1001, %v992
      %v1209 = vpack.c.b16 %v1002, %v993
      %v1210 = vpack.c.b16 %v1012, %v1003
      %v1211 = vpack.c.b16 %v1013, %v1004
      %v1212 = vpack.c.b16 %v1014, %v1005
      %v1213 = vpack.c.b16 %v1015, %v1006
      %v1214 = vpack.c.b16 %v1016, %v1007
      %v1215 = vpack.c.b16 %v1017, %v1008
      %v1216 = vpack.c.b16 %v1018, %v1009
      %v1217 = vpack.c.b16 %v1019, %v1010
      %v1218 = vpack.c.b16 %v1020, %v1011
      %v1219 = vpack.c.b16 %v1030, %v1021
      %v1220 = vpack.c.b16 %v1031, %v1022
      %v1221 = vpack.c.b16 %v1032, %v1023
      %v1222 = vpack.c.b16 %v1033, %v1024
      %v1223 = vpack.c.b16 %v1034, %v1025
      %v1224 = vpack.c.b16 %v1035, %v1026
      %v1225 = vpack.c.b16 %v1036, %v1027
      %v1226 = vpack.c.b16 %v1037, %v1028
      %v1227 = vpack.c.b16 %v1038, %v1029
      %v1228 = vpack.c.b16 %v1048, %v1039
      %v1229 = vpack.c.b16 %v1049, %v1040
      %v1230 = vpack.c.b16 %v1050, %v1041
      %v1231 = vpack.c.b16 %v1051, %v1042
      %v1232 = vpack.c.b16 %v1052, %v1043
      %v1233 = vpack.c.b16 %v1053, %v1044
      %v1234 = vpack.c.b16 %v1054, %v1045
      %v1235 = vpack.c.b16 %v1055, %v1046
      %v1236 = vpack.c.b16 %v1056, %v1047
      %v1237 = vpack.c.b16 %v1066, %v1057
      %v1238 = vpack.c.b16 %v1067, %v1058
      %v1239 = vpack.c.b16 %v1068, %v1059
      %v1240 = vpack.c.b16 %v1069, %v1060
      %v1241 = vpack.c.b16 %v1070, %v1061
      %v1242 = vpack.c.b16 %v1071, %v1062
      %v1243 = vpack.c.b16 %v1072, %v1063
      %v1244 = vpack.c.b16 %v1073, %v1064
      %v1245 = vpack.c.b16 %v1074, %v1065
      %v1246 = vpack.c.b16 %v1084, %v1075
      %v1247 = vpack.c.b16 %v1085, %v1076
      %v1248 = vpack.c.b16 %v1086, %v1077
      %v1249 = vpack.c.b16 %v1087, %v1078
      %v1250 = vpack.c.b16 %v1088, %v1079
      %v1251 = vpack.c.b16 %v1089, %v1080
      %v1252 = vpack.c.b16 %v1090, %v1081
      %v1253 = vpack.c.b16 %v1091, %v1082
      %v1254 = vpack.c.b16 %v1092, %v1083
      %v1255 = vpack.c.b16 %v1102, %v1093
      %v1256 = vpack.c.b16 %v1103, %v1094
      %v1257 = vpack.c.b16 %v1104, %v1095
      %v1258 = vpack.c.b16 %v1105, %v1096
      %v1259 = vpack.c.b16 %v1106, %v1097
      %v1260 = vpack.c.b16 %v1107, %v1098
      %v1261 = vpack.c.b16 %v1108, %v1099
      %v1262 = vpack.c.b16 %v1109, %v1100
      %v1263 = vpack.c.b16 %v1110, %v1101
      %v1264 = vpack.c.b16 %v1120, %v1111
      %v1265 = vpack.c.b16 %v1121, %v1112
      %v1266 = vpack.c.b16 %v1122, %v1113
      %v1267 = vpack.c.b16 %v1123, %v1114
      %v1268 = vpack.c.b16 %v1124, %v1115
      %v1269 = vpack.c.b16 %v1125, %v1116
      %v1270 = vpack.c.b16 %v1126, %v1117
      %v1271 = vpack.c.b16 %v1127, %v1118
      %v1272 = vpack.c.b16 %v1128, %v1119
      %v1561 = vunpack.c.l.b16 %v537
      %v1562 = vunpack.c.l.b16 %v538
      %v1563 = vunpack.c.l.b16 %v539
      %v1564 = vunpack.c.l.b16 %v540
      %v1565 = vunpack.c.l.b16 %v541
      %v1566 = vunpack.c.l.b16 %v542
      %v1567 = vunpack.c.l.b16 %v543
      %v1568 = vunpack.c.l.b16 %v544
      %v1569 = vunpack.c.l.b16 %v545
      %v1570 = vunpack.c.l.b16 %v546
      %v1571 = vunpack.c.l.b16 %v547
      %v1572 = vunpack.c.l.b16 %v548
      %v1573 = vunpack.c.l.b16 %v549
      %v1574 = vunpack.c.l.b16 %v550
      %v1575 = vunpack.c.l.b16 %v551
      %v1576 = vunpack.c.l.b16 %v552
      %v1577 = vunpack.c.l.b16 %v553
      %v1578 = vunpack.c.l.b16 %v554
      %v1579 = vunpack.c.l.b16 %v555
      %v1580 = vunpack.c.l.b16 %v556
      %v1581 = vunpack.c.l.b16 %v557
      %v1582 = vunpack.c.l.b16 %v558
      %v1583 = vunpack.c.l.b16 %v559
      %v1584 = vunpack.c.l.b16 %v560
      %v1585 = vunpack.c.l.b16 %v561
      %v1586 = vunpack.c.l.b16 %v562
      %v1587 = vunpack.c.l.b16 %v563
      %v1588 = vunpack.c.l.b16 %v564
      %v1589 = vunpack.c.l.b16 %v565
      %v1590 = vunpack.c.l.b16 %v566
      %v1591 = vunpack.c.l.b16 %v567
      %v1592 = vunpack.c.l.b16 %v568
      %v1593 = vunpack.c.l.b16 %v569
      %v1594 = vunpack.c.l.b16 %v570
      %v1595 = vunpack.c.l.b16 %v571
      %v1596 = vunpack.c.l.b16 %v572
      %v1597 = vunpack.c.l.b16 %v573
      %v1598 = vunpack.c.l.b16 %v574
      %v1599 = vunpack.c.l.b16 %v575
      %v1600 = vunpack.c.l.b16 %v576
      %v1601 = vunpack.c.l.b16 %v577
      %v1602 = vunpack.c.l.b16 %v578
      %v1603 = vunpack.c.l.b16 %v579
      %v1604 = vunpack.c.l.b16 %v580
      %v1605 = vunpack.c.l.b16 %v581
      %v1606 = vunpack.c.l.b16 %v582
      %v1607 = vunpack.c.l.b16 %v583
      %v1608 = vunpack.c.l.b16 %v584
      %v1609 = vunpack.c.l.b16 %v585
      %v1610 = vunpack.c.l.b16 %v586
      %v1611 = vunpack.c.l.b16 %v587
      %v1612 = vunpack.c.l.b16 %v588
      %v1613 = vunpack.c.l.b16 %v589
      %v1614 = vunpack.c.l.b16 %v590
      %v1615 = vunpack.c.l.b16 %v591
      %v1616 = vunpack.c.l.b16 %v592
      %v1617 = vunpack.c.l.b16 %v593
      %v1618 = vunpack.c.l.b16 %v594
      %v1619 = vunpack.c.l.b16 %v595
      %v1620 = vunpack.c.l.b16 %v596
      %v1621 = vunpack.c.l.b16 %v597
      %v1622 = vunpack.c.l.b16 %v598
      %v1623 = vunpack.c.l.b16 %v599
      %v1624 = vunpack.c.l.b16 %v600
      %v1625 = vunpack.c.l.b16 %v601
      %v1626 = vunpack.c.l.b16 %v602
      %v1627 = vunpack.c.l.b16 %v603
      %v1628 = vunpack.c.l.b16 %v604
      %v1629 = vunpack.c.l.b16 %v605
      %v1630 = vunpack.c.l.b16 %v606
      %v1631 = vunpack.c.l.b16 %v607
      %v1632 = vunpack.c.l.b16 %v608
      %v1633 = vunpack.c.l.b16 %v609
      %v1634 = vunpack.c.l.b16 %v610
      %v1635 = vunpack.c.l.b16 %v611
      %v1636 = vunpack.c.l.b16 %v612
      %v1637 = vunpack.c.l.b16 %v613
      %v1638 = vunpack.c.l.b16 %v614
      %v1639 = vunpack.c.l.b16 %v615
      %v1640 = vunpack.c.l.b16 %v616
      %v1641 = vunpack.c.l.b16 %v617
      %v1642 = vunpack.c.l.b16 %v618
      %v1643 = vunpack.c.l.b16 %v619
      %v1644 = vunpack.c.l.b16 %v620
      %v1645 = vunpack.c.l.b16 %v621
      %v1646 = vunpack.c.l.b16 %v622
      %v1647 = vunpack.c.l.b16 %v623
      %v1648 = vunpack.c.l.b16 %v624
      %v1649 = vunpack.c.l.b16 %v625
      %v1650 = vunpack.c.l.b16 %v626
      %v1651 = vunpack.c.l.b16 %v627
      %v1652 = vunpack.c.l.b16 %v628
      %v1653 = vunpack.c.l.b16 %v629
      %v1654 = vunpack.c.l.b16 %v630
      %v1655 = vunpack.c.l.b16 %v631
      %v1656 = vunpack.c.l.b16 %v632
      %v1657 = vunpack.c.l.b16 %v633
      %v1658 = vunpack.c.l.b16 %v634
      %v1659 = vunpack.c.l.b16 %v635
      %v1660 = vunpack.c.l.b16 %v636
      %v1661 = vunpack.c.l.b16 %v637
      %v1662 = vunpack.c.l.b16 %v638
      %v1663 = vunpack.c.l.b16 %v639
      %v1664 = vunpack.c.l.b16 %v640
      %v1665 = vunpack.c.l.b16 %v641
      %v1666 = vunpack.c.l.b16 %v642
      %v1667 = vunpack.c.l.b16 %v643
      %v1668 = vunpack.c.l.b16 %v644
      %v1669 = vunpack.c.l.b16 %v645
      %v1670 = vunpack.c.l.b16 %v646
      %v1671 = vunpack.c.l.b16 %v647
      %v1672 = vunpack.c.l.b16 %v648
      %v1673 = vunpack.c.l.b16 %v649
      %v1674 = vunpack.c.l.b16 %v650
      %v1675 = vunpack.c.l.b16 %v651
      %v1676 = vunpack.c.l.b16 %v652
      %v1677 = vunpack.c.l.b16 %v653
      %v1678 = vunpack.c.l.b16 %v654
      %v1679 = vunpack.c.l.b16 %v655
      %v1680 = vunpack.c.l.b16 %v656
      %v1681 = vunpack.c.l.b16 %v657
      %v1682 = vunpack.c.l.b16 %v658
      %v1683 = vunpack.c.l.b16 %v659
      %v1684 = vunpack.c.l.b16 %v660
      %v1685 = vunpack.c.l.b16 %v661
      %v1686 = vunpack.c.l.b16 %v662
      %v1687 = vunpack.c.l.b16 %v663
      %v1688 = vunpack.c.l.b16 %v664
      %v1689 = vunpack.c.l.b16 %v665
      %v1690 = vunpack.c.l.b16 %v666
      %v1691 = vunpack.c.l.b16 %v667
      %v1692 = vunpack.c.l.b16 %v668
      %v1693 = vunpack.c.l.b16 %v669
      %v1694 = vunpack.c.l.b16 %v670
      %v1695 = vunpack.c.l.b16 %v671
      %v1696 = vunpack.c.l.b16 %v672
      %v1697 = vunpack.c.l.b16 %v673
      %v1698 = vunpack.c.l.b16 %v674
      %v1699 = vunpack.c.l.b16 %v675
      %v1700 = vunpack.c.l.b16 %v676
      %v1701 = vunpack.c.l.b16 %v677
      %v1702 = vunpack.c.l.b16 %v678
      %v1703 = vunpack.c.l.b16 %v679
      %v1704 = vunpack.c.l.b16 %v680
      %v1705 = vpack.c.b16 %v1562, %v1561
      %v1706 = vpack.c.b16 %v1564, %v1563
      %v1707 = vpack.c.b16 %v1566, %v1565
      %v1708 = vpack.c.b16 %v1568, %v1567
      %v1709 = vpack.c.b16 %v1570, %v1569
      %v1710 = vpack.c.b16 %v1572, %v1571
      %v1711 = vpack.c.b16 %v1574, %v1573
      %v1712 = vpack.c.b16 %v1576, %v1575
      %v1713 = vpack.c.b16 %v1578, %v1577
      %v1714 = vpack.c.b16 %v1580, %v1579
      %v1715 = vpack.c.b16 %v1582, %v1581
      %v1716 = vpack.c.b16 %v1584, %v1583
      %v1717 = vpack.c.b16 %v1586, %v1585
      %v1718 = vpack.c.b16 %v1588, %v1587
      %v1719 = vpack.c.b16 %v1590, %v1589
      %v1720 = vpack.c.b16 %v1592, %v1591
      %v1721 = vpack.c.b16 %v1594, %v1593
      %v1722 = vpack.c.b16 %v1596, %v1595
      %v1723 = vpack.c.b16 %v1598, %v1597
      %v1724 = vpack.c.b16 %v1600, %v1599
      %v1725 = vpack.c.b16 %v1602, %v1601
      %v1726 = vpack.c.b16 %v1604, %v1603
      %v1727 = vpack.c.b16 %v1606, %v1605
      %v1728 = vpack.c.b16 %v1608, %v1607
      %v1729 = vpack.c.b16 %v1610, %v1609
      %v1730 = vpack.c.b16 %v1612, %v1611
      %v1731 = vpack.c.b16 %v1614, %v1613
      %v1732 = vpack.c.b16 %v1616, %v1615
      %v1733 = vpack.c.b16 %v1618, %v1617
      %v1734 = vpack.c.b16 %v1620, %v1619
      %v1735 = vpack.c.b16 %v1622, %v1621
      %v1736 = vpack.c.b16 %v1624, %v1623
      %v1737 = vpack.c.b16 %v1626, %v1625
      %v1738 = vpack.c.b16 %v1628, %v1627
      %v1739 = vpack.c.b16 %v1630, %v1629
      %v1740 = vpack.c.b16 %v1632, %v1631
      %v1741 = vpack.c.b16 %v1634, %v1633
      %v1742 = vpack.c.b16 %v1636, %v1635
      %v1743 = vpack.c.b16 %v1638, %v1637
      %v1744 = vpack.c.b16 %v1640, %v1639
      %v1745 = vpack.c.b16 %v1642, %v1641
      %v1746 = vpack.c.b16 %v1644, %v1643
      %v1747 = vpack.c.b16 %v1646, %v1645
      %v1748 = vpack.c.b16 %v1648, %v1647
      %v1749 = vpack.c.b16 %v1650, %v1649
      %v1750 = vpack.c.b16 %v1652, %v1651
      %v1751 = vpack.c.b16 %v1654, %v1653
      %v1752 = vpack.c.b16 %v1656, %v1655
      %v1753 = vpack.c.b16 %v1658, %v1657
      %v1754 = vpack.c.b16 %v1660, %v1659
      %v1755 = vpack.c.b16 %v1662, %v1661
      %v1756 = vpack.c.b16 %v1664, %v1663
      %v1757 = vpack.c.b16 %v1666, %v1665
      %v1758 = vpack.c.b16 %v1668, %v1667
      %v1759 = vpack.c.b16 %v1670, %v1669
      %v1760 = vpack.c.b16 %v1672, %v1671
      %v1761 = vpack.c.b16 %v1674, %v1673
      %v1762 = vpack.c.b16 %v1676, %v1675
      %v1763 = vpack.c.b16 %v1678, %v1677
      %v1764 = vpack.c.b16 %v1680, %v1679
      %v1765 = vpack.c.b16 %v1682, %v1681
      %v1766 = vpack.c.b16 %v1684, %v1683
      %v1767 = vpack.c.b16 %v1686, %v1685
      %v1768 = vpack.c.b16 %v1688, %v1687
      %v1769 = vpack.c.b16 %v1690, %v1689
      %v1770 = vpack.c.b16 %v1692, %v1691
      %v1771 = vpack.c.b16 %v1694, %v1693
      %v1772 = vpack.c.b16 %v1696, %v1695
      %v1773 = vpack.c.b16 %v1698, %v1697
      %v1774 = vpack.c.b16 %v1700, %v1699
      %v1775 = vpack.c.b16 %v1702, %v1701
      %v1776 = vpack.c.b16 %v1704, %v1703
      %1849 = vmatprep.subr.bf16.mxu0 0
      %1850 = vmatpush1.bf16.msra.mxu0 %v1712
      %1851 = vmatprep.subr.bf16.mxu0 0
      %1852 = vmatpush1.bf16.msra.mxu0 %v1711
      %1853 = vmatprep.subr.bf16.mxu0 0
      %1854 = vmatpush1.bf16.msra.mxu0 %v1710
      %1855 = vmatprep.subr.bf16.mxu0 0
      %1856 = vmatpush1.bf16.msra.mxu0 %v1709
      %1857 = vmatprep.subr.bf16.mxu0 0
      %1858 = vmatpush1.bf16.msra.mxu0 %v1708
      %1859 = vmatprep.subr.bf16.mxu0 0
      %1860 = vmatpush1.bf16.msra.mxu0 %v1707
      %1861 = vmatprep.subr.bf16.mxu0 0
      %1862 = vmatpush1.bf16.msra.mxu0 %v1706
      %1863 = vmatprep.subr.bf16.mxu0 0
      %1864 = vmatpush1.bf16.msra.mxu0 %v1705
      %1865 = vmatprep.subr.bf16.mxu0 0
      %1866 = vmatpush2.bf16.msra.mxu0 %v1720
      %1867 = vmatprep.subr.bf16.mxu0 0
      %1868 = vmatpush2.bf16.msra.mxu0 %v1719
      %1869 = vmatprep.subr.bf16.mxu0 0
      %1870 = vmatpush2.bf16.msra.mxu0 %v1718
      %1871 = vmatprep.subr.bf16.mxu0 0
      %1872 = vmatpush2.bf16.msra.mxu0 %v1717
      %1873 = vmatprep.subr.bf16.mxu0 0
      %1874 = vmatpush2.bf16.msra.mxu0 %v1716
      %1875 = vmatprep.subr.bf16.mxu0 0
      %1876 = vmatpush2.bf16.msra.mxu0 %v1715
      %1877 = vmatprep.subr.bf16.mxu0 0
      %1878 = vmatpush2.bf16.msra.mxu0 %v1714
      %1879 = vmatprep.subr.bf16.mxu0 0
      %1880 = vmatpush2.bf16.msra.mxu0 %v1713
      %1881 = vmatprep.mubr.bf16.mxu0 %v1130
      %1882 = vmatmul.mubr.bf16.gmra.mxu0 %v1129
      %v1883 = vpop.f32.mrf.mxu0
      %v1884 = vadd.f32 0.0, %v1883
      %v1885 = vpop.f32.mrf.mxu0
      %v1886 = vpop.f32.mrf.mxu0
      %v1887 = vadd.f32 0.0, %v1886
      %v1888 = vpop.f32.mrf.mxu0
      %1889 = vmatprep.mubr.bf16.mxu0 %v1139
      %1890 = vmatmul.mubr.bf16.gmra.mxu0 %v1138
      %v1891 = vpop.f32.mrf.mxu0
      %v1892 = vadd.f32 0.0, %v1891
      %v1893 = vpop.f32.mrf.mxu0
      %v1894 = vpop.f32.mrf.mxu0
      %v1895 = vadd.f32 0.0, %v1894
      %v1896 = vpop.f32.mrf.mxu0
      %1897 = vmatprep.mubr.bf16.mxu0 %v1148
      %1898 = vmatmul.mubr.bf16.gmra.mxu0 %v1147
      %v1899 = vpop.f32.mrf.mxu0
      %v1900 = vadd.f32 0.0, %v1899
      %v1901 = vpop.f32.mrf.mxu0
      %v1902 = vpop.f32.mrf.mxu0
      %v1903 = vadd.f32 0.0, %v1902
      %v1904 = vpop.f32.mrf.mxu0
      %1905 = vmatprep.mubr.bf16.mxu0 %v1157
      %1906 = vmatmul.mubr.bf16.gmra.mxu0 %v1156
      %v1907 = vpop.f32.mrf.mxu0
      %v1908 = vadd.f32 0.0, %v1907
      %v1909 = vpop.f32.mrf.mxu0
      %v1910 = vpop.f32.mrf.mxu0
      %v1911 = vadd.f32 0.0, %v1910
      %v1912 = vpop.f32.mrf.mxu0
      %1913 = vmatprep.mubr.bf16.mxu0 %v1166
      %1914 = vmatmul.mubr.bf16.gmra.mxu0 %v1165
      %v1915 = vpop.f32.mrf.mxu0
      %v1916 = vadd.f32 0.0, %v1915
      %v1917 = vpop.f32.mrf.mxu0
      %v1918 = vpop.f32.mrf.mxu0
      %v1919 = vadd.f32 0.0, %v1918
      %v1920 = vpop.f32.mrf.mxu0
      %1921 = vmatprep.mubr.bf16.mxu0 %v1175
      %1922 = vmatmul.mubr.bf16.gmra.mxu0 %v1174
      %v1923 = vpop.f32.mrf.mxu0
      %v1924 = vadd.f32 0.0, %v1923
      %v1925 = vpop.f32.mrf.mxu0
      %v1926 = vpop.f32.mrf.mxu0
      %v1927 = vadd.f32 0.0, %v1926
      %v1928 = vpop.f32.mrf.mxu0
      %1929 = vmatprep.mubr.bf16.mxu0 %v1184
      %1930 = vmatmul.mubr.bf16.gmra.mxu0 %v1183
      %v1931 = vpop.f32.mrf.mxu0
      %v1932 = vadd.f32 0.0, %v1931
      %v1933 = vpop.f32.mrf.mxu0
      %v1934 = vpop.f32.mrf.mxu0
      %v1935 = vadd.f32 0.0, %v1934
      %v1936 = vpop.f32.mrf.mxu0
      %1937 = vmatprep.mubr.bf16.mxu0 %v1193
      %1938 = vmatmul.mubr.bf16.gmra.mxu0 %v1192
      %v1939 = vpop.f32.mrf.mxu0
      %v1940 = vadd.f32 0.0, %v1939
      %v1941 = vpop.f32.mrf.mxu0
      %v1942 = vpop.f32.mrf.mxu0
      %v1943 = vadd.f32 0.0, %v1942
      %v1944 = vpop.f32.mrf.mxu0
      %1945 = vmatprep.mubr.bf16.mxu0 %v1202
      %1946 = vmatmul.mubr.bf16.gmra.mxu0 %v1201
      %v1947 = vpop.f32.mrf.mxu0
      %v1948 = vadd.f32 0.0, %v1947
      %v1949 = vpop.f32.mrf.mxu0
      %v1950 = vpop.f32.mrf.mxu0
      %v1951 = vadd.f32 0.0, %v1950
      %v1952 = vpop.f32.mrf.mxu0
      %1953 = vmatprep.mubr.bf16.mxu0 %v1211
      %1954 = vmatmul.mubr.bf16.gmra.mxu0 %v1210
      %v1955 = vpop.f32.mrf.mxu0
      %v1956 = vadd.f32 0.0, %v1955
      %v1957 = vpop.f32.mrf.mxu0
      %v1958 = vpop.f32.mrf.mxu0
      %v1959 = vadd.f32 0.0, %v1958
      %v1960 = vpop.f32.mrf.mxu0
      %1961 = vmatprep.mubr.bf16.mxu0 %v1220
      %1962 = vmatmul.mubr.bf16.gmra.mxu0 %v1219
      %v1963 = vpop.f32.mrf.mxu0
      %v1964 = vadd.f32 0.0, %v1963
      %v1965 = vpop.f32.mrf.mxu0
      %v1966 = vpop.f32.mrf.mxu0
      %v1967 = vadd.f32 0.0, %v1966
      %v1968 = vpop.f32.mrf.mxu0
      %1969 = vmatprep.mubr.bf16.mxu0 %v1229
      %1970 = vmatmul.mubr.bf16.gmra.mxu0 %v1228
      %v1971 = vpop.f32.mrf.mxu0
      %v1972 = vadd.f32 0.0, %v1971
      %v1973 = vpop.f32.mrf.mxu0
      %v1974 = vpop.f32.mrf.mxu0
      %v1975 = vadd.f32 0.0, %v1974
      %v1976 = vpop.f32.mrf.mxu0
      %1977 = vmatprep.mubr.bf16.mxu0 %v1238
      %1978 = vmatmul.mubr.bf16.gmra.mxu0 %v1237
      %v1979 = vpop.f32.mrf.mxu0
      %v1980 = vadd.f32 0.0, %v1979
      %v1981 = vpop.f32.mrf.mxu0
      %v1982 = vpop.f32.mrf.mxu0
      %v1983 = vadd.f32 0.0, %v1982
      %v1984 = vpop.f32.mrf.mxu0
      %1985 = vmatprep.mubr.bf16.mxu0 %v1247
      %1986 = vmatmul.mubr.bf16.gmra.mxu0 %v1246
      %v1987 = vpop.f32.mrf.mxu0
      %v1988 = vadd.f32 0.0, %v1987
      %v1989 = vpop.f32.mrf.mxu0
      %v1990 = vpop.f32.mrf.mxu0
      %v1991 = vadd.f32 0.0, %v1990
      %v1992 = vpop.f32.mrf.mxu0
      %1993 = vmatprep.mubr.bf16.mxu0 %v1256
      %1994 = vmatmul.mubr.bf16.gmra.mxu0 %v1255
      %v1995 = vpop.f32.mrf.mxu0
      %v1996 = vadd.f32 0.0, %v1995
      %v1997 = vpop.f32.mrf.mxu0
      %v1998 = vpop.f32.mrf.mxu0
      %v1999 = vadd.f32 0.0, %v1998
      %v2000 = vpop.f32.mrf.mxu0
      %2001 = vmatprep.mubr.bf16.mxu0 %v1265
      %2002 = vmatmul.mubr.bf16.gmra.mxu0 %v1264
      %v2003 = vpop.f32.mrf.mxu0
      %v2004 = vadd.f32 0.0, %v2003
      %v2005 = vpop.f32.mrf.mxu0
      %v2006 = vpop.f32.mrf.mxu0
      %v2007 = vadd.f32 0.0, %v2006
      %v2008 = vpop.f32.mrf.mxu0
      %2009 = vdwg.mxu0
      %2010 = vmatprep.subr.bf16.mxu0 0
      %2011 = vmatpush1.bf16.msra.mxu0 %v1728
      %2012 = vmatprep.subr.bf16.mxu0 0
      %2013 = vmatpush1.bf16.msra.mxu0 %v1727
      %2014 = vmatprep.subr.bf16.mxu0 0
      %2015 = vmatpush1.bf16.msra.mxu0 %v1726
      %2016 = vmatprep.subr.bf16.mxu0 0
      %2017 = vmatpush1.bf16.msra.mxu0 %v1725
      %2018 = vmatprep.subr.bf16.mxu0 0
      %2019 = vmatpush1.bf16.msra.mxu0 %v1724
      %2020 = vmatprep.subr.bf16.mxu0 0
      %2021 = vmatpush1.bf16.msra.mxu0 %v1723
      %2022 = vmatprep.subr.bf16.mxu0 0
      %2023 = vmatpush1.bf16.msra.mxu0 %v1722
      %2024 = vmatprep.subr.bf16.mxu0 0
      %2025 = vmatpush1.bf16.msra.mxu0 %v1721
      %2026 = vmatprep.subr.bf16.mxu0 0
      %2027 = vmatpush2.bf16.msra.mxu0 %v1736
      %2028 = vmatprep.subr.bf16.mxu0 0
      %2029 = vmatpush2.bf16.msra.mxu0 %v1735
      %2030 = vmatprep.subr.bf16.mxu0 0
      %2031 = vmatpush2.bf16.msra.mxu0 %v1734
      %2032 = vmatprep.subr.bf16.mxu0 0
      %2033 = vmatpush2.bf16.msra.mxu0 %v1733
      %2034 = vmatprep.subr.bf16.mxu0 0
      %2035 = vmatpush2.bf16.msra.mxu0 %v1732
      %2036 = vmatprep.subr.bf16.mxu0 0
      %2037 = vmatpush2.bf16.msra.mxu0 %v1731
      %2038 = vmatprep.subr.bf16.mxu0 0
      %2039 = vmatpush2.bf16.msra.mxu0 %v1730
      %2040 = vmatprep.subr.bf16.mxu0 0
      %2041 = vmatpush2.bf16.msra.mxu0 %v1729
      %2042 = vmatprep.mubr.bf16.mxu0 %v1132
      %2043 = vmatmul.mubr.bf16.gmra.mxu0 %v1131
      %v2044 = vpop.f32.mrf.mxu0
      %v2045 = vadd.f32 %v1884, %v2044
      %v2046 = vpop.f32.mrf.mxu0
      %v2047 = vpop.f32.mrf.mxu0
      %v2048 = vadd.f32 %v1887, %v2047
      %v2049 = vpop.f32.mrf.mxu0
      %2050 = vmatprep.mubr.bf16.mxu0 %v1141
      %2051 = vmatmul.mubr.bf16.gmra.mxu0 %v1140
      %v2052 = vpop.f32.mrf.mxu0
      %v2053 = vadd.f32 %v1892, %v2052
      %v2054 = vpop.f32.mrf.mxu0
      %v2055 = vpop.f32.mrf.mxu0
      %v2056 = vadd.f32 %v1895, %v2055
      %v2057 = vpop.f32.mrf.mxu0
      %2058 = vmatprep.mubr.bf16.mxu0 %v1150
      %2059 = vmatmul.mubr.bf16.gmra.mxu0 %v1149
      %v2060 = vpop.f32.mrf.mxu0
      %v2061 = vadd.f32 %v1900, %v2060
      %v2062 = vpop.f32.mrf.mxu0
      %v2063 = vpop.f32.mrf.mxu0
      %v2064 = vadd.f32 %v1903, %v2063
      %v2065 = vpop.f32.mrf.mxu0
      %2066 = vmatprep.mubr.bf16.mxu0 %v1159
      %2067 = vmatmul.mubr.bf16.gmra.mxu0 %v1158
      %v2068 = vpop.f32.mrf.mxu0
      %v2069 = vadd.f32 %v1908, %v2068
      %v2070 = vpop.f32.mrf.mxu0
      %v2071 = vpop.f32.mrf.mxu0
      %v2072 = vadd.f32 %v1911, %v2071
      %v2073 = vpop.f32.mrf.mxu0
      %2074 = vmatprep.mubr.bf16.mxu0 %v1168
      %2075 = vmatmul.mubr.bf16.gmra.mxu0 %v1167
      %v2076 = vpop.f32.mrf.mxu0
      %v2077 = vadd.f32 %v1916, %v2076
      %v2078 = vpop.f32.mrf.mxu0
      %v2079 = vpop.f32.mrf.mxu0
      %v2080 = vadd.f32 %v1919, %v2079
      %v2081 = vpop.f32.mrf.mxu0
      %2082 = vmatprep.mubr.bf16.mxu0 %v1177
      %2083 = vmatmul.mubr.bf16.gmra.mxu0 %v1176
      %v2084 = vpop.f32.mrf.mxu0
      %v2085 = vadd.f32 %v1924, %v2084
      %v2086 = vpop.f32.mrf.mxu0
      %v2087 = vpop.f32.mrf.mxu0
      %v2088 = vadd.f32 %v1927, %v2087
      %v2089 = vpop.f32.mrf.mxu0
      %2090 = vmatprep.mubr.bf16.mxu0 %v1186
      %2091 = vmatmul.mubr.bf16.gmra.mxu0 %v1185
      %v2092 = vpop.f32.mrf.mxu0
      %v2093 = vadd.f32 %v1932, %v2092
      %v2094 = vpop.f32.mrf.mxu0
      %v2095 = vpop.f32.mrf.mxu0
      %v2096 = vadd.f32 %v1935, %v2095
      %v2097 = vpop.f32.mrf.mxu0
      %2098 = vmatprep.mubr.bf16.mxu0 %v1195
      %2099 = vmatmul.mubr.bf16.gmra.mxu0 %v1194
      %v2100 = vpop.f32.mrf.mxu0
      %v2101 = vadd.f32 %v1940, %v2100
      %v2102 = vpop.f32.mrf.mxu0
      %v2103 = vpop.f32.mrf.mxu0
      %v2104 = vadd.f32 %v1943, %v2103
      %v2105 = vpop.f32.mrf.mxu0
      %2106 = vmatprep.mubr.bf16.mxu0 %v1204
      %2107 = vmatmul.mubr.bf16.gmra.mxu0 %v1203
      %v2108 = vpop.f32.mrf.mxu0
      %v2109 = vadd.f32 %v1948, %v2108
      %v2110 = vpop.f32.mrf.mxu0
      %v2111 = vpop.f32.mrf.mxu0
      %v2112 = vadd.f32 %v1951, %v2111
      %v2113 = vpop.f32.mrf.mxu0
      %2114 = vmatprep.mubr.bf16.mxu0 %v1213
      %2115 = vmatmul.mubr.bf16.gmra.mxu0 %v1212
      %v2116 = vpop.f32.mrf.mxu0
      %v2117 = vadd.f32 %v1956, %v2116
      %v2118 = vpop.f32.mrf.mxu0
      %v2119 = vpop.f32.mrf.mxu0
      %v2120 = vadd.f32 %v1959, %v2119
      %v2121 = vpop.f32.mrf.mxu0
      %2122 = vmatprep.mubr.bf16.mxu0 %v1222
      %2123 = vmatmul.mubr.bf16.gmra.mxu0 %v1221
      %v2124 = vpop.f32.mrf.mxu0
      %v2125 = vadd.f32 %v1964, %v2124
      %v2126 = vpop.f32.mrf.mxu0
      %v2127 = vpop.f32.mrf.mxu0
      %v2128 = vadd.f32 %v1967, %v2127
      %v2129 = vpop.f32.mrf.mxu0
      %2130 = vmatprep.mubr.bf16.mxu0 %v1231
      %2131 = vmatmul.mubr.bf16.gmra.mxu0 %v1230
      %v2132 = vpop.f32.mrf.mxu0
      %v2133 = vadd.f32 %v1972, %v2132
      %v2134 = vpop.f32.mrf.mxu0
      %v2135 = vpop.f32.mrf.mxu0
      %v2136 = vadd.f32 %v1975, %v2135
      %v2137 = vpop.f32.mrf.mxu0
      %2138 = vmatprep.mubr.bf16.mxu0 %v1240
      %2139 = vmatmul.mubr.bf16.gmra.mxu0 %v1239
      %v2140 = vpop.f32.mrf.mxu0
      %v2141 = vadd.f32 %v1980, %v2140
      %v2142 = vpop.f32.mrf.mxu0
      %v2143 = vpop.f32.mrf.mxu0
      %v2144 = vadd.f32 %v1983, %v2143
      %v2145 = vpop.f32.mrf.mxu0
      %2146 = vmatprep.mubr.bf16.mxu0 %v1249
      %2147 = vmatmul.mubr.bf16.gmra.mxu0 %v1248
      %v2148 = vpop.f32.mrf.mxu0
      %v2149 = vadd.f32 %v1988, %v2148
      %v2150 = vpop.f32.mrf.mxu0
      %v2151 = vpop.f32.mrf.mxu0
      %v2152 = vadd.f32 %v1991, %v2151
      %v2153 = vpop.f32.mrf.mxu0
      %2154 = vmatprep.mubr.bf16.mxu0 %v1258
      %2155 = vmatmul.mubr.bf16.gmra.mxu0 %v1257
      %v2156 = vpop.f32.mrf.mxu0
      %v2157 = vadd.f32 %v1996, %v2156
      %v2158 = vpop.f32.mrf.mxu0
      %v2159 = vpop.f32.mrf.mxu0
      %v2160 = vadd.f32 %v1999, %v2159
      %v2161 = vpop.f32.mrf.mxu0
      %2162 = vmatprep.mubr.bf16.mxu0 %v1267
      %2163 = vmatmul.mubr.bf16.gmra.mxu0 %v1266
      %v2164 = vpop.f32.mrf.mxu0
      %v2165 = vadd.f32 %v2004, %v2164
      %v2166 = vpop.f32.mrf.mxu0
      %v2167 = vpop.f32.mrf.mxu0
      %v2168 = vadd.f32 %v2007, %v2167
      %v2169 = vpop.f32.mrf.mxu0
      %2170 = vdwg.mxu0
      %2171 = vmatprep.subr.bf16.mxu0 0
      %2172 = vmatpush1.bf16.msra.mxu0 %v1744
      %2173 = vmatprep.subr.bf16.mxu0 0
      %2174 = vmatpush1.bf16.msra.mxu0 %v1743
      %2175 = vmatprep.subr.bf16.mxu0 0
      %2176 = vmatpush1.bf16.msra.mxu0 %v1742
      %2177 = vmatprep.subr.bf16.mxu0 0
      %2178 = vmatpush1.bf16.msra.mxu0 %v1741
      %2179 = vmatprep.subr.bf16.mxu0 0
      %2180 = vmatpush1.bf16.msra.mxu0 %v1740
      %2181 = vmatprep.subr.bf16.mxu0 0
      %2182 = vmatpush1.bf16.msra.mxu0 %v1739
      %2183 = vmatprep.subr.bf16.mxu0 0
      %2184 = vmatpush1.bf16.msra.mxu0 %v1738
      %2185 = vmatprep.subr.bf16.mxu0 0
      %2186 = vmatpush1.bf16.msra.mxu0 %v1737
      %2187 = vmatprep.subr.bf16.mxu0 0
      %2188 = vmatpush2.bf16.msra.mxu0 %v1752
      %2189 = vmatprep.subr.bf16.mxu0 0
      %2190 = vmatpush2.bf16.msra.mxu0 %v1751
      %2191 = vmatprep.subr.bf16.mxu0 0
      %2192 = vmatpush2.bf16.msra.mxu0 %v1750
      %2193 = vmatprep.subr.bf16.mxu0 0
      %2194 = vmatpush2.bf16.msra.mxu0 %v1749
      %2195 = vmatprep.subr.bf16.mxu0 0
      %2196 = vmatpush2.bf16.msra.mxu0 %v1748
      %2197 = vmatprep.subr.bf16.mxu0 0
      %2198 = vmatpush2.bf16.msra.mxu0 %v1747
      %2199 = vmatprep.subr.bf16.mxu0 0
      %2200 = vmatpush2.bf16.msra.mxu0 %v1746
      %2201 = vmatprep.subr.bf16.mxu0 0
      %2202 = vmatpush2.bf16.msra.mxu0 %v1745
      %2203 = vmatprep.mubr.bf16.mxu0 %v1134
      %2204 = vmatmul.mubr.bf16.gmra.mxu0 %v1133
      %v2205 = vpop.f32.mrf.mxu0
      %v2206 = vadd.f32 %v2045, %v2205
      %v2207 = vpop.f32.mrf.mxu0
      %v2208 = vpop.f32.mrf.mxu0
      %v2209 = vadd.f32 %v2048, %v2208
      %v2210 = vpop.f32.mrf.mxu0
      %2211 = vmatprep.mubr.bf16.mxu0 %v1143
      %2212 = vmatmul.mubr.bf16.gmra.mxu0 %v1142
      %v2213 = vpop.f32.mrf.mxu0
      %v2214 = vadd.f32 %v2053, %v2213
      %v2215 = vpop.f32.mrf.mxu0
      %v2216 = vpop.f32.mrf.mxu0
      %v2217 = vadd.f32 %v2056, %v2216
      %v2218 = vpop.f32.mrf.mxu0
      %2219 = vmatprep.mubr.bf16.mxu0 %v1152
      %2220 = vmatmul.mubr.bf16.gmra.mxu0 %v1151
      %v2221 = vpop.f32.mrf.mxu0
      %v2222 = vadd.f32 %v2061, %v2221
      %v2223 = vpop.f32.mrf.mxu0
      %v2224 = vpop.f32.mrf.mxu0
      %v2225 = vadd.f32 %v2064, %v2224
      %v2226 = vpop.f32.mrf.mxu0
      %2227 = vmatprep.mubr.bf16.mxu0 %v1161
      %2228 = vmatmul.mubr.bf16.gmra.mxu0 %v1160
      %v2229 = vpop.f32.mrf.mxu0
      %v2230 = vadd.f32 %v2069, %v2229
      %v2231 = vpop.f32.mrf.mxu0
      %v2232 = vpop.f32.mrf.mxu0
      %v2233 = vadd.f32 %v2072, %v2232
      %v2234 = vpop.f32.mrf.mxu0
      %2235 = vmatprep.mubr.bf16.mxu0 %v1170
      %2236 = vmatmul.mubr.bf16.gmra.mxu0 %v1169
      %v2237 = vpop.f32.mrf.mxu0
      %v2238 = vadd.f32 %v2077, %v2237
      %v2239 = vpop.f32.mrf.mxu0
      %v2240 = vpop.f32.mrf.mxu0
      %v2241 = vadd.f32 %v2080, %v2240
      %v2242 = vpop.f32.mrf.mxu0
      %2243 = vmatprep.mubr.bf16.mxu0 %v1179
      %2244 = vmatmul.mubr.bf16.gmra.mxu0 %v1178
      %v2245 = vpop.f32.mrf.mxu0
      %v2246 = vadd.f32 %v2085, %v2245
      %v2247 = vpop.f32.mrf.mxu0
      %v2248 = vpop.f32.mrf.mxu0
      %v2249 = vadd.f32 %v2088, %v2248
      %v2250 = vpop.f32.mrf.mxu0
      %2251 = vmatprep.mubr.bf16.mxu0 %v1188
      %2252 = vmatmul.mubr.bf16.gmra.mxu0 %v1187
      %v2253 = vpop.f32.mrf.mxu0
      %v2254 = vadd.f32 %v2093, %v2253
      %v2255 = vpop.f32.mrf.mxu0
      %v2256 = vpop.f32.mrf.mxu0
      %v2257 = vadd.f32 %v2096, %v2256
      %v2258 = vpop.f32.mrf.mxu0
      %2259 = vmatprep.mubr.bf16.mxu0 %v1197
      %2260 = vmatmul.mubr.bf16.gmra.mxu0 %v1196
      %v2261 = vpop.f32.mrf.mxu0
      %v2262 = vadd.f32 %v2101, %v2261
      %v2263 = vpop.f32.mrf.mxu0
      %v2264 = vpop.f32.mrf.mxu0
      %v2265 = vadd.f32 %v2104, %v2264
      %v2266 = vpop.f32.mrf.mxu0
      %2267 = vmatprep.mubr.bf16.mxu0 %v1206
      %2268 = vmatmul.mubr.bf16.gmra.mxu0 %v1205
      %v2269 = vpop.f32.mrf.mxu0
      %v2270 = vadd.f32 %v2109, %v2269
      %v2271 = vpop.f32.mrf.mxu0
      %v2272 = vpop.f32.mrf.mxu0
      %v2273 = vadd.f32 %v2112, %v2272
      %v2274 = vpop.f32.mrf.mxu0
      %2275 = vmatprep.mubr.bf16.mxu0 %v1215
      %2276 = vmatmul.mubr.bf16.gmra.mxu0 %v1214
      %v2277 = vpop.f32.mrf.mxu0
      %v2278 = vadd.f32 %v2117, %v2277
      %v2279 = vpop.f32.mrf.mxu0
      %v2280 = vpop.f32.mrf.mxu0
      %v2281 = vadd.f32 %v2120, %v2280
      %v2282 = vpop.f32.mrf.mxu0
      %2283 = vmatprep.mubr.bf16.mxu0 %v1224
      %2284 = vmatmul.mubr.bf16.gmra.mxu0 %v1223
      %v2285 = vpop.f32.mrf.mxu0
      %v2286 = vadd.f32 %v2125, %v2285
      %v2287 = vpop.f32.mrf.mxu0
      %v2288 = vpop.f32.mrf.mxu0
      %v2289 = vadd.f32 %v2128, %v2288
      %v2290 = vpop.f32.mrf.mxu0
      %2291 = vmatprep.mubr.bf16.mxu0 %v1233
      %2292 = vmatmul.mubr.bf16.gmra.mxu0 %v1232
      %v2293 = vpop.f32.mrf.mxu0
      %v2294 = vadd.f32 %v2133, %v2293
      %v2295 = vpop.f32.mrf.mxu0
      %v2296 = vpop.f32.mrf.mxu0
      %v2297 = vadd.f32 %v2136, %v2296
      %v2298 = vpop.f32.mrf.mxu0
      %2299 = vmatprep.mubr.bf16.mxu0 %v1242
      %2300 = vmatmul.mubr.bf16.gmra.mxu0 %v1241
      %v2301 = vpop.f32.mrf.mxu0
      %v2302 = vadd.f32 %v2141, %v2301
      %v2303 = vpop.f32.mrf.mxu0
      %v2304 = vpop.f32.mrf.mxu0
      %v2305 = vadd.f32 %v2144, %v2304
      %v2306 = vpop.f32.mrf.mxu0
      %2307 = vmatprep.mubr.bf16.mxu0 %v1251
      %2308 = vmatmul.mubr.bf16.gmra.mxu0 %v1250
      %v2309 = vpop.f32.mrf.mxu0
      %v2310 = vadd.f32 %v2149, %v2309
      %v2311 = vpop.f32.mrf.mxu0
      %v2312 = vpop.f32.mrf.mxu0
      %v2313 = vadd.f32 %v2152, %v2312
      %v2314 = vpop.f32.mrf.mxu0
      %2315 = vmatprep.mubr.bf16.mxu0 %v1260
      %2316 = vmatmul.mubr.bf16.gmra.mxu0 %v1259
      %v2317 = vpop.f32.mrf.mxu0
      %v2318 = vadd.f32 %v2157, %v2317
      %v2319 = vpop.f32.mrf.mxu0
      %v2320 = vpop.f32.mrf.mxu0
      %v2321 = vadd.f32 %v2160, %v2320
      %v2322 = vpop.f32.mrf.mxu0
      %2323 = vmatprep.mubr.bf16.mxu0 %v1269
      %2324 = vmatmul.mubr.bf16.gmra.mxu0 %v1268
      %v2325 = vpop.f32.mrf.mxu0
      %v2326 = vadd.f32 %v2165, %v2325
      %v2327 = vpop.f32.mrf.mxu0
      %v2328 = vpop.f32.mrf.mxu0
      %v2329 = vadd.f32 %v2168, %v2328
      %v2330 = vpop.f32.mrf.mxu0
      %2331 = vdwg.mxu0
      %2332 = vmatprep.subr.bf16.mxu0 0
      %2333 = vmatpush1.bf16.msra.mxu0 %v1760
      %2334 = vmatprep.subr.bf16.mxu0 0
      %2335 = vmatpush1.bf16.msra.mxu0 %v1759
      %2336 = vmatprep.subr.bf16.mxu0 0
      %2337 = vmatpush1.bf16.msra.mxu0 %v1758
      %2338 = vmatprep.subr.bf16.mxu0 0
      %2339 = vmatpush1.bf16.msra.mxu0 %v1757
      %2340 = vmatprep.subr.bf16.mxu0 0
      %2341 = vmatpush1.bf16.msra.mxu0 %v1756
      %2342 = vmatprep.subr.bf16.mxu0 0
      %2343 = vmatpush1.bf16.msra.mxu0 %v1755
      %2344 = vmatprep.subr.bf16.mxu0 0
      %2345 = vmatpush1.bf16.msra.mxu0 %v1754
      %2346 = vmatprep.subr.bf16.mxu0 0
      %2347 = vmatpush1.bf16.msra.mxu0 %v1753
      %2348 = vmatprep.subr.bf16.mxu0 0
      %2349 = vmatpush2.bf16.msra.mxu0 %v1768
      %2350 = vmatprep.subr.bf16.mxu0 0
      %2351 = vmatpush2.bf16.msra.mxu0 %v1767
      %2352 = vmatprep.subr.bf16.mxu0 0
      %2353 = vmatpush2.bf16.msra.mxu0 %v1766
      %2354 = vmatprep.subr.bf16.mxu0 0
      %2355 = vmatpush2.bf16.msra.mxu0 %v1765
      %2356 = vmatprep.subr.bf16.mxu0 0
      %2357 = vmatpush2.bf16.msra.mxu0 %v1764
      %2358 = vmatprep.subr.bf16.mxu0 0
      %2359 = vmatpush2.bf16.msra.mxu0 %v1763
      %2360 = vmatprep.subr.bf16.mxu0 0
      %2361 = vmatpush2.bf16.msra.mxu0 %v1762
      %2362 = vmatprep.subr.bf16.mxu0 0
      %2363 = vmatpush2.bf16.msra.mxu0 %v1761
      %2364 = vmatprep.mubr.bf16.mxu0 %v1136
      %2365 = vmatmul.mubr.bf16.gmra.mxu0 %v1135
      %v2366 = vpop.f32.mrf.mxu0
      %v2367 = vadd.f32 %v2206, %v2366
      %v2368 = vpop.f32.mrf.mxu0
      %v2369 = vpop.f32.mrf.mxu0
      %v2370 = vadd.f32 %v2209, %v2369
      %v2371 = vpop.f32.mrf.mxu0
      %2372 = vmatprep.mubr.bf16.mxu0 %v1145
      %2373 = vmatmul.mubr.bf16.gmra.mxu0 %v1144
      %v2374 = vpop.f32.mrf.mxu0
      %v2375 = vadd.f32 %v2214, %v2374
      %v2376 = vpop.f32.mrf.mxu0
      %v2377 = vpop.f32.mrf.mxu0
      %v2378 = vadd.f32 %v2217, %v2377
      %v2379 = vpop.f32.mrf.mxu0
      %2380 = vmatprep.mubr.bf16.mxu0 %v1154
      %2381 = vmatmul.mubr.bf16.gmra.mxu0 %v1153
      %v2382 = vpop.f32.mrf.mxu0
      %v2383 = vadd.f32 %v2222, %v2382
      %v2384 = vpop.f32.mrf.mxu0
      %v2385 = vpop.f32.mrf.mxu0
      %v2386 = vadd.f32 %v2225, %v2385
      %v2387 = vpop.f32.mrf.mxu0
      %2388 = vmatprep.mubr.bf16.mxu0 %v1163
      %2389 = vmatmul.mubr.bf16.gmra.mxu0 %v1162
      %v2390 = vpop.f32.mrf.mxu0
      %v2391 = vadd.f32 %v2230, %v2390
      %v2392 = vpop.f32.mrf.mxu0
      %v2393 = vpop.f32.mrf.mxu0
      %v2394 = vadd.f32 %v2233, %v2393
      %v2395 = vpop.f32.mrf.mxu0
      %2396 = vmatprep.mubr.bf16.mxu0 %v1172
      %2397 = vmatmul.mubr.bf16.gmra.mxu0 %v1171
      %v2398 = vpop.f32.mrf.mxu0
      %v2399 = vadd.f32 %v2238, %v2398
      %v2400 = vpop.f32.mrf.mxu0
      %v2401 = vpop.f32.mrf.mxu0
      %v2402 = vadd.f32 %v2241, %v2401
      %v2403 = vpop.f32.mrf.mxu0
      %2404 = vmatprep.mubr.bf16.mxu0 %v1181
      %2405 = vmatmul.mubr.bf16.gmra.mxu0 %v1180
      %v2406 = vpop.f32.mrf.mxu0
      %v2407 = vadd.f32 %v2246, %v2406
      %v2408 = vpop.f32.mrf.mxu0
      %v2409 = vpop.f32.mrf.mxu0
      %v2410 = vadd.f32 %v2249, %v2409
      %v2411 = vpop.f32.mrf.mxu0
      %2412 = vmatprep.mubr.bf16.mxu0 %v1190
      %2413 = vmatmul.mubr.bf16.gmra.mxu0 %v1189
      %v2414 = vpop.f32.mrf.mxu0
      %v2415 = vadd.f32 %v2254, %v2414
      %v2416 = vpop.f32.mrf.mxu0
      %v2417 = vpop.f32.mrf.mxu0
      %v2418 = vadd.f32 %v2257, %v2417
      %v2419 = vpop.f32.mrf.mxu0
      %2420 = vmatprep.mubr.bf16.mxu0 %v1199
      %2421 = vmatmul.mubr.bf16.gmra.mxu0 %v1198
      %v2422 = vpop.f32.mrf.mxu0
      %v2423 = vadd.f32 %v2262, %v2422
      %v2424 = vpop.f32.mrf.mxu0
      %v2425 = vpop.f32.mrf.mxu0
      %v2426 = vadd.f32 %v2265, %v2425
      %v2427 = vpop.f32.mrf.mxu0
      %2428 = vmatprep.mubr.bf16.mxu0 %v1208
      %2429 = vmatmul.mubr.bf16.gmra.mxu0 %v1207
      %v2430 = vpop.f32.mrf.mxu0
      %v2431 = vadd.f32 %v2270, %v2430
      %v2432 = vpop.f32.mrf.mxu0
      %v2433 = vpop.f32.mrf.mxu0
      %v2434 = vadd.f32 %v2273, %v2433
      %v2435 = vpop.f32.mrf.mxu0
      %2436 = vmatprep.mubr.bf16.mxu0 %v1217
      %2437 = vmatmul.mubr.bf16.gmra.mxu0 %v1216
      %v2438 = vpop.f32.mrf.mxu0
      %v2439 = vadd.f32 %v2278, %v2438
      %v2440 = vpop.f32.mrf.mxu0
      %v2441 = vpop.f32.mrf.mxu0
      %v2442 = vadd.f32 %v2281, %v2441
      %v2443 = vpop.f32.mrf.mxu0
      %2444 = vmatprep.mubr.bf16.mxu0 %v1226
      %2445 = vmatmul.mubr.bf16.gmra.mxu0 %v1225
      %v2446 = vpop.f32.mrf.mxu0
      %v2447 = vadd.f32 %v2286, %v2446
      %v2448 = vpop.f32.mrf.mxu0
      %v2449 = vpop.f32.mrf.mxu0
      %v2450 = vadd.f32 %v2289, %v2449
      %v2451 = vpop.f32.mrf.mxu0
      %2452 = vmatprep.mubr.bf16.mxu0 %v1235
      %2453 = vmatmul.mubr.bf16.gmra.mxu0 %v1234
      %v2454 = vpop.f32.mrf.mxu0
      %v2455 = vadd.f32 %v2294, %v2454
      %v2456 = vpop.f32.mrf.mxu0
      %v2457 = vpop.f32.mrf.mxu0
      %v2458 = vadd.f32 %v2297, %v2457
      %v2459 = vpop.f32.mrf.mxu0
      %2460 = vmatprep.mubr.bf16.mxu0 %v1244
      %2461 = vmatmul.mubr.bf16.gmra.mxu0 %v1243
      %v2462 = vpop.f32.mrf.mxu0
      %v2463 = vadd.f32 %v2302, %v2462
      %v2464 = vpop.f32.mrf.mxu0
      %v2465 = vpop.f32.mrf.mxu0
      %v2466 = vadd.f32 %v2305, %v2465
      %v2467 = vpop.f32.mrf.mxu0
      %2468 = vmatprep.mubr.bf16.mxu0 %v1253
      %2469 = vmatmul.mubr.bf16.gmra.mxu0 %v1252
      %v2470 = vpop.f32.mrf.mxu0
      %v2471 = vadd.f32 %v2310, %v2470
      %v2472 = vpop.f32.mrf.mxu0
      %v2473 = vpop.f32.mrf.mxu0
      %v2474 = vadd.f32 %v2313, %v2473
      %v2475 = vpop.f32.mrf.mxu0
      %2476 = vmatprep.mubr.bf16.mxu0 %v1262
      %2477 = vmatmul.mubr.bf16.gmra.mxu0 %v1261
      %v2478 = vpop.f32.mrf.mxu0
      %v2479 = vadd.f32 %v2318, %v2478
      %v2480 = vpop.f32.mrf.mxu0
      %v2481 = vpop.f32.mrf.mxu0
      %v2482 = vadd.f32 %v2321, %v2481
      %v2483 = vpop.f32.mrf.mxu0
      %2484 = vmatprep.mubr.bf16.mxu0 %v1271
      %2485 = vmatmul.mubr.bf16.gmra.mxu0 %v1270
      %v2486 = vpop.f32.mrf.mxu0
      %v2487 = vadd.f32 %v2326, %v2486
      %v2488 = vpop.f32.mrf.mxu0
      %v2489 = vpop.f32.mrf.mxu0
      %v2490 = vadd.f32 %v2329, %v2489
      %v2491 = vpop.f32.mrf.mxu0
      %2492 = vdwg.mxu0
      %2493 = vmatprep.subr.bf16.mxu0 0
      %2494 = vmatpush1.bf16.msra.mxu0 %v1776
      %2495 = vmatprep.subr.bf16.mxu0 0
      %2496 = vmatpush1.bf16.msra.mxu0 %v1775
      %2497 = vmatprep.subr.bf16.mxu0 0
      %2498 = vmatpush1.bf16.msra.mxu0 %v1774
      %2499 = vmatprep.subr.bf16.mxu0 0
      %2500 = vmatpush1.bf16.msra.mxu0 %v1773
      %2501 = vmatprep.subr.bf16.mxu0 0
      %2502 = vmatpush1.bf16.msra.mxu0 %v1772
      %2503 = vmatprep.subr.bf16.mxu0 0
      %2504 = vmatpush1.bf16.msra.mxu0 %v1771
      %2505 = vmatprep.subr.bf16.mxu0 0
      %2506 = vmatpush1.bf16.msra.mxu0 %v1770
      %2507 = vmatprep.subr.bf16.mxu0 0
      %2508 = vmatpush1.bf16.msra.mxu0 %v1769
      %2509 = vmatprep.subr.bf16.mxu0 0
      %2510 = vmatpush2.bf16.msra.mxu0 0
      %2511 = vmatprep.subr.bf16.mxu0 0
      %2512 = vmatpush2.bf16.msra.mxu0 0
      %2513 = vmatprep.subr.bf16.mxu0 0
      %2514 = vmatpush2.bf16.msra.mxu0 0
      %2515 = vmatprep.subr.bf16.mxu0 0
      %2516 = vmatpush2.bf16.msra.mxu0 0
      %2517 = vmatprep.subr.bf16.mxu0 0
      %2518 = vmatpush2.bf16.msra.mxu0 0
      %2519 = vmatprep.subr.bf16.mxu0 0
      %2520 = vmatpush2.bf16.msra.mxu0 0
      %2521 = vmatprep.subr.bf16.mxu0 0
      %2522 = vmatpush2.bf16.msra.mxu0 0
      %2523 = vmatprep.subr.bf16.mxu0 0
      %2524 = vmatpush2.bf16.msra.mxu0 0
      %2525 = vmatprep.mubr.bf16.mxu0 0
      %2526 = vmatmul.mubr.bf16.gmra.mxu0 %v1137
      %v2527 = vpop.f32.mrf.mxu0
      %v2528 = vadd.f32 %v2367, %v2527
      %v2529 = vpop.f32.mrf.mxu0
      %v2530 = vpop.f32.mrf.mxu0
      %v2531 = vadd.f32 %v2370, %v2530
      %v2532 = vpop.f32.mrf.mxu0
      %2533 = vmatprep.mubr.bf16.mxu0 0
      %2534 = vmatmul.mubr.bf16.gmra.mxu0 %v1146
      %v2535 = vpop.f32.mrf.mxu0
      %v2536 = vadd.f32 %v2375, %v2535
      %v2537 = vpop.f32.mrf.mxu0
      %v2538 = vpop.f32.mrf.mxu0
      %v2539 = vadd.f32 %v2378, %v2538
      %v2540 = vpop.f32.mrf.mxu0
      %2541 = vmatprep.mubr.bf16.mxu0 0
      %2542 = vmatmul.mubr.bf16.gmra.mxu0 %v1155
      %v2543 = vpop.f32.mrf.mxu0
      %v2544 = vadd.f32 %v2383, %v2543
      %v2545 = vpop.f32.mrf.mxu0
      %v2546 = vpop.f32.mrf.mxu0
      %v2547 = vadd.f32 %v2386, %v2546
      %v2548 = vpop.f32.mrf.mxu0
      %2549 = vmatprep.mubr.bf16.mxu0 0
      %2550 = vmatmul.mubr.bf16.gmra.mxu0 %v1164
      %v2551 = vpop.f32.mrf.mxu0
      %v2552 = vadd.f32 %v2391, %v2551
      %v2553 = vpop.f32.mrf.mxu0
      %v2554 = vpop.f32.mrf.mxu0
      %v2555 = vadd.f32 %v2394, %v2554
      %v2556 = vpop.f32.mrf.mxu0
      %2557 = vmatprep.mubr.bf16.mxu0 0
      %2558 = vmatmul.mubr.bf16.gmra.mxu0 %v1173
      %v2559 = vpop.f32.mrf.mxu0
      %v2560 = vadd.f32 %v2399, %v2559
      %v2561 = vpop.f32.mrf.mxu0
      %v2562 = vpop.f32.mrf.mxu0
      %v2563 = vadd.f32 %v2402, %v2562
      %v2564 = vpop.f32.mrf.mxu0
      %2565 = vmatprep.mubr.bf16.mxu0 0
      %2566 = vmatmul.mubr.bf16.gmra.mxu0 %v1182
      %v2567 = vpop.f32.mrf.mxu0
      %v2568 = vadd.f32 %v2407, %v2567
      %v2569 = vpop.f32.mrf.mxu0
      %v2570 = vpop.f32.mrf.mxu0
      %v2571 = vadd.f32 %v2410, %v2570
      %v2572 = vpop.f32.mrf.mxu0
      %2573 = vmatprep.mubr.bf16.mxu0 0
      %2574 = vmatmul.mubr.bf16.gmra.mxu0 %v1191
      %v2575 = vpop.f32.mrf.mxu0
      %v2576 = vadd.f32 %v2415, %v2575
      %v2577 = vpop.f32.mrf.mxu0
      %v2578 = vpop.f32.mrf.mxu0
      %v2579 = vadd.f32 %v2418, %v2578
      %v2580 = vpop.f32.mrf.mxu0
      %2581 = vmatprep.mubr.bf16.mxu0 0
      %2582 = vmatmul.mubr.bf16.gmra.mxu0 %v1200
      %v2583 = vpop.f32.mrf.mxu0
      %v2584 = vadd.f32 %v2423, %v2583
      %v2585 = vpop.f32.mrf.mxu0
      %v2586 = vpop.f32.mrf.mxu0
      %v2587 = vadd.f32 %v2426, %v2586
      %v2588 = vpop.f32.mrf.mxu0
      %2589 = vmatprep.mubr.bf16.mxu0 0
      %2590 = vmatmul.mubr.bf16.gmra.mxu0 %v1209
      %v2591 = vpop.f32.mrf.mxu0
      %v2592 = vadd.f32 %v2431, %v2591
      %v2593 = vpop.f32.mrf.mxu0
      %v2594 = vpop.f32.mrf.mxu0
      %v2595 = vadd.f32 %v2434, %v2594
      %v2596 = vpop.f32.mrf.mxu0
      %2597 = vmatprep.mubr.bf16.mxu0 0
      %2598 = vmatmul.mubr.bf16.gmra.mxu0 %v1218
      %v2599 = vpop.f32.mrf.mxu0
      %v2600 = vadd.f32 %v2439, %v2599
      %v2601 = vpop.f32.mrf.mxu0
      %v2602 = vpop.f32.mrf.mxu0
      %v2603 = vadd.f32 %v2442, %v2602
      %v2604 = vpop.f32.mrf.mxu0
      %2605 = vmatprep.mubr.bf16.mxu0 0
      %2606 = vmatmul.mubr.bf16.gmra.mxu0 %v1227
      %v2607 = vpop.f32.mrf.mxu0
      %v2608 = vadd.f32 %v2447, %v2607
      %v2609 = vpop.f32.mrf.mxu0
      %v2610 = vpop.f32.mrf.mxu0
      %v2611 = vadd.f32 %v2450, %v2610
      %v2612 = vpop.f32.mrf.mxu0
      %2613 = vmatprep.mubr.bf16.mxu0 0
      %2614 = vmatmul.mubr.bf16.gmra.mxu0 %v1236
      %v2615 = vpop.f32.mrf.mxu0
      %v2616 = vadd.f32 %v2455, %v2615
      %v2617 = vpop.f32.mrf.mxu0
      %v2618 = vpop.f32.mrf.mxu0
      %v2619 = vadd.f32 %v2458, %v2618
      %v2620 = vpop.f32.mrf.mxu0
      %2621 = vmatprep.mubr.bf16.mxu0 0
      %2622 = vmatmul.mubr.bf16.gmra.mxu0 %v1245
      %v2623 = vpop.f32.mrf.mxu0
      %v2624 = vadd.f32 %v2463, %v2623
      %v2625 = vpop.f32.mrf.mxu0
      %v2626 = vpop.f32.mrf.mxu0
      %v2627 = vadd.f32 %v2466, %v2626
      %v2628 = vpop.f32.mrf.mxu0
      %2629 = vmatprep.mubr.bf16.mxu0 0
      %2630 = vmatmul.mubr.bf16.gmra.mxu0 %v1254
      %v2631 = vpop.f32.mrf.mxu0
      %v2632 = vadd.f32 %v2471, %v2631
      %v2633 = vpop.f32.mrf.mxu0
      %v2634 = vpop.f32.mrf.mxu0
      %v2635 = vadd.f32 %v2474, %v2634
      %v2636 = vpop.f32.mrf.mxu0
      %2637 = vmatprep.mubr.bf16.mxu0 0
      %2638 = vmatmul.mubr.bf16.gmra.mxu0 %v1263
      %v2639 = vpop.f32.mrf.mxu0
      %v2640 = vadd.f32 %v2479, %v2639
      %v2641 = vpop.f32.mrf.mxu0
      %v2642 = vpop.f32.mrf.mxu0
      %v2643 = vadd.f32 %v2482, %v2642
      %v2644 = vpop.f32.mrf.mxu0
      %2645 = vmatprep.mubr.bf16.mxu0 0
      %2646 = vmatmul.mubr.bf16.gmra.mxu0 %v1272
      %v2647 = vpop.f32.mrf.mxu0
      %v2648 = vadd.f32 %v2487, %v2647
      %v2649 = vpop.f32.mrf.mxu0
      %v2650 = vpop.f32.mrf.mxu0
      %v2651 = vadd.f32 %v2490, %v2650
      %v2652 = vpop.f32.mrf.mxu0
      %2653 = vdwg.mxu0
      %v2654 = vadd.f32 %v345, %v2528
      %v2655 = vadd.f32 %v346, %v2531
      %v2656 = vadd.f32 %v347, %v2536
      %v2657 = vadd.f32 %v348, %v2539
      %v2658 = vadd.f32 %v349, %v2544
      %v2659 = vadd.f32 %v350, %v2547
      %v2660 = vadd.f32 %v351, %v2552
      %v2661 = vadd.f32 %v352, %v2555
      %v2662 = vadd.f32 %v353, %v2560
      %v2663 = vadd.f32 %v354, %v2563
      %v2664 = vadd.f32 %v355, %v2568
      %v2665 = vadd.f32 %v356, %v2571
      %v2666 = vadd.f32 %v357, %v2576
      %v2667 = vadd.f32 %v358, %v2579
      %v2668 = vadd.f32 %v359, %v2584
      %v2669 = vadd.f32 %v360, %v2587
      %v2670 = vadd.f32 %v361, %v2592
      %v2671 = vadd.f32 %v362, %v2595
      %v2672 = vadd.f32 %v363, %v2600
      %v2673 = vadd.f32 %v364, %v2603
      %v2674 = vadd.f32 %v365, %v2608
      %v2675 = vadd.f32 %v366, %v2611
      %v2676 = vadd.f32 %v367, %v2616
      %v2677 = vadd.f32 %v368, %v2619
      %v2678 = vadd.f32 %v369, %v2624
      %v2679 = vadd.f32 %v370, %v2627
      %v2680 = vadd.f32 %v371, %v2632
      %v2681 = vadd.f32 %v372, %v2635
      %v2682 = vadd.f32 %v373, %v2640
      %v2683 = vadd.f32 %v374, %v2643
      %v2684 = vadd.f32 %v375, %v2648
      %v2685 = vadd.f32 %v376, %v2651
      %2686 = vst [vmem:[#allocation2] sm:$0xff] %v2654
      %2687 = vst [vmem:[#allocation2 + $0x8] sm:$0xff] %v2655
      %2688 = vst [vmem:[#allocation2 + $0x10] sm:$0xff] %v2656
      %2689 = vst [vmem:[#allocation2 + $0x18] sm:$0xff] %v2657
      %2690 = vst [vmem:[#allocation2 + $0x20] sm:$0xff] %v2658
      %2691 = vst [vmem:[#allocation2 + $0x28] sm:$0xff] %v2659
      %2692 = vst [vmem:[#allocation2 + $0x30] sm:$0xff] %v2660
      %2693 = vst [vmem:[#allocation2 + $0x38] sm:$0xff] %v2661
      %2694 = vst [vmem:[#allocation2 + $0x40] sm:$0xff] %v2662
      %2695 = vst [vmem:[#allocation2 + $0x48] sm:$0xff] %v2663
      %2696 = vst [vmem:[#allocation2 + $0x50] sm:$0xff] %v2664
      %2697 = vst [vmem:[#allocation2 + $0x58] sm:$0xff] %v2665
      %2698 = vst [vmem:[#allocation2 + $0x60] sm:$0xff] %v2666
      %2699 = vst [vmem:[#allocation2 + $0x68] sm:$0xff] %v2667
      %2700 = vst [vmem:[#allocation2 + $0x70] sm:$0xff] %v2668
      %2701 = vst [vmem:[#allocation2 + $0x78] sm:$0xff] %v2669
      %2702 = vst [vmem:[#allocation2 + $0x80] sm:$0xff] %v2670
      %2703 = vst [vmem:[#allocation2 + $0x88] sm:$0xff] %v2671
      %2704 = vst [vmem:[#allocation2 + $0x90] sm:$0xff] %v2672
      %2705 = vst [vmem:[#allocation2 + $0x98] sm:$0xff] %v2673
      %2706 = vst [vmem:[#allocation2 + $0xa0] sm:$0xff] %v2674
      %2707 = vst [vmem:[#allocation2 + $0xa8] sm:$0xff] %v2675
      %2708 = vst [vmem:[#allocation2 + $0xb0] sm:$0xff] %v2676
      %2709 = vst [vmem:[#allocation2 + $0xb8] sm:$0xff] %v2677
      %2710 = vst [vmem:[#allocation2 + $0xc0] sm:$0xff] %v2678
      %2711 = vst [vmem:[#allocation2 + $0xc8] sm:$0xff] %v2679
      %2712 = vst [vmem:[#allocation2 + $0xd0] sm:$0xff] %v2680
      %2713 = vst [vmem:[#allocation2 + $0xd8] sm:$0xff] %v2681
      %2714 = vst [vmem:[#allocation2 + $0xe0] sm:$0xff] %v2682
      %2715 = vst [vmem:[#allocation2 + $0xe8] sm:$0xff] %v2683
      %2716 = vst [vmem:[#allocation2 + $0xf0] sm:$0xff] %v2684
      %2717 = vst [vmem:[#allocation2 + $0xf8] sm:$0xff] %v2685
      // Predicated region
      $region41: #{resnet_encoder3d_forward.8} parent=35 // pred_check
        %p2718 = pneg %p309
      $region42: #{resnet_encoder3d_forward.8} parent=35 // pred_check_branch
        %2720 = sbr.rel (%p2718) target = $region44
      $region43: #{resnet_encoder3d_forward.8} parent=35 // pred_region
        %v2721 = vld [vmem:[#allocation2] sm:$0xff]
        %v2722 = vld [vmem:[#allocation2 + $0x8] sm:$0xff]
        %v2723 = vld [vmem:[#allocation2 + $0x10] sm:$0xff]
        %v2724 = vld [vmem:[#allocation2 + $0x18] sm:$0xff]
        %v2725 = vld [vmem:[#allocation2 + $0x20] sm:$0xff]
        %v2726 = vld [vmem:[#allocation2 + $0x28] sm:$0xff]
        %v2727 = vld [vmem:[#allocation2 + $0x30] sm:$0xff]
        %v2728 = vld [vmem:[#allocation2 + $0x38] sm:$0xff]
        %v2729 = vld [vmem:[#allocation2 + $0x40] sm:$0xff]
        %v2730 = vld [vmem:[#allocation2 + $0x48] sm:$0xff]
        %v2731 = vld [vmem:[#allocation2 + $0x50] sm:$0xff]
        %v2732 = vld [vmem:[#allocation2 + $0x58] sm:$0xff]
        %v2733 = vld [vmem:[#allocation2 + $0x60] sm:$0xff]
        %v2734 = vld [vmem:[#allocation2 + $0x68] sm:$0xff]
        %v2735 = vld [vmem:[#allocation2 + $0x70] sm:$0xff]
        %v2736 = vld [vmem:[#allocation2 + $0x78] sm:$0xff]
        %v2737 = vld [vmem:[#allocation2 + $0x80] sm:$0xff]
        %v2738 = vld [vmem:[#allocation2 + $0x88] sm:$0xff]
        %v2739 = vld [vmem:[#allocation2 + $0x90] sm:$0xff]
        %v2740 = vld [vmem:[#allocation2 + $0x98] sm:$0xff]
        %v2741 = vld [vmem:[#allocation2 + $0xa0] sm:$0xff]
        %v2742 = vld [vmem:[#allocation2 + $0xa8] sm:$0xff]
        %v2743 = vld [vmem:[#allocation2 + $0xb0] sm:$0xff]
        %v2744 = vld [vmem:[#allocation2 + $0xb8] sm:$0xff]
        %v2745 = vld [vmem:[#allocation2 + $0xc0] sm:$0xff]
        %v2746 = vld [vmem:[#allocation2 + $0xc8] sm:$0xff]
        %v2747 = vld [vmem:[#allocation2 + $0xd0] sm:$0xff]
        %v2748 = vld [vmem:[#allocation2 + $0xd8] sm:$0xff]
        %v2749 = vld [vmem:[#allocation2 + $0xe0] sm:$0xff]
        %v2750 = vld [vmem:[#allocation2 + $0xe8] sm:$0xff]
        %v2751 = vld [vmem:[#allocation2 + $0xf0] sm:$0xff]
        %v2752 = vld [vmem:[#allocation2 + $0xf8] sm:$0xff]
        %v2753 = vld [vmem:[%s295] sm:$0x1]
        %v2755 = vlaneseq
        %v2756 = vshrl.u32 %v2755, 7
        %v2757 = vsub.s32 0, %v2756
        %v2758 = vrot.slane %v2753, %v2757
        %v2760 = vmul.f32 %v2721, %v2758
        %v2761 = vmul.f32 %v2722, %v2758
        %v2762 = vmul.f32 %v2723, %v2758
        %v2763 = vmul.f32 %v2724, %v2758
        %v2764 = vmul.f32 %v2725, %v2758
        %v2765 = vmul.f32 %v2726, %v2758
        %v2766 = vmul.f32 %v2727, %v2758
        %v2767 = vmul.f32 %v2728, %v2758
        %v2768 = vmul.f32 %v2729, %v2758
        %v2769 = vmul.f32 %v2730, %v2758
        %v2770 = vmul.f32 %v2731, %v2758
        %v2771 = vmul.f32 %v2732, %v2758
        %v2772 = vmul.f32 %v2733, %v2758
        %v2773 = vmul.f32 %v2734, %v2758
        %v2774 = vmul.f32 %v2735, %v2758
        %v2775 = vmul.f32 %v2736, %v2758
        %v2776 = vmul.f32 %v2737, %v2758
        %v2777 = vmul.f32 %v2738, %v2758
        %v2778 = vmul.f32 %v2739, %v2758
        %v2779 = vmul.f32 %v2740, %v2758
        %v2780 = vmul.f32 %v2741, %v2758
        %v2781 = vmul.f32 %v2742, %v2758
        %v2782 = vmul.f32 %v2743, %v2758
        %v2783 = vmul.f32 %v2744, %v2758
        %v2784 = vmul.f32 %v2745, %v2758
        %v2785 = vmul.f32 %v2746, %v2758
        %v2786 = vmul.f32 %v2747, %v2758
        %v2787 = vmul.f32 %v2748, %v2758
        %v2788 = vmul.f32 %v2749, %v2758
        %v2789 = vmul.f32 %v2750, %v2758
        %v2790 = vmul.f32 %v2751, %v2758
        %v2791 = vmul.f32 %v2752, %v2758
        %v2792 = vld [vmem:[%s298] sm:$0x1]
        %v2794 = vlaneseq
        %v2795 = vshrl.u32 %v2794, 7
        %v2796 = vsub.s32 0, %v2795
        %v2797 = vrot.slane %v2792, %v2796
        %v2799 = vadd.f32 %v2760, %v2797
        %v2800 = vadd.f32 %v2761, %v2797
        %v2801 = vadd.f32 %v2762, %v2797
        %v2802 = vadd.f32 %v2763, %v2797
        %v2803 = vadd.f32 %v2764, %v2797
        %v2804 = vadd.f32 %v2765, %v2797
        %v2805 = vadd.f32 %v2766, %v2797
        %v2806 = vadd.f32 %v2767, %v2797
        %v2807 = vadd.f32 %v2768, %v2797
        %v2808 = vadd.f32 %v2769, %v2797
        %v2809 = vadd.f32 %v2770, %v2797
        %v2810 = vadd.f32 %v2771, %v2797
        %v2811 = vadd.f32 %v2772, %v2797
        %v2812 = vadd.f32 %v2773, %v2797
        %v2813 = vadd.f32 %v2774, %v2797
        %v2814 = vadd.f32 %v2775, %v2797
        %v2815 = vadd.f32 %v2776, %v2797
        %v2816 = vadd.f32 %v2777, %v2797
        %v2817 = vadd.f32 %v2778, %v2797
        %v2818 = vadd.f32 %v2779, %v2797
        %v2819 = vadd.f32 %v2780, %v2797
        %v2820 = vadd.f32 %v2781, %v2797
        %v2821 = vadd.f32 %v2782, %v2797
        %v2822 = vadd.f32 %v2783, %v2797
        %v2823 = vadd.f32 %v2784, %v2797
        %v2824 = vadd.f32 %v2785, %v2797
        %v2825 = vadd.f32 %v2786, %v2797
        %v2826 = vadd.f32 %v2787, %v2797
        %v2827 = vadd.f32 %v2788, %v2797
        %v2828 = vadd.f32 %v2789, %v2797
        %v2829 = vadd.f32 %v2790, %v2797
        %v2830 = vadd.f32 %v2791, %v2797
        %v2831 = vmax.f32 %v2799, 0.0
        %v2832 = vmax.f32 %v2800, 0.0
        %v2833 = vmax.f32 %v2801, 0.0
        %v2834 = vmax.f32 %v2802, 0.0
        %v2835 = vmax.f32 %v2803, 0.0
        %v2836 = vmax.f32 %v2804, 0.0
        %v2837 = vmax.f32 %v2805, 0.0
        %v2838 = vmax.f32 %v2806, 0.0
        %v2839 = vmax.f32 %v2807, 0.0
        %v2840 = vmax.f32 %v2808, 0.0
        %v2841 = vmax.f32 %v2809, 0.0
        %v2842 = vmax.f32 %v2810, 0.0
        %v2843 = vmax.f32 %v2811, 0.0
        %v2844 = vmax.f32 %v2812, 0.0
        %v2845 = vmax.f32 %v2813, 0.0
        %v2846 = vmax.f32 %v2814, 0.0
        %v2847 = vmax.f32 %v2815, 0.0
        %v2848 = vmax.f32 %v2816, 0.0
        %v2849 = vmax.f32 %v2817, 0.0
        %v2850 = vmax.f32 %v2818, 0.0
        %v2851 = vmax.f32 %v2819, 0.0
        %v2852 = vmax.f32 %v2820, 0.0
        %v2853 = vmax.f32 %v2821, 0.0
        %v2854 = vmax.f32 %v2822, 0.0
        %v2855 = vmax.f32 %v2823, 0.0
        %v2856 = vmax.f32 %v2824, 0.0
        %v2857 = vmax.f32 %v2825, 0.0
        %v2858 = vmax.f32 %v2826, 0.0
        %v2859 = vmax.f32 %v2827, 0.0
        %v2860 = vmax.f32 %v2828, 0.0
        %v2861 = vmax.f32 %v2829, 0.0
        %v2862 = vmax.f32 %v2830, 0.0
        %v2863 = vpack.c.bf16 %v2832, %v2831
        %v2864 = vpack.c.bf16 %v2834, %v2833
        %v2865 = vpack.c.bf16 %v2836, %v2835
        %v2866 = vpack.c.bf16 %v2838, %v2837
        %v2867 = vpack.c.bf16 %v2840, %v2839
        %v2868 = vpack.c.bf16 %v2842, %v2841
        %v2869 = vpack.c.bf16 %v2844, %v2843
        %v2870 = vpack.c.bf16 %v2846, %v2845
        %v2871 = vpack.c.bf16 %v2848, %v2847
        %v2872 = vpack.c.bf16 %v2850, %v2849
        %v2873 = vpack.c.bf16 %v2852, %v2851
        %v2874 = vpack.c.bf16 %v2854, %v2853
        %v2875 = vpack.c.bf16 %v2856, %v2855
        %v2876 = vpack.c.bf16 %v2858, %v2857
        %v2877 = vpack.c.bf16 %v2860, %v2859
        %v2878 = vpack.c.bf16 %v2862, %v2861
        %v2895 = vunpack.c.l.b16 %v2863
        %v2896 = vunpack.c.h.b16 %v2863
        %v2897 = vunpack.c.l.b16 %v2864
        %v2898 = vunpack.c.h.b16 %v2864
        %v2899 = vunpack.c.l.b16 %v2865
        %v2900 = vunpack.c.h.b16 %v2865
        %v2901 = vunpack.c.l.b16 %v2866
        %v2902 = vunpack.c.h.b16 %v2866
        %v2903 = vunpack.c.l.b16 %v2867
        %v2904 = vunpack.c.h.b16 %v2867
        %v2905 = vunpack.c.l.b16 %v2868
        %v2906 = vunpack.c.h.b16 %v2868
        %v2907 = vunpack.c.l.b16 %v2869
        %v2908 = vunpack.c.h.b16 %v2869
        %v2909 = vunpack.c.l.b16 %v2870
        %v2910 = vunpack.c.h.b16 %v2870
        %v2911 = vunpack.c.l.b16 %v2871
        %v2912 = vunpack.c.h.b16 %v2871
        %v2913 = vunpack.c.l.b16 %v2872
        %v2914 = vunpack.c.h.b16 %v2872
        %v2915 = vunpack.c.l.b16 %v2873
        %v2916 = vunpack.c.h.b16 %v2873
        %v2917 = vunpack.c.l.b16 %v2874
        %v2918 = vunpack.c.h.b16 %v2874
        %v2919 = vunpack.c.l.b16 %v2875
        %v2920 = vunpack.c.h.b16 %v2875
        %v2921 = vunpack.c.l.b16 %v2876
        %v2922 = vunpack.c.h.b16 %v2876
        %v2923 = vunpack.c.l.b16 %v2877
        %v2924 = vunpack.c.h.b16 %v2877
        %v2925 = vunpack.c.l.b16 %v2878
        %v2926 = vunpack.c.h.b16 %v2878
        %v2927 = vpack.c.b16 %v2895, %v2895
        %v2928 = vpack.c.b16 %v2896, %v2896
        %v2929 = vpack.c.b16 %v2897, %v2897
        %v2930 = vpack.c.b16 %v2898, %v2898
        %v2931 = vpack.c.b16 %v2899, %v2899
        %v2932 = vpack.c.b16 %v2900, %v2900
        %v2933 = vpack.c.b16 %v2901, %v2901
        %v2934 = vpack.c.b16 %v2902, %v2902
        %v2935 = vpack.c.b16 %v2903, %v2903
        %v2936 = vpack.c.b16 %v2904, %v2904
        %v2937 = vpack.c.b16 %v2905, %v2905
        %v2938 = vpack.c.b16 %v2906, %v2906
        %v2939 = vpack.c.b16 %v2907, %v2907
        %v2940 = vpack.c.b16 %v2908, %v2908
        %v2941 = vpack.c.b16 %v2909, %v2909
        %v2942 = vpack.c.b16 %v2910, %v2910
        %v2943 = vpack.c.b16 %v2911, %v2911
        %v2944 = vpack.c.b16 %v2912, %v2912
        %v2945 = vpack.c.b16 %v2913, %v2913
        %v2946 = vpack.c.b16 %v2914, %v2914
        %v2947 = vpack.c.b16 %v2915, %v2915
        %v2948 = vpack.c.b16 %v2916, %v2916
        %v2949 = vpack.c.b16 %v2917, %v2917
        %v2950 = vpack.c.b16 %v2918, %v2918
        %v2951 = vpack.c.b16 %v2919, %v2919
        %v2952 = vpack.c.b16 %v2920, %v2920
        %v2953 = vpack.c.b16 %v2921, %v2921
        %v2954 = vpack.c.b16 %v2922, %v2922
        %v2955 = vpack.c.b16 %v2923, %v2923
        %v2956 = vpack.c.b16 %v2924, %v2924
        %v2957 = vpack.c.b16 %v2925, %v2925
        %v2958 = vpack.c.b16 %v2926, %v2926
        %2991 = vst [vmem:[%s306] sm:$0xf] %v2927
        %2992 = vst [vmem:[%s306 + $0x4] sm:$0xf] %v2928
        %2993 = vst [vmem:[%s306 + $0x8] sm:$0xf] %v2929
        %2994 = vst [vmem:[%s306 + $0xc] sm:$0xf] %v2930
        %2995 = vst [vmem:[%s306 + $0x10] sm:$0xf] %v2931
        %2996 = vst [vmem:[%s306 + $0x14] sm:$0xf] %v2932
        %2997 = vst [vmem:[%s306 + $0x18] sm:$0xf] %v2933
        %2998 = vst [vmem:[%s306 + $0x1c] sm:$0xf] %v2934
        %2999 = vst [vmem:[%s306 + $0x20] sm:$0xf] %v2935
        %3000 = vst [vmem:[%s306 + $0x24] sm:$0xf] %v2936
        %3001 = vst [vmem:[%s306 + $0x28] sm:$0xf] %v2937
        %3002 = vst [vmem:[%s306 + $0x2c] sm:$0xf] %v2938
        %3003 = vst [vmem:[%s306 + $0x30] sm:$0xf] %v2939
        %3004 = vst [vmem:[%s306 + $0x34] sm:$0xf] %v2940
        %3005 = vst [vmem:[%s306 + $0x38] sm:$0xf] %v2941
        %3006 = vst [vmem:[%s306 + $0x3c] sm:$0xf] %v2942
        %3007 = vst [vmem:[%s306 + $0x40] sm:$0xf] %v2943
        %3008 = vst [vmem:[%s306 + $0x44] sm:$0xf] %v2944
        %3009 = vst [vmem:[%s306 + $0x48] sm:$0xf] %v2945
        %3010 = vst [vmem:[%s306 + $0x4c] sm:$0xf] %v2946
        %3011 = vst [vmem:[%s306 + $0x50] sm:$0xf] %v2947
        %3012 = vst [vmem:[%s306 + $0x54] sm:$0xf] %v2948
        %3013 = vst [vmem:[%s306 + $0x58] sm:$0xf] %v2949
        %3014 = vst [vmem:[%s306 + $0x5c] sm:$0xf] %v2950
        %3015 = vst [vmem:[%s306 + $0x60] sm:$0xf] %v2951
        %3016 = vst [vmem:[%s306 + $0x64] sm:$0xf] %v2952
        %3017 = vst [vmem:[%s306 + $0x68] sm:$0xf] %v2953
        %3018 = vst [vmem:[%s306 + $0x6c] sm:$0xf] %v2954
        %3019 = vst [vmem:[%s306 + $0x70] sm:$0xf] %v2955
        %3020 = vst [vmem:[%s306 + $0x74] sm:$0xf] %v2956
        %3021 = vst [vmem:[%s306 + $0x78] sm:$0xf] %v2957
        %3022 = vst [vmem:[%s306 + $0x7c] sm:$0xf] %v2958
      $region44: #{resnet_encoder3d_forward.8} parent=35 // pred_fallthru
        _
      %s3023 = smul.u32 32, %s20
      %p3024 = scmp.lt.s32.totalorder %s3023, 255
      %s3025 = scalar_select %p3024, %s3023, 255
      %p3026 = scmp.lt.s32.totalorder %s21, 0
      %s3027 = scalar_select %p3026, %s21, 0
      %s3028 = sadd.s32 %s3027, %s3025
      %s3029 = smul.addr %s3028, 4
      %s3030 = scalar_lea.vmem %s4, %s3029
      // Predicated region
      $region45: #{resnet_encoder3d_forward.8} parent=35 // pred_check
        %p3031 = pneg %p162
      $region46: #{resnet_encoder3d_forward.8} parent=35 // pred_check_branch
        %3033 = sbr.rel (%p3031) target = $region48
      $region47: #{resnet_encoder3d_forward.8} parent=35 // pred_region
        %s3034 = smul.u32 32, %s20
      $region48: #{resnet_encoder3d_forward.8} parent=35 // pred_fallthru
        _
    $region36: #{resnet_encoder3d_forward.8} parent=5 // pred_fallthru
      _
    %p3035 = scmp.le.s32.totalorder 2, %s10
    // Predicated region
    $region49: #{resnet_encoder3d_forward.8} parent=5 // pred_check
      %p3036 = pneg %p3035
    $region50: #{resnet_encoder3d_forward.8} parent=5 // pred_check_branch
      %3038 = sbr.rel (%p3036) target = $region52
    $region51: #{resnet_encoder3d_forward.8} parent=5 // pred_region
      %s3039 = ssub.s32 %s10, 2
      // Predicated region
      $region53: #{resnet_encoder3d_forward.8} parent=51 // pred_check
        %p3040 = pneg %p168
      $region54: #{resnet_encoder3d_forward.8} parent=51 // pred_check_branch
        %3042 = sbr.rel (%p3040) target = $region56
      $region55: #{resnet_encoder3d_forward.8} parent=51 // pred_region
        %s3043 = smul.u32 32, %s23
        %p3044 = scmp.lt.s32.totalorder %s3043, 255
        %s3045 = scalar_select %p3044, %s3043, 255
        %p3046 = scmp.lt.s32.totalorder %s24, 0
        %s3047 = scalar_select %p3046, %s24, 0
        %s3048 = sadd.s32 %s3047, %s3045
        %s3049 = smul.addr %s3048, 4
        %s3050 = scalar_lea.vmem %s4, %s3049
      $region56: #{resnet_encoder3d_forward.8} parent=51 // pred_fallthru
        _
    $region52: #{resnet_encoder3d_forward.8} parent=5 // pred_fallthru
      _
  $region6: #{resnet_encoder3d_forward.8} parent=0 // loop_footer
    %s14 = sadd.s32 1, %s10
  $region7: #{resnet_encoder3d_forward.8} parent=0 // loop_footer_branch
    %9 = sbr.rel target = $region3
  $region8: #{resnet_encoder3d_forward.8} parent=0 // loop_exit
    _

// kernel: resnet_encoder3d_forward.10
$region0: #{resnet_encoder3d_forward.10}
  #allocation0 [shape = 'u32[]', space=smem, size = 0x4, offset = 0x4, fixed_abs, tag = 'smem constant byte address 0x4 - core index']
  #allocation1 [shape = 'u32[144,128]{1,0:T(1,128)}', space=vmem, size = 0x12000, scoped, tag = 'internal scratch']
  %s0 = inlined_call_operand.vmem [shape: bf16[12,9,1024], index: 0, kind: input, shape index: {}]
  %s1 = inlined_call_operand.vmem [shape: bf16[12,8,512], index: 1, kind: output, shape index: {}]
  %s2 = sld [smem:[#allocation0]]
  $region14: #{resnet_encoder3d_forward.10} parent=0
    _
  %s4 = ssub.s32 1, %s2
  %s5 = scalar_select 0, %s4, %s2
  // Predicated region
  $region2: #{resnet_encoder3d_forward.10} parent=0 // pred_check
    _
  $region3: #{resnet_encoder3d_forward.10} parent=0 // pred_check_branch
    %7 = sbr.rel (0) target = $region5
  $region4: #{resnet_encoder3d_forward.10} parent=0 // pred_region
    _
  $region5: #{resnet_encoder3d_forward.10} parent=0 // pred_fallthru
    _
  %v8 = vld [vmem:[%s0] sm:$0xff]
  %v9 = vld [vmem:[%s0 + $0x8] sm:$0xff]
  %v10 = vld [vmem:[%s0 + $0x10] sm:$0xff]
  %v11 = vld [vmem:[%s0 + $0x18] sm:$0xff]
  %v12 = vld [vmem:[%s0 + $0x20] sm:$0x11]
  %v13 = vld [vmem:[%s0 + $0x28] sm:$0x11]
  %v14 = vld [vmem:[%s0 + $0x40] sm:$0xff]
  %v15 = vld [vmem:[%s0 + $0x48] sm:$0xff]
  %v16 = vld [vmem:[%s0 + $0x50] sm:$0xff]
  %v17 = vld [vmem:[%s0 + $0x58] sm:$0xff]
  %v18 = vld [vmem:[%s0 + $0x60] sm:$0x11]
  %v19 = vld [vmem:[%s0 + $0x68] sm:$0x11]
  %v20 = vld [vmem:[%s0 + $0x80] sm:$0xff]
  %v21 = vld [vmem:[%s0 + $0x88] sm:$0xff]
  %v22 = vld [vmem:[%s0 + $0x90] sm:$0xff]
  %v23 = vld [vmem:[%s0 + $0x98] sm:$0xff]
  %v24 = vld [vmem:[%s0 + $0xa0] sm:$0x11]
  %v25 = vld [vmem:[%s0 + $0xa8] sm:$0x11]
  %v26 = vld [vmem:[%s0 + $0xc0] sm:$0xff]
  %v27 = vld [vmem:[%s0 + $0xc8] sm:$0xff]
  %v28 = vld [vmem:[%s0 + $0xd0] sm:$0xff]
  %v29 = vld [vmem:[%s0 + $0xd8] sm:$0xff]
  %v30 = vld [vmem:[%s0 + $0xe0] sm:$0x11]
  %v31 = vld [vmem:[%s0 + $0xe8] sm:$0x11]
  %v32 = vld [vmem:[%s0 + $0x100] sm:$0xff]
  %v33 = vld [vmem:[%s0 + $0x108] sm:$0xff]
  %v34 = vld [vmem:[%s0 + $0x110] sm:$0xff]
  %v35 = vld [vmem:[%s0 + $0x118] sm:$0xff]
  %v36 = vld [vmem:[%s0 + $0x120] sm:$0x11]
  %v37 = vld [vmem:[%s0 + $0x128] sm:$0x11]
  %v38 = vld [vmem:[%s0 + $0x140] sm:$0xff]
  %v39 = vld [vmem:[%s0 + $0x148] sm:$0xff]
  %v40 = vld [vmem:[%s0 + $0x150] sm:$0xff]
  %v41 = vld [vmem:[%s0 + $0x158] sm:$0xff]
  %v42 = vld [vmem:[%s0 + $0x160] sm:$0x11]
  %v43 = vld [vmem:[%s0 + $0x168] sm:$0x11]
  %v44 = vld [vmem:[%s0 + $0x180] sm:$0xff]
  %v45 = vld [vmem:[%s0 + $0x188] sm:$0xff]
  %v46 = vld [vmem:[%s0 + $0x190] sm:$0xff]
  %v47 = vld [vmem:[%s0 + $0x198] sm:$0xff]
  %v48 = vld [vmem:[%s0 + $0x1a0] sm:$0x11]
  %v49 = vld [vmem:[%s0 + $0x1a8] sm:$0x11]
  %v50 = vld [vmem:[%s0 + $0x1c0] sm:$0xff]
  %v51 = vld [vmem:[%s0 + $0x1c8] sm:$0xff]
  %v52 = vld [vmem:[%s0 + $0x1d0] sm:$0xff]
  %v53 = vld [vmem:[%s0 + $0x1d8] sm:$0xff]
  %v54 = vld [vmem:[%s0 + $0x1e0] sm:$0x11]
  %v55 = vld [vmem:[%s0 + $0x1e8] sm:$0x11]
  %v56 = vld [vmem:[%s0 + $0x200] sm:$0xff]
  %v57 = vld [vmem:[%s0 + $0x208] sm:$0xff]
  %v58 = vld [vmem:[%s0 + $0x210] sm:$0xff]
  %v59 = vld [vmem:[%s0 + $0x218] sm:$0xff]
  %v60 = vld [vmem:[%s0 + $0x220] sm:$0x11]
  %v61 = vld [vmem:[%s0 + $0x228] sm:$0x11]
  %v62 = vld [vmem:[%s0 + $0x240] sm:$0xff]
  %v63 = vld [vmem:[%s0 + $0x248] sm:$0xff]
  %v64 = vld [vmem:[%s0 + $0x250] sm:$0xff]
  %v65 = vld [vmem:[%s0 + $0x258] sm:$0xff]
  %v66 = vld [vmem:[%s0 + $0x260] sm:$0x11]
  %v67 = vld [vmem:[%s0 + $0x268] sm:$0x11]
  %v68 = vld [vmem:[%s0 + $0x280] sm:$0xff]
  %v69 = vld [vmem:[%s0 + $0x288] sm:$0xff]
  %v70 = vld [vmem:[%s0 + $0x290] sm:$0xff]
  %v71 = vld [vmem:[%s0 + $0x298] sm:$0xff]
  %v72 = vld [vmem:[%s0 + $0x2a0] sm:$0x11]
  %v73 = vld [vmem:[%s0 + $0x2a8] sm:$0x11]
  %v74 = vld [vmem:[%s0 + $0x2c0] sm:$0xff]
  %v75 = vld [vmem:[%s0 + $0x2c8] sm:$0xff]
  %v76 = vld [vmem:[%s0 + $0x2d0] sm:$0xff]
  %v77 = vld [vmem:[%s0 + $0x2d8] sm:$0xff]
  %v78 = vld [vmem:[%s0 + $0x2e0] sm:$0x11]
  %v79 = vld [vmem:[%s0 + $0x2e8] sm:$0x11]
  %v80 = vmax.bf16 %v8, %v10
  %v81 = vmax.bf16 %v9, %v11
  %v82 = vmax.bf16 %v14, %v16
  %v83 = vmax.bf16 %v15, %v17
  %v84 = vmax.bf16 %v20, %v22
  %v85 = vmax.bf16 %v21, %v23
  %v86 = vmax.bf16 %v26, %v28
  %v87 = vmax.bf16 %v27, %v29
  %v88 = vmax.bf16 %v32, %v34
  %v89 = vmax.bf16 %v33, %v35
  %v90 = vmax.bf16 %v38, %v40
  %v91 = vmax.bf16 %v39, %v41
  %v92 = vmax.bf16 %v44, %v46
  %v93 = vmax.bf16 %v45, %v47
  %v94 = vmax.bf16 %v50, %v52
  %v95 = vmax.bf16 %v51, %v53
  %v96 = vmax.bf16 %v56, %v58
  %v97 = vmax.bf16 %v57, %v59
  %v98 = vmax.bf16 %v62, %v64
  %v99 = vmax.bf16 %v63, %v65
  %v100 = vmax.bf16 %v68, %v70
  %v101 = vmax.bf16 %v69, %v71
  %v102 = vmax.bf16 %v74, %v76
  %v103 = vmax.bf16 %v75, %v77
  %vm104 = vsmask.f32 3328
  %vm105 = vsmask.f32 7440
  %vm106 = vmor %vm104, %vm105
  %v108 = vshrl.u32 %v8, 16
  %v110 = vrot.slane %v108, 4
  %v111 = vshll.u32 %v8, 16
  %v113 = vrot.slane %v111, 5
  %v114 = vor.u32 %v110, %v113
  %v115 = vrot.slane %v114, 4
  %v117 = vshll.u32 %v12, 16
  %v119 = vrot.slane %v117, 5
  %v120 = vsel %vm106, %v115, %v119
  %v122 = vshrl.u32 %v9, 16
  %v124 = vrot.slane %v122, 4
  %v125 = vshll.u32 %v9, 16
  %v127 = vrot.slane %v125, 5
  %v128 = vor.u32 %v124, %v127
  %v129 = vrot.slane %v128, 4
  %v131 = vshll.u32 %v13, 16
  %v133 = vrot.slane %v131, 5
  %v134 = vsel %vm106, %v129, %v133
  %v136 = vshrl.u32 %v14, 16
  %v138 = vrot.slane %v136, 4
  %v139 = vshll.u32 %v14, 16
  %v141 = vrot.slane %v139, 5
  %v142 = vor.u32 %v138, %v141
  %v143 = vrot.slane %v142, 4
  %v145 = vshll.u32 %v18, 16
  %v147 = vrot.slane %v145, 5
  %v148 = vsel %vm106, %v143, %v147
  %v150 = vshrl.u32 %v15, 16
  %v152 = vrot.slane %v150, 4
  %v153 = vshll.u32 %v15, 16
  %v155 = vrot.slane %v153, 5
  %v156 = vor.u32 %v152, %v155
  %v157 = vrot.slane %v156, 4
  %v159 = vshll.u32 %v19, 16
  %v161 = vrot.slane %v159, 5
  %v162 = vsel %vm106, %v157, %v161
  %v164 = vshrl.u32 %v20, 16
  %v166 = vrot.slane %v164, 4
  %v167 = vshll.u32 %v20, 16
  %v169 = vrot.slane %v167, 5
  %v170 = vor.u32 %v166, %v169
  %v171 = vrot.slane %v170, 4
  %v173 = vshll.u32 %v24, 16
  %v175 = vrot.slane %v173, 5
  %v176 = vsel %vm106, %v171, %v175
  %v178 = vshrl.u32 %v21, 16
  %v180 = vrot.slane %v178, 4
  %v181 = vshll.u32 %v21, 16
  %v183 = vrot.slane %v181, 5
  %v184 = vor.u32 %v180, %v183
  %v185 = vrot.slane %v184, 4
  %v187 = vshll.u32 %v25, 16
  %v189 = vrot.slane %v187, 5
  %v190 = vsel %vm106, %v185, %v189
  %v192 = vshrl.u32 %v26, 16
  %v194 = vrot.slane %v192, 4
  %v195 = vshll.u32 %v26, 16
  %v197 = vrot.slane %v195, 5
  %v198 = vor.u32 %v194, %v197
  %v199 = vrot.slane %v198, 4
  %v201 = vshll.u32 %v30, 16
  %v203 = vrot.slane %v201, 5
  %v204 = vsel %vm106, %v199, %v203
  %v206 = vshrl.u32 %v27, 16
  %v208 = vrot.slane %v206, 4
  %v209 = vshll.u32 %v27, 16
  %v211 = vrot.slane %v209, 5
  %v212 = vor.u32 %v208, %v211
  %v213 = vrot.slane %v212, 4
  %v215 = vshll.u32 %v31, 16
  %v217 = vrot.slane %v215, 5
  %v218 = vsel %vm106, %v213, %v217
  %v220 = vshrl.u32 %v32, 16
  %v222 = vrot.slane %v220, 4
  %v223 = vshll.u32 %v32, 16
  %v225 = vrot.slane %v223, 5
  %v226 = vor.u32 %v222, %v225
  %v227 = vrot.slane %v226, 4
  %v229 = vshll.u32 %v36, 16
  %v231 = vrot.slane %v229, 5
  %v232 = vsel %vm106, %v227, %v231
  %v234 = vshrl.u32 %v33, 16
  %v236 = vrot.slane %v234, 4
  %v237 = vshll.u32 %v33, 16
  %v239 = vrot.slane %v237, 5
  %v240 = vor.u32 %v236, %v239
  %v241 = vrot.slane %v240, 4
  %v243 = vshll.u32 %v37, 16
  %v245 = vrot.slane %v243, 5
  %v246 = vsel %vm106, %v241, %v245
  %v248 = vshrl.u32 %v38, 16
  %v250 = vrot.slane %v248, 4
  %v251 = vshll.u32 %v38, 16
  %v253 = vrot.slane %v251, 5
  %v254 = vor.u32 %v250, %v253
  %v255 = vrot.slane %v254, 4
  %v257 = vshll.u32 %v42, 16
  %v259 = vrot.slane %v257, 5
  %v260 = vsel %vm106, %v255, %v259
  %v262 = vshrl.u32 %v39, 16
  %v264 = vrot.slane %v262, 4
  %v265 = vshll.u32 %v39, 16
  %v267 = vrot.slane %v265, 5
  %v268 = vor.u32 %v264, %v267
  %v269 = vrot.slane %v268, 4
  %v271 = vshll.u32 %v43, 16
  %v273 = vrot.slane %v271, 5
  %v274 = vsel %vm106, %v269, %v273
  %v276 = vshrl.u32 %v44, 16
  %v278 = vrot.slane %v276, 4
  %v279 = vshll.u32 %v44, 16
  %v281 = vrot.slane %v279, 5
  %v282 = vor.u32 %v278, %v281
  %v283 = vrot.slane %v282, 4
  %v285 = vshll.u32 %v48, 16
  %v287 = vrot.slane %v285, 5
  %v288 = vsel %vm106, %v283, %v287
  %v290 = vshrl.u32 %v45, 16
  %v292 = vrot.slane %v290, 4
  %v293 = vshll.u32 %v45, 16
  %v295 = vrot.slane %v293, 5
  %v296 = vor.u32 %v292, %v295
  %v297 = vrot.slane %v296, 4
  %v299 = vshll.u32 %v49, 16
  %v301 = vrot.slane %v299, 5
  %v302 = vsel %vm106, %v297, %v301
  %v304 = vshrl.u32 %v50, 16
  %v306 = vrot.slane %v304, 4
  %v307 = vshll.u32 %v50, 16
  %v309 = vrot.slane %v307, 5
  %v310 = vor.u32 %v306, %v309
  %v311 = vrot.slane %v310, 4
  %v313 = vshll.u32 %v54, 16
  %v315 = vrot.slane %v313, 5
  %v316 = vsel %vm106, %v311, %v315
  %v318 = vshrl.u32 %v51, 16
  %v320 = vrot.slane %v318, 4
  %v321 = vshll.u32 %v51, 16
  %v323 = vrot.slane %v321, 5
  %v324 = vor.u32 %v320, %v323
  %v325 = vrot.slane %v324, 4
  %v327 = vshll.u32 %v55, 16
  %v329 = vrot.slane %v327, 5
  %v330 = vsel %vm106, %v325, %v329
  %v332 = vshrl.u32 %v56, 16
  %v334 = vrot.slane %v332, 4
  %v335 = vshll.u32 %v56, 16
  %v337 = vrot.slane %v335, 5
  %v338 = vor.u32 %v334, %v337
  %v339 = vrot.slane %v338, 4
  %v341 = vshll.u32 %v60, 16
  %v343 = vrot.slane %v341, 5
  %v344 = vsel %vm106, %v339, %v343
  %v346 = vshrl.u32 %v57, 16
  %v348 = vrot.slane %v346, 4
  %v349 = vshll.u32 %v57, 16
  %v351 = vrot.slane %v349, 5
  %v352 = vor.u32 %v348, %v351
  %v353 = vrot.slane %v352, 4
  %v355 = vshll.u32 %v61, 16
  %v357 = vrot.slane %v355, 5
  %v358 = vsel %vm106, %v353, %v357
  %v360 = vshrl.u32 %v62, 16
  %v362 = vrot.slane %v360, 4
  %v363 = vshll.u32 %v62, 16
  %v365 = vrot.slane %v363, 5
  %v366 = vor.u32 %v362, %v365
  %v367 = vrot.slane %v366, 4
  %v369 = vshll.u32 %v66, 16
  %v371 = vrot.slane %v369, 5
  %v372 = vsel %vm106, %v367, %v371
  %v374 = vshrl.u32 %v63, 16
  %v376 = vrot.slane %v374, 4
  %v377 = vshll.u32 %v63, 16
  %v379 = vrot.slane %v377, 5
  %v380 = vor.u32 %v376, %v379
  %v381 = vrot.slane %v380, 4
  %v383 = vshll.u32 %v67, 16
  %v385 = vrot.slane %v383, 5
  %v386 = vsel %vm106, %v381, %v385
  %v388 = vshrl.u32 %v68, 16
  %v390 = vrot.slane %v388, 4
  %v391 = vshll.u32 %v68, 16
  %v393 = vrot.slane %v391, 5
  %v394 = vor.u32 %v390, %v393
  %v395 = vrot.slane %v394, 4
  %v397 = vshll.u32 %v72, 16
  %v399 = vrot.slane %v397, 5
  %v400 = vsel %vm106, %v395, %v399
  %v402 = vshrl.u32 %v69, 16
  %v404 = vrot.slane %v402, 4
  %v405 = vshll.u32 %v69, 16
  %v407 = vrot.slane %v405, 5
  %v408 = vor.u32 %v404, %v407
  %v409 = vrot.slane %v408, 4
  %v411 = vshll.u32 %v73, 16
  %v413 = vrot.slane %v411, 5
  %v414 = vsel %vm106, %v409, %v413
  %v416 = vshrl.u32 %v74, 16
  %v418 = vrot.slane %v416, 4
  %v419 = vshll.u32 %v74, 16
  %v421 = vrot.slane %v419, 5
  %v422 = vor.u32 %v418, %v421
  %v423 = vrot.slane %v422, 4
  %v425 = vshll.u32 %v78, 16
  %v427 = vrot.slane %v425, 5
  %v428 = vsel %vm106, %v423, %v427
  %v430 = vshrl.u32 %v75, 16
  %v432 = vrot.slane %v430, 4
  %v433 = vshll.u32 %v75, 16
  %v435 = vrot.slane %v433, 5
  %v436 = vor.u32 %v432, %v435
  %v437 = vrot.slane %v436, 4
  %v439 = vshll.u32 %v79, 16
  %v441 = vrot.slane %v439, 5
  %v442 = vsel %vm106, %v437, %v441
  %v467 = vmax.bf16 %v80, %v120
  %v468 = vmax.bf16 %v81, %v134
  %v469 = vmax.bf16 %v82, %v148
  %v470 = vmax.bf16 %v83, %v162
  %v471 = vmax.bf16 %v84, %v176
  %v472 = vmax.bf16 %v85, %v190
  %v473 = vmax.bf16 %v86, %v204
  %v474 = vmax.bf16 %v87, %v218
  %v475 = vmax.bf16 %v88, %v232
  %v476 = vmax.bf16 %v89, %v246
  %v477 = vmax.bf16 %v90, %v260
  %v478 = vmax.bf16 %v91, %v274
  %v479 = vmax.bf16 %v92, %v288
  %v480 = vmax.bf16 %v93, %v302
  %v481 = vmax.bf16 %v94, %v316
  %v482 = vmax.bf16 %v95, %v330
  %v483 = vmax.bf16 %v96, %v344
  %v484 = vmax.bf16 %v97, %v358
  %v485 = vmax.bf16 %v98, %v372
  %v486 = vmax.bf16 %v99, %v386
  %v487 = vmax.bf16 %v100, %v400
  %v488 = vmax.bf16 %v101, %v414
  %v489 = vmax.bf16 %v102, %v428
  %v490 = vmax.bf16 %v103, %v442
  %491 = vst [vmem:[%s1] sm:$0xff] %v467
  %492 = vst [vmem:[%s1 + $0x8] sm:$0xff] %v468
  %493 = vst [vmem:[%s1 + $0x10] sm:$0xff] %v469
  %494 = vst [vmem:[%s1 + $0x18] sm:$0xff] %v470
  %495 = vst [vmem:[%s1 + $0x20] sm:$0xff] %v471
  %496 = vst [vmem:[%s1 + $0x28] sm:$0xff] %v472
  %497 = vst [vmem:[%s1 + $0x30] sm:$0xff] %v473
  %498 = vst [vmem:[%s1 + $0x38] sm:$0xff] %v474
  %499 = vst [vmem:[%s1 + $0x40] sm:$0xff] %v475
  %500 = vst [vmem:[%s1 + $0x48] sm:$0xff] %v476
  %501 = vst [vmem:[%s1 + $0x50] sm:$0xff] %v477
  %502 = vst [vmem:[%s1 + $0x58] sm:$0xff] %v478
  %503 = vst [vmem:[%s1 + $0x60] sm:$0xff] %v479
  %504 = vst [vmem:[%s1 + $0x68] sm:$0xff] %v480
  %505 = vst [vmem:[%s1 + $0x70] sm:$0xff] %v481
  %506 = vst [vmem:[%s1 + $0x78] sm:$0xff] %v482
  %507 = vst [vmem:[%s1 + $0x80] sm:$0xff] %v483
  %508 = vst [vmem:[%s1 + $0x88] sm:$0xff] %v484
  %509 = vst [vmem:[%s1 + $0x90] sm:$0xff] %v485
  %510 = vst [vmem:[%s1 + $0x98] sm:$0xff] %v486
  %511 = vst [vmem:[%s1 + $0xa0] sm:$0xff] %v487
  %512 = vst [vmem:[%s1 + $0xa8] sm:$0xff] %v488
  %513 = vst [vmem:[%s1 + $0xb0] sm:$0xff] %v489
  %514 = vst [vmem:[%s1 + $0xb8] sm:$0xff] %v490
  // Predicated region
  $region6: #{resnet_encoder3d_forward.10} parent=0 // pred_check
    _
  $region7: #{resnet_encoder3d_forward.10} parent=0 // pred_check_branch
    %516 = sbr.rel (0) target = $region9
  $region8: #{resnet_encoder3d_forward.10} parent=0 // pred_region
    _
  $region9: #{resnet_encoder3d_forward.10} parent=0 // pred_fallthru
    _
  // Predicated region
  $region10: #{resnet_encoder3d_forward.10} parent=0 // pred_check
    _
  $region11: #{resnet_encoder3d_forward.10} parent=0 // pred_check_branch
    %518 = sbr.rel (0) target = $region13
  $region12: #{resnet_encoder3d_forward.10} parent=0 // pred_region
    _
  $region13: #{resnet_encoder3d_forward.10} parent=0 // pred_fallthru
    _

// kernel: resnet_encoder3d_forward.9
$region0: #{resnet_encoder3d_forward.9}
  #allocation0 [shape = 'u32[]', space=smem, size = 0x4, offset = 0x4, fixed_abs, tag = 'smem constant byte address 0x4 - core index']
  #allocation1 [shape = 'u32[144,128]{1,0:T(1,128)}', space=vmem, size = 0x12000, scoped, tag = 'internal scratch']
  %s0 = inlined_call_operand.vmem [shape: bf16[216,9,128], index: 0, kind: input, shape index: {}]
  %s1 = inlined_call_operand.vmem [shape: bf16[216,8,64], index: 1, kind: output, shape index: {}]
  %s2 = sld [smem:[#allocation0]]
  $region14: #{resnet_encoder3d_forward.9} parent=0
    _
  %s4 = ssub.s32 1, %s2
  %s5 = scalar_select 0, %s4, %s2
  // Predicated region
  $region2: #{resnet_encoder3d_forward.9} parent=0 // pred_check
    _
  $region3: #{resnet_encoder3d_forward.9} parent=0 // pred_check_branch
    %7 = sbr.rel (0) target = $region5
  $region4: #{resnet_encoder3d_forward.9} parent=0 // pred_region
    _
  $region5: #{resnet_encoder3d_forward.9} parent=0 // pred_fallthru
    _
  %v8 = vld [vmem:[%s0] sm:$0xf]
  %v9 = vld [vmem:[%s0 + $0x4] sm:$0x1]
  %v10 = vld [vmem:[%s0 + $0x8] sm:$0xf]
  %v11 = vld [vmem:[%s0 + $0xc] sm:$0x1]
  %v12 = vld [vmem:[%s0 + $0x10] sm:$0xf]
  %v13 = vld [vmem:[%s0 + $0x14] sm:$0x1]
  %v14 = vld [vmem:[%s0 + $0x18] sm:$0xf]
  %v15 = vld [vmem:[%s0 + $0x1c] sm:$0x1]
  %v16 = vld [vmem:[%s0 + $0x20] sm:$0xf]
  %v17 = vld [vmem:[%s0 + $0x24] sm:$0x1]
  %v18 = vld [vmem:[%s0 + $0x28] sm:$0xf]
  %v19 = vld [vmem:[%s0 + $0x2c] sm:$0x1]
  %v20 = vld [vmem:[%s0 + $0x30] sm:$0xf]
  %v21 = vld [vmem:[%s0 + $0x34] sm:$0x1]
  %v22 = vld [vmem:[%s0 + $0x38] sm:$0xf]
  %v23 = vld [vmem:[%s0 + $0x3c] sm:$0x1]
  %v24 = vld [vmem:[%s0 + $0x40] sm:$0xf]
  %v25 = vld [vmem:[%s0 + $0x44] sm:$0x1]
  %v26 = vld [vmem:[%s0 + $0x48] sm:$0xf]
  %v27 = vld [vmem:[%s0 + $0x4c] sm:$0x1]
  %v28 = vld [vmem:[%s0 + $0x50] sm:$0xf]
  %v29 = vld [vmem:[%s0 + $0x54] sm:$0x1]
  %v30 = vld [vmem:[%s0 + $0x58] sm:$0xf]
  %v31 = vld [vmem:[%s0 + $0x5c] sm:$0x1]
  %v32 = vld [vmem:[%s0 + $0x60] sm:$0xf]
  %v33 = vld [vmem:[%s0 + $0x64] sm:$0x1]
  %v34 = vld [vmem:[%s0 + $0x68] sm:$0xf]
  %v35 = vld [vmem:[%s0 + $0x6c] sm:$0x1]
  %v36 = vld [vmem:[%s0 + $0x70] sm:$0xf]
  %v37 = vld [vmem:[%s0 + $0x74] sm:$0x1]
  %v38 = vld [vmem:[%s0 + $0x78] sm:$0xf]
  %v39 = vld [vmem:[%s0 + $0x7c] sm:$0x1]
  %v40 = vld [vmem:[%s0 + $0x80] sm:$0xf]
  %v41 = vld [vmem:[%s0 + $0x84] sm:$0x1]
  %v42 = vld [vmem:[%s0 + $0x88] sm:$0xf]
  %v43 = vld [vmem:[%s0 + $0x8c] sm:$0x1]
  %v44 = vld [vmem:[%s0 + $0x90] sm:$0xf]
  %v45 = vld [vmem:[%s0 + $0x94] sm:$0x1]
  %v46 = vld [vmem:[%s0 + $0x98] sm:$0xf]
  %v47 = vld [vmem:[%s0 + $0x9c] sm:$0x1]
  %v48 = vld [vmem:[%s0 + $0xa0] sm:$0xf]
  %v49 = vld [vmem:[%s0 + $0xa4] sm:$0x1]
  %v50 = vld [vmem:[%s0 + $0xa8] sm:$0xf]
  %v51 = vld [vmem:[%s0 + $0xac] sm:$0x1]
  %v52 = vld [vmem:[%s0 + $0xb0] sm:$0xf]
  %v53 = vld [vmem:[%s0 + $0xb4] sm:$0x1]
  %v54 = vld [vmem:[%s0 + $0xb8] sm:$0xf]
  %v55 = vld [vmem:[%s0 + $0xbc] sm:$0x1]
  %v56 = vld [vmem:[%s0 + $0xc0] sm:$0xf]
  %v57 = vld [vmem:[%s0 + $0xc4] sm:$0x1]
  %v58 = vld [vmem:[%s0 + $0xc8] sm:$0xf]
  %v59 = vld [vmem:[%s0 + $0xcc] sm:$0x1]
  %v60 = vld [vmem:[%s0 + $0xd0] sm:$0xf]
  %v61 = vld [vmem:[%s0 + $0xd4] sm:$0x1]
  %v62 = vld [vmem:[%s0 + $0xd8] sm:$0xf]
  %v63 = vld [vmem:[%s0 + $0xdc] sm:$0x1]
  %v64 = vld [vmem:[%s0 + $0xe0] sm:$0xf]
  %v65 = vld [vmem:[%s0 + $0xe4] sm:$0x1]
  %v66 = vld [vmem:[%s0 + $0xe8] sm:$0xf]
  %v67 = vld [vmem:[%s0 + $0xec] sm:$0x1]
  %v68 = vld [vmem:[%s0 + $0xf0] sm:$0xf]
  %v69 = vld [vmem:[%s0 + $0xf4] sm:$0x1]
  %v70 = vld [vmem:[%s0 + $0xf8] sm:$0xf]
  %v71 = vld [vmem:[%s0 + $0xfc] sm:$0x1]
  %v72 = vld [vmem:[%s0 + $0x100] sm:$0xf]
  %v73 = vld [vmem:[%s0 + $0x104] sm:$0x1]
  %v74 = vld [vmem:[%s0 + $0x108] sm:$0xf]
  %v75 = vld [vmem:[%s0 + $0x10c] sm:$0x1]
  %v76 = vld [vmem:[%s0 + $0x110] sm:$0xf]
  %v77 = vld [vmem:[%s0 + $0x114] sm:$0x1]
  %v78 = vld [vmem:[%s0 + $0x118] sm:$0xf]
  %v79 = vld [vmem:[%s0 + $0x11c] sm:$0x1]
  %v80 = vld [vmem:[%s0 + $0x120] sm:$0xf]
  %v81 = vld [vmem:[%s0 + $0x124] sm:$0x1]
  %v82 = vld [vmem:[%s0 + $0x128] sm:$0xf]
  %v83 = vld [vmem:[%s0 + $0x12c] sm:$0x1]
  %v84 = vld [vmem:[%s0 + $0x130] sm:$0xf]
  %v85 = vld [vmem:[%s0 + $0x134] sm:$0x1]
  %v86 = vld [vmem:[%s0 + $0x138] sm:$0xf]
  %v87 = vld [vmem:[%s0 + $0x13c] sm:$0x1]
  %v88 = vld [vmem:[%s0 + $0x140] sm:$0xf]
  %v89 = vld [vmem:[%s0 + $0x144] sm:$0x1]
  %v90 = vld [vmem:[%s0 + $0x148] sm:$0xf]
  %v91 = vld [vmem:[%s0 + $0x14c] sm:$0x1]
  %v92 = vld [vmem:[%s0 + $0x150] sm:$0xf]
  %v93 = vld [vmem:[%s0 + $0x154] sm:$0x1]
  %v94 = vld [vmem:[%s0 + $0x158] sm:$0xf]
  %v95 = vld [vmem:[%s0 + $0x15c] sm:$0x1]
  %v96 = vld [vmem:[%s0 + $0x160] sm:$0xf]
  %v97 = vld [vmem:[%s0 + $0x164] sm:$0x1]
  %v98 = vld [vmem:[%s0 + $0x168] sm:$0xf]
  %v99 = vld [vmem:[%s0 + $0x16c] sm:$0x1]
  %v100 = vld [vmem:[%s0 + $0x170] sm:$0xf]
  %v101 = vld [vmem:[%s0 + $0x174] sm:$0x1]
  %v102 = vld [vmem:[%s0 + $0x178] sm:$0xf]
  %v103 = vld [vmem:[%s0 + $0x17c] sm:$0x1]
  %v104 = vld [vmem:[%s0 + $0x180] sm:$0xf]
  %v105 = vld [vmem:[%s0 + $0x184] sm:$0x1]
  %v106 = vld [vmem:[%s0 + $0x188] sm:$0xf]
  %v107 = vld [vmem:[%s0 + $0x18c] sm:$0x1]
  %v108 = vld [vmem:[%s0 + $0x190] sm:$0xf]
  %v109 = vld [vmem:[%s0 + $0x194] sm:$0x1]
  %v110 = vld [vmem:[%s0 + $0x198] sm:$0xf]
  %v111 = vld [vmem:[%s0 + $0x19c] sm:$0x1]
  %v112 = vld [vmem:[%s0 + $0x1a0] sm:$0xf]
  %v113 = vld [vmem:[%s0 + $0x1a4] sm:$0x1]
  %v114 = vld [vmem:[%s0 + $0x1a8] sm:$0xf]
  %v115 = vld [vmem:[%s0 + $0x1ac] sm:$0x1]
  %v116 = vld [vmem:[%s0 + $0x1b0] sm:$0xf]
  %v117 = vld [vmem:[%s0 + $0x1b4] sm:$0x1]
  %v118 = vld [vmem:[%s0 + $0x1b8] sm:$0xf]
  %v119 = vld [vmem:[%s0 + $0x1bc] sm:$0x1]
  %v120 = vld [vmem:[%s0 + $0x1c0] sm:$0xf]
  %v121 = vld [vmem:[%s0 + $0x1c4] sm:$0x1]
  %v122 = vld [vmem:[%s0 + $0x1c8] sm:$0xf]
  %v123 = vld [vmem:[%s0 + $0x1cc] sm:$0x1]
  %v124 = vld [vmem:[%s0 + $0x1d0] sm:$0xf]
  %v125 = vld [vmem:[%s0 + $0x1d4] sm:$0x1]
  %v126 = vld [vmem:[%s0 + $0x1d8] sm:$0xf]
  %v127 = vld [vmem:[%s0 + $0x1dc] sm:$0x1]
  %v128 = vld [vmem:[%s0 + $0x1e0] sm:$0xf]
  %v129 = vld [vmem:[%s0 + $0x1e4] sm:$0x1]
  %v130 = vld [vmem:[%s0 + $0x1e8] sm:$0xf]
  %v131 = vld [vmem:[%s0 + $0x1ec] sm:$0x1]
  %v132 = vld [vmem:[%s0 + $0x1f0] sm:$0xf]
  %v133 = vld [vmem:[%s0 + $0x1f4] sm:$0x1]
  %v134 = vld [vmem:[%s0 + $0x1f8] sm:$0xf]
  %v135 = vld [vmem:[%s0 + $0x1fc] sm:$0x1]
  %v136 = vld [vmem:[%s0 + $0x200] sm:$0xf]
  %v137 = vld [vmem:[%s0 + $0x204] sm:$0x1]
  %v138 = vld [vmem:[%s0 + $0x208] sm:$0xf]
  %v139 = vld [vmem:[%s0 + $0x20c] sm:$0x1]
  %v140 = vld [vmem:[%s0 + $0x210] sm:$0xf]
  %v141 = vld [vmem:[%s0 + $0x214] sm:$0x1]
  %v142 = vld [vmem:[%s0 + $0x218] sm:$0xf]
  %v143 = vld [vmem:[%s0 + $0x21c] sm:$0x1]
  %v144 = vld [vmem:[%s0 + $0x220] sm:$0xf]
  %v145 = vld [vmem:[%s0 + $0x224] sm:$0x1]
  %v146 = vld [vmem:[%s0 + $0x228] sm:$0xf]
  %v147 = vld [vmem:[%s0 + $0x22c] sm:$0x1]
  %v148 = vld [vmem:[%s0 + $0x230] sm:$0xf]
  %v149 = vld [vmem:[%s0 + $0x234] sm:$0x1]
  %v150 = vld [vmem:[%s0 + $0x238] sm:$0xf]
  %v151 = vld [vmem:[%s0 + $0x23c] sm:$0x1]
  %v152 = vld [vmem:[%s0 + $0x240] sm:$0xf]
  %v153 = vld [vmem:[%s0 + $0x244] sm:$0x1]
  %v154 = vld [vmem:[%s0 + $0x248] sm:$0xf]
  %v155 = vld [vmem:[%s0 + $0x24c] sm:$0x1]
  %v156 = vld [vmem:[%s0 + $0x250] sm:$0xf]
  %v157 = vld [vmem:[%s0 + $0x254] sm:$0x1]
  %v158 = vld [vmem:[%s0 + $0x258] sm:$0xf]
  %v159 = vld [vmem:[%s0 + $0x25c] sm:$0x1]
  %v160 = vld [vmem:[%s0 + $0x260] sm:$0xf]
  %v161 = vld [vmem:[%s0 + $0x264] sm:$0x1]
  %v162 = vld [vmem:[%s0 + $0x268] sm:$0xf]
  %v163 = vld [vmem:[%s0 + $0x26c] sm:$0x1]
  %v164 = vld [vmem:[%s0 + $0x270] sm:$0xf]
  %v165 = vld [vmem:[%s0 + $0x274] sm:$0x1]
  %v166 = vld [vmem:[%s0 + $0x278] sm:$0xf]
  %v167 = vld [vmem:[%s0 + $0x27c] sm:$0x1]
  %v168 = vld [vmem:[%s0 + $0x280] sm:$0xf]
  %v169 = vld [vmem:[%s0 + $0x284] sm:$0x1]
  %v170 = vld [vmem:[%s0 + $0x288] sm:$0xf]
  %v171 = vld [vmem:[%s0 + $0x28c] sm:$0x1]
  %v172 = vld [vmem:[%s0 + $0x290] sm:$0xf]
  %v173 = vld [vmem:[%s0 + $0x294] sm:$0x1]
  %v174 = vld [vmem:[%s0 + $0x298] sm:$0xf]
  %v175 = vld [vmem:[%s0 + $0x29c] sm:$0x1]
  %v176 = vld [vmem:[%s0 + $0x2a0] sm:$0xf]
  %v177 = vld [vmem:[%s0 + $0x2a4] sm:$0x1]
  %v178 = vld [vmem:[%s0 + $0x2a8] sm:$0xf]
  %v179 = vld [vmem:[%s0 + $0x2ac] sm:$0x1]
  %v180 = vld [vmem:[%s0 + $0x2b0] sm:$0xf]
  %v181 = vld [vmem:[%s0 + $0x2b4] sm:$0x1]
  %v182 = vld [vmem:[%s0 + $0x2b8] sm:$0xf]
  %v183 = vld [vmem:[%s0 + $0x2bc] sm:$0x1]
  %v184 = vld [vmem:[%s0 + $0x2c0] sm:$0xf]
  %v185 = vld [vmem:[%s0 + $0x2c4] sm:$0x1]
  %v186 = vld [vmem:[%s0 + $0x2c8] sm:$0xf]
  %v187 = vld [vmem:[%s0 + $0x2cc] sm:$0x1]
  %v188 = vld [vmem:[%s0 + $0x2d0] sm:$0xf]
  %v189 = vld [vmem:[%s0 + $0x2d4] sm:$0x1]
  %v190 = vld [vmem:[%s0 + $0x2d8] sm:$0xf]
  %v191 = vld [vmem:[%s0 + $0x2dc] sm:$0x1]
  %v192 = vld [vmem:[%s0 + $0x2e0] sm:$0xf]
  %v193 = vld [vmem:[%s0 + $0x2e4] sm:$0x1]
  %v194 = vld [vmem:[%s0 + $0x2e8] sm:$0xf]
  %v195 = vld [vmem:[%s0 + $0x2ec] sm:$0x1]
  %v196 = vld [vmem:[%s0 + $0x2f0] sm:$0xf]
  %v197 = vld [vmem:[%s0 + $0x2f4] sm:$0x1]
  %v198 = vld [vmem:[%s0 + $0x2f8] sm:$0xf]
  %v199 = vld [vmem:[%s0 + $0x2fc] sm:$0x1]
  %v200 = vld [vmem:[%s0 + $0x300] sm:$0xf]
  %v201 = vld [vmem:[%s0 + $0x304] sm:$0x1]
  %v202 = vld [vmem:[%s0 + $0x308] sm:$0xf]
  %v203 = vld [vmem:[%s0 + $0x30c] sm:$0x1]
  %v204 = vld [vmem:[%s0 + $0x310] sm:$0xf]
  %v205 = vld [vmem:[%s0 + $0x314] sm:$0x1]
  %v206 = vld [vmem:[%s0 + $0x318] sm:$0xf]
  %v207 = vld [vmem:[%s0 + $0x31c] sm:$0x1]
  %v208 = vld [vmem:[%s0 + $0x320] sm:$0xf]
  %v209 = vld [vmem:[%s0 + $0x324] sm:$0x1]
  %v210 = vld [vmem:[%s0 + $0x328] sm:$0xf]
  %v211 = vld [vmem:[%s0 + $0x32c] sm:$0x1]
  %v212 = vld [vmem:[%s0 + $0x330] sm:$0xf]
  %v213 = vld [vmem:[%s0 + $0x334] sm:$0x1]
  %v214 = vld [vmem:[%s0 + $0x338] sm:$0xf]
  %v215 = vld [vmem:[%s0 + $0x33c] sm:$0x1]
  %v216 = vld [vmem:[%s0 + $0x340] sm:$0xf]
  %v217 = vld [vmem:[%s0 + $0x344] sm:$0x1]
  %v218 = vld [vmem:[%s0 + $0x348] sm:$0xf]
  %v219 = vld [vmem:[%s0 + $0x34c] sm:$0x1]
  %v220 = vld [vmem:[%s0 + $0x350] sm:$0xf]
  %v221 = vld [vmem:[%s0 + $0x354] sm:$0x1]
  %v222 = vld [vmem:[%s0 + $0x358] sm:$0xf]
  %v223 = vld [vmem:[%s0 + $0x35c] sm:$0x1]
  %v224 = vld [vmem:[%s0 + $0x360] sm:$0xf]
  %v225 = vld [vmem:[%s0 + $0x364] sm:$0x1]
  %v226 = vld [vmem:[%s0 + $0x368] sm:$0xf]
  %v227 = vld [vmem:[%s0 + $0x36c] sm:$0x1]
  %v228 = vld [vmem:[%s0 + $0x370] sm:$0xf]
  %v229 = vld [vmem:[%s0 + $0x374] sm:$0x1]
  %v230 = vld [vmem:[%s0 + $0x378] sm:$0xf]
  %v231 = vld [vmem:[%s0 + $0x37c] sm:$0x1]
  %v232 = vld [vmem:[%s0 + $0x380] sm:$0xf]
  %v233 = vld [vmem:[%s0 + $0x384] sm:$0x1]
  %v234 = vld [vmem:[%s0 + $0x388] sm:$0xf]
  %v235 = vld [vmem:[%s0 + $0x38c] sm:$0x1]
  %v236 = vld [vmem:[%s0 + $0x390] sm:$0xf]
  %v237 = vld [vmem:[%s0 + $0x394] sm:$0x1]
  %v238 = vld [vmem:[%s0 + $0x398] sm:$0xf]
  %v239 = vld [vmem:[%s0 + $0x39c] sm:$0x1]
  %v240 = vld [vmem:[%s0 + $0x3a0] sm:$0xf]
  %v241 = vld [vmem:[%s0 + $0x3a4] sm:$0x1]
  %v242 = vld [vmem:[%s0 + $0x3a8] sm:$0xf]
  %v243 = vld [vmem:[%s0 + $0x3ac] sm:$0x1]
  %v244 = vld [vmem:[%s0 + $0x3b0] sm:$0xf]
  %v245 = vld [vmem:[%s0 + $0x3b4] sm:$0x1]
  %v246 = vld [vmem:[%s0 + $0x3b8] sm:$0xf]
  %v247 = vld [vmem:[%s0 + $0x3bc] sm:$0x1]
  %v248 = vld [vmem:[%s0 + $0x3c0] sm:$0xf]
  %v249 = vld [vmem:[%s0 + $0x3c4] sm:$0x1]
  %v250 = vld [vmem:[%s0 + $0x3c8] sm:$0xf]
  %v251 = vld [vmem:[%s0 + $0x3cc] sm:$0x1]
  %v252 = vld [vmem:[%s0 + $0x3d0] sm:$0xf]
  %v253 = vld [vmem:[%s0 + $0x3d4] sm:$0x1]
  %v254 = vld [vmem:[%s0 + $0x3d8] sm:$0xf]
  %v255 = vld [vmem:[%s0 + $0x3dc] sm:$0x1]
  %v256 = vld [vmem:[%s0 + $0x3e0] sm:$0xf]
  %v257 = vld [vmem:[%s0 + $0x3e4] sm:$0x1]
  %v258 = vld [vmem:[%s0 + $0x3e8] sm:$0xf]
  %v259 = vld [vmem:[%s0 + $0x3ec] sm:$0x1]
  %v260 = vld [vmem:[%s0 + $0x3f0] sm:$0xf]
  %v261 = vld [vmem:[%s0 + $0x3f4] sm:$0x1]
  %v262 = vld [vmem:[%s0 + $0x3f8] sm:$0xf]
  %v263 = vld [vmem:[%s0 + $0x3fc] sm:$0x1]
  %v264 = vld [vmem:[%s0 + $0x400] sm:$0xf]
  %v265 = vld [vmem:[%s0 + $0x404] sm:$0x1]
  %v266 = vld [vmem:[%s0 + $0x408] sm:$0xf]
  %v267 = vld [vmem:[%s0 + $0x40c] sm:$0x1]
  %v268 = vld [vmem:[%s0 + $0x410] sm:$0xf]
  %v269 = vld [vmem:[%s0 + $0x414] sm:$0x1]
  %v270 = vld [vmem:[%s0 + $0x418] sm:$0xf]
  %v271 = vld [vmem:[%s0 + $0x41c] sm:$0x1]
  %v272 = vld [vmem:[%s0 + $0x420] sm:$0xf]
  %v273 = vld [vmem:[%s0 + $0x424] sm:$0x1]
  %v274 = vld [vmem:[%s0 + $0x428] sm:$0xf]
  %v275 = vld [vmem:[%s0 + $0x42c] sm:$0x1]
  %v276 = vld [vmem:[%s0 + $0x430] sm:$0xf]
  %v277 = vld [vmem:[%s0 + $0x434] sm:$0x1]
  %v278 = vld [vmem:[%s0 + $0x438] sm:$0xf]
  %v279 = vld [vmem:[%s0 + $0x43c] sm:$0x1]
  %v280 = vld [vmem:[%s0 + $0x440] sm:$0xf]
  %v281 = vld [vmem:[%s0 + $0x444] sm:$0x1]
  %v282 = vld [vmem:[%s0 + $0x448] sm:$0xf]
  %v283 = vld [vmem:[%s0 + $0x44c] sm:$0x1]
  %v284 = vld [vmem:[%s0 + $0x450] sm:$0xf]
  %v285 = vld [vmem:[%s0 + $0x454] sm:$0x1]
  %v286 = vld [vmem:[%s0 + $0x458] sm:$0xf]
  %v287 = vld [vmem:[%s0 + $0x45c] sm:$0x1]
  %v288 = vld [vmem:[%s0 + $0x460] sm:$0xf]
  %v289 = vld [vmem:[%s0 + $0x464] sm:$0x1]
  %v290 = vld [vmem:[%s0 + $0x468] sm:$0xf]
  %v291 = vld [vmem:[%s0 + $0x46c] sm:$0x1]
  %v292 = vld [vmem:[%s0 + $0x470] sm:$0xf]
  %v293 = vld [vmem:[%s0 + $0x474] sm:$0x1]
  %v294 = vld [vmem:[%s0 + $0x478] sm:$0xf]
  %v295 = vld [vmem:[%s0 + $0x47c] sm:$0x1]
  %v296 = vld [vmem:[%s0 + $0x480] sm:$0xf]
  %v297 = vld [vmem:[%s0 + $0x484] sm:$0x1]
  %v298 = vld [vmem:[%s0 + $0x488] sm:$0xf]
  %v299 = vld [vmem:[%s0 + $0x48c] sm:$0x1]
  %v300 = vld [vmem:[%s0 + $0x490] sm:$0xf]
  %v301 = vld [vmem:[%s0 + $0x494] sm:$0x1]
  %v302 = vld [vmem:[%s0 + $0x498] sm:$0xf]
  %v303 = vld [vmem:[%s0 + $0x49c] sm:$0x1]
  %v304 = vld [vmem:[%s0 + $0x4a0] sm:$0xf]
  %v305 = vld [vmem:[%s0 + $0x4a4] sm:$0x1]
  %v306 = vld [vmem:[%s0 + $0x4a8] sm:$0xf]
  %v307 = vld [vmem:[%s0 + $0x4ac] sm:$0x1]
  %v308 = vld [vmem:[%s0 + $0x4b0] sm:$0xf]
  %v309 = vld [vmem:[%s0 + $0x4b4] sm:$0x1]
  %v310 = vld [vmem:[%s0 + $0x4b8] sm:$0xf]
  %v311 = vld [vmem:[%s0 + $0x4bc] sm:$0x1]
  %v312 = vld [vmem:[%s0 + $0x4c0] sm:$0xf]
  %v313 = vld [vmem:[%s0 + $0x4c4] sm:$0x1]
  %v314 = vld [vmem:[%s0 + $0x4c8] sm:$0xf]
  %v315 = vld [vmem:[%s0 + $0x4cc] sm:$0x1]
  %v316 = vld [vmem:[%s0 + $0x4d0] sm:$0xf]
  %v317 = vld [vmem:[%s0 + $0x4d4] sm:$0x1]
  %v318 = vld [vmem:[%s0 + $0x4d8] sm:$0xf]
  %v319 = vld [vmem:[%s0 + $0x4dc] sm:$0x1]
  %v320 = vld [vmem:[%s0 + $0x4e0] sm:$0xf]
  %v321 = vld [vmem:[%s0 + $0x4e4] sm:$0x1]
  %v322 = vld [vmem:[%s0 + $0x4e8] sm:$0xf]
  %v323 = vld [vmem:[%s0 + $0x4ec] sm:$0x1]
  %v324 = vld [vmem:[%s0 + $0x4f0] sm:$0xf]
  %v325 = vld [vmem:[%s0 + $0x4f4] sm:$0x1]
  %v326 = vld [vmem:[%s0 + $0x4f8] sm:$0xf]
  %v327 = vld [vmem:[%s0 + $0x4fc] sm:$0x1]
  %v328 = vld [vmem:[%s0 + $0x500] sm:$0xf]
  %v329 = vld [vmem:[%s0 + $0x504] sm:$0x1]
  %v330 = vld [vmem:[%s0 + $0x508] sm:$0xf]
  %v331 = vld [vmem:[%s0 + $0x50c] sm:$0x1]
  %v332 = vld [vmem:[%s0 + $0x510] sm:$0xf]
  %v333 = vld [vmem:[%s0 + $0x514] sm:$0x1]
  %v334 = vld [vmem:[%s0 + $0x518] sm:$0xf]
  %v335 = vld [vmem:[%s0 + $0x51c] sm:$0x1]
  %v336 = vld [vmem:[%s0 + $0x520] sm:$0xf]
  %v337 = vld [vmem:[%s0 + $0x524] sm:$0x1]
  %v338 = vld [vmem:[%s0 + $0x528] sm:$0xf]
  %v339 = vld [vmem:[%s0 + $0x52c] sm:$0x1]
  %v340 = vld [vmem:[%s0 + $0x530] sm:$0xf]
  %v341 = vld [vmem:[%s0 + $0x534] sm:$0x1]
  %v342 = vld [vmem:[%s0 + $0x538] sm:$0xf]
  %v343 = vld [vmem:[%s0 + $0x53c] sm:$0x1]
  %v344 = vld [vmem:[%s0 + $0x540] sm:$0xf]
  %v345 = vld [vmem:[%s0 + $0x544] sm:$0x1]
  %v346 = vld [vmem:[%s0 + $0x548] sm:$0xf]
  %v347 = vld [vmem:[%s0 + $0x54c] sm:$0x1]
  %v348 = vld [vmem:[%s0 + $0x550] sm:$0xf]
  %v349 = vld [vmem:[%s0 + $0x554] sm:$0x1]
  %v350 = vld [vmem:[%s0 + $0x558] sm:$0xf]
  %v351 = vld [vmem:[%s0 + $0x55c] sm:$0x1]
  %v352 = vld [vmem:[%s0 + $0x560] sm:$0xf]
  %v353 = vld [vmem:[%s0 + $0x564] sm:$0x1]
  %v354 = vld [vmem:[%s0 + $0x568] sm:$0xf]
  %v355 = vld [vmem:[%s0 + $0x56c] sm:$0x1]
  %v356 = vld [vmem:[%s0 + $0x570] sm:$0xf]
  %v357 = vld [vmem:[%s0 + $0x574] sm:$0x1]
  %v358 = vld [vmem:[%s0 + $0x578] sm:$0xf]
  %v359 = vld [vmem:[%s0 + $0x57c] sm:$0x1]
  %v360 = vld [vmem:[%s0 + $0x580] sm:$0xf]
  %v361 = vld [vmem:[%s0 + $0x584] sm:$0x1]
  %v362 = vld [vmem:[%s0 + $0x588] sm:$0xf]
  %v363 = vld [vmem:[%s0 + $0x58c] sm:$0x1]
  %v364 = vld [vmem:[%s0 + $0x590] sm:$0xf]
  %v365 = vld [vmem:[%s0 + $0x594] sm:$0x1]
  %v366 = vld [vmem:[%s0 + $0x598] sm:$0xf]
  %v367 = vld [vmem:[%s0 + $0x59c] sm:$0x1]
  %v368 = vld [vmem:[%s0 + $0x5a0] sm:$0xf]
  %v369 = vld [vmem:[%s0 + $0x5a4] sm:$0x1]
  %v370 = vld [vmem:[%s0 + $0x5a8] sm:$0xf]
  %v371 = vld [vmem:[%s0 + $0x5ac] sm:$0x1]
  %v372 = vld [vmem:[%s0 + $0x5b0] sm:$0xf]
  %v373 = vld [vmem:[%s0 + $0x5b4] sm:$0x1]
  %v374 = vld [vmem:[%s0 + $0x5b8] sm:$0xf]
  %v375 = vld [vmem:[%s0 + $0x5bc] sm:$0x1]
  %v376 = vld [vmem:[%s0 + $0x5c0] sm:$0xf]
  %v377 = vld [vmem:[%s0 + $0x5c4] sm:$0x1]
  %v378 = vld [vmem:[%s0 + $0x5c8] sm:$0xf]
  %v379 = vld [vmem:[%s0 + $0x5cc] sm:$0x1]
  %v380 = vld [vmem:[%s0 + $0x5d0] sm:$0xf]
  %v381 = vld [vmem:[%s0 + $0x5d4] sm:$0x1]
  %v382 = vld [vmem:[%s0 + $0x5d8] sm:$0xf]
  %v383 = vld [vmem:[%s0 + $0x5dc] sm:$0x1]
  %v384 = vld [vmem:[%s0 + $0x5e0] sm:$0xf]
  %v385 = vld [vmem:[%s0 + $0x5e4] sm:$0x1]
  %v386 = vld [vmem:[%s0 + $0x5e8] sm:$0xf]
  %v387 = vld [vmem:[%s0 + $0x5ec] sm:$0x1]
  %v388 = vld [vmem:[%s0 + $0x5f0] sm:$0xf]
  %v389 = vld [vmem:[%s0 + $0x5f4] sm:$0x1]
  %v390 = vld [vmem:[%s0 + $0x5f8] sm:$0xf]
  %v391 = vld [vmem:[%s0 + $0x5fc] sm:$0x1]
  %v392 = vld [vmem:[%s0 + $0x600] sm:$0xf]
  %v393 = vld [vmem:[%s0 + $0x604] sm:$0x1]
  %v394 = vld [vmem:[%s0 + $0x608] sm:$0xf]
  %v395 = vld [vmem:[%s0 + $0x60c] sm:$0x1]
  %v396 = vld [vmem:[%s0 + $0x610] sm:$0xf]
  %v397 = vld [vmem:[%s0 + $0x614] sm:$0x1]
  %v398 = vld [vmem:[%s0 + $0x618] sm:$0xf]
  %v399 = vld [vmem:[%s0 + $0x61c] sm:$0x1]
  %v400 = vld [vmem:[%s0 + $0x620] sm:$0xf]
  %v401 = vld [vmem:[%s0 + $0x624] sm:$0x1]
  %v402 = vld [vmem:[%s0 + $0x628] sm:$0xf]
  %v403 = vld [vmem:[%s0 + $0x62c] sm:$0x1]
  %v404 = vld [vmem:[%s0 + $0x630] sm:$0xf]
  %v405 = vld [vmem:[%s0 + $0x634] sm:$0x1]
  %v406 = vld [vmem:[%s0 + $0x638] sm:$0xf]
  %v407 = vld [vmem:[%s0 + $0x63c] sm:$0x1]
  %v408 = vld [vmem:[%s0 + $0x640] sm:$0xf]
  %v409 = vld [vmem:[%s0 + $0x644] sm:$0x1]
  %v410 = vld [vmem:[%s0 + $0x648] sm:$0xf]
  %v411 = vld [vmem:[%s0 + $0x64c] sm:$0x1]
  %v412 = vld [vmem:[%s0 + $0x650] sm:$0xf]
  %v413 = vld [vmem:[%s0 + $0x654] sm:$0x1]
  %v414 = vld [vmem:[%s0 + $0x658] sm:$0xf]
  %v415 = vld [vmem:[%s0 + $0x65c] sm:$0x1]
  %v416 = vld [vmem:[%s0 + $0x660] sm:$0xf]
  %v417 = vld [vmem:[%s0 + $0x664] sm:$0x1]
  %v418 = vld [vmem:[%s0 + $0x668] sm:$0xf]
  %v419 = vld [vmem:[%s0 + $0x66c] sm:$0x1]
  %v420 = vld [vmem:[%s0 + $0x670] sm:$0xf]
  %v421 = vld [vmem:[%s0 + $0x674] sm:$0x1]
  %v422 = vld [vmem:[%s0 + $0x678] sm:$0xf]
  %v423 = vld [vmem:[%s0 + $0x67c] sm:$0x1]
  %v424 = vld [vmem:[%s0 + $0x680] sm:$0xf]
  %v425 = vld [vmem:[%s0 + $0x684] sm:$0x1]
  %v426 = vld [vmem:[%s0 + $0x688] sm:$0xf]
  %v427 = vld [vmem:[%s0 + $0x68c] sm:$0x1]
  %v428 = vld [vmem:[%s0 + $0x690] sm:$0xf]
  %v429 = vld [vmem:[%s0 + $0x694] sm:$0x1]
  %v430 = vld [vmem:[%s0 + $0x698] sm:$0xf]
  %v431 = vld [vmem:[%s0 + $0x69c] sm:$0x1]
  %v432 = vld [vmem:[%s0 + $0x6a0] sm:$0xf]
  %v433 = vld [vmem:[%s0 + $0x6a4] sm:$0x1]
  %v434 = vld [vmem:[%s0 + $0x6a8] sm:$0xf]
  %v435 = vld [vmem:[%s0 + $0x6ac] sm:$0x1]
  %v436 = vld [vmem:[%s0 + $0x6b0] sm:$0xf]
  %v437 = vld [vmem:[%s0 + $0x6b4] sm:$0x1]
  %v438 = vld [vmem:[%s0 + $0x6b8] sm:$0xf]
  %v439 = vld [vmem:[%s0 + $0x6bc] sm:$0x1]
  %656 = vrot.lane.b32.xlu0 %v8, 64
  %v657 = vpop.permute.xlu0 %656
  %658 = vrot.lane.b32.xlu0 %v10, 64
  %v659 = vpop.permute.xlu0 %658
  %660 = vrot.lane.b32.xlu0 %v12, 64
  %v661 = vpop.permute.xlu0 %660
  %662 = vrot.lane.b32.xlu0 %v14, 64
  %v663 = vpop.permute.xlu0 %662
  %664 = vrot.lane.b32.xlu0 %v16, 64
  %v665 = vpop.permute.xlu0 %664
  %666 = vrot.lane.b32.xlu0 %v18, 64
  %v667 = vpop.permute.xlu0 %666
  %668 = vrot.lane.b32.xlu0 %v20, 64
  %v669 = vpop.permute.xlu0 %668
  %670 = vrot.lane.b32.xlu0 %v22, 64
  %v671 = vpop.permute.xlu0 %670
  %672 = vrot.lane.b32.xlu0 %v24, 64
  %v673 = vpop.permute.xlu0 %672
  %674 = vrot.lane.b32.xlu0 %v26, 64
  %v675 = vpop.permute.xlu0 %674
  %676 = vrot.lane.b32.xlu0 %v28, 64
  %v677 = vpop.permute.xlu0 %676
  %678 = vrot.lane.b32.xlu0 %v30, 64
  %v679 = vpop.permute.xlu0 %678
  %680 = vrot.lane.b32.xlu0 %v32, 64
  %v681 = vpop.permute.xlu0 %680
  %682 = vrot.lane.b32.xlu0 %v34, 64
  %v683 = vpop.permute.xlu0 %682
  %684 = vrot.lane.b32.xlu0 %v36, 64
  %v685 = vpop.permute.xlu0 %684
  %686 = vrot.lane.b32.xlu0 %v38, 64
  %v687 = vpop.permute.xlu0 %686
  %688 = vrot.lane.b32.xlu0 %v40, 64
  %v689 = vpop.permute.xlu0 %688
  %690 = vrot.lane.b32.xlu0 %v42, 64
  %v691 = vpop.permute.xlu0 %690
  %692 = vrot.lane.b32.xlu0 %v44, 64
  %v693 = vpop.permute.xlu0 %692
  %694 = vrot.lane.b32.xlu0 %v46, 64
  %v695 = vpop.permute.xlu0 %694
  %696 = vrot.lane.b32.xlu0 %v48, 64
  %v697 = vpop.permute.xlu0 %696
  %698 = vrot.lane.b32.xlu0 %v50, 64
  %v699 = vpop.permute.xlu0 %698
  %700 = vrot.lane.b32.xlu0 %v52, 64
  %v701 = vpop.permute.xlu0 %700
  %702 = vrot.lane.b32.xlu0 %v54, 64
  %v703 = vpop.permute.xlu0 %702
  %704 = vrot.lane.b32.xlu0 %v56, 64
  %v705 = vpop.permute.xlu0 %704
  %706 = vrot.lane.b32.xlu0 %v58, 64
  %v707 = vpop.permute.xlu0 %706
  %708 = vrot.lane.b32.xlu0 %v60, 64
  %v709 = vpop.permute.xlu0 %708
  %710 = vrot.lane.b32.xlu0 %v62, 64
  %v711 = vpop.permute.xlu0 %710
  %712 = vrot.lane.b32.xlu0 %v64, 64
  %v713 = vpop.permute.xlu0 %712
  %714 = vrot.lane.b32.xlu0 %v66, 64
  %v715 = vpop.permute.xlu0 %714
  %716 = vrot.lane.b32.xlu0 %v68, 64
  %v717 = vpop.permute.xlu0 %716
  %718 = vrot.lane.b32.xlu0 %v70, 64
  %v719 = vpop.permute.xlu0 %718
  %720 = vrot.lane.b32.xlu0 %v72, 64
  %v721 = vpop.permute.xlu0 %720
  %722 = vrot.lane.b32.xlu0 %v74, 64
  %v723 = vpop.permute.xlu0 %722
  %724 = vrot.lane.b32.xlu0 %v76, 64
  %v725 = vpop.permute.xlu0 %724
  %726 = vrot.lane.b32.xlu0 %v78, 64
  %v727 = vpop.permute.xlu0 %726
  %728 = vrot.lane.b32.xlu0 %v80, 64
  %v729 = vpop.permute.xlu0 %728
  %730 = vrot.lane.b32.xlu0 %v82, 64
  %v731 = vpop.permute.xlu0 %730
  %732 = vrot.lane.b32.xlu0 %v84, 64
  %v733 = vpop.permute.xlu0 %732
  %734 = vrot.lane.b32.xlu0 %v86, 64
  %v735 = vpop.permute.xlu0 %734
  %736 = vrot.lane.b32.xlu0 %v88, 64
  %v737 = vpop.permute.xlu0 %736
  %738 = vrot.lane.b32.xlu0 %v90, 64
  %v739 = vpop.permute.xlu0 %738
  %740 = vrot.lane.b32.xlu0 %v92, 64
  %v741 = vpop.permute.xlu0 %740
  %742 = vrot.lane.b32.xlu0 %v94, 64
  %v743 = vpop.permute.xlu0 %742
  %744 = vrot.lane.b32.xlu0 %v96, 64
  %v745 = vpop.permute.xlu0 %744
  %746 = vrot.lane.b32.xlu0 %v98, 64
  %v747 = vpop.permute.xlu0 %746
  %748 = vrot.lane.b32.xlu0 %v100, 64
  %v749 = vpop.permute.xlu0 %748
  %750 = vrot.lane.b32.xlu0 %v102, 64
  %v751 = vpop.permute.xlu0 %750
  %752 = vrot.lane.b32.xlu0 %v104, 64
  %v753 = vpop.permute.xlu0 %752
  %754 = vrot.lane.b32.xlu0 %v106, 64
  %v755 = vpop.permute.xlu0 %754
  %756 = vrot.lane.b32.xlu0 %v108, 64
  %v757 = vpop.permute.xlu0 %756
  %758 = vrot.lane.b32.xlu0 %v110, 64
  %v759 = vpop.permute.xlu0 %758
  %760 = vrot.lane.b32.xlu0 %v112, 64
  %v761 = vpop.permute.xlu0 %760
  %762 = vrot.lane.b32.xlu0 %v114, 64
  %v763 = vpop.permute.xlu0 %762
  %764 = vrot.lane.b32.xlu0 %v116, 64
  %v765 = vpop.permute.xlu0 %764
  %766 = vrot.lane.b32.xlu0 %v118, 64
  %v767 = vpop.permute.xlu0 %766
  %768 = vrot.lane.b32.xlu0 %v120, 64
  %v769 = vpop.permute.xlu0 %768
  %770 = vrot.lane.b32.xlu0 %v122, 64
  %v771 = vpop.permute.xlu0 %770
  %772 = vrot.lane.b32.xlu0 %v124, 64
  %v773 = vpop.permute.xlu0 %772
  %774 = vrot.lane.b32.xlu0 %v126, 64
  %v775 = vpop.permute.xlu0 %774
  %776 = vrot.lane.b32.xlu0 %v128, 64
  %v777 = vpop.permute.xlu0 %776
  %778 = vrot.lane.b32.xlu0 %v130, 64
  %v779 = vpop.permute.xlu0 %778
  %780 = vrot.lane.b32.xlu0 %v132, 64
  %v781 = vpop.permute.xlu0 %780
  %782 = vrot.lane.b32.xlu0 %v134, 64
  %v783 = vpop.permute.xlu0 %782
  %784 = vrot.lane.b32.xlu0 %v136, 64
  %v785 = vpop.permute.xlu0 %784
  %786 = vrot.lane.b32.xlu0 %v138, 64
  %v787 = vpop.permute.xlu0 %786
  %788 = vrot.lane.b32.xlu0 %v140, 64
  %v789 = vpop.permute.xlu0 %788
  %790 = vrot.lane.b32.xlu0 %v142, 64
  %v791 = vpop.permute.xlu0 %790
  %792 = vrot.lane.b32.xlu0 %v144, 64
  %v793 = vpop.permute.xlu0 %792
  %794 = vrot.lane.b32.xlu0 %v146, 64
  %v795 = vpop.permute.xlu0 %794
  %796 = vrot.lane.b32.xlu0 %v148, 64
  %v797 = vpop.permute.xlu0 %796
  %798 = vrot.lane.b32.xlu0 %v150, 64
  %v799 = vpop.permute.xlu0 %798
  %800 = vrot.lane.b32.xlu0 %v152, 64
  %v801 = vpop.permute.xlu0 %800
  %802 = vrot.lane.b32.xlu0 %v154, 64
  %v803 = vpop.permute.xlu0 %802
  %804 = vrot.lane.b32.xlu0 %v156, 64
  %v805 = vpop.permute.xlu0 %804
  %806 = vrot.lane.b32.xlu0 %v158, 64
  %v807 = vpop.permute.xlu0 %806
  %808 = vrot.lane.b32.xlu0 %v160, 64
  %v809 = vpop.permute.xlu0 %808
  %810 = vrot.lane.b32.xlu0 %v162, 64
  %v811 = vpop.permute.xlu0 %810
  %812 = vrot.lane.b32.xlu0 %v164, 64
  %v813 = vpop.permute.xlu0 %812
  %814 = vrot.lane.b32.xlu0 %v166, 64
  %v815 = vpop.permute.xlu0 %814
  %816 = vrot.lane.b32.xlu0 %v168, 64
  %v817 = vpop.permute.xlu0 %816
  %818 = vrot.lane.b32.xlu0 %v170, 64
  %v819 = vpop.permute.xlu0 %818
  %820 = vrot.lane.b32.xlu0 %v172, 64
  %v821 = vpop.permute.xlu0 %820
  %822 = vrot.lane.b32.xlu0 %v174, 64
  %v823 = vpop.permute.xlu0 %822
  %824 = vrot.lane.b32.xlu0 %v176, 64
  %v825 = vpop.permute.xlu0 %824
  %826 = vrot.lane.b32.xlu0 %v178, 64
  %v827 = vpop.permute.xlu0 %826
  %828 = vrot.lane.b32.xlu0 %v180, 64
  %v829 = vpop.permute.xlu0 %828
  %830 = vrot.lane.b32.xlu0 %v182, 64
  %v831 = vpop.permute.xlu0 %830
  %832 = vrot.lane.b32.xlu0 %v184, 64
  %v833 = vpop.permute.xlu0 %832
  %834 = vrot.lane.b32.xlu0 %v186, 64
  %v835 = vpop.permute.xlu0 %834
  %836 = vrot.lane.b32.xlu0 %v188, 64
  %v837 = vpop.permute.xlu0 %836
  %838 = vrot.lane.b32.xlu0 %v190, 64
  %v839 = vpop.permute.xlu0 %838
  %840 = vrot.lane.b32.xlu0 %v192, 64
  %v841 = vpop.permute.xlu0 %840
  %842 = vrot.lane.b32.xlu0 %v194, 64
  %v843 = vpop.permute.xlu0 %842
  %844 = vrot.lane.b32.xlu0 %v196, 64
  %v845 = vpop.permute.xlu0 %844
  %846 = vrot.lane.b32.xlu0 %v198, 64
  %v847 = vpop.permute.xlu0 %846
  %848 = vrot.lane.b32.xlu0 %v200, 64
  %v849 = vpop.permute.xlu0 %848
  %850 = vrot.lane.b32.xlu0 %v202, 64
  %v851 = vpop.permute.xlu0 %850
  %852 = vrot.lane.b32.xlu0 %v204, 64
  %v853 = vpop.permute.xlu0 %852
  %854 = vrot.lane.b32.xlu0 %v206, 64
  %v855 = vpop.permute.xlu0 %854
  %856 = vrot.lane.b32.xlu0 %v208, 64
  %v857 = vpop.permute.xlu0 %856
  %858 = vrot.lane.b32.xlu0 %v210, 64
  %v859 = vpop.permute.xlu0 %858
  %860 = vrot.lane.b32.xlu0 %v212, 64
  %v861 = vpop.permute.xlu0 %860
  %862 = vrot.lane.b32.xlu0 %v214, 64
  %v863 = vpop.permute.xlu0 %862
  %864 = vrot.lane.b32.xlu0 %v216, 64
  %v865 = vpop.permute.xlu0 %864
  %866 = vrot.lane.b32.xlu0 %v218, 64
  %v867 = vpop.permute.xlu0 %866
  %868 = vrot.lane.b32.xlu0 %v220, 64
  %v869 = vpop.permute.xlu0 %868
  %870 = vrot.lane.b32.xlu0 %v222, 64
  %v871 = vpop.permute.xlu0 %870
  %872 = vrot.lane.b32.xlu0 %v224, 64
  %v873 = vpop.permute.xlu0 %872
  %874 = vrot.lane.b32.xlu0 %v226, 64
  %v875 = vpop.permute.xlu0 %874
  %876 = vrot.lane.b32.xlu0 %v228, 64
  %v877 = vpop.permute.xlu0 %876
  %878 = vrot.lane.b32.xlu0 %v230, 64
  %v879 = vpop.permute.xlu0 %878
  %880 = vrot.lane.b32.xlu0 %v232, 64
  %v881 = vpop.permute.xlu0 %880
  %882 = vrot.lane.b32.xlu0 %v234, 64
  %v883 = vpop.permute.xlu0 %882
  %884 = vrot.lane.b32.xlu0 %v236, 64
  %v885 = vpop.permute.xlu0 %884
  %886 = vrot.lane.b32.xlu0 %v238, 64
  %v887 = vpop.permute.xlu0 %886
  %888 = vrot.lane.b32.xlu0 %v240, 64
  %v889 = vpop.permute.xlu0 %888
  %890 = vrot.lane.b32.xlu0 %v242, 64
  %v891 = vpop.permute.xlu0 %890
  %892 = vrot.lane.b32.xlu0 %v244, 64
  %v893 = vpop.permute.xlu0 %892
  %894 = vrot.lane.b32.xlu0 %v246, 64
  %v895 = vpop.permute.xlu0 %894
  %896 = vrot.lane.b32.xlu0 %v248, 64
  %v897 = vpop.permute.xlu0 %896
  %898 = vrot.lane.b32.xlu0 %v250, 64
  %v899 = vpop.permute.xlu0 %898
  %900 = vrot.lane.b32.xlu0 %v252, 64
  %v901 = vpop.permute.xlu0 %900
  %902 = vrot.lane.b32.xlu0 %v254, 64
  %v903 = vpop.permute.xlu0 %902
  %904 = vrot.lane.b32.xlu0 %v256, 64
  %v905 = vpop.permute.xlu0 %904
  %906 = vrot.lane.b32.xlu0 %v258, 64
  %v907 = vpop.permute.xlu0 %906
  %908 = vrot.lane.b32.xlu0 %v260, 64
  %v909 = vpop.permute.xlu0 %908
  %910 = vrot.lane.b32.xlu0 %v262, 64
  %v911 = vpop.permute.xlu0 %910
  %912 = vrot.lane.b32.xlu0 %v264, 64
  %v913 = vpop.permute.xlu0 %912
  %914 = vrot.lane.b32.xlu0 %v266, 64
  %v915 = vpop.permute.xlu0 %914
  %916 = vrot.lane.b32.xlu0 %v268, 64
  %v917 = vpop.permute.xlu0 %916
  %918 = vrot.lane.b32.xlu0 %v270, 64
  %v919 = vpop.permute.xlu0 %918
  %920 = vrot.lane.b32.xlu0 %v272, 64
  %v921 = vpop.permute.xlu0 %920
  %922 = vrot.lane.b32.xlu0 %v274, 64
  %v923 = vpop.permute.xlu0 %922
  %924 = vrot.lane.b32.xlu0 %v276, 64
  %v925 = vpop.permute.xlu0 %924
  %926 = vrot.lane.b32.xlu0 %v278, 64
  %v927 = vpop.permute.xlu0 %926
  %928 = vrot.lane.b32.xlu0 %v280, 64
  %v929 = vpop.permute.xlu0 %928
  %930 = vrot.lane.b32.xlu0 %v282, 64
  %v931 = vpop.permute.xlu0 %930
  %932 = vrot.lane.b32.xlu0 %v284, 64
  %v933 = vpop.permute.xlu0 %932
  %934 = vrot.lane.b32.xlu0 %v286, 64
  %v935 = vpop.permute.xlu0 %934
  %936 = vrot.lane.b32.xlu0 %v288, 64
  %v937 = vpop.permute.xlu0 %936
  %938 = vrot.lane.b32.xlu0 %v290, 64
  %v939 = vpop.permute.xlu0 %938
  %940 = vrot.lane.b32.xlu0 %v292, 64
  %v941 = vpop.permute.xlu0 %940
  %942 = vrot.lane.b32.xlu0 %v294, 64
  %v943 = vpop.permute.xlu0 %942
  %944 = vrot.lane.b32.xlu0 %v296, 64
  %v945 = vpop.permute.xlu0 %944
  %946 = vrot.lane.b32.xlu0 %v298, 64
  %v947 = vpop.permute.xlu0 %946
  %948 = vrot.lane.b32.xlu0 %v300, 64
  %v949 = vpop.permute.xlu0 %948
  %950 = vrot.lane.b32.xlu0 %v302, 64
  %v951 = vpop.permute.xlu0 %950
  %952 = vrot.lane.b32.xlu0 %v304, 64
  %v953 = vpop.permute.xlu0 %952
  %954 = vrot.lane.b32.xlu0 %v306, 64
  %v955 = vpop.permute.xlu0 %954
  %956 = vrot.lane.b32.xlu0 %v308, 64
  %v957 = vpop.permute.xlu0 %956
  %958 = vrot.lane.b32.xlu0 %v310, 64
  %v959 = vpop.permute.xlu0 %958
  %960 = vrot.lane.b32.xlu0 %v312, 64
  %v961 = vpop.permute.xlu0 %960
  %962 = vrot.lane.b32.xlu0 %v314, 64
  %v963 = vpop.permute.xlu0 %962
  %964 = vrot.lane.b32.xlu0 %v316, 64
  %v965 = vpop.permute.xlu0 %964
  %966 = vrot.lane.b32.xlu0 %v318, 64
  %v967 = vpop.permute.xlu0 %966
  %968 = vrot.lane.b32.xlu0 %v320, 64
  %v969 = vpop.permute.xlu0 %968
  %970 = vrot.lane.b32.xlu0 %v322, 64
  %v971 = vpop.permute.xlu0 %970
  %972 = vrot.lane.b32.xlu0 %v324, 64
  %v973 = vpop.permute.xlu0 %972
  %974 = vrot.lane.b32.xlu0 %v326, 64
  %v975 = vpop.permute.xlu0 %974
  %976 = vrot.lane.b32.xlu0 %v328, 64
  %v977 = vpop.permute.xlu0 %976
  %978 = vrot.lane.b32.xlu0 %v330, 64
  %v979 = vpop.permute.xlu0 %978
  %980 = vrot.lane.b32.xlu0 %v332, 64
  %v981 = vpop.permute.xlu0 %980
  %982 = vrot.lane.b32.xlu0 %v334, 64
  %v983 = vpop.permute.xlu0 %982
  %984 = vrot.lane.b32.xlu0 %v336, 64
  %v985 = vpop.permute.xlu0 %984
  %986 = vrot.lane.b32.xlu0 %v338, 64
  %v987 = vpop.permute.xlu0 %986
  %988 = vrot.lane.b32.xlu0 %v340, 64
  %v989 = vpop.permute.xlu0 %988
  %990 = vrot.lane.b32.xlu0 %v342, 64
  %v991 = vpop.permute.xlu0 %990
  %992 = vrot.lane.b32.xlu0 %v344, 64
  %v993 = vpop.permute.xlu0 %992
  %994 = vrot.lane.b32.xlu0 %v346, 64
  %v995 = vpop.permute.xlu0 %994
  %996 = vrot.lane.b32.xlu0 %v348, 64
  %v997 = vpop.permute.xlu0 %996
  %998 = vrot.lane.b32.xlu0 %v350, 64
  %v999 = vpop.permute.xlu0 %998
  %1000 = vrot.lane.b32.xlu0 %v352, 64
  %v1001 = vpop.permute.xlu0 %1000
  %1002 = vrot.lane.b32.xlu0 %v354, 64
  %v1003 = vpop.permute.xlu0 %1002
  %1004 = vrot.lane.b32.xlu0 %v356, 64
  %v1005 = vpop.permute.xlu0 %1004
  %1006 = vrot.lane.b32.xlu0 %v358, 64
  %v1007 = vpop.permute.xlu0 %1006
  %1008 = vrot.lane.b32.xlu0 %v360, 64
  %v1009 = vpop.permute.xlu0 %1008
  %1010 = vrot.lane.b32.xlu0 %v362, 64
  %v1011 = vpop.permute.xlu0 %1010
  %1012 = vrot.lane.b32.xlu0 %v364, 64
  %v1013 = vpop.permute.xlu0 %1012
  %1014 = vrot.lane.b32.xlu0 %v366, 64
  %v1015 = vpop.permute.xlu0 %1014
  %1016 = vrot.lane.b32.xlu0 %v368, 64
  %v1017 = vpop.permute.xlu0 %1016
  %1018 = vrot.lane.b32.xlu0 %v370, 64
  %v1019 = vpop.permute.xlu0 %1018
  %1020 = vrot.lane.b32.xlu0 %v372, 64
  %v1021 = vpop.permute.xlu0 %1020
  %1022 = vrot.lane.b32.xlu0 %v374, 64
  %v1023 = vpop.permute.xlu0 %1022
  %1024 = vrot.lane.b32.xlu0 %v376, 64
  %v1025 = vpop.permute.xlu0 %1024
  %1026 = vrot.lane.b32.xlu0 %v378, 64
  %v1027 = vpop.permute.xlu0 %1026
  %1028 = vrot.lane.b32.xlu0 %v380, 64
  %v1029 = vpop.permute.xlu0 %1028
  %1030 = vrot.lane.b32.xlu0 %v382, 64
  %v1031 = vpop.permute.xlu0 %1030
  %1032 = vrot.lane.b32.xlu0 %v384, 64
  %v1033 = vpop.permute.xlu0 %1032
  %1034 = vrot.lane.b32.xlu0 %v386, 64
  %v1035 = vpop.permute.xlu0 %1034
  %1036 = vrot.lane.b32.xlu0 %v388, 64
  %v1037 = vpop.permute.xlu0 %1036
  %1038 = vrot.lane.b32.xlu0 %v390, 64
  %v1039 = vpop.permute.xlu0 %1038
  %1040 = vrot.lane.b32.xlu0 %v392, 64
  %v1041 = vpop.permute.xlu0 %1040
  %1042 = vrot.lane.b32.xlu0 %v394, 64
  %v1043 = vpop.permute.xlu0 %1042
  %1044 = vrot.lane.b32.xlu0 %v396, 64
  %v1045 = vpop.permute.xlu0 %1044
  %1046 = vrot.lane.b32.xlu0 %v398, 64
  %v1047 = vpop.permute.xlu0 %1046
  %1048 = vrot.lane.b32.xlu0 %v400, 64
  %v1049 = vpop.permute.xlu0 %1048
  %1050 = vrot.lane.b32.xlu0 %v402, 64
  %v1051 = vpop.permute.xlu0 %1050
  %1052 = vrot.lane.b32.xlu0 %v404, 64
  %v1053 = vpop.permute.xlu0 %1052
  %1054 = vrot.lane.b32.xlu0 %v406, 64
  %v1055 = vpop.permute.xlu0 %1054
  %1056 = vrot.lane.b32.xlu0 %v408, 64
  %v1057 = vpop.permute.xlu0 %1056
  %1058 = vrot.lane.b32.xlu0 %v410, 64
  %v1059 = vpop.permute.xlu0 %1058
  %1060 = vrot.lane.b32.xlu0 %v412, 64
  %v1061 = vpop.permute.xlu0 %1060
  %1062 = vrot.lane.b32.xlu0 %v414, 64
  %v1063 = vpop.permute.xlu0 %1062
  %1064 = vrot.lane.b32.xlu0 %v416, 64
  %v1065 = vpop.permute.xlu0 %1064
  %1066 = vrot.lane.b32.xlu0 %v418, 64
  %v1067 = vpop.permute.xlu0 %1066
  %1068 = vrot.lane.b32.xlu0 %v420, 64
  %v1069 = vpop.permute.xlu0 %1068
  %1070 = vrot.lane.b32.xlu0 %v422, 64
  %v1071 = vpop.permute.xlu0 %1070
  %1072 = vrot.lane.b32.xlu0 %v424, 64
  %v1073 = vpop.permute.xlu0 %1072
  %1074 = vrot.lane.b32.xlu0 %v426, 64
  %v1075 = vpop.permute.xlu0 %1074
  %1076 = vrot.lane.b32.xlu0 %v428, 64
  %v1077 = vpop.permute.xlu0 %1076
  %1078 = vrot.lane.b32.xlu0 %v430, 64
  %v1079 = vpop.permute.xlu0 %1078
  %1080 = vrot.lane.b32.xlu0 %v432, 64
  %v1081 = vpop.permute.xlu0 %1080
  %1082 = vrot.lane.b32.xlu0 %v434, 64
  %v1083 = vpop.permute.xlu0 %1082
  %1084 = vrot.lane.b32.xlu0 %v436, 64
  %v1085 = vpop.permute.xlu0 %1084
  %1086 = vrot.lane.b32.xlu0 %v438, 64
  %v1087 = vpop.permute.xlu0 %1086
  %v1304 = vmax.bf16 %v8, %v657
  %v1305 = vmax.bf16 %v10, %v659
  %v1306 = vmax.bf16 %v12, %v661
  %v1307 = vmax.bf16 %v14, %v663
  %v1308 = vmax.bf16 %v16, %v665
  %v1309 = vmax.bf16 %v18, %v667
  %v1310 = vmax.bf16 %v20, %v669
  %v1311 = vmax.bf16 %v22, %v671
  %v1312 = vmax.bf16 %v24, %v673
  %v1313 = vmax.bf16 %v26, %v675
  %v1314 = vmax.bf16 %v28, %v677
  %v1315 = vmax.bf16 %v30, %v679
  %v1316 = vmax.bf16 %v32, %v681
  %v1317 = vmax.bf16 %v34, %v683
  %v1318 = vmax.bf16 %v36, %v685
  %v1319 = vmax.bf16 %v38, %v687
  %v1320 = vmax.bf16 %v40, %v689
  %v1321 = vmax.bf16 %v42, %v691
  %v1322 = vmax.bf16 %v44, %v693
  %v1323 = vmax.bf16 %v46, %v695
  %v1324 = vmax.bf16 %v48, %v697
  %v1325 = vmax.bf16 %v50, %v699
  %v1326 = vmax.bf16 %v52, %v701
  %v1327 = vmax.bf16 %v54, %v703
  %v1328 = vmax.bf16 %v56, %v705
  %v1329 = vmax.bf16 %v58, %v707
  %v1330 = vmax.bf16 %v60, %v709
  %v1331 = vmax.bf16 %v62, %v711
  %v1332 = vmax.bf16 %v64, %v713
  %v1333 = vmax.bf16 %v66, %v715
  %v1334 = vmax.bf16 %v68, %v717
  %v1335 = vmax.bf16 %v70, %v719
  %v1336 = vmax.bf16 %v72, %v721
  %v1337 = vmax.bf16 %v74, %v723
  %v1338 = vmax.bf16 %v76, %v725
  %v1339 = vmax.bf16 %v78, %v727
  %v1340 = vmax.bf16 %v80, %v729
  %v1341 = vmax.bf16 %v82, %v731
  %v1342 = vmax.bf16 %v84, %v733
  %v1343 = vmax.bf16 %v86, %v735
  %v1344 = vmax.bf16 %v88, %v737
  %v1345 = vmax.bf16 %v90, %v739
  %v1346 = vmax.bf16 %v92, %v741
  %v1347 = vmax.bf16 %v94, %v743
  %v1348 = vmax.bf16 %v96, %v745
  %v1349 = vmax.bf16 %v98, %v747
  %v1350 = vmax.bf16 %v100, %v749
  %v1351 = vmax.bf16 %v102, %v751
  %v1352 = vmax.bf16 %v104, %v753
  %v1353 = vmax.bf16 %v106, %v755
  %v1354 = vmax.bf16 %v108, %v757
  %v1355 = vmax.bf16 %v110, %v759
  %v1356 = vmax.bf16 %v112, %v761
  %v1357 = vmax.bf16 %v114, %v763
  %v1358 = vmax.bf16 %v116, %v765
  %v1359 = vmax.bf16 %v118, %v767
  %v1360 = vmax.bf16 %v120, %v769
  %v1361 = vmax.bf16 %v122, %v771
  %v1362 = vmax.bf16 %v124, %v773
  %v1363 = vmax.bf16 %v126, %v775
  %v1364 = vmax.bf16 %v128, %v777
  %v1365 = vmax.bf16 %v130, %v779
  %v1366 = vmax.bf16 %v132, %v781
  %v1367 = vmax.bf16 %v134, %v783
  %v1368 = vmax.bf16 %v136, %v785
  %v1369 = vmax.bf16 %v138, %v787
  %v1370 = vmax.bf16 %v140, %v789
  %v1371 = vmax.bf16 %v142, %v791
  %v1372 = vmax.bf16 %v144, %v793
  %v1373 = vmax.bf16 %v146, %v795
  %v1374 = vmax.bf16 %v148, %v797
  %v1375 = vmax.bf16 %v150, %v799
  %v1376 = vmax.bf16 %v152, %v801
  %v1377 = vmax.bf16 %v154, %v803
  %v1378 = vmax.bf16 %v156, %v805
  %v1379 = vmax.bf16 %v158, %v807
  %v1380 = vmax.bf16 %v160, %v809
  %v1381 = vmax.bf16 %v162, %v811
  %v1382 = vmax.bf16 %v164, %v813
  %v1383 = vmax.bf16 %v166, %v815
  %v1384 = vmax.bf16 %v168, %v817
  %v1385 = vmax.bf16 %v170, %v819
  %v1386 = vmax.bf16 %v172, %v821
  %v1387 = vmax.bf16 %v174, %v823
  %v1388 = vmax.bf16 %v176, %v825
  %v1389 = vmax.bf16 %v178, %v827
  %v1390 = vmax.bf16 %v180, %v829
  %v1391 = vmax.bf16 %v182, %v831
  %v1392 = vmax.bf16 %v184, %v833
  %v1393 = vmax.bf16 %v186, %v835
  %v1394 = vmax.bf16 %v188, %v837
  %v1395 = vmax.bf16 %v190, %v839
  %v1396 = vmax.bf16 %v192, %v841
  %v1397 = vmax.bf16 %v194, %v843
  %v1398 = vmax.bf16 %v196, %v845
  %v1399 = vmax.bf16 %v198, %v847
  %v1400 = vmax.bf16 %v200, %v849
  %v1401 = vmax.bf16 %v202, %v851
  %v1402 = vmax.bf16 %v204, %v853
  %v1403 = vmax.bf16 %v206, %v855
  %v1404 = vmax.bf16 %v208, %v857
  %v1405 = vmax.bf16 %v210, %v859
  %v1406 = vmax.bf16 %v212, %v861
  %v1407 = vmax.bf16 %v214, %v863
  %v1408 = vmax.bf16 %v216, %v865
  %v1409 = vmax.bf16 %v218, %v867
  %v1410 = vmax.bf16 %v220, %v869
  %v1411 = vmax.bf16 %v222, %v871
  %v1412 = vmax.bf16 %v224, %v873
  %v1413 = vmax.bf16 %v226, %v875
  %v1414 = vmax.bf16 %v228, %v877
  %v1415 = vmax.bf16 %v230, %v879
  %v1416 = vmax.bf16 %v232, %v881
  %v1417 = vmax.bf16 %v234, %v883
  %v1418 = vmax.bf16 %v236, %v885
  %v1419 = vmax.bf16 %v238, %v887
  %v1420 = vmax.bf16 %v240, %v889
  %v1421 = vmax.bf16 %v242, %v891
  %v1422 = vmax.bf16 %v244, %v893
  %v1423 = vmax.bf16 %v246, %v895
  %v1424 = vmax.bf16 %v248, %v897
  %v1425 = vmax.bf16 %v250, %v899
  %v1426 = vmax.bf16 %v252, %v901
  %v1427 = vmax.bf16 %v254, %v903
  %v1428 = vmax.bf16 %v256, %v905
  %v1429 = vmax.bf16 %v258, %v907
  %v1430 = vmax.bf16 %v260, %v909
  %v1431 = vmax.bf16 %v262, %v911
  %v1432 = vmax.bf16 %v264, %v913
  %v1433 = vmax.bf16 %v266, %v915
  %v1434 = vmax.bf16 %v268, %v917
  %v1435 = vmax.bf16 %v270, %v919
  %v1436 = vmax.bf16 %v272, %v921
  %v1437 = vmax.bf16 %v274, %v923
  %v1438 = vmax.bf16 %v276, %v925
  %v1439 = vmax.bf16 %v278, %v927
  %v1440 = vmax.bf16 %v280, %v929
  %v1441 = vmax.bf16 %v282, %v931
  %v1442 = vmax.bf16 %v284, %v933
  %v1443 = vmax.bf16 %v286, %v935
  %v1444 = vmax.bf16 %v288, %v937
  %v1445 = vmax.bf16 %v290, %v939
  %v1446 = vmax.bf16 %v292, %v941
  %v1447 = vmax.bf16 %v294, %v943
  %v1448 = vmax.bf16 %v296, %v945
  %v1449 = vmax.bf16 %v298, %v947
  %v1450 = vmax.bf16 %v300, %v949
  %v1451 = vmax.bf16 %v302, %v951
  %v1452 = vmax.bf16 %v304, %v953
  %v1453 = vmax.bf16 %v306, %v955
  %v1454 = vmax.bf16 %v308, %v957
  %v1455 = vmax.bf16 %v310, %v959
  %v1456 = vmax.bf16 %v312, %v961
  %v1457 = vmax.bf16 %v314, %v963
  %v1458 = vmax.bf16 %v316, %v965
  %v1459 = vmax.bf16 %v318, %v967
  %v1460 = vmax.bf16 %v320, %v969
  %v1461 = vmax.bf16 %v322, %v971
  %v1462 = vmax.bf16 %v324, %v973
  %v1463 = vmax.bf16 %v326, %v975
  %v1464 = vmax.bf16 %v328, %v977
  %v1465 = vmax.bf16 %v330, %v979
  %v1466 = vmax.bf16 %v332, %v981
  %v1467 = vmax.bf16 %v334, %v983
  %v1468 = vmax.bf16 %v336, %v985
  %v1469 = vmax.bf16 %v338, %v987
  %v1470 = vmax.bf16 %v340, %v989
  %v1471 = vmax.bf16 %v342, %v991
  %v1472 = vmax.bf16 %v344, %v993
  %v1473 = vmax.bf16 %v346, %v995
  %v1474 = vmax.bf16 %v348, %v997
  %v1475 = vmax.bf16 %v350, %v999
  %v1476 = vmax.bf16 %v352, %v1001
  %v1477 = vmax.bf16 %v354, %v1003
  %v1478 = vmax.bf16 %v356, %v1005
  %v1479 = vmax.bf16 %v358, %v1007
  %v1480 = vmax.bf16 %v360, %v1009
  %v1481 = vmax.bf16 %v362, %v1011
  %v1482 = vmax.bf16 %v364, %v1013
  %v1483 = vmax.bf16 %v366, %v1015
  %v1484 = vmax.bf16 %v368, %v1017
  %v1485 = vmax.bf16 %v370, %v1019
  %v1486 = vmax.bf16 %v372, %v1021
  %v1487 = vmax.bf16 %v374, %v1023
  %v1488 = vmax.bf16 %v376, %v1025
  %v1489 = vmax.bf16 %v378, %v1027
  %v1490 = vmax.bf16 %v380, %v1029
  %v1491 = vmax.bf16 %v382, %v1031
  %v1492 = vmax.bf16 %v384, %v1033
  %v1493 = vmax.bf16 %v386, %v1035
  %v1494 = vmax.bf16 %v388, %v1037
  %v1495 = vmax.bf16 %v390, %v1039
  %v1496 = vmax.bf16 %v392, %v1041
  %v1497 = vmax.bf16 %v394, %v1043
  %v1498 = vmax.bf16 %v396, %v1045
  %v1499 = vmax.bf16 %v398, %v1047
  %v1500 = vmax.bf16 %v400, %v1049
  %v1501 = vmax.bf16 %v402, %v1051
  %v1502 = vmax.bf16 %v404, %v1053
  %v1503 = vmax.bf16 %v406, %v1055
  %v1504 = vmax.bf16 %v408, %v1057
  %v1505 = vmax.bf16 %v410, %v1059
  %v1506 = vmax.bf16 %v412, %v1061
  %v1507 = vmax.bf16 %v414, %v1063
  %v1508 = vmax.bf16 %v416, %v1065
  %v1509 = vmax.bf16 %v418, %v1067
  %v1510 = vmax.bf16 %v420, %v1069
  %v1511 = vmax.bf16 %v422, %v1071
  %v1512 = vmax.bf16 %v424, %v1073
  %v1513 = vmax.bf16 %v426, %v1075
  %v1514 = vmax.bf16 %v428, %v1077
  %v1515 = vmax.bf16 %v430, %v1079
  %v1516 = vmax.bf16 %v432, %v1081
  %v1517 = vmax.bf16 %v434, %v1083
  %v1518 = vmax.bf16 %v436, %v1085
  %v1519 = vmax.bf16 %v438, %v1087
  %vm1520 = vsmask.f32 3328
  %vm1521 = vsmask.f32 7440
  %vm1522 = vmor %vm1520, %vm1521
  %v1524 = vshrl.u32 %v8, 16
  %v1526 = vrot.slane %v1524, 4
  %v1527 = vshll.u32 %v8, 16
  %v1529 = vrot.slane %v1527, 5
  %v1530 = vor.u32 %v1526, %v1529
  %v1531 = vrot.slane %v1530, 4
  %v1533 = vshll.u32 %v9, 16
  %v1535 = vrot.slane %v1533, 5
  %v1536 = vsel %vm1522, %v1531, %v1535
  %v1538 = vshrl.u32 %v10, 16
  %v1540 = vrot.slane %v1538, 4
  %v1541 = vshll.u32 %v10, 16
  %v1543 = vrot.slane %v1541, 5
  %v1544 = vor.u32 %v1540, %v1543
  %v1545 = vrot.slane %v1544, 4
  %v1547 = vshll.u32 %v11, 16
  %v1549 = vrot.slane %v1547, 5
  %v1550 = vsel %vm1522, %v1545, %v1549
  %v1552 = vshrl.u32 %v12, 16
  %v1554 = vrot.slane %v1552, 4
  %v1555 = vshll.u32 %v12, 16
  %v1557 = vrot.slane %v1555, 5
  %v1558 = vor.u32 %v1554, %v1557
  %v1559 = vrot.slane %v1558, 4
  %v1561 = vshll.u32 %v13, 16
  %v1563 = vrot.slane %v1561, 5
  %v1564 = vsel %vm1522, %v1559, %v1563
  %v1566 = vshrl.u32 %v14, 16
  %v1568 = vrot.slane %v1566, 4
  %v1569 = vshll.u32 %v14, 16
  %v1571 = vrot.slane %v1569, 5
  %v1572 = vor.u32 %v1568, %v1571
  %v1573 = vrot.slane %v1572, 4
  %v1575 = vshll.u32 %v15, 16
  %v1577 = vrot.slane %v1575, 5
  %v1578 = vsel %vm1522, %v1573, %v1577
  %v1580 = vshrl.u32 %v16, 16
  %v1582 = vrot.slane %v1580, 4
  %v1583 = vshll.u32 %v16, 16
  %v1585 = vrot.slane %v1583, 5
  %v1586 = vor.u32 %v1582, %v1585
  %v1587 = vrot.slane %v1586, 4
  %v1589 = vshll.u32 %v17, 16
  %v1591 = vrot.slane %v1589, 5
  %v1592 = vsel %vm1522, %v1587, %v1591
  %v1594 = vshrl.u32 %v18, 16
  %v1596 = vrot.slane %v1594, 4
  %v1597 = vshll.u32 %v18, 16
  %v1599 = vrot.slane %v1597, 5
  %v1600 = vor.u32 %v1596, %v1599
  %v1601 = vrot.slane %v1600, 4
  %v1603 = vshll.u32 %v19, 16
  %v1605 = vrot.slane %v1603, 5
  %v1606 = vsel %vm1522, %v1601, %v1605
  %v1608 = vshrl.u32 %v20, 16
  %v1610 = vrot.slane %v1608, 4
  %v1611 = vshll.u32 %v20, 16
  %v1613 = vrot.slane %v1611, 5
  %v1614 = vor.u32 %v1610, %v1613
  %v1615 = vrot.slane %v1614, 4
  %v1617 = vshll.u32 %v21, 16
  %v1619 = vrot.slane %v1617, 5
  %v1620 = vsel %vm1522, %v1615, %v1619
  %v1622 = vshrl.u32 %v22, 16
  %v1624 = vrot.slane %v1622, 4
  %v1625 = vshll.u32 %v22, 16
  %v1627 = vrot.slane %v1625, 5
  %v1628 = vor.u32 %v1624, %v1627
  %v1629 = vrot.slane %v1628, 4
  %v1631 = vshll.u32 %v23, 16
  %v1633 = vrot.slane %v1631, 5
  %v1634 = vsel %vm1522, %v1629, %v1633
  %v1636 = vshrl.u32 %v24, 16
  %v1638 = vrot.slane %v1636, 4
  %v1639 = vshll.u32 %v24, 16
  %v1641 = vrot.slane %v1639, 5
  %v1642 = vor.u32 %v1638, %v1641
  %v1643 = vrot.slane %v1642, 4
  %v1645 = vshll.u32 %v25, 16
  %v1647 = vrot.slane %v1645, 5
  %v1648 = vsel %vm1522, %v1643, %v1647
  %v1650 = vshrl.u32 %v26, 16
  %v1652 = vrot.slane %v1650, 4
  %v1653 = vshll.u32 %v26, 16
  %v1655 = vrot.slane %v1653, 5
  %v1656 = vor.u32 %v1652, %v1655
  %v1657 = vrot.slane %v1656, 4
  %v1659 = vshll.u32 %v27, 16
  %v1661 = vrot.slane %v1659, 5
  %v1662 = vsel %vm1522, %v1657, %v1661
  %v1664 = vshrl.u32 %v28, 16
  %v1666 = vrot.slane %v1664, 4
  %v1667 = vshll.u32 %v28, 16
  %v1669 = vrot.slane %v1667, 5
  %v1670 = vor.u32 %v1666, %v1669
  %v1671 = vrot.slane %v1670, 4
  %v1673 = vshll.u32 %v29, 16
  %v1675 = vrot.slane %v1673, 5
  %v1676 = vsel %vm1522, %v1671, %v1675
  %v1678 = vshrl.u32 %v30, 16
  %v1680 = vrot.slane %v1678, 4
  %v1681 = vshll.u32 %v30, 16
  %v1683 = vrot.slane %v1681, 5
  %v1684 = vor.u32 %v1680, %v1683
  %v1685 = vrot.slane %v1684, 4
  %v1687 = vshll.u32 %v31, 16
  %v1689 = vrot.slane %v1687, 5
  %v1690 = vsel %vm1522, %v1685, %v1689
  %v1692 = vshrl.u32 %v32, 16
  %v1694 = vrot.slane %v1692, 4
  %v1695 = vshll.u32 %v32, 16
  %v1697 = vrot.slane %v1695, 5
  %v1698 = vor.u32 %v1694, %v1697
  %v1699 = vrot.slane %v1698, 4
  %v1701 = vshll.u32 %v33, 16
  %v1703 = vrot.slane %v1701, 5
  %v1704 = vsel %vm1522, %v1699, %v1703
  %v1706 = vshrl.u32 %v34, 16
  %v1708 = vrot.slane %v1706, 4
  %v1709 = vshll.u32 %v34, 16
  %v1711 = vrot.slane %v1709, 5
  %v1712 = vor.u32 %v1708, %v1711
  %v1713 = vrot.slane %v1712, 4
  %v1715 = vshll.u32 %v35, 16
  %v1717 = vrot.slane %v1715, 5
  %v1718 = vsel %vm1522, %v1713, %v1717
  %v1720 = vshrl.u32 %v36, 16
  %v1722 = vrot.slane %v1720, 4
  %v1723 = vshll.u32 %v36, 16
  %v1725 = vrot.slane %v1723, 5
  %v1726 = vor.u32 %v1722, %v1725
  %v1727 = vrot.slane %v1726, 4
  %v1729 = vshll.u32 %v37, 16
  %v1731 = vrot.slane %v1729, 5
  %v1732 = vsel %vm1522, %v1727, %v1731
  %v1734 = vshrl.u32 %v38, 16
  %v1736 = vrot.slane %v1734, 4
  %v1737 = vshll.u32 %v38, 16
  %v1739 = vrot.slane %v1737, 5
  %v1740 = vor.u32 %v1736, %v1739
  %v1741 = vrot.slane %v1740, 4
  %v1743 = vshll.u32 %v39, 16
  %v1745 = vrot.slane %v1743, 5
  %v1746 = vsel %vm1522, %v1741, %v1745
  %v1748 = vshrl.u32 %v40, 16
  %v1750 = vrot.slane %v1748, 4
  %v1751 = vshll.u32 %v40, 16
  %v1753 = vrot.slane %v1751, 5
  %v1754 = vor.u32 %v1750, %v1753
  %v1755 = vrot.slane %v1754, 4
  %v1757 = vshll.u32 %v41, 16
  %v1759 = vrot.slane %v1757, 5
  %v1760 = vsel %vm1522, %v1755, %v1759
  %v1762 = vshrl.u32 %v42, 16
  %v1764 = vrot.slane %v1762, 4
  %v1765 = vshll.u32 %v42, 16
  %v1767 = vrot.slane %v1765, 5
  %v1768 = vor.u32 %v1764, %v1767
  %v1769 = vrot.slane %v1768, 4
  %v1771 = vshll.u32 %v43, 16
  %v1773 = vrot.slane %v1771, 5
  %v1774 = vsel %vm1522, %v1769, %v1773
  %v1776 = vshrl.u32 %v44, 16
  %v1778 = vrot.slane %v1776, 4
  %v1779 = vshll.u32 %v44, 16
  %v1781 = vrot.slane %v1779, 5
  %v1782 = vor.u32 %v1778, %v1781
  %v1783 = vrot.slane %v1782, 4
  %v1785 = vshll.u32 %v45, 16
  %v1787 = vrot.slane %v1785, 5
  %v1788 = vsel %vm1522, %v1783, %v1787
  %v1790 = vshrl.u32 %v46, 16
  %v1792 = vrot.slane %v1790, 4
  %v1793 = vshll.u32 %v46, 16
  %v1795 = vrot.slane %v1793, 5
  %v1796 = vor.u32 %v1792, %v1795
  %v1797 = vrot.slane %v1796, 4
  %v1799 = vshll.u32 %v47, 16
  %v1801 = vrot.slane %v1799, 5
  %v1802 = vsel %vm1522, %v1797, %v1801
  %v1804 = vshrl.u32 %v48, 16
  %v1806 = vrot.slane %v1804, 4
  %v1807 = vshll.u32 %v48, 16
  %v1809 = vrot.slane %v1807, 5
  %v1810 = vor.u32 %v1806, %v1809
  %v1811 = vrot.slane %v1810, 4
  %v1813 = vshll.u32 %v49, 16
  %v1815 = vrot.slane %v1813, 5
  %v1816 = vsel %vm1522, %v1811, %v1815
  %v1818 = vshrl.u32 %v50, 16
  %v1820 = vrot.slane %v1818, 4
  %v1821 = vshll.u32 %v50, 16
  %v1823 = vrot.slane %v1821, 5
  %v1824 = vor.u32 %v1820, %v1823
  %v1825 = vrot.slane %v1824, 4
  %v1827 = vshll.u32 %v51, 16
  %v1829 = vrot.slane %v1827, 5
  %v1830 = vsel %vm1522, %v1825, %v1829
  %v1832 = vshrl.u32 %v52, 16
  %v1834 = vrot.slane %v1832, 4
  %v1835 = vshll.u32 %v52, 16
  %v1837 = vrot.slane %v1835, 5
  %v1838 = vor.u32 %v1834, %v1837
  %v1839 = vrot.slane %v1838, 4
  %v1841 = vshll.u32 %v53, 16
  %v1843 = vrot.slane %v1841, 5
  %v1844 = vsel %vm1522, %v1839, %v1843
  %v1846 = vshrl.u32 %v54, 16
  %v1848 = vrot.slane %v1846, 4
  %v1849 = vshll.u32 %v54, 16
  %v1851 = vrot.slane %v1849, 5
  %v1852 = vor.u32 %v1848, %v1851
  %v1853 = vrot.slane %v1852, 4
  %v1855 = vshll.u32 %v55, 16
  %v1857 = vrot.slane %v1855, 5
  %v1858 = vsel %vm1522, %v1853, %v1857
  %v1860 = vshrl.u32 %v56, 16
  %v1862 = vrot.slane %v1860, 4
  %v1863 = vshll.u32 %v56, 16
  %v1865 = vrot.slane %v1863, 5
  %v1866 = vor.u32 %v1862, %v1865
  %v1867 = vrot.slane %v1866, 4
  %v1869 = vshll.u32 %v57, 16
  %v1871 = vrot.slane %v1869, 5
  %v1872 = vsel %vm1522, %v1867, %v1871
  %v1874 = vshrl.u32 %v58, 16
  %v1876 = vrot.slane %v1874, 4
  %v1877 = vshll.u32 %v58, 16
  %v1879 = vrot.slane %v1877, 5
  %v1880 = vor.u32 %v1876, %v1879
  %v1881 = vrot.slane %v1880, 4
  %v1883 = vshll.u32 %v59, 16
  %v1885 = vrot.slane %v1883, 5
  %v1886 = vsel %vm1522, %v1881, %v1885
  %v1888 = vshrl.u32 %v60, 16
  %v1890 = vrot.slane %v1888, 4
  %v1891 = vshll.u32 %v60, 16
  %v1893 = vrot.slane %v1891, 5
  %v1894 = vor.u32 %v1890, %v1893
  %v1895 = vrot.slane %v1894, 4
  %v1897 = vshll.u32 %v61, 16
  %v1899 = vrot.slane %v1897, 5
  %v1900 = vsel %vm1522, %v1895, %v1899
  %v1902 = vshrl.u32 %v62, 16
  %v1904 = vrot.slane %v1902, 4
  %v1905 = vshll.u32 %v62, 16
  %v1907 = vrot.slane %v1905, 5
  %v1908 = vor.u32 %v1904, %v1907
  %v1909 = vrot.slane %v1908, 4
  %v1911 = vshll.u32 %v63, 16
  %v1913 = vrot.slane %v1911, 5
  %v1914 = vsel %vm1522, %v1909, %v1913
  %v1916 = vshrl.u32 %v64, 16
  %v1918 = vrot.slane %v1916, 4
  %v1919 = vshll.u32 %v64, 16
  %v1921 = vrot.slane %v1919, 5
  %v1922 = vor.u32 %v1918, %v1921
  %v1923 = vrot.slane %v1922, 4
  %v1925 = vshll.u32 %v65, 16
  %v1927 = vrot.slane %v1925, 5
  %v1928 = vsel %vm1522, %v1923, %v1927
  %v1930 = vshrl.u32 %v66, 16
  %v1932 = vrot.slane %v1930, 4
  %v1933 = vshll.u32 %v66, 16
  %v1935 = vrot.slane %v1933, 5
  %v1936 = vor.u32 %v1932, %v1935
  %v1937 = vrot.slane %v1936, 4
  %v1939 = vshll.u32 %v67, 16
  %v1941 = vrot.slane %v1939, 5
  %v1942 = vsel %vm1522, %v1937, %v1941
  %v1944 = vshrl.u32 %v68, 16
  %v1946 = vrot.slane %v1944, 4
  %v1947 = vshll.u32 %v68, 16
  %v1949 = vrot.slane %v1947, 5
  %v1950 = vor.u32 %v1946, %v1949
  %v1951 = vrot.slane %v1950, 4
  %v1953 = vshll.u32 %v69, 16
  %v1955 = vrot.slane %v1953, 5
  %v1956 = vsel %vm1522, %v1951, %v1955
  %v1958 = vshrl.u32 %v70, 16
  %v1960 = vrot.slane %v1958, 4
  %v1961 = vshll.u32 %v70, 16
  %v1963 = vrot.slane %v1961, 5
  %v1964 = vor.u32 %v1960, %v1963
  %v1965 = vrot.slane %v1964, 4
  %v1967 = vshll.u32 %v71, 16
  %v1969 = vrot.slane %v1967, 5
  %v1970 = vsel %vm1522, %v1965, %v1969
  %v1972 = vshrl.u32 %v72, 16
  %v1974 = vrot.slane %v1972, 4
  %v1975 = vshll.u32 %v72, 16
  %v1977 = vrot.slane %v1975, 5
  %v1978 = vor.u32 %v1974, %v1977
  %v1979 = vrot.slane %v1978, 4
  %v1981 = vshll.u32 %v73, 16
  %v1983 = vrot.slane %v1981, 5
  %v1984 = vsel %vm1522, %v1979, %v1983
  %v1986 = vshrl.u32 %v74, 16
  %v1988 = vrot.slane %v1986, 4
  %v1989 = vshll.u32 %v74, 16
  %v1991 = vrot.slane %v1989, 5
  %v1992 = vor.u32 %v1988, %v1991
  %v1993 = vrot.slane %v1992, 4
  %v1995 = vshll.u32 %v75, 16
  %v1997 = vrot.slane %v1995, 5
  %v1998 = vsel %vm1522, %v1993, %v1997
  %v2000 = vshrl.u32 %v76, 16
  %v2002 = vrot.slane %v2000, 4
  %v2003 = vshll.u32 %v76, 16
  %v2005 = vrot.slane %v2003, 5
  %v2006 = vor.u32 %v2002, %v2005
  %v2007 = vrot.slane %v2006, 4
  %v2009 = vshll.u32 %v77, 16
  %v2011 = vrot.slane %v2009, 5
  %v2012 = vsel %vm1522, %v2007, %v2011
  %v2014 = vshrl.u32 %v78, 16
  %v2016 = vrot.slane %v2014, 4
  %v2017 = vshll.u32 %v78, 16
  %v2019 = vrot.slane %v2017, 5
  %v2020 = vor.u32 %v2016, %v2019
  %v2021 = vrot.slane %v2020, 4
  %v2023 = vshll.u32 %v79, 16
  %v2025 = vrot.slane %v2023, 5
  %v2026 = vsel %vm1522, %v2021, %v2025
  %v2028 = vshrl.u32 %v80, 16
  %v2030 = vrot.slane %v2028, 4
  %v2031 = vshll.u32 %v80, 16
  %v2033 = vrot.slane %v2031, 5
  %v2034 = vor.u32 %v2030, %v2033
  %v2035 = vrot.slane %v2034, 4
  %v2037 = vshll.u32 %v81, 16
  %v2039 = vrot.slane %v2037, 5
  %v2040 = vsel %vm1522, %v2035, %v2039
  %v2042 = vshrl.u32 %v82, 16
  %v2044 = vrot.slane %v2042, 4
  %v2045 = vshll.u32 %v82, 16
  %v2047 = vrot.slane %v2045, 5
  %v2048 = vor.u32 %v2044, %v2047
  %v2049 = vrot.slane %v2048, 4
  %v2051 = vshll.u32 %v83, 16
  %v2053 = vrot.slane %v2051, 5
  %v2054 = vsel %vm1522, %v2049, %v2053
  %v2056 = vshrl.u32 %v84, 16
  %v2058 = vrot.slane %v2056, 4
  %v2059 = vshll.u32 %v84, 16
  %v2061 = vrot.slane %v2059, 5
  %v2062 = vor.u32 %v2058, %v2061
  %v2063 = vrot.slane %v2062, 4
  %v2065 = vshll.u32 %v85, 16
  %v2067 = vrot.slane %v2065, 5
  %v2068 = vsel %vm1522, %v2063, %v2067
  %v2070 = vshrl.u32 %v86, 16
  %v2072 = vrot.slane %v2070, 4
  %v2073 = vshll.u32 %v86, 16
  %v2075 = vrot.slane %v2073, 5
  %v2076 = vor.u32 %v2072, %v2075
  %v2077 = vrot.slane %v2076, 4
  %v2079 = vshll.u32 %v87, 16
  %v2081 = vrot.slane %v2079, 5
  %v2082 = vsel %vm1522, %v2077, %v2081
  %v2084 = vshrl.u32 %v88, 16
  %v2086 = vrot.slane %v2084, 4
  %v2087 = vshll.u32 %v88, 16
  %v2089 = vrot.slane %v2087, 5
  %v2090 = vor.u32 %v2086, %v2089
  %v2091 = vrot.slane %v2090, 4
  %v2093 = vshll.u32 %v89, 16
  %v2095 = vrot.slane %v2093, 5
  %v2096 = vsel %vm1522, %v2091, %v2095
  %v2098 = vshrl.u32 %v90, 16
  %v2100 = vrot.slane %v2098, 4
  %v2101 = vshll.u32 %v90, 16
  %v2103 = vrot.slane %v2101, 5
  %v2104 = vor.u32 %v2100, %v2103
  %v2105 = vrot.slane %v2104, 4
  %v2107 = vshll.u32 %v91, 16
  %v2109 = vrot.slane %v2107, 5
  %v2110 = vsel %vm1522, %v2105, %v2109
  %v2112 = vshrl.u32 %v92, 16
  %v2114 = vrot.slane %v2112, 4
  %v2115 = vshll.u32 %v92, 16
  %v2117 = vrot.slane %v2115, 5
  %v2118 = vor.u32 %v2114, %v2117
  %v2119 = vrot.slane %v2118, 4
  %v2121 = vshll.u32 %v93, 16
  %v2123 = vrot.slane %v2121, 5
  %v2124 = vsel %vm1522, %v2119, %v2123
  %v2126 = vshrl.u32 %v94, 16
  %v2128 = vrot.slane %v2126, 4
  %v2129 = vshll.u32 %v94, 16
  %v2131 = vrot.slane %v2129, 5
  %v2132 = vor.u32 %v2128, %v2131
  %v2133 = vrot.slane %v2132, 4
  %v2135 = vshll.u32 %v95, 16
  %v2137 = vrot.slane %v2135, 5
  %v2138 = vsel %vm1522, %v2133, %v2137
  %v2140 = vshrl.u32 %v96, 16
  %v2142 = vrot.slane %v2140, 4
  %v2143 = vshll.u32 %v96, 16
  %v2145 = vrot.slane %v2143, 5
  %v2146 = vor.u32 %v2142, %v2145
  %v2147 = vrot.slane %v2146, 4
  %v2149 = vshll.u32 %v97, 16
  %v2151 = vrot.slane %v2149, 5
  %v2152 = vsel %vm1522, %v2147, %v2151
  %v2154 = vshrl.u32 %v98, 16
  %v2156 = vrot.slane %v2154, 4
  %v2157 = vshll.u32 %v98, 16
  %v2159 = vrot.slane %v2157, 5
  %v2160 = vor.u32 %v2156, %v2159
  %v2161 = vrot.slane %v2160, 4
  %v2163 = vshll.u32 %v99, 16
  %v2165 = vrot.slane %v2163, 5
  %v2166 = vsel %vm1522, %v2161, %v2165
  %v2168 = vshrl.u32 %v100, 16
  %v2170 = vrot.slane %v2168, 4
  %v2171 = vshll.u32 %v100, 16
  %v2173 = vrot.slane %v2171, 5
  %v2174 = vor.u32 %v2170, %v2173
  %v2175 = vrot.slane %v2174, 4
  %v2177 = vshll.u32 %v101, 16
  %v2179 = vrot.slane %v2177, 5
  %v2180 = vsel %vm1522, %v2175, %v2179
  %v2182 = vshrl.u32 %v102, 16
  %v2184 = vrot.slane %v2182, 4
  %v2185 = vshll.u32 %v102, 16
  %v2187 = vrot.slane %v2185, 5
  %v2188 = vor.u32 %v2184, %v2187
  %v2189 = vrot.slane %v2188, 4
  %v2191 = vshll.u32 %v103, 16
  %v2193 = vrot.slane %v2191, 5
  %v2194 = vsel %vm1522, %v2189, %v2193
  %v2196 = vshrl.u32 %v104, 16
  %v2198 = vrot.slane %v2196, 4
  %v2199 = vshll.u32 %v104, 16
  %v2201 = vrot.slane %v2199, 5
  %v2202 = vor.u32 %v2198, %v2201
  %v2203 = vrot.slane %v2202, 4
  %v2205 = vshll.u32 %v105, 16
  %v2207 = vrot.slane %v2205, 5
  %v2208 = vsel %vm1522, %v2203, %v2207
  %v2210 = vshrl.u32 %v106, 16
  %v2212 = vrot.slane %v2210, 4
  %v2213 = vshll.u32 %v106, 16
  %v2215 = vrot.slane %v2213, 5
  %v2216 = vor.u32 %v2212, %v2215
  %v2217 = vrot.slane %v2216, 4
  %v2219 = vshll.u32 %v107, 16
  %v2221 = vrot.slane %v2219, 5
  %v2222 = vsel %vm1522, %v2217, %v2221
  %v2224 = vshrl.u32 %v108, 16
  %v2226 = vrot.slane %v2224, 4
  %v2227 = vshll.u32 %v108, 16
  %v2229 = vrot.slane %v2227, 5
  %v2230 = vor.u32 %v2226, %v2229
  %v2231 = vrot.slane %v2230, 4
  %v2233 = vshll.u32 %v109, 16
  %v2235 = vrot.slane %v2233, 5
  %v2236 = vsel %vm1522, %v2231, %v2235
  %v2238 = vshrl.u32 %v110, 16
  %v2240 = vrot.slane %v2238, 4
  %v2241 = vshll.u32 %v110, 16
  %v2243 = vrot.slane %v2241, 5
  %v2244 = vor.u32 %v2240, %v2243
  %v2245 = vrot.slane %v2244, 4
  %v2247 = vshll.u32 %v111, 16
  %v2249 = vrot.slane %v2247, 5
  %v2250 = vsel %vm1522, %v2245, %v2249
  %v2252 = vshrl.u32 %v112, 16
  %v2254 = vrot.slane %v2252, 4
  %v2255 = vshll.u32 %v112, 16
  %v2257 = vrot.slane %v2255, 5
  %v2258 = vor.u32 %v2254, %v2257
  %v2259 = vrot.slane %v2258, 4
  %v2261 = vshll.u32 %v113, 16
  %v2263 = vrot.slane %v2261, 5
  %v2264 = vsel %vm1522, %v2259, %v2263
  %v2266 = vshrl.u32 %v114, 16
  %v2268 = vrot.slane %v2266, 4
  %v2269 = vshll.u32 %v114, 16
  %v2271 = vrot.slane %v2269, 5
  %v2272 = vor.u32 %v2268, %v2271
  %v2273 = vrot.slane %v2272, 4
  %v2275 = vshll.u32 %v115, 16
  %v2277 = vrot.slane %v2275, 5
  %v2278 = vsel %vm1522, %v2273, %v2277
  %v2280 = vshrl.u32 %v116, 16
  %v2282 = vrot.slane %v2280, 4
  %v2283 = vshll.u32 %v116, 16
  %v2285 = vrot.slane %v2283, 5
  %v2286 = vor.u32 %v2282, %v2285
  %v2287 = vrot.slane %v2286, 4
  %v2289 = vshll.u32 %v117, 16
  %v2291 = vrot.slane %v2289, 5
  %v2292 = vsel %vm1522, %v2287, %v2291
  %v2294 = vshrl.u32 %v118, 16
  %v2296 = vrot.slane %v2294, 4
  %v2297 = vshll.u32 %v118, 16
  %v2299 = vrot.slane %v2297, 5
  %v2300 = vor.u32 %v2296, %v2299
  %v2301 = vrot.slane %v2300, 4
  %v2303 = vshll.u32 %v119, 16
  %v2305 = vrot.slane %v2303, 5
  %v2306 = vsel %vm1522, %v2301, %v2305
  %v2308 = vshrl.u32 %v120, 16
  %v2310 = vrot.slane %v2308, 4
  %v2311 = vshll.u32 %v120, 16
  %v2313 = vrot.slane %v2311, 5
  %v2314 = vor.u32 %v2310, %v2313
  %v2315 = vrot.slane %v2314, 4
  %v2317 = vshll.u32 %v121, 16
  %v2319 = vrot.slane %v2317, 5
  %v2320 = vsel %vm1522, %v2315, %v2319
  %v2322 = vshrl.u32 %v122, 16
  %v2324 = vrot.slane %v2322, 4
  %v2325 = vshll.u32 %v122, 16
  %v2327 = vrot.slane %v2325, 5
  %v2328 = vor.u32 %v2324, %v2327
  %v2329 = vrot.slane %v2328, 4
  %v2331 = vshll.u32 %v123, 16
  %v2333 = vrot.slane %v2331, 5
  %v2334 = vsel %vm1522, %v2329, %v2333
  %v2336 = vshrl.u32 %v124, 16
  %v2338 = vrot.slane %v2336, 4
  %v2339 = vshll.u32 %v124, 16
  %v2341 = vrot.slane %v2339, 5
  %v2342 = vor.u32 %v2338, %v2341
  %v2343 = vrot.slane %v2342, 4
  %v2345 = vshll.u32 %v125, 16
  %v2347 = vrot.slane %v2345, 5
  %v2348 = vsel %vm1522, %v2343, %v2347
  %v2350 = vshrl.u32 %v126, 16
  %v2352 = vrot.slane %v2350, 4
  %v2353 = vshll.u32 %v126, 16
  %v2355 = vrot.slane %v2353, 5
  %v2356 = vor.u32 %v2352, %v2355
  %v2357 = vrot.slane %v2356, 4
  %v2359 = vshll.u32 %v127, 16
  %v2361 = vrot.slane %v2359, 5
  %v2362 = vsel %vm1522, %v2357, %v2361
  %v2364 = vshrl.u32 %v128, 16
  %v2366 = vrot.slane %v2364, 4
  %v2367 = vshll.u32 %v128, 16
  %v2369 = vrot.slane %v2367, 5
  %v2370 = vor.u32 %v2366, %v2369
  %v2371 = vrot.slane %v2370, 4
  %v2373 = vshll.u32 %v129, 16
  %v2375 = vrot.slane %v2373, 5
  %v2376 = vsel %vm1522, %v2371, %v2375
  %v2378 = vshrl.u32 %v130, 16
  %v2380 = vrot.slane %v2378, 4
  %v2381 = vshll.u32 %v130, 16
  %v2383 = vrot.slane %v2381, 5
  %v2384 = vor.u32 %v2380, %v2383
  %v2385 = vrot.slane %v2384, 4
  %v2387 = vshll.u32 %v131, 16
  %v2389 = vrot.slane %v2387, 5
  %v2390 = vsel %vm1522, %v2385, %v2389
  %v2392 = vshrl.u32 %v132, 16
  %v2394 = vrot.slane %v2392, 4
  %v2395 = vshll.u32 %v132, 16
  %v2397 = vrot.slane %v2395, 5
  %v2398 = vor.u32 %v2394, %v2397
  %v2399 = vrot.slane %v2398, 4
  %v2401 = vshll.u32 %v133, 16
  %v2403 = vrot.slane %v2401, 5
  %v2404 = vsel %vm1522, %v2399, %v2403
  %v2406 = vshrl.u32 %v134, 16
  %v2408 = vrot.slane %v2406, 4
  %v2409 = vshll.u32 %v134, 16
  %v2411 = vrot.slane %v2409, 5
  %v2412 = vor.u32 %v2408, %v2411
  %v2413 = vrot.slane %v2412, 4
  %v2415 = vshll.u32 %v135, 16
  %v2417 = vrot.slane %v2415, 5
  %v2418 = vsel %vm1522, %v2413, %v2417
  %v2420 = vshrl.u32 %v136, 16
  %v2422 = vrot.slane %v2420, 4
  %v2423 = vshll.u32 %v136, 16
  %v2425 = vrot.slane %v2423, 5
  %v2426 = vor.u32 %v2422, %v2425
  %v2427 = vrot.slane %v2426, 4
  %v2429 = vshll.u32 %v137, 16
  %v2431 = vrot.slane %v2429, 5
  %v2432 = vsel %vm1522, %v2427, %v2431
  %v2434 = vshrl.u32 %v138, 16
  %v2436 = vrot.slane %v2434, 4
  %v2437 = vshll.u32 %v138, 16
  %v2439 = vrot.slane %v2437, 5
  %v2440 = vor.u32 %v2436, %v2439
  %v2441 = vrot.slane %v2440, 4
  %v2443 = vshll.u32 %v139, 16
  %v2445 = vrot.slane %v2443, 5
  %v2446 = vsel %vm1522, %v2441, %v2445
  %v2448 = vshrl.u32 %v140, 16
  %v2450 = vrot.slane %v2448, 4
  %v2451 = vshll.u32 %v140, 16
  %v2453 = vrot.slane %v2451, 5
  %v2454 = vor.u32 %v2450, %v2453
  %v2455 = vrot.slane %v2454, 4
  %v2457 = vshll.u32 %v141, 16
  %v2459 = vrot.slane %v2457, 5
  %v2460 = vsel %vm1522, %v2455, %v2459
  %v2462 = vshrl.u32 %v142, 16
  %v2464 = vrot.slane %v2462, 4
  %v2465 = vshll.u32 %v142, 16
  %v2467 = vrot.slane %v2465, 5
  %v2468 = vor.u32 %v2464, %v2467
  %v2469 = vrot.slane %v2468, 4
  %v2471 = vshll.u32 %v143, 16
  %v2473 = vrot.slane %v2471, 5
  %v2474 = vsel %vm1522, %v2469, %v2473
  %v2476 = vshrl.u32 %v144, 16
  %v2478 = vrot.slane %v2476, 4
  %v2479 = vshll.u32 %v144, 16
  %v2481 = vrot.slane %v2479, 5
  %v2482 = vor.u32 %v2478, %v2481
  %v2483 = vrot.slane %v2482, 4
  %v2485 = vshll.u32 %v145, 16
  %v2487 = vrot.slane %v2485, 5
  %v2488 = vsel %vm1522, %v2483, %v2487
  %v2490 = vshrl.u32 %v146, 16
  %v2492 = vrot.slane %v2490, 4
  %v2493 = vshll.u32 %v146, 16
  %v2495 = vrot.slane %v2493, 5
  %v2496 = vor.u32 %v2492, %v2495
  %v2497 = vrot.slane %v2496, 4
  %v2499 = vshll.u32 %v147, 16
  %v2501 = vrot.slane %v2499, 5
  %v2502 = vsel %vm1522, %v2497, %v2501
  %v2504 = vshrl.u32 %v148, 16
  %v2506 = vrot.slane %v2504, 4
  %v2507 = vshll.u32 %v148, 16
  %v2509 = vrot.slane %v2507, 5
  %v2510 = vor.u32 %v2506, %v2509
  %v2511 = vrot.slane %v2510, 4
  %v2513 = vshll.u32 %v149, 16
  %v2515 = vrot.slane %v2513, 5
  %v2516 = vsel %vm1522, %v2511, %v2515
  %v2518 = vshrl.u32 %v150, 16
  %v2520 = vrot.slane %v2518, 4
  %v2521 = vshll.u32 %v150, 16
  %v2523 = vrot.slane %v2521, 5
  %v2524 = vor.u32 %v2520, %v2523
  %v2525 = vrot.slane %v2524, 4
  %v2527 = vshll.u32 %v151, 16
  %v2529 = vrot.slane %v2527, 5
  %v2530 = vsel %vm1522, %v2525, %v2529
  %v2532 = vshrl.u32 %v152, 16
  %v2534 = vrot.slane %v2532, 4
  %v2535 = vshll.u32 %v152, 16
  %v2537 = vrot.slane %v2535, 5
  %v2538 = vor.u32 %v2534, %v2537
  %v2539 = vrot.slane %v2538, 4
  %v2541 = vshll.u32 %v153, 16
  %v2543 = vrot.slane %v2541, 5
  %v2544 = vsel %vm1522, %v2539, %v2543
  %v2546 = vshrl.u32 %v154, 16
  %v2548 = vrot.slane %v2546, 4
  %v2549 = vshll.u32 %v154, 16
  %v2551 = vrot.slane %v2549, 5
  %v2552 = vor.u32 %v2548, %v2551
  %v2553 = vrot.slane %v2552, 4
  %v2555 = vshll.u32 %v155, 16
  %v2557 = vrot.slane %v2555, 5
  %v2558 = vsel %vm1522, %v2553, %v2557
  %v2560 = vshrl.u32 %v156, 16
  %v2562 = vrot.slane %v2560, 4
  %v2563 = vshll.u32 %v156, 16
  %v2565 = vrot.slane %v2563, 5
  %v2566 = vor.u32 %v2562, %v2565
  %v2567 = vrot.slane %v2566, 4
  %v2569 = vshll.u32 %v157, 16
  %v2571 = vrot.slane %v2569, 5
  %v2572 = vsel %vm1522, %v2567, %v2571
  %v2574 = vshrl.u32 %v158, 16
  %v2576 = vrot.slane %v2574, 4
  %v2577 = vshll.u32 %v158, 16
  %v2579 = vrot.slane %v2577, 5
  %v2580 = vor.u32 %v2576, %v2579
  %v2581 = vrot.slane %v2580, 4
  %v2583 = vshll.u32 %v159, 16
  %v2585 = vrot.slane %v2583, 5
  %v2586 = vsel %vm1522, %v2581, %v2585
  %v2588 = vshrl.u32 %v160, 16
  %v2590 = vrot.slane %v2588, 4
  %v2591 = vshll.u32 %v160, 16
  %v2593 = vrot.slane %v2591, 5
  %v2594 = vor.u32 %v2590, %v2593
  %v2595 = vrot.slane %v2594, 4
  %v2597 = vshll.u32 %v161, 16
  %v2599 = vrot.slane %v2597, 5
  %v2600 = vsel %vm1522, %v2595, %v2599
  %v2602 = vshrl.u32 %v162, 16
  %v2604 = vrot.slane %v2602, 4
  %v2605 = vshll.u32 %v162, 16
  %v2607 = vrot.slane %v2605, 5
  %v2608 = vor.u32 %v2604, %v2607
  %v2609 = vrot.slane %v2608, 4
  %v2611 = vshll.u32 %v163, 16
  %v2613 = vrot.slane %v2611, 5
  %v2614 = vsel %vm1522, %v2609, %v2613
  %v2616 = vshrl.u32 %v164, 16
  %v2618 = vrot.slane %v2616, 4
  %v2619 = vshll.u32 %v164, 16
  %v2621 = vrot.slane %v2619, 5
  %v2622 = vor.u32 %v2618, %v2621
  %v2623 = vrot.slane %v2622, 4
  %v2625 = vshll.u32 %v165, 16
  %v2627 = vrot.slane %v2625, 5
  %v2628 = vsel %vm1522, %v2623, %v2627
  %v2630 = vshrl.u32 %v166, 16
  %v2632 = vrot.slane %v2630, 4
  %v2633 = vshll.u32 %v166, 16
  %v2635 = vrot.slane %v2633, 5
  %v2636 = vor.u32 %v2632, %v2635
  %v2637 = vrot.slane %v2636, 4
  %v2639 = vshll.u32 %v167, 16
  %v2641 = vrot.slane %v2639, 5
  %v2642 = vsel %vm1522, %v2637, %v2641
  %v2644 = vshrl.u32 %v168, 16
  %v2646 = vrot.slane %v2644, 4
  %v2647 = vshll.u32 %v168, 16
  %v2649 = vrot.slane %v2647, 5
  %v2650 = vor.u32 %v2646, %v2649
  %v2651 = vrot.slane %v2650, 4
  %v2653 = vshll.u32 %v169, 16
  %v2655 = vrot.slane %v2653, 5
  %v2656 = vsel %vm1522, %v2651, %v2655
  %v2658 = vshrl.u32 %v170, 16
  %v2660 = vrot.slane %v2658, 4
  %v2661 = vshll.u32 %v170, 16
  %v2663 = vrot.slane %v2661, 5
  %v2664 = vor.u32 %v2660, %v2663
  %v2665 = vrot.slane %v2664, 4
  %v2667 = vshll.u32 %v171, 16
  %v2669 = vrot.slane %v2667, 5
  %v2670 = vsel %vm1522, %v2665, %v2669
  %v2672 = vshrl.u32 %v172, 16
  %v2674 = vrot.slane %v2672, 4
  %v2675 = vshll.u32 %v172, 16
  %v2677 = vrot.slane %v2675, 5
  %v2678 = vor.u32 %v2674, %v2677
  %v2679 = vrot.slane %v2678, 4
  %v2681 = vshll.u32 %v173, 16
  %v2683 = vrot.slane %v2681, 5
  %v2684 = vsel %vm1522, %v2679, %v2683
  %v2686 = vshrl.u32 %v174, 16
  %v2688 = vrot.slane %v2686, 4
  %v2689 = vshll.u32 %v174, 16
  %v2691 = vrot.slane %v2689, 5
  %v2692 = vor.u32 %v2688, %v2691
  %v2693 = vrot.slane %v2692, 4
  %v2695 = vshll.u32 %v175, 16
  %v2697 = vrot.slane %v2695, 5
  %v2698 = vsel %vm1522, %v2693, %v2697
  %v2700 = vshrl.u32 %v176, 16
  %v2702 = vrot.slane %v2700, 4
  %v2703 = vshll.u32 %v176, 16
  %v2705 = vrot.slane %v2703, 5
  %v2706 = vor.u32 %v2702, %v2705
  %v2707 = vrot.slane %v2706, 4
  %v2709 = vshll.u32 %v177, 16
  %v2711 = vrot.slane %v2709, 5
  %v2712 = vsel %vm1522, %v2707, %v2711
  %v2714 = vshrl.u32 %v178, 16
  %v2716 = vrot.slane %v2714, 4
  %v2717 = vshll.u32 %v178, 16
  %v2719 = vrot.slane %v2717, 5
  %v2720 = vor.u32 %v2716, %v2719
  %v2721 = vrot.slane %v2720, 4
  %v2723 = vshll.u32 %v179, 16
  %v2725 = vrot.slane %v2723, 5
  %v2726 = vsel %vm1522, %v2721, %v2725
  %v2728 = vshrl.u32 %v180, 16
  %v2730 = vrot.slane %v2728, 4
  %v2731 = vshll.u32 %v180, 16
  %v2733 = vrot.slane %v2731, 5
  %v2734 = vor.u32 %v2730, %v2733
  %v2735 = vrot.slane %v2734, 4
  %v2737 = vshll.u32 %v181, 16
  %v2739 = vrot.slane %v2737, 5
  %v2740 = vsel %vm1522, %v2735, %v2739
  %v2742 = vshrl.u32 %v182, 16
  %v2744 = vrot.slane %v2742, 4
  %v2745 = vshll.u32 %v182, 16
  %v2747 = vrot.slane %v2745, 5
  %v2748 = vor.u32 %v2744, %v2747
  %v2749 = vrot.slane %v2748, 4
  %v2751 = vshll.u32 %v183, 16
  %v2753 = vrot.slane %v2751, 5
  %v2754 = vsel %vm1522, %v2749, %v2753
  %v2756 = vshrl.u32 %v184, 16
  %v2758 = vrot.slane %v2756, 4
  %v2759 = vshll.u32 %v184, 16
  %v2761 = vrot.slane %v2759, 5
  %v2762 = vor.u32 %v2758, %v2761
  %v2763 = vrot.slane %v2762, 4
  %v2765 = vshll.u32 %v185, 16
  %v2767 = vrot.slane %v2765, 5
  %v2768 = vsel %vm1522, %v2763, %v2767
  %v2770 = vshrl.u32 %v186, 16
  %v2772 = vrot.slane %v2770, 4
  %v2773 = vshll.u32 %v186, 16
  %v2775 = vrot.slane %v2773, 5
  %v2776 = vor.u32 %v2772, %v2775
  %v2777 = vrot.slane %v2776, 4
  %v2779 = vshll.u32 %v187, 16
  %v2781 = vrot.slane %v2779, 5
  %v2782 = vsel %vm1522, %v2777, %v2781
  %v2784 = vshrl.u32 %v188, 16
  %v2786 = vrot.slane %v2784, 4
  %v2787 = vshll.u32 %v188, 16
  %v2789 = vrot.slane %v2787, 5
  %v2790 = vor.u32 %v2786, %v2789
  %v2791 = vrot.slane %v2790, 4
  %v2793 = vshll.u32 %v189, 16
  %v2795 = vrot.slane %v2793, 5
  %v2796 = vsel %vm1522, %v2791, %v2795
  %v2798 = vshrl.u32 %v190, 16
  %v2800 = vrot.slane %v2798, 4
  %v2801 = vshll.u32 %v190, 16
  %v2803 = vrot.slane %v2801, 5
  %v2804 = vor.u32 %v2800, %v2803
  %v2805 = vrot.slane %v2804, 4
  %v2807 = vshll.u32 %v191, 16
  %v2809 = vrot.slane %v2807, 5
  %v2810 = vsel %vm1522, %v2805, %v2809
  %v2812 = vshrl.u32 %v192, 16
  %v2814 = vrot.slane %v2812, 4
  %v2815 = vshll.u32 %v192, 16
  %v2817 = vrot.slane %v2815, 5
  %v2818 = vor.u32 %v2814, %v2817
  %v2819 = vrot.slane %v2818, 4
  %v2821 = vshll.u32 %v193, 16
  %v2823 = vrot.slane %v2821, 5
  %v2824 = vsel %vm1522, %v2819, %v2823
  %v2826 = vshrl.u32 %v194, 16
  %v2828 = vrot.slane %v2826, 4
  %v2829 = vshll.u32 %v194, 16
  %v2831 = vrot.slane %v2829, 5
  %v2832 = vor.u32 %v2828, %v2831
  %v2833 = vrot.slane %v2832, 4
  %v2835 = vshll.u32 %v195, 16
  %v2837 = vrot.slane %v2835, 5
  %v2838 = vsel %vm1522, %v2833, %v2837
  %v2840 = vshrl.u32 %v196, 16
  %v2842 = vrot.slane %v2840, 4
  %v2843 = vshll.u32 %v196, 16
  %v2845 = vrot.slane %v2843, 5
  %v2846 = vor.u32 %v2842, %v2845
  %v2847 = vrot.slane %v2846, 4
  %v2849 = vshll.u32 %v197, 16
  %v2851 = vrot.slane %v2849, 5
  %v2852 = vsel %vm1522, %v2847, %v2851
  %v2854 = vshrl.u32 %v198, 16
  %v2856 = vrot.slane %v2854, 4
  %v2857 = vshll.u32 %v198, 16
  %v2859 = vrot.slane %v2857, 5
  %v2860 = vor.u32 %v2856, %v2859
  %v2861 = vrot.slane %v2860, 4
  %v2863 = vshll.u32 %v199, 16
  %v2865 = vrot.slane %v2863, 5
  %v2866 = vsel %vm1522, %v2861, %v2865
  %v2868 = vshrl.u32 %v200, 16
  %v2870 = vrot.slane %v2868, 4
  %v2871 = vshll.u32 %v200, 16
  %v2873 = vrot.slane %v2871, 5
  %v2874 = vor.u32 %v2870, %v2873
  %v2875 = vrot.slane %v2874, 4
  %v2877 = vshll.u32 %v201, 16
  %v2879 = vrot.slane %v2877, 5
  %v2880 = vsel %vm1522, %v2875, %v2879
  %v2882 = vshrl.u32 %v202, 16
  %v2884 = vrot.slane %v2882, 4
  %v2885 = vshll.u32 %v202, 16
  %v2887 = vrot.slane %v2885, 5
  %v2888 = vor.u32 %v2884, %v2887
  %v2889 = vrot.slane %v2888, 4
  %v2891 = vshll.u32 %v203, 16
  %v2893 = vrot.slane %v2891, 5
  %v2894 = vsel %vm1522, %v2889, %v2893
  %v2896 = vshrl.u32 %v204, 16
  %v2898 = vrot.slane %v2896, 4
  %v2899 = vshll.u32 %v204, 16
  %v2901 = vrot.slane %v2899, 5
  %v2902 = vor.u32 %v2898, %v2901
  %v2903 = vrot.slane %v2902, 4
  %v2905 = vshll.u32 %v205, 16
  %v2907 = vrot.slane %v2905, 5
  %v2908 = vsel %vm1522, %v2903, %v2907
  %v2910 = vshrl.u32 %v206, 16
  %v2912 = vrot.slane %v2910, 4
  %v2913 = vshll.u32 %v206, 16
  %v2915 = vrot.slane %v2913, 5
  %v2916 = vor.u32 %v2912, %v2915
  %v2917 = vrot.slane %v2916, 4
  %v2919 = vshll.u32 %v207, 16
  %v2921 = vrot.slane %v2919, 5
  %v2922 = vsel %vm1522, %v2917, %v2921
  %v2924 = vshrl.u32 %v208, 16
  %v2926 = vrot.slane %v2924, 4
  %v2927 = vshll.u32 %v208, 16
  %v2929 = vrot.slane %v2927, 5
  %v2930 = vor.u32 %v2926, %v2929
  %v2931 = vrot.slane %v2930, 4
  %v2933 = vshll.u32 %v209, 16
  %v2935 = vrot.slane %v2933, 5
  %v2936 = vsel %vm1522, %v2931, %v2935
  %v2938 = vshrl.u32 %v210, 16
  %v2940 = vrot.slane %v2938, 4
  %v2941 = vshll.u32 %v210, 16
  %v2943 = vrot.slane %v2941, 5
  %v2944 = vor.u32 %v2940, %v2943
  %v2945 = vrot.slane %v2944, 4
  %v2947 = vshll.u32 %v211, 16
  %v2949 = vrot.slane %v2947, 5
  %v2950 = vsel %vm1522, %v2945, %v2949
  %v2952 = vshrl.u32 %v212, 16
  %v2954 = vrot.slane %v2952, 4
  %v2955 = vshll.u32 %v212, 16
  %v2957 = vrot.slane %v2955, 5
  %v2958 = vor.u32 %v2954, %v2957
  %v2959 = vrot.slane %v2958, 4
  %v2961 = vshll.u32 %v213, 16
  %v2963 = vrot.slane %v2961, 5
  %v2964 = vsel %vm1522, %v2959, %v2963
  %v2966 = vshrl.u32 %v214, 16
  %v2968 = vrot.slane %v2966, 4
  %v2969 = vshll.u32 %v214, 16
  %v2971 = vrot.slane %v2969, 5
  %v2972 = vor.u32 %v2968, %v2971
  %v2973 = vrot.slane %v2972, 4
  %v2975 = vshll.u32 %v215, 16
  %v2977 = vrot.slane %v2975, 5
  %v2978 = vsel %vm1522, %v2973, %v2977
  %v2980 = vshrl.u32 %v216, 16
  %v2982 = vrot.slane %v2980, 4
  %v2983 = vshll.u32 %v216, 16
  %v2985 = vrot.slane %v2983, 5
  %v2986 = vor.u32 %v2982, %v2985
  %v2987 = vrot.slane %v2986, 4
  %v2989 = vshll.u32 %v217, 16
  %v2991 = vrot.slane %v2989, 5
  %v2992 = vsel %vm1522, %v2987, %v2991
  %v2994 = vshrl.u32 %v218, 16
  %v2996 = vrot.slane %v2994, 4
  %v2997 = vshll.u32 %v218, 16
  %v2999 = vrot.slane %v2997, 5
  %v3000 = vor.u32 %v2996, %v2999
  %v3001 = vrot.slane %v3000, 4
  %v3003 = vshll.u32 %v219, 16
  %v3005 = vrot.slane %v3003, 5
  %v3006 = vsel %vm1522, %v3001, %v3005
  %v3008 = vshrl.u32 %v220, 16
  %v3010 = vrot.slane %v3008, 4
  %v3011 = vshll.u32 %v220, 16
  %v3013 = vrot.slane %v3011, 5
  %v3014 = vor.u32 %v3010, %v3013
  %v3015 = vrot.slane %v3014, 4
  %v3017 = vshll.u32 %v221, 16
  %v3019 = vrot.slane %v3017, 5
  %v3020 = vsel %vm1522, %v3015, %v3019
  %v3022 = vshrl.u32 %v222, 16
  %v3024 = vrot.slane %v3022, 4
  %v3025 = vshll.u32 %v222, 16
  %v3027 = vrot.slane %v3025, 5
  %v3028 = vor.u32 %v3024, %v3027
  %v3029 = vrot.slane %v3028, 4
  %v3031 = vshll.u32 %v223, 16
  %v3033 = vrot.slane %v3031, 5
  %v3034 = vsel %vm1522, %v3029, %v3033
  %v3036 = vshrl.u32 %v224, 16
  %v3038 = vrot.slane %v3036, 4
  %v3039 = vshll.u32 %v224, 16
  %v3041 = vrot.slane %v3039, 5
  %v3042 = vor.u32 %v3038, %v3041
  %v3043 = vrot.slane %v3042, 4
  %v3045 = vshll.u32 %v225, 16
  %v3047 = vrot.slane %v3045, 5
  %v3048 = vsel %vm1522, %v3043, %v3047
  %v3050 = vshrl.u32 %v226, 16
  %v3052 = vrot.slane %v3050, 4
  %v3053 = vshll.u32 %v226, 16
  %v3055 = vrot.slane %v3053, 5
  %v3056 = vor.u32 %v3052, %v3055
  %v3057 = vrot.slane %v3056, 4
  %v3059 = vshll.u32 %v227, 16
  %v3061 = vrot.slane %v3059, 5
  %v3062 = vsel %vm1522, %v3057, %v3061
  %v3064 = vshrl.u32 %v228, 16
  %v3066 = vrot.slane %v3064, 4
  %v3067 = vshll.u32 %v228, 16
  %v3069 = vrot.slane %v3067, 5
  %v3070 = vor.u32 %v3066, %v3069
  %v3071 = vrot.slane %v3070, 4
  %v3073 = vshll.u32 %v229, 16
  %v3075 = vrot.slane %v3073, 5
  %v3076 = vsel %vm1522, %v3071, %v3075
  %v3078 = vshrl.u32 %v230, 16
  %v3080 = vrot.slane %v3078, 4
  %v3081 = vshll.u32 %v230, 16
  %v3083 = vrot.slane %v3081, 5
  %v3084 = vor.u32 %v3080, %v3083
  %v3085 = vrot.slane %v3084, 4
  %v3087 = vshll.u32 %v231, 16
  %v3089 = vrot.slane %v3087, 5
  %v3090 = vsel %vm1522, %v3085, %v3089
  %v3092 = vshrl.u32 %v232, 16
  %v3094 = vrot.slane %v3092, 4
  %v3095 = vshll.u32 %v232, 16
  %v3097 = vrot.slane %v3095, 5
  %v3098 = vor.u32 %v3094, %v3097
  %v3099 = vrot.slane %v3098, 4
  %v3101 = vshll.u32 %v233, 16
  %v3103 = vrot.slane %v3101, 5
  %v3104 = vsel %vm1522, %v3099, %v3103
  %v3106 = vshrl.u32 %v234, 16
  %v3108 = vrot.slane %v3106, 4
  %v3109 = vshll.u32 %v234, 16
  %v3111 = vrot.slane %v3109, 5
  %v3112 = vor.u32 %v3108, %v3111
  %v3113 = vrot.slane %v3112, 4
  %v3115 = vshll.u32 %v235, 16
  %v3117 = vrot.slane %v3115, 5
  %v3118 = vsel %vm1522, %v3113, %v3117
  %v3120 = vshrl.u32 %v236, 16
  %v3122 = vrot.slane %v3120, 4
  %v3123 = vshll.u32 %v236, 16
  %v3125 = vrot.slane %v3123, 5
  %v3126 = vor.u32 %v3122, %v3125
  %v3127 = vrot.slane %v3126, 4
  %v3129 = vshll.u32 %v237, 16
  %v3131 = vrot.slane %v3129, 5
  %v3132 = vsel %vm1522, %v3127, %v3131
  %v3134 = vshrl.u32 %v238, 16
  %v3136 = vrot.slane %v3134, 4
  %v3137 = vshll.u32 %v238, 16
  %v3139 = vrot.slane %v3137, 5
  %v3140 = vor.u32 %v3136, %v3139
  %v3141 = vrot.slane %v3140, 4
  %v3143 = vshll.u32 %v239, 16
  %v3145 = vrot.slane %v3143, 5
  %v3146 = vsel %vm1522, %v3141, %v3145
  %v3148 = vshrl.u32 %v240, 16
  %v3150 = vrot.slane %v3148, 4
  %v3151 = vshll.u32 %v240, 16
  %v3153 = vrot.slane %v3151, 5
  %v3154 = vor.u32 %v3150, %v3153
  %v3155 = vrot.slane %v3154, 4
  %v3157 = vshll.u32 %v241, 16
  %v3159 = vrot.slane %v3157, 5
  %v3160 = vsel %vm1522, %v3155, %v3159
  %v3162 = vshrl.u32 %v242, 16
  %v3164 = vrot.slane %v3162, 4
  %v3165 = vshll.u32 %v242, 16
  %v3167 = vrot.slane %v3165, 5
  %v3168 = vor.u32 %v3164, %v3167
  %v3169 = vrot.slane %v3168, 4
  %v3171 = vshll.u32 %v243, 16
  %v3173 = vrot.slane %v3171, 5
  %v3174 = vsel %vm1522, %v3169, %v3173
  %v3176 = vshrl.u32 %v244, 16
  %v3178 = vrot.slane %v3176, 4
  %v3179 = vshll.u32 %v244, 16
  %v3181 = vrot.slane %v3179, 5
  %v3182 = vor.u32 %v3178, %v3181
  %v3183 = vrot.slane %v3182, 4
  %v3185 = vshll.u32 %v245, 16
  %v3187 = vrot.slane %v3185, 5
  %v3188 = vsel %vm1522, %v3183, %v3187
  %v3190 = vshrl.u32 %v246, 16
  %v3192 = vrot.slane %v3190, 4
  %v3193 = vshll.u32 %v246, 16
  %v3195 = vrot.slane %v3193, 5
  %v3196 = vor.u32 %v3192, %v3195
  %v3197 = vrot.slane %v3196, 4
  %v3199 = vshll.u32 %v247, 16
  %v3201 = vrot.slane %v3199, 5
  %v3202 = vsel %vm1522, %v3197, %v3201
  %v3204 = vshrl.u32 %v248, 16
  %v3206 = vrot.slane %v3204, 4
  %v3207 = vshll.u32 %v248, 16
  %v3209 = vrot.slane %v3207, 5
  %v3210 = vor.u32 %v3206, %v3209
  %v3211 = vrot.slane %v3210, 4
  %v3213 = vshll.u32 %v249, 16
  %v3215 = vrot.slane %v3213, 5
  %v3216 = vsel %vm1522, %v3211, %v3215
  %v3218 = vshrl.u32 %v250, 16
  %v3220 = vrot.slane %v3218, 4
  %v3221 = vshll.u32 %v250, 16
  %v3223 = vrot.slane %v3221, 5
  %v3224 = vor.u32 %v3220, %v3223
  %v3225 = vrot.slane %v3224, 4
  %v3227 = vshll.u32 %v251, 16
  %v3229 = vrot.slane %v3227, 5
  %v3230 = vsel %vm1522, %v3225, %v3229
  %v3232 = vshrl.u32 %v252, 16
  %v3234 = vrot.slane %v3232, 4
  %v3235 = vshll.u32 %v252, 16
  %v3237 = vrot.slane %v3235, 5
  %v3238 = vor.u32 %v3234, %v3237
  %v3239 = vrot.slane %v3238, 4
  %v3241 = vshll.u32 %v253, 16
  %v3243 = vrot.slane %v3241, 5
  %v3244 = vsel %vm1522, %v3239, %v3243
  %v3246 = vshrl.u32 %v254, 16
  %v3248 = vrot.slane %v3246, 4
  %v3249 = vshll.u32 %v254, 16
  %v3251 = vrot.slane %v3249, 5
  %v3252 = vor.u32 %v3248, %v3251
  %v3253 = vrot.slane %v3252, 4
  %v3255 = vshll.u32 %v255, 16
  %v3257 = vrot.slane %v3255, 5
  %v3258 = vsel %vm1522, %v3253, %v3257
  %v3260 = vshrl.u32 %v256, 16
  %v3262 = vrot.slane %v3260, 4
  %v3263 = vshll.u32 %v256, 16
  %v3265 = vrot.slane %v3263, 5
  %v3266 = vor.u32 %v3262, %v3265
  %v3267 = vrot.slane %v3266, 4
  %v3269 = vshll.u32 %v257, 16
  %v3271 = vrot.slane %v3269, 5
  %v3272 = vsel %vm1522, %v3267, %v3271
  %v3274 = vshrl.u32 %v258, 16
  %v3276 = vrot.slane %v3274, 4
  %v3277 = vshll.u32 %v258, 16
  %v3279 = vrot.slane %v3277, 5
  %v3280 = vor.u32 %v3276, %v3279
  %v3281 = vrot.slane %v3280, 4
  %v3283 = vshll.u32 %v259, 16
  %v3285 = vrot.slane %v3283, 5
  %v3286 = vsel %vm1522, %v3281, %v3285
  %v3288 = vshrl.u32 %v260, 16
  %v3290 = vrot.slane %v3288, 4
  %v3291 = vshll.u32 %v260, 16
  %v3293 = vrot.slane %v3291, 5
  %v3294 = vor.u32 %v3290, %v3293
  %v3295 = vrot.slane %v3294, 4
  %v3297 = vshll.u32 %v261, 16
  %v3299 = vrot.slane %v3297, 5
  %v3300 = vsel %vm1522, %v3295, %v3299
  %v3302 = vshrl.u32 %v262, 16
  %v3304 = vrot.slane %v3302, 4
  %v3305 = vshll.u32 %v262, 16
  %v3307 = vrot.slane %v3305, 5
  %v3308 = vor.u32 %v3304, %v3307
  %v3309 = vrot.slane %v3308, 4
  %v3311 = vshll.u32 %v263, 16
  %v3313 = vrot.slane %v3311, 5
  %v3314 = vsel %vm1522, %v3309, %v3313
  %v3316 = vshrl.u32 %v264, 16
  %v3318 = vrot.slane %v3316, 4
  %v3319 = vshll.u32 %v264, 16
  %v3321 = vrot.slane %v3319, 5
  %v3322 = vor.u32 %v3318, %v3321
  %v3323 = vrot.slane %v3322, 4
  %v3325 = vshll.u32 %v265, 16
  %v3327 = vrot.slane %v3325, 5
  %v3328 = vsel %vm1522, %v3323, %v3327
  %v3330 = vshrl.u32 %v266, 16
  %v3332 = vrot.slane %v3330, 4
  %v3333 = vshll.u32 %v266, 16
  %v3335 = vrot.slane %v3333, 5
  %v3336 = vor.u32 %v3332, %v3335
  %v3337 = vrot.slane %v3336, 4
  %v3339 = vshll.u32 %v267, 16
  %v3341 = vrot.slane %v3339, 5
  %v3342 = vsel %vm1522, %v3337, %v3341
  %v3344 = vshrl.u32 %v268, 16
  %v3346 = vrot.slane %v3344, 4
  %v3347 = vshll.u32 %v268, 16
  %v3349 = vrot.slane %v3347, 5
  %v3350 = vor.u32 %v3346, %v3349
  %v3351 = vrot.slane %v3350, 4
  %v3353 = vshll.u32 %v269, 16
  %v3355 = vrot.slane %v3353, 5
  %v3356 = vsel %vm1522, %v3351, %v3355
  %v3358 = vshrl.u32 %v270, 16
  %v3360 = vrot.slane %v3358, 4
  %v3361 = vshll.u32 %v270, 16
  %v3363 = vrot.slane %v3361, 5
  %v3364 = vor.u32 %v3360, %v3363
  %v3365 = vrot.slane %v3364, 4
  %v3367 = vshll.u32 %v271, 16
  %v3369 = vrot.slane %v3367, 5
  %v3370 = vsel %vm1522, %v3365, %v3369
  %v3372 = vshrl.u32 %v272, 16
  %v3374 = vrot.slane %v3372, 4
  %v3375 = vshll.u32 %v272, 16
  %v3377 = vrot.slane %v3375, 5
  %v3378 = vor.u32 %v3374, %v3377
  %v3379 = vrot.slane %v3378, 4
  %v3381 = vshll.u32 %v273, 16
  %v3383 = vrot.slane %v3381, 5
  %v3384 = vsel %vm1522, %v3379, %v3383
  %v3386 = vshrl.u32 %v274, 16
  %v3388 = vrot.slane %v3386, 4
  %v3389 = vshll.u32 %v274, 16
  %v3391 = vrot.slane %v3389, 5
  %v3392 = vor.u32 %v3388, %v3391
  %v3393 = vrot.slane %v3392, 4
  %v3395 = vshll.u32 %v275, 16
  %v3397 = vrot.slane %v3395, 5
  %v3398 = vsel %vm1522, %v3393, %v3397
  %v3400 = vshrl.u32 %v276, 16
  %v3402 = vrot.slane %v3400, 4
  %v3403 = vshll.u32 %v276, 16
  %v3405 = vrot.slane %v3403, 5
  %v3406 = vor.u32 %v3402, %v3405
  %v3407 = vrot.slane %v3406, 4
  %v3409 = vshll.u32 %v277, 16
  %v3411 = vrot.slane %v3409, 5
  %v3412 = vsel %vm1522, %v3407, %v3411
  %v3414 = vshrl.u32 %v278, 16
  %v3416 = vrot.slane %v3414, 4
  %v3417 = vshll.u32 %v278, 16
  %v3419 = vrot.slane %v3417, 5
  %v3420 = vor.u32 %v3416, %v3419
  %v3421 = vrot.slane %v3420, 4
  %v3423 = vshll.u32 %v279, 16
  %v3425 = vrot.slane %v3423, 5
  %v3426 = vsel %vm1522, %v3421, %v3425
  %v3428 = vshrl.u32 %v280, 16
  %v3430 = vrot.slane %v3428, 4
  %v3431 = vshll.u32 %v280, 16
  %v3433 = vrot.slane %v3431, 5
  %v3434 = vor.u32 %v3430, %v3433
  %v3435 = vrot.slane %v3434, 4
  %v3437 = vshll.u32 %v281, 16
  %v3439 = vrot.slane %v3437, 5
  %v3440 = vsel %vm1522, %v3435, %v3439
  %v3442 = vshrl.u32 %v282, 16
  %v3444 = vrot.slane %v3442, 4
  %v3445 = vshll.u32 %v282, 16
  %v3447 = vrot.slane %v3445, 5
  %v3448 = vor.u32 %v3444, %v3447
  %v3449 = vrot.slane %v3448, 4
  %v3451 = vshll.u32 %v283, 16
  %v3453 = vrot.slane %v3451, 5
  %v3454 = vsel %vm1522, %v3449, %v3453
  %v3456 = vshrl.u32 %v284, 16
  %v3458 = vrot.slane %v3456, 4
  %v3459 = vshll.u32 %v284, 16
  %v3461 = vrot.slane %v3459, 5
  %v3462 = vor.u32 %v3458, %v3461
  %v3463 = vrot.slane %v3462, 4
  %v3465 = vshll.u32 %v285, 16
  %v3467 = vrot.slane %v3465, 5
  %v3468 = vsel %vm1522, %v3463, %v3467
  %v3470 = vshrl.u32 %v286, 16
  %v3472 = vrot.slane %v3470, 4
  %v3473 = vshll.u32 %v286, 16
  %v3475 = vrot.slane %v3473, 5
  %v3476 = vor.u32 %v3472, %v3475
  %v3477 = vrot.slane %v3476, 4
  %v3479 = vshll.u32 %v287, 16
  %v3481 = vrot.slane %v3479, 5
  %v3482 = vsel %vm1522, %v3477, %v3481
  %v3484 = vshrl.u32 %v288, 16
  %v3486 = vrot.slane %v3484, 4
  %v3487 = vshll.u32 %v288, 16
  %v3489 = vrot.slane %v3487, 5
  %v3490 = vor.u32 %v3486, %v3489
  %v3491 = vrot.slane %v3490, 4
  %v3493 = vshll.u32 %v289, 16
  %v3495 = vrot.slane %v3493, 5
  %v3496 = vsel %vm1522, %v3491, %v3495
  %v3498 = vshrl.u32 %v290, 16
  %v3500 = vrot.slane %v3498, 4
  %v3501 = vshll.u32 %v290, 16
  %v3503 = vrot.slane %v3501, 5
  %v3504 = vor.u32 %v3500, %v3503
  %v3505 = vrot.slane %v3504, 4
  %v3507 = vshll.u32 %v291, 16
  %v3509 = vrot.slane %v3507, 5
  %v3510 = vsel %vm1522, %v3505, %v3509
  %v3512 = vshrl.u32 %v292, 16
  %v3514 = vrot.slane %v3512, 4
  %v3515 = vshll.u32 %v292, 16
  %v3517 = vrot.slane %v3515, 5
  %v3518 = vor.u32 %v3514, %v3517
  %v3519 = vrot.slane %v3518, 4
  %v3521 = vshll.u32 %v293, 16
  %v3523 = vrot.slane %v3521, 5
  %v3524 = vsel %vm1522, %v3519, %v3523
  %v3526 = vshrl.u32 %v294, 16
  %v3528 = vrot.slane %v3526, 4
  %v3529 = vshll.u32 %v294, 16
  %v3531 = vrot.slane %v3529, 5
  %v3532 = vor.u32 %v3528, %v3531
  %v3533 = vrot.slane %v3532, 4
  %v3535 = vshll.u32 %v295, 16
  %v3537 = vrot.slane %v3535, 5
  %v3538 = vsel %vm1522, %v3533, %v3537
  %v3540 = vshrl.u32 %v296, 16
  %v3542 = vrot.slane %v3540, 4
  %v3543 = vshll.u32 %v296, 16
  %v3545 = vrot.slane %v3543, 5
  %v3546 = vor.u32 %v3542, %v3545
  %v3547 = vrot.slane %v3546, 4
  %v3549 = vshll.u32 %v297, 16
  %v3551 = vrot.slane %v3549, 5
  %v3552 = vsel %vm1522, %v3547, %v3551
  %v3554 = vshrl.u32 %v298, 16
  %v3556 = vrot.slane %v3554, 4
  %v3557 = vshll.u32 %v298, 16
  %v3559 = vrot.slane %v3557, 5
  %v3560 = vor.u32 %v3556, %v3559
  %v3561 = vrot.slane %v3560, 4
  %v3563 = vshll.u32 %v299, 16
  %v3565 = vrot.slane %v3563, 5
  %v3566 = vsel %vm1522, %v3561, %v3565
  %v3568 = vshrl.u32 %v300, 16
  %v3570 = vrot.slane %v3568, 4
  %v3571 = vshll.u32 %v300, 16
  %v3573 = vrot.slane %v3571, 5
  %v3574 = vor.u32 %v3570, %v3573
  %v3575 = vrot.slane %v3574, 4
  %v3577 = vshll.u32 %v301, 16
  %v3579 = vrot.slane %v3577, 5
  %v3580 = vsel %vm1522, %v3575, %v3579
  %v3582 = vshrl.u32 %v302, 16
  %v3584 = vrot.slane %v3582, 4
  %v3585 = vshll.u32 %v302, 16
  %v3587 = vrot.slane %v3585, 5
  %v3588 = vor.u32 %v3584, %v3587
  %v3589 = vrot.slane %v3588, 4
  %v3591 = vshll.u32 %v303, 16
  %v3593 = vrot.slane %v3591, 5
  %v3594 = vsel %vm1522, %v3589, %v3593
  %v3596 = vshrl.u32 %v304, 16
  %v3598 = vrot.slane %v3596, 4
  %v3599 = vshll.u32 %v304, 16
  %v3601 = vrot.slane %v3599, 5
  %v3602 = vor.u32 %v3598, %v3601
  %v3603 = vrot.slane %v3602, 4
  %v3605 = vshll.u32 %v305, 16
  %v3607 = vrot.slane %v3605, 5
  %v3608 = vsel %vm1522, %v3603, %v3607
  %v3610 = vshrl.u32 %v306, 16
  %v3612 = vrot.slane %v3610, 4
  %v3613 = vshll.u32 %v306, 16
  %v3615 = vrot.slane %v3613, 5
  %v3616 = vor.u32 %v3612, %v3615
  %v3617 = vrot.slane %v3616, 4
  %v3619 = vshll.u32 %v307, 16
  %v3621 = vrot.slane %v3619, 5
  %v3622 = vsel %vm1522, %v3617, %v3621
  %v3624 = vshrl.u32 %v308, 16
  %v3626 = vrot.slane %v3624, 4
  %v3627 = vshll.u32 %v308, 16
  %v3629 = vrot.slane %v3627, 5
  %v3630 = vor.u32 %v3626, %v3629
  %v3631 = vrot.slane %v3630, 4
  %v3633 = vshll.u32 %v309, 16
  %v3635 = vrot.slane %v3633, 5
  %v3636 = vsel %vm1522, %v3631, %v3635
  %v3638 = vshrl.u32 %v310, 16
  %v3640 = vrot.slane %v3638, 4
  %v3641 = vshll.u32 %v310, 16
  %v3643 = vrot.slane %v3641, 5
  %v3644 = vor.u32 %v3640, %v3643
  %v3645 = vrot.slane %v3644, 4
  %v3647 = vshll.u32 %v311, 16
  %v3649 = vrot.slane %v3647, 5
  %v3650 = vsel %vm1522, %v3645, %v3649
  %v3652 = vshrl.u32 %v312, 16
  %v3654 = vrot.slane %v3652, 4
  %v3655 = vshll.u32 %v312, 16
  %v3657 = vrot.slane %v3655, 5
  %v3658 = vor.u32 %v3654, %v3657
  %v3659 = vrot.slane %v3658, 4
  %v3661 = vshll.u32 %v313, 16
  %v3663 = vrot.slane %v3661, 5
  %v3664 = vsel %vm1522, %v3659, %v3663
  %v3666 = vshrl.u32 %v314, 16
  %v3668 = vrot.slane %v3666, 4
  %v3669 = vshll.u32 %v314, 16
  %v3671 = vrot.slane %v3669, 5
  %v3672 = vor.u32 %v3668, %v3671
  %v3673 = vrot.slane %v3672, 4
  %v3675 = vshll.u32 %v315, 16
  %v3677 = vrot.slane %v3675, 5
  %v3678 = vsel %vm1522, %v3673, %v3677
  %v3680 = vshrl.u32 %v316, 16
  %v3682 = vrot.slane %v3680, 4
  %v3683 = vshll.u32 %v316, 16
  %v3685 = vrot.slane %v3683, 5
  %v3686 = vor.u32 %v3682, %v3685
  %v3687 = vrot.slane %v3686, 4
  %v3689 = vshll.u32 %v317, 16
  %v3691 = vrot.slane %v3689, 5
  %v3692 = vsel %vm1522, %v3687, %v3691
  %v3694 = vshrl.u32 %v318, 16
  %v3696 = vrot.slane %v3694, 4
  %v3697 = vshll.u32 %v318, 16
  %v3699 = vrot.slane %v3697, 5
  %v3700 = vor.u32 %v3696, %v3699
  %v3701 = vrot.slane %v3700, 4
  %v3703 = vshll.u32 %v319, 16
  %v3705 = vrot.slane %v3703, 5
  %v3706 = vsel %vm1522, %v3701, %v3705
  %v3708 = vshrl.u32 %v320, 16
  %v3710 = vrot.slane %v3708, 4
  %v3711 = vshll.u32 %v320, 16
  %v3713 = vrot.slane %v3711, 5
  %v3714 = vor.u32 %v3710, %v3713
  %v3715 = vrot.slane %v3714, 4
  %v3717 = vshll.u32 %v321, 16
  %v3719 = vrot.slane %v3717, 5
  %v3720 = vsel %vm1522, %v3715, %v3719
  %v3722 = vshrl.u32 %v322, 16
  %v3724 = vrot.slane %v3722, 4
  %v3725 = vshll.u32 %v322, 16
  %v3727 = vrot.slane %v3725, 5
  %v3728 = vor.u32 %v3724, %v3727
  %v3729 = vrot.slane %v3728, 4
  %v3731 = vshll.u32 %v323, 16
  %v3733 = vrot.slane %v3731, 5
  %v3734 = vsel %vm1522, %v3729, %v3733
  %v3736 = vshrl.u32 %v324, 16
  %v3738 = vrot.slane %v3736, 4
  %v3739 = vshll.u32 %v324, 16
  %v3741 = vrot.slane %v3739, 5
  %v3742 = vor.u32 %v3738, %v3741
  %v3743 = vrot.slane %v3742, 4
  %v3745 = vshll.u32 %v325, 16
  %v3747 = vrot.slane %v3745, 5
  %v3748 = vsel %vm1522, %v3743, %v3747
  %v3750 = vshrl.u32 %v326, 16
  %v3752 = vrot.slane %v3750, 4
  %v3753 = vshll.u32 %v326, 16
  %v3755 = vrot.slane %v3753, 5
  %v3756 = vor.u32 %v3752, %v3755
  %v3757 = vrot.slane %v3756, 4
  %v3759 = vshll.u32 %v327, 16
  %v3761 = vrot.slane %v3759, 5
  %v3762 = vsel %vm1522, %v3757, %v3761
  %v3764 = vshrl.u32 %v328, 16
  %v3766 = vrot.slane %v3764, 4
  %v3767 = vshll.u32 %v328, 16
  %v3769 = vrot.slane %v3767, 5
  %v3770 = vor.u32 %v3766, %v3769
  %v3771 = vrot.slane %v3770, 4
  %v3773 = vshll.u32 %v329, 16
  %v3775 = vrot.slane %v3773, 5
  %v3776 = vsel %vm1522, %v3771, %v3775
  %v3778 = vshrl.u32 %v330, 16
  %v3780 = vrot.slane %v3778, 4
  %v3781 = vshll.u32 %v330, 16
  %v3783 = vrot.slane %v3781, 5
  %v3784 = vor.u32 %v3780, %v3783
  %v3785 = vrot.slane %v3784, 4
  %v3787 = vshll.u32 %v331, 16
  %v3789 = vrot.slane %v3787, 5
  %v3790 = vsel %vm1522, %v3785, %v3789
  %v3792 = vshrl.u32 %v332, 16
  %v3794 = vrot.slane %v3792, 4
  %v3795 = vshll.u32 %v332, 16
  %v3797 = vrot.slane %v3795, 5
  %v3798 = vor.u32 %v3794, %v3797
  %v3799 = vrot.slane %v3798, 4
  %v3801 = vshll.u32 %v333, 16
  %v3803 = vrot.slane %v3801, 5
  %v3804 = vsel %vm1522, %v3799, %v3803
  %v3806 = vshrl.u32 %v334, 16
  %v3808 = vrot.slane %v3806, 4
  %v3809 = vshll.u32 %v334, 16
  %v3811 = vrot.slane %v3809, 5
  %v3812 = vor.u32 %v3808, %v3811
  %v3813 = vrot.slane %v3812, 4
  %v3815 = vshll.u32 %v335, 16
  %v3817 = vrot.slane %v3815, 5
  %v3818 = vsel %vm1522, %v3813, %v3817
  %v3820 = vshrl.u32 %v336, 16
  %v3822 = vrot.slane %v3820, 4
  %v3823 = vshll.u32 %v336, 16
  %v3825 = vrot.slane %v3823, 5
  %v3826 = vor.u32 %v3822, %v3825
  %v3827 = vrot.slane %v3826, 4
  %v3829 = vshll.u32 %v337, 16
  %v3831 = vrot.slane %v3829, 5
  %v3832 = vsel %vm1522, %v3827, %v3831
  %v3834 = vshrl.u32 %v338, 16
  %v3836 = vrot.slane %v3834, 4
  %v3837 = vshll.u32 %v338, 16
  %v3839 = vrot.slane %v3837, 5
  %v3840 = vor.u32 %v3836, %v3839
  %v3841 = vrot.slane %v3840, 4
  %v3843 = vshll.u32 %v339, 16
  %v3845 = vrot.slane %v3843, 5
  %v3846 = vsel %vm1522, %v3841, %v3845
  %v3848 = vshrl.u32 %v340, 16
  %v3850 = vrot.slane %v3848, 4
  %v3851 = vshll.u32 %v340, 16
  %v3853 = vrot.slane %v3851, 5
  %v3854 = vor.u32 %v3850, %v3853
  %v3855 = vrot.slane %v3854, 4
  %v3857 = vshll.u32 %v341, 16
  %v3859 = vrot.slane %v3857, 5
  %v3860 = vsel %vm1522, %v3855, %v3859
  %v3862 = vshrl.u32 %v342, 16
  %v3864 = vrot.slane %v3862, 4
  %v3865 = vshll.u32 %v342, 16
  %v3867 = vrot.slane %v3865, 5
  %v3868 = vor.u32 %v3864, %v3867
  %v3869 = vrot.slane %v3868, 4
  %v3871 = vshll.u32 %v343, 16
  %v3873 = vrot.slane %v3871, 5
  %v3874 = vsel %vm1522, %v3869, %v3873
  %v3876 = vshrl.u32 %v344, 16
  %v3878 = vrot.slane %v3876, 4
  %v3879 = vshll.u32 %v344, 16
  %v3881 = vrot.slane %v3879, 5
  %v3882 = vor.u32 %v3878, %v3881
  %v3883 = vrot.slane %v3882, 4
  %v3885 = vshll.u32 %v345, 16
  %v3887 = vrot.slane %v3885, 5
  %v3888 = vsel %vm1522, %v3883, %v3887
  %v3890 = vshrl.u32 %v346, 16
  %v3892 = vrot.slane %v3890, 4
  %v3893 = vshll.u32 %v346, 16
  %v3895 = vrot.slane %v3893, 5
  %v3896 = vor.u32 %v3892, %v3895
  %v3897 = vrot.slane %v3896, 4
  %v3899 = vshll.u32 %v347, 16
  %v3901 = vrot.slane %v3899, 5
  %v3902 = vsel %vm1522, %v3897, %v3901
  %v3904 = vshrl.u32 %v348, 16
  %v3906 = vrot.slane %v3904, 4
  %v3907 = vshll.u32 %v348, 16
  %v3909 = vrot.slane %v3907, 5
  %v3910 = vor.u32 %v3906, %v3909
  %v3911 = vrot.slane %v3910, 4
  %v3913 = vshll.u32 %v349, 16
  %v3915 = vrot.slane %v3913, 5
  %v3916 = vsel %vm1522, %v3911, %v3915
  %v3918 = vshrl.u32 %v350, 16
  %v3920 = vrot.slane %v3918, 4
  %v3921 = vshll.u32 %v350, 16
  %v3923 = vrot.slane %v3921, 5
  %v3924 = vor.u32 %v3920, %v3923
  %v3925 = vrot.slane %v3924, 4
  %v3927 = vshll.u32 %v351, 16
  %v3929 = vrot.slane %v3927, 5
  %v3930 = vsel %vm1522, %v3925, %v3929
  %v3932 = vshrl.u32 %v352, 16
  %v3934 = vrot.slane %v3932, 4
  %v3935 = vshll.u32 %v352, 16
  %v3937 = vrot.slane %v3935, 5
  %v3938 = vor.u32 %v3934, %v3937
  %v3939 = vrot.slane %v3938, 4
  %v3941 = vshll.u32 %v353, 16
  %v3943 = vrot.slane %v3941, 5
  %v3944 = vsel %vm1522, %v3939, %v3943
  %v3946 = vshrl.u32 %v354, 16
  %v3948 = vrot.slane %v3946, 4
  %v3949 = vshll.u32 %v354, 16
  %v3951 = vrot.slane %v3949, 5
  %v3952 = vor.u32 %v3948, %v3951
  %v3953 = vrot.slane %v3952, 4
  %v3955 = vshll.u32 %v355, 16
  %v3957 = vrot.slane %v3955, 5
  %v3958 = vsel %vm1522, %v3953, %v3957
  %v3960 = vshrl.u32 %v356, 16
  %v3962 = vrot.slane %v3960, 4
  %v3963 = vshll.u32 %v356, 16
  %v3965 = vrot.slane %v3963, 5
  %v3966 = vor.u32 %v3962, %v3965
  %v3967 = vrot.slane %v3966, 4
  %v3969 = vshll.u32 %v357, 16
  %v3971 = vrot.slane %v3969, 5
  %v3972 = vsel %vm1522, %v3967, %v3971
  %v3974 = vshrl.u32 %v358, 16
  %v3976 = vrot.slane %v3974, 4
  %v3977 = vshll.u32 %v358, 16
  %v3979 = vrot.slane %v3977, 5
  %v3980 = vor.u32 %v3976, %v3979
  %v3981 = vrot.slane %v3980, 4
  %v3983 = vshll.u32 %v359, 16
  %v3985 = vrot.slane %v3983, 5
  %v3986 = vsel %vm1522, %v3981, %v3985
  %v3988 = vshrl.u32 %v360, 16
  %v3990 = vrot.slane %v3988, 4
  %v3991 = vshll.u32 %v360, 16
  %v3993 = vrot.slane %v3991, 5
  %v3994 = vor.u32 %v3990, %v3993
  %v3995 = vrot.slane %v3994, 4
  %v3997 = vshll.u32 %v361, 16
  %v3999 = vrot.slane %v3997, 5
  %v4000 = vsel %vm1522, %v3995, %v3999
  %v4002 = vshrl.u32 %v362, 16
  %v4004 = vrot.slane %v4002, 4
  %v4005 = vshll.u32 %v362, 16
  %v4007 = vrot.slane %v4005, 5
  %v4008 = vor.u32 %v4004, %v4007
  %v4009 = vrot.slane %v4008, 4
  %v4011 = vshll.u32 %v363, 16
  %v4013 = vrot.slane %v4011, 5
  %v4014 = vsel %vm1522, %v4009, %v4013
  %v4016 = vshrl.u32 %v364, 16
  %v4018 = vrot.slane %v4016, 4
  %v4019 = vshll.u32 %v364, 16
  %v4021 = vrot.slane %v4019, 5
  %v4022 = vor.u32 %v4018, %v4021
  %v4023 = vrot.slane %v4022, 4
  %v4025 = vshll.u32 %v365, 16
  %v4027 = vrot.slane %v4025, 5
  %v4028 = vsel %vm1522, %v4023, %v4027
  %v4030 = vshrl.u32 %v366, 16
  %v4032 = vrot.slane %v4030, 4
  %v4033 = vshll.u32 %v366, 16
  %v4035 = vrot.slane %v4033, 5
  %v4036 = vor.u32 %v4032, %v4035
  %v4037 = vrot.slane %v4036, 4
  %v4039 = vshll.u32 %v367, 16
  %v4041 = vrot.slane %v4039, 5
  %v4042 = vsel %vm1522, %v4037, %v4041
  %v4044 = vshrl.u32 %v368, 16
  %v4046 = vrot.slane %v4044, 4
  %v4047 = vshll.u32 %v368, 16
  %v4049 = vrot.slane %v4047, 5
  %v4050 = vor.u32 %v4046, %v4049
  %v4051 = vrot.slane %v4050, 4
  %v4053 = vshll.u32 %v369, 16
  %v4055 = vrot.slane %v4053, 5
  %v4056 = vsel %vm1522, %v4051, %v4055
  %v4058 = vshrl.u32 %v370, 16
  %v4060 = vrot.slane %v4058, 4
  %v4061 = vshll.u32 %v370, 16
  %v4063 = vrot.slane %v4061, 5
  %v4064 = vor.u32 %v4060, %v4063
  %v4065 = vrot.slane %v4064, 4
  %v4067 = vshll.u32 %v371, 16
  %v4069 = vrot.slane %v4067, 5
  %v4070 = vsel %vm1522, %v4065, %v4069
  %v4072 = vshrl.u32 %v372, 16
  %v4074 = vrot.slane %v4072, 4
  %v4075 = vshll.u32 %v372, 16
  %v4077 = vrot.slane %v4075, 5
  %v4078 = vor.u32 %v4074, %v4077
  %v4079 = vrot.slane %v4078, 4
  %v4081 = vshll.u32 %v373, 16
  %v4083 = vrot.slane %v4081, 5
  %v4084 = vsel %vm1522, %v4079, %v4083
  %v4086 = vshrl.u32 %v374, 16
  %v4088 = vrot.slane %v4086, 4
  %v4089 = vshll.u32 %v374, 16
  %v4091 = vrot.slane %v4089, 5
  %v4092 = vor.u32 %v4088, %v4091
  %v4093 = vrot.slane %v4092, 4
  %v4095 = vshll.u32 %v375, 16
  %v4097 = vrot.slane %v4095, 5
  %v4098 = vsel %vm1522, %v4093, %v4097
  %v4100 = vshrl.u32 %v376, 16
  %v4102 = vrot.slane %v4100, 4
  %v4103 = vshll.u32 %v376, 16
  %v4105 = vrot.slane %v4103, 5
  %v4106 = vor.u32 %v4102, %v4105
  %v4107 = vrot.slane %v4106, 4
  %v4109 = vshll.u32 %v377, 16
  %v4111 = vrot.slane %v4109, 5
  %v4112 = vsel %vm1522, %v4107, %v4111
  %v4114 = vshrl.u32 %v378, 16
  %v4116 = vrot.slane %v4114, 4
  %v4117 = vshll.u32 %v378, 16
  %v4119 = vrot.slane %v4117, 5
  %v4120 = vor.u32 %v4116, %v4119
  %v4121 = vrot.slane %v4120, 4
  %v4123 = vshll.u32 %v379, 16
  %v4125 = vrot.slane %v4123, 5
  %v4126 = vsel %vm1522, %v4121, %v4125
  %v4128 = vshrl.u32 %v380, 16
  %v4130 = vrot.slane %v4128, 4
  %v4131 = vshll.u32 %v380, 16
  %v4133 = vrot.slane %v4131, 5
  %v4134 = vor.u32 %v4130, %v4133
  %v4135 = vrot.slane %v4134, 4
  %v4137 = vshll.u32 %v381, 16
  %v4139 = vrot.slane %v4137, 5
  %v4140 = vsel %vm1522, %v4135, %v4139
  %v4142 = vshrl.u32 %v382, 16
  %v4144 = vrot.slane %v4142, 4
  %v4145 = vshll.u32 %v382, 16
  %v4147 = vrot.slane %v4145, 5
  %v4148 = vor.u32 %v4144, %v4147
  %v4149 = vrot.slane %v4148, 4
  %v4151 = vshll.u32 %v383, 16
  %v4153 = vrot.slane %v4151, 5
  %v4154 = vsel %vm1522, %v4149, %v4153
  %v4156 = vshrl.u32 %v384, 16
  %v4158 = vrot.slane %v4156, 4
  %v4159 = vshll.u32 %v384, 16
  %v4161 = vrot.slane %v4159, 5
  %v4162 = vor.u32 %v4158, %v4161
  %v4163 = vrot.slane %v4162, 4
  %v4165 = vshll.u32 %v385, 16
  %v4167 = vrot.slane %v4165, 5
  %v4168 = vsel %vm1522, %v4163, %v4167
  %v4170 = vshrl.u32 %v386, 16
  %v4172 = vrot.slane %v4170, 4
  %v4173 = vshll.u32 %v386, 16
  %v4175 = vrot.slane %v4173, 5
  %v4176 = vor.u32 %v4172, %v4175
  %v4177 = vrot.slane %v4176, 4
  %v4179 = vshll.u32 %v387, 16
  %v4181 = vrot.slane %v4179, 5
  %v4182 = vsel %vm1522, %v4177, %v4181
  %v4184 = vshrl.u32 %v388, 16
  %v4186 = vrot.slane %v4184, 4
  %v4187 = vshll.u32 %v388, 16
  %v4189 = vrot.slane %v4187, 5
  %v4190 = vor.u32 %v4186, %v4189
  %v4191 = vrot.slane %v4190, 4
  %v4193 = vshll.u32 %v389, 16
  %v4195 = vrot.slane %v4193, 5
  %v4196 = vsel %vm1522, %v4191, %v4195
  %v4198 = vshrl.u32 %v390, 16
  %v4200 = vrot.slane %v4198, 4
  %v4201 = vshll.u32 %v390, 16
  %v4203 = vrot.slane %v4201, 5
  %v4204 = vor.u32 %v4200, %v4203
  %v4205 = vrot.slane %v4204, 4
  %v4207 = vshll.u32 %v391, 16
  %v4209 = vrot.slane %v4207, 5
  %v4210 = vsel %vm1522, %v4205, %v4209
  %v4212 = vshrl.u32 %v392, 16
  %v4214 = vrot.slane %v4212, 4
  %v4215 = vshll.u32 %v392, 16
  %v4217 = vrot.slane %v4215, 5
  %v4218 = vor.u32 %v4214, %v4217
  %v4219 = vrot.slane %v4218, 4
  %v4221 = vshll.u32 %v393, 16
  %v4223 = vrot.slane %v4221, 5
  %v4224 = vsel %vm1522, %v4219, %v4223
  %v4226 = vshrl.u32 %v394, 16
  %v4228 = vrot.slane %v4226, 4
  %v4229 = vshll.u32 %v394, 16
  %v4231 = vrot.slane %v4229, 5
  %v4232 = vor.u32 %v4228, %v4231
  %v4233 = vrot.slane %v4232, 4
  %v4235 = vshll.u32 %v395, 16
  %v4237 = vrot.slane %v4235, 5
  %v4238 = vsel %vm1522, %v4233, %v4237
  %v4240 = vshrl.u32 %v396, 16
  %v4242 = vrot.slane %v4240, 4
  %v4243 = vshll.u32 %v396, 16
  %v4245 = vrot.slane %v4243, 5
  %v4246 = vor.u32 %v4242, %v4245
  %v4247 = vrot.slane %v4246, 4
  %v4249 = vshll.u32 %v397, 16
  %v4251 = vrot.slane %v4249, 5
  %v4252 = vsel %vm1522, %v4247, %v4251
  %v4254 = vshrl.u32 %v398, 16
  %v4256 = vrot.slane %v4254, 4
  %v4257 = vshll.u32 %v398, 16
  %v4259 = vrot.slane %v4257, 5
  %v4260 = vor.u32 %v4256, %v4259
  %v4261 = vrot.slane %v4260, 4
  %v4263 = vshll.u32 %v399, 16
  %v4265 = vrot.slane %v4263, 5
  %v4266 = vsel %vm1522, %v4261, %v4265
  %v4268 = vshrl.u32 %v400, 16
  %v4270 = vrot.slane %v4268, 4
  %v4271 = vshll.u32 %v400, 16
  %v4273 = vrot.slane %v4271, 5
  %v4274 = vor.u32 %v4270, %v4273
  %v4275 = vrot.slane %v4274, 4
  %v4277 = vshll.u32 %v401, 16
  %v4279 = vrot.slane %v4277, 5
  %v4280 = vsel %vm1522, %v4275, %v4279
  %v4282 = vshrl.u32 %v402, 16
  %v4284 = vrot.slane %v4282, 4
  %v4285 = vshll.u32 %v402, 16
  %v4287 = vrot.slane %v4285, 5
  %v4288 = vor.u32 %v4284, %v4287
  %v4289 = vrot.slane %v4288, 4
  %v4291 = vshll.u32 %v403, 16
  %v4293 = vrot.slane %v4291, 5
  %v4294 = vsel %vm1522, %v4289, %v4293
  %v4296 = vshrl.u32 %v404, 16
  %v4298 = vrot.slane %v4296, 4
  %v4299 = vshll.u32 %v404, 16
  %v4301 = vrot.slane %v4299, 5
  %v4302 = vor.u32 %v4298, %v4301
  %v4303 = vrot.slane %v4302, 4
  %v4305 = vshll.u32 %v405, 16
  %v4307 = vrot.slane %v4305, 5
  %v4308 = vsel %vm1522, %v4303, %v4307
  %v4310 = vshrl.u32 %v406, 16
  %v4312 = vrot.slane %v4310, 4
  %v4313 = vshll.u32 %v406, 16
  %v4315 = vrot.slane %v4313, 5
  %v4316 = vor.u32 %v4312, %v4315
  %v4317 = vrot.slane %v4316, 4
  %v4319 = vshll.u32 %v407, 16
  %v4321 = vrot.slane %v4319, 5
  %v4322 = vsel %vm1522, %v4317, %v4321
  %v4324 = vshrl.u32 %v408, 16
  %v4326 = vrot.slane %v4324, 4
  %v4327 = vshll.u32 %v408, 16
  %v4329 = vrot.slane %v4327, 5
  %v4330 = vor.u32 %v4326, %v4329
  %v4331 = vrot.slane %v4330, 4
  %v4333 = vshll.u32 %v409, 16
  %v4335 = vrot.slane %v4333, 5
  %v4336 = vsel %vm1522, %v4331, %v4335
  %v4338 = vshrl.u32 %v410, 16
  %v4340 = vrot.slane %v4338, 4
  %v4341 = vshll.u32 %v410, 16
  %v4343 = vrot.slane %v4341, 5
  %v4344 = vor.u32 %v4340, %v4343
  %v4345 = vrot.slane %v4344, 4
  %v4347 = vshll.u32 %v411, 16
  %v4349 = vrot.slane %v4347, 5
  %v4350 = vsel %vm1522, %v4345, %v4349
  %v4352 = vshrl.u32 %v412, 16
  %v4354 = vrot.slane %v4352, 4
  %v4355 = vshll.u32 %v412, 16
  %v4357 = vrot.slane %v4355, 5
  %v4358 = vor.u32 %v4354, %v4357
  %v4359 = vrot.slane %v4358, 4
  %v4361 = vshll.u32 %v413, 16
  %v4363 = vrot.slane %v4361, 5
  %v4364 = vsel %vm1522, %v4359, %v4363
  %v4366 = vshrl.u32 %v414, 16
  %v4368 = vrot.slane %v4366, 4
  %v4369 = vshll.u32 %v414, 16
  %v4371 = vrot.slane %v4369, 5
  %v4372 = vor.u32 %v4368, %v4371
  %v4373 = vrot.slane %v4372, 4
  %v4375 = vshll.u32 %v415, 16
  %v4377 = vrot.slane %v4375, 5
  %v4378 = vsel %vm1522, %v4373, %v4377
  %v4380 = vshrl.u32 %v416, 16
  %v4382 = vrot.slane %v4380, 4
  %v4383 = vshll.u32 %v416, 16
  %v4385 = vrot.slane %v4383, 5
  %v4386 = vor.u32 %v4382, %v4385
  %v4387 = vrot.slane %v4386, 4
  %v4389 = vshll.u32 %v417, 16
  %v4391 = vrot.slane %v4389, 5
  %v4392 = vsel %vm1522, %v4387, %v4391
  %v4394 = vshrl.u32 %v418, 16
  %v4396 = vrot.slane %v4394, 4
  %v4397 = vshll.u32 %v418, 16
  %v4399 = vrot.slane %v4397, 5
  %v4400 = vor.u32 %v4396, %v4399
  %v4401 = vrot.slane %v4400, 4
  %v4403 = vshll.u32 %v419, 16
  %v4405 = vrot.slane %v4403, 5
  %v4406 = vsel %vm1522, %v4401, %v4405
  %v4408 = vshrl.u32 %v420, 16
  %v4410 = vrot.slane %v4408, 4
  %v4411 = vshll.u32 %v420, 16
  %v4413 = vrot.slane %v4411, 5
  %v4414 = vor.u32 %v4410, %v4413
  %v4415 = vrot.slane %v4414, 4
  %v4417 = vshll.u32 %v421, 16
  %v4419 = vrot.slane %v4417, 5
  %v4420 = vsel %vm1522, %v4415, %v4419
  %v4422 = vshrl.u32 %v422, 16
  %v4424 = vrot.slane %v4422, 4
  %v4425 = vshll.u32 %v422, 16
  %v4427 = vrot.slane %v4425, 5
  %v4428 = vor.u32 %v4424, %v4427
  %v4429 = vrot.slane %v4428, 4
  %v4431 = vshll.u32 %v423, 16
  %v4433 = vrot.slane %v4431, 5
  %v4434 = vsel %vm1522, %v4429, %v4433
  %v4436 = vshrl.u32 %v424, 16
  %v4438 = vrot.slane %v4436, 4
  %v4439 = vshll.u32 %v424, 16
  %v4441 = vrot.slane %v4439, 5
  %v4442 = vor.u32 %v4438, %v4441
  %v4443 = vrot.slane %v4442, 4
  %v4445 = vshll.u32 %v425, 16
  %v4447 = vrot.slane %v4445, 5
  %v4448 = vsel %vm1522, %v4443, %v4447
  %v4450 = vshrl.u32 %v426, 16
  %v4452 = vrot.slane %v4450, 4
  %v4453 = vshll.u32 %v426, 16
  %v4455 = vrot.slane %v4453, 5
  %v4456 = vor.u32 %v4452, %v4455
  %v4457 = vrot.slane %v4456, 4
  %v4459 = vshll.u32 %v427, 16
  %v4461 = vrot.slane %v4459, 5
  %v4462 = vsel %vm1522, %v4457, %v4461
  %v4464 = vshrl.u32 %v428, 16
  %v4466 = vrot.slane %v4464, 4
  %v4467 = vshll.u32 %v428, 16
  %v4469 = vrot.slane %v4467, 5
  %v4470 = vor.u32 %v4466, %v4469
  %v4471 = vrot.slane %v4470, 4
  %v4473 = vshll.u32 %v429, 16
  %v4475 = vrot.slane %v4473, 5
  %v4476 = vsel %vm1522, %v4471, %v4475
  %v4478 = vshrl.u32 %v430, 16
  %v4480 = vrot.slane %v4478, 4
  %v4481 = vshll.u32 %v430, 16
  %v4483 = vrot.slane %v4481, 5
  %v4484 = vor.u32 %v4480, %v4483
  %v4485 = vrot.slane %v4484, 4
  %v4487 = vshll.u32 %v431, 16
  %v4489 = vrot.slane %v4487, 5
  %v4490 = vsel %vm1522, %v4485, %v4489
  %v4492 = vshrl.u32 %v432, 16
  %v4494 = vrot.slane %v4492, 4
  %v4495 = vshll.u32 %v432, 16
  %v4497 = vrot.slane %v4495, 5
  %v4498 = vor.u32 %v4494, %v4497
  %v4499 = vrot.slane %v4498, 4
  %v4501 = vshll.u32 %v433, 16
  %v4503 = vrot.slane %v4501, 5
  %v4504 = vsel %vm1522, %v4499, %v4503
  %v4506 = vshrl.u32 %v434, 16
  %v4508 = vrot.slane %v4506, 4
  %v4509 = vshll.u32 %v434, 16
  %v4511 = vrot.slane %v4509, 5
  %v4512 = vor.u32 %v4508, %v4511
  %v4513 = vrot.slane %v4512, 4
  %v4515 = vshll.u32 %v435, 16
  %v4517 = vrot.slane %v4515, 5
  %v4518 = vsel %vm1522, %v4513, %v4517
  %v4520 = vshrl.u32 %v436, 16
  %v4522 = vrot.slane %v4520, 4
  %v4523 = vshll.u32 %v436, 16
  %v4525 = vrot.slane %v4523, 5
  %v4526 = vor.u32 %v4522, %v4525
  %v4527 = vrot.slane %v4526, 4
  %v4529 = vshll.u32 %v437, 16
  %v4531 = vrot.slane %v4529, 5
  %v4532 = vsel %vm1522, %v4527, %v4531
  %v4534 = vshrl.u32 %v438, 16
  %v4536 = vrot.slane %v4534, 4
  %v4537 = vshll.u32 %v438, 16
  %v4539 = vrot.slane %v4537, 5
  %v4540 = vor.u32 %v4536, %v4539
  %v4541 = vrot.slane %v4540, 4
  %v4543 = vshll.u32 %v439, 16
  %v4545 = vrot.slane %v4543, 5
  %v4546 = vsel %vm1522, %v4541, %v4545
  %v4763 = vmax.bf16 %v1304, %v1536
  %v4764 = vmax.bf16 %v1305, %v1550
  %v4765 = vmax.bf16 %v1306, %v1564
  %v4766 = vmax.bf16 %v1307, %v1578
  %v4767 = vmax.bf16 %v1308, %v1592
  %v4768 = vmax.bf16 %v1309, %v1606
  %v4769 = vmax.bf16 %v1310, %v1620
  %v4770 = vmax.bf16 %v1311, %v1634
  %v4771 = vmax.bf16 %v1312, %v1648
  %v4772 = vmax.bf16 %v1313, %v1662
  %v4773 = vmax.bf16 %v1314, %v1676
  %v4774 = vmax.bf16 %v1315, %v1690
  %v4775 = vmax.bf16 %v1316, %v1704
  %v4776 = vmax.bf16 %v1317, %v1718
  %v4777 = vmax.bf16 %v1318, %v1732
  %v4778 = vmax.bf16 %v1319, %v1746
  %v4779 = vmax.bf16 %v1320, %v1760
  %v4780 = vmax.bf16 %v1321, %v1774
  %v4781 = vmax.bf16 %v1322, %v1788
  %v4782 = vmax.bf16 %v1323, %v1802
  %v4783 = vmax.bf16 %v1324, %v1816
  %v4784 = vmax.bf16 %v1325, %v1830
  %v4785 = vmax.bf16 %v1326, %v1844
  %v4786 = vmax.bf16 %v1327, %v1858
  %v4787 = vmax.bf16 %v1328, %v1872
  %v4788 = vmax.bf16 %v1329, %v1886
  %v4789 = vmax.bf16 %v1330, %v1900
  %v4790 = vmax.bf16 %v1331, %v1914
  %v4791 = vmax.bf16 %v1332, %v1928
  %v4792 = vmax.bf16 %v1333, %v1942
  %v4793 = vmax.bf16 %v1334, %v1956
  %v4794 = vmax.bf16 %v1335, %v1970
  %v4795 = vmax.bf16 %v1336, %v1984
  %v4796 = vmax.bf16 %v1337, %v1998
  %v4797 = vmax.bf16 %v1338, %v2012
  %v4798 = vmax.bf16 %v1339, %v2026
  %v4799 = vmax.bf16 %v1340, %v2040
  %v4800 = vmax.bf16 %v1341, %v2054
  %v4801 = vmax.bf16 %v1342, %v2068
  %v4802 = vmax.bf16 %v1343, %v2082
  %v4803 = vmax.bf16 %v1344, %v2096
  %v4804 = vmax.bf16 %v1345, %v2110
  %v4805 = vmax.bf16 %v1346, %v2124
  %v4806 = vmax.bf16 %v1347, %v2138
  %v4807 = vmax.bf16 %v1348, %v2152
  %v4808 = vmax.bf16 %v1349, %v2166
  %v4809 = vmax.bf16 %v1350, %v2180
  %v4810 = vmax.bf16 %v1351, %v2194
  %v4811 = vmax.bf16 %v1352, %v2208
  %v4812 = vmax.bf16 %v1353, %v2222
  %v4813 = vmax.bf16 %v1354, %v2236
  %v4814 = vmax.bf16 %v1355, %v2250
  %v4815 = vmax.bf16 %v1356, %v2264
  %v4816 = vmax.bf16 %v1357, %v2278
  %v4817 = vmax.bf16 %v1358, %v2292
  %v4818 = vmax.bf16 %v1359, %v2306
  %v4819 = vmax.bf16 %v1360, %v2320
  %v4820 = vmax.bf16 %v1361, %v2334
  %v4821 = vmax.bf16 %v1362, %v2348
  %v4822 = vmax.bf16 %v1363, %v2362
  %v4823 = vmax.bf16 %v1364, %v2376
  %v4824 = vmax.bf16 %v1365, %v2390
  %v4825 = vmax.bf16 %v1366, %v2404
  %v4826 = vmax.bf16 %v1367, %v2418
  %v4827 = vmax.bf16 %v1368, %v2432
  %v4828 = vmax.bf16 %v1369, %v2446
  %v4829 = vmax.bf16 %v1370, %v2460
  %v4830 = vmax.bf16 %v1371, %v2474
  %v4831 = vmax.bf16 %v1372, %v2488
  %v4832 = vmax.bf16 %v1373, %v2502
  %v4833 = vmax.bf16 %v1374, %v2516
  %v4834 = vmax.bf16 %v1375, %v2530
  %v4835 = vmax.bf16 %v1376, %v2544
  %v4836 = vmax.bf16 %v1377, %v2558
  %v4837 = vmax.bf16 %v1378, %v2572
  %v4838 = vmax.bf16 %v1379, %v2586
  %v4839 = vmax.bf16 %v1380, %v2600
  %v4840 = vmax.bf16 %v1381, %v2614
  %v4841 = vmax.bf16 %v1382, %v2628
  %v4842 = vmax.bf16 %v1383, %v2642
  %v4843 = vmax.bf16 %v1384, %v2656
  %v4844 = vmax.bf16 %v1385, %v2670
  %v4845 = vmax.bf16 %v1386, %v2684
  %v4846 = vmax.bf16 %v1387, %v2698
  %v4847 = vmax.bf16 %v1388, %v2712
  %v4848 = vmax.bf16 %v1389, %v2726
  %v4849 = vmax.bf16 %v1390, %v2740
  %v4850 = vmax.bf16 %v1391, %v2754
  %v4851 = vmax.bf16 %v1392, %v2768
  %v4852 = vmax.bf16 %v1393, %v2782
  %v4853 = vmax.bf16 %v1394, %v2796
  %v4854 = vmax.bf16 %v1395, %v2810
  %v4855 = vmax.bf16 %v1396, %v2824
  %v4856 = vmax.bf16 %v1397, %v2838
  %v4857 = vmax.bf16 %v1398, %v2852
  %v4858 = vmax.bf16 %v1399, %v2866
  %v4859 = vmax.bf16 %v1400, %v2880
  %v4860 = vmax.bf16 %v1401, %v2894
  %v4861 = vmax.bf16 %v1402, %v2908
  %v4862 = vmax.bf16 %v1403, %v2922
  %v4863 = vmax.bf16 %v1404, %v2936
  %v4864 = vmax.bf16 %v1405, %v2950
  %v4865 = vmax.bf16 %v1406, %v2964
  %v4866 = vmax.bf16 %v1407, %v2978
  %v4867 = vmax.bf16 %v1408, %v2992
  %v4868 = vmax.bf16 %v1409, %v3006
  %v4869 = vmax.bf16 %v1410, %v3020
  %v4870 = vmax.bf16 %v1411, %v3034
  %v4871 = vmax.bf16 %v1412, %v3048
  %v4872 = vmax.bf16 %v1413, %v3062
  %v4873 = vmax.bf16 %v1414, %v3076
  %v4874 = vmax.bf16 %v1415, %v3090
  %v4875 = vmax.bf16 %v1416, %v3104
  %v4876 = vmax.bf16 %v1417, %v3118
  %v4877 = vmax.bf16 %v1418, %v3132
  %v4878 = vmax.bf16 %v1419, %v3146
  %v4879 = vmax.bf16 %v1420, %v3160
  %v4880 = vmax.bf16 %v1421, %v3174
  %v4881 = vmax.bf16 %v1422, %v3188
  %v4882 = vmax.bf16 %v1423, %v3202
  %v4883 = vmax.bf16 %v1424, %v3216
  %v4884 = vmax.bf16 %v1425, %v3230
  %v4885 = vmax.bf16 %v1426, %v3244
  %v4886 = vmax.bf16 %v1427, %v3258
  %v4887 = vmax.bf16 %v1428, %v3272
  %v4888 = vmax.bf16 %v1429, %v3286
  %v4889 = vmax.bf16 %v1430, %v3300
  %v4890 = vmax.bf16 %v1431, %v3314
  %v4891 = vmax.bf16 %v1432, %v3328
  %v4892 = vmax.bf16 %v1433, %v3342
  %v4893 = vmax.bf16 %v1434, %v3356
  %v4894 = vmax.bf16 %v1435, %v3370
  %v4895 = vmax.bf16 %v1436, %v3384
  %v4896 = vmax.bf16 %v1437, %v3398
  %v4897 = vmax.bf16 %v1438, %v3412
  %v4898 = vmax.bf16 %v1439, %v3426
  %v4899 = vmax.bf16 %v1440, %v3440
  %v4900 = vmax.bf16 %v1441, %v3454
  %v4901 = vmax.bf16 %v1442, %v3468
  %v4902 = vmax.bf16 %v1443, %v3482
  %v4903 = vmax.bf16 %v1444, %v3496
  %v4904 = vmax.bf16 %v1445, %v3510
  %v4905 = vmax.bf16 %v1446, %v3524
  %v4906 = vmax.bf16 %v1447, %v3538
  %v4907 = vmax.bf16 %v1448, %v3552
  %v4908 = vmax.bf16 %v1449, %v3566
  %v4909 = vmax.bf16 %v1450, %v3580
  %v4910 = vmax.bf16 %v1451, %v3594
  %v4911 = vmax.bf16 %v1452, %v3608
  %v4912 = vmax.bf16 %v1453, %v3622
  %v4913 = vmax.bf16 %v1454, %v3636
  %v4914 = vmax.bf16 %v1455, %v3650
  %v4915 = vmax.bf16 %v1456, %v3664
  %v4916 = vmax.bf16 %v1457, %v3678
  %v4917 = vmax.bf16 %v1458, %v3692
  %v4918 = vmax.bf16 %v1459, %v3706
  %v4919 = vmax.bf16 %v1460, %v3720
  %v4920 = vmax.bf16 %v1461, %v3734
  %v4921 = vmax.bf16 %v1462, %v3748
  %v4922 = vmax.bf16 %v1463, %v3762
  %v4923 = vmax.bf16 %v1464, %v3776
  %v4924 = vmax.bf16 %v1465, %v3790
  %v4925 = vmax.bf16 %v1466, %v3804
  %v4926 = vmax.bf16 %v1467, %v3818
  %v4927 = vmax.bf16 %v1468, %v3832
  %v4928 = vmax.bf16 %v1469, %v3846
  %v4929 = vmax.bf16 %v1470, %v3860
  %v4930 = vmax.bf16 %v1471, %v3874
  %v4931 = vmax.bf16 %v1472, %v3888
  %v4932 = vmax.bf16 %v1473, %v3902
  %v4933 = vmax.bf16 %v1474, %v3916
  %v4934 = vmax.bf16 %v1475, %v3930
  %v4935 = vmax.bf16 %v1476, %v3944
  %v4936 = vmax.bf16 %v1477, %v3958
  %v4937 = vmax.bf16 %v1478, %v3972
  %v4938 = vmax.bf16 %v1479, %v3986
  %v4939 = vmax.bf16 %v1480, %v4000
  %v4940 = vmax.bf16 %v1481, %v4014
  %v4941 = vmax.bf16 %v1482, %v4028
  %v4942 = vmax.bf16 %v1483, %v4042
  %v4943 = vmax.bf16 %v1484, %v4056
  %v4944 = vmax.bf16 %v1485, %v4070
  %v4945 = vmax.bf16 %v1486, %v4084
  %v4946 = vmax.bf16 %v1487, %v4098
  %v4947 = vmax.bf16 %v1488, %v4112
  %v4948 = vmax.bf16 %v1489, %v4126
  %v4949 = vmax.bf16 %v1490, %v4140
  %v4950 = vmax.bf16 %v1491, %v4154
  %v4951 = vmax.bf16 %v1492, %v4168
  %v4952 = vmax.bf16 %v1493, %v4182
  %v4953 = vmax.bf16 %v1494, %v4196
  %v4954 = vmax.bf16 %v1495, %v4210
  %v4955 = vmax.bf16 %v1496, %v4224
  %v4956 = vmax.bf16 %v1497, %v4238
  %v4957 = vmax.bf16 %v1498, %v4252
  %v4958 = vmax.bf16 %v1499, %v4266
  %v4959 = vmax.bf16 %v1500, %v4280
  %v4960 = vmax.bf16 %v1501, %v4294
  %v4961 = vmax.bf16 %v1502, %v4308
  %v4962 = vmax.bf16 %v1503, %v4322
  %v4963 = vmax.bf16 %v1504, %v4336
  %v4964 = vmax.bf16 %v1505, %v4350
  %v4965 = vmax.bf16 %v1506, %v4364
  %v4966 = vmax.bf16 %v1507, %v4378
  %v4967 = vmax.bf16 %v1508, %v4392
  %v4968 = vmax.bf16 %v1509, %v4406
  %v4969 = vmax.bf16 %v1510, %v4420
  %v4970 = vmax.bf16 %v1511, %v4434
  %v4971 = vmax.bf16 %v1512, %v4448
  %v4972 = vmax.bf16 %v1513, %v4462
  %v4973 = vmax.bf16 %v1514, %v4476
  %v4974 = vmax.bf16 %v1515, %v4490
  %v4975 = vmax.bf16 %v1516, %v4504
  %v4976 = vmax.bf16 %v1517, %v4518
  %v4977 = vmax.bf16 %v1518, %v4532
  %v4978 = vmax.bf16 %v1519, %v4546
  %vm4979 = vcmask 519168
  %4980 = vst.msk [vmem:[%s1] sm:$0xf] %vm4979, %v4763
  %4981 = vst.msk [vmem:[%s1 + $0x4] sm:$0xf] %vm4979, %v4764
  %4982 = vst.msk [vmem:[%s1 + $0x8] sm:$0xf] %vm4979, %v4765
  %4983 = vst.msk [vmem:[%s1 + $0xc] sm:$0xf] %vm4979, %v4766
  %4984 = vst.msk [vmem:[%s1 + $0x10] sm:$0xf] %vm4979, %v4767
  %4985 = vst.msk [vmem:[%s1 + $0x14] sm:$0xf] %vm4979, %v4768
  %4986 = vst.msk [vmem:[%s1 + $0x18] sm:$0xf] %vm4979, %v4769
  %4987 = vst.msk [vmem:[%s1 + $0x1c] sm:$0xf] %vm4979, %v4770
  %4988 = vst.msk [vmem:[%s1 + $0x20] sm:$0xf] %vm4979, %v4771
  %4989 = vst.msk [vmem:[%s1 + $0x24] sm:$0xf] %vm4979, %v4772
  %4990 = vst.msk [vmem:[%s1 + $0x28] sm:$0xf] %vm4979, %v4773
  %4991 = vst.msk [vmem:[%s1 + $0x2c] sm:$0xf] %vm4979, %v4774
  %4992 = vst.msk [vmem:[%s1 + $0x30] sm:$0xf] %vm4979, %v4775
  %4993 = vst.msk [vmem:[%s1 + $0x34] sm:$0xf] %vm4979, %v4776
  %4994 = vst.msk [vmem:[%s1 + $0x38] sm:$0xf] %vm4979, %v4777
  %4995 = vst.msk [vmem:[%s1 + $0x3c] sm:$0xf] %vm4979, %v4778
  %4996 = vst.msk [vmem:[%s1 + $0x40] sm:$0xf] %vm4979, %v4779
  %4997 = vst.msk [vmem:[%s1 + $0x44] sm:$0xf] %vm4979, %v4780
  %4998 = vst.msk [vmem:[%s1 + $0x48] sm:$0xf] %vm4979, %v4781
  %4999 = vst.msk [vmem:[%s1 + $0x4c] sm:$0xf] %vm4979, %v4782
  %5000 = vst.msk [vmem:[%s1 + $0x50] sm:$0xf] %vm4979, %v4783
  %5001 = vst.msk [vmem:[%s1 + $0x54] sm:$0xf] %vm4979, %v4784
  %5002 = vst.msk [vmem:[%s1 + $0x58] sm:$0xf] %vm4979, %v4785
  %5003 = vst.msk [vmem:[%s1 + $0x5c] sm:$0xf] %vm4979, %v4786
  %5004 = vst.msk [vmem:[%s1 + $0x60] sm:$0xf] %vm4979, %v4787
  %5005 = vst.msk [vmem:[%s1 + $0x64] sm:$0xf] %vm4979, %v4788
  %5006 = vst.msk [vmem:[%s1 + $0x68] sm:$0xf] %vm4979, %v4789
  %5007 = vst.msk [vmem:[%s1 + $0x6c] sm:$0xf] %vm4979, %v4790
  %5008 = vst.msk [vmem:[%s1 + $0x70] sm:$0xf] %vm4979, %v4791
  %5009 = vst.msk [vmem:[%s1 + $0x74] sm:$0xf] %vm4979, %v4792
  %5010 = vst.msk [vmem:[%s1 + $0x78] sm:$0xf] %vm4979, %v4793
  %5011 = vst.msk [vmem:[%s1 + $0x7c] sm:$0xf] %vm4979, %v4794
  %5012 = vst.msk [vmem:[%s1 + $0x80] sm:$0xf] %vm4979, %v4795
  %5013 = vst.msk [vmem:[%s1 + $0x84] sm:$0xf] %vm4979, %v4796
  %5014 = vst.msk [vmem:[%s1 + $0x88] sm:$0xf] %vm4979, %v4797
  %5015 = vst.msk [vmem:[%s1 + $0x8c] sm:$0xf] %vm4979, %v4798
  %5016 = vst.msk [vmem:[%s1 + $0x90] sm:$0xf] %vm4979, %v4799
  %5017 = vst.msk [vmem:[%s1 + $0x94] sm:$0xf] %vm4979, %v4800
  %5018 = vst.msk [vmem:[%s1 + $0x98] sm:$0xf] %vm4979, %v4801
  %5019 = vst.msk [vmem:[%s1 + $0x9c] sm:$0xf] %vm4979, %v4802
  %5020 = vst.msk [vmem:[%s1 + $0xa0] sm:$0xf] %vm4979, %v4803
  %5021 = vst.msk [vmem:[%s1 + $0xa4] sm:$0xf] %vm4979, %v4804
  %5022 = vst.msk [vmem:[%s1 + $0xa8] sm:$0xf] %vm4979, %v4805
  %5023 = vst.msk [vmem:[%s1 + $0xac] sm:$0xf] %vm4979, %v4806
  %5024 = vst.msk [vmem:[%s1 + $0xb0] sm:$0xf] %vm4979, %v4807
  %5025 = vst.msk [vmem:[%s1 + $0xb4] sm:$0xf] %vm4979, %v4808
  %5026 = vst.msk [vmem:[%s1 + $0xb8] sm:$0xf] %vm4979, %v4809
  %5027 = vst.msk [vmem:[%s1 + $0xbc] sm:$0xf] %vm4979, %v4810
  %5028 = vst.msk [vmem:[%s1 + $0xc0] sm:$0xf] %vm4979, %v4811
  %5029 = vst.msk [vmem:[%s1 + $0xc4] sm:$0xf] %vm4979, %v4812
  %5030 = vst.msk [vmem:[%s1 + $0xc8] sm:$0xf] %vm4979, %v4813
  %5031 = vst.msk [vmem:[%s1 + $0xcc] sm:$0xf] %vm4979, %v4814
  %5032 = vst.msk [vmem:[%s1 + $0xd0] sm:$0xf] %vm4979, %v4815
  %5033 = vst.msk [vmem:[%s1 + $0xd4] sm:$0xf] %vm4979, %v4816
  %5034 = vst.msk [vmem:[%s1 + $0xd8] sm:$0xf] %vm4979, %v4817
  %5035 = vst.msk [vmem:[%s1 + $0xdc] sm:$0xf] %vm4979, %v4818
  %5036 = vst.msk [vmem:[%s1 + $0xe0] sm:$0xf] %vm4979, %v4819
  %5037 = vst.msk [vmem:[%s1 + $0xe4] sm:$0xf] %vm4979, %v4820
  %5038 = vst.msk [vmem:[%s1 + $0xe8] sm:$0xf] %vm4979, %v4821
  %5039 = vst.msk [vmem:[%s1 + $0xec] sm:$0xf] %vm4979, %v4822
  %5040 = vst.msk [vmem:[%s1 + $0xf0] sm:$0xf] %vm4979, %v4823
  %5041 = vst.msk [vmem:[%s1 + $0xf4] sm:$0xf] %vm4979, %v4824
  %5042 = vst.msk [vmem:[%s1 + $0xf8] sm:$0xf] %vm4979, %v4825
  %5043 = vst.msk [vmem:[%s1 + $0xfc] sm:$0xf] %vm4979, %v4826
  %5044 = vst.msk [vmem:[%s1 + $0x100] sm:$0xf] %vm4979, %v4827
  %5045 = vst.msk [vmem:[%s1 + $0x104] sm:$0xf] %vm4979, %v4828
  %5046 = vst.msk [vmem:[%s1 + $0x108] sm:$0xf] %vm4979, %v4829
  %5047 = vst.msk [vmem:[%s1 + $0x10c] sm:$0xf] %vm4979, %v4830
  %5048 = vst.msk [vmem:[%s1 + $0x110] sm:$0xf] %vm4979, %v4831
  %5049 = vst.msk [vmem:[%s1 + $0x114] sm:$0xf] %vm4979, %v4832
  %5050 = vst.msk [vmem:[%s1 + $0x118] sm:$0xf] %vm4979, %v4833
  %5051 = vst.msk [vmem:[%s1 + $0x11c] sm:$0xf] %vm4979, %v4834
  %5052 = vst.msk [vmem:[%s1 + $0x120] sm:$0xf] %vm4979, %v4835
  %5053 = vst.msk [vmem:[%s1 + $0x124] sm:$0xf] %vm4979, %v4836
  %5054 = vst.msk [vmem:[%s1 + $0x128] sm:$0xf] %vm4979, %v4837
  %5055 = vst.msk [vmem:[%s1 + $0x12c] sm:$0xf] %vm4979, %v4838
  %5056 = vst.msk [vmem:[%s1 + $0x130] sm:$0xf] %vm4979, %v4839
  %5057 = vst.msk [vmem:[%s1 + $0x134] sm:$0xf] %vm4979, %v4840
  %5058 = vst.msk [vmem:[%s1 + $0x138] sm:$0xf] %vm4979, %v4841
  %5059 = vst.msk [vmem:[%s1 + $0x13c] sm:$0xf] %vm4979, %v4842
  %5060 = vst.msk [vmem:[%s1 + $0x140] sm:$0xf] %vm4979, %v4843
  %5061 = vst.msk [vmem:[%s1 + $0x144] sm:$0xf] %vm4979, %v4844
  %5062 = vst.msk [vmem:[%s1 + $0x148] sm:$0xf] %vm4979, %v4845
  %5063 = vst.msk [vmem:[%s1 + $0x14c] sm:$0xf] %vm4979, %v4846
  %5064 = vst.msk [vmem:[%s1 + $0x150] sm:$0xf] %vm4979, %v4847
  %5065 = vst.msk [vmem:[%s1 + $0x154] sm:$0xf] %vm4979, %v4848
  %5066 = vst.msk [vmem:[%s1 + $0x158] sm:$0xf] %vm4979, %v4849
  %5067 = vst.msk [vmem:[%s1 + $0x15c] sm:$0xf] %vm4979, %v4850
  %5068 = vst.msk [vmem:[%s1 + $0x160] sm:$0xf] %vm4979, %v4851
  %5069 = vst.msk [vmem:[%s1 + $0x164] sm:$0xf] %vm4979, %v4852
  %5070 = vst.msk [vmem:[%s1 + $0x168] sm:$0xf] %vm4979, %v4853
  %5071 = vst.msk [vmem:[%s1 + $0x16c] sm:$0xf] %vm4979, %v4854
  %5072 = vst.msk [vmem:[%s1 + $0x170] sm:$0xf] %vm4979, %v4855
  %5073 = vst.msk [vmem:[%s1 + $0x174] sm:$0xf] %vm4979, %v4856
  %5074 = vst.msk [vmem:[%s1 + $0x178] sm:$0xf] %vm4979, %v4857
  %5075 = vst.msk [vmem:[%s1 + $0x17c] sm:$0xf] %vm4979, %v4858
  %5076 = vst.msk [vmem:[%s1 + $0x180] sm:$0xf] %vm4979, %v4859
  %5077 = vst.msk [vmem:[%s1 + $0x184] sm:$0xf] %vm4979, %v4860
  %5078 = vst.msk [vmem:[%s1 + $0x188] sm:$0xf] %vm4979, %v4861
  %5079 = vst.msk [vmem:[%s1 + $0x18c] sm:$0xf] %vm4979, %v4862
  %5080 = vst.msk [vmem:[%s1 + $0x190] sm:$0xf] %vm4979, %v4863
  %5081 = vst.msk [vmem:[%s1 + $0x194] sm:$0xf] %vm4979, %v4864
  %5082 = vst.msk [vmem:[%s1 + $0x198] sm:$0xf] %vm4979, %v4865
  %5083 = vst.msk [vmem:[%s1 + $0x19c] sm:$0xf] %vm4979, %v4866
  %5084 = vst.msk [vmem:[%s1 + $0x1a0] sm:$0xf] %vm4979, %v4867
  %5085 = vst.msk [vmem:[%s1 + $0x1a4] sm:$0xf] %vm4979, %v4868
  %5086 = vst.msk [vmem:[%s1 + $0x1a8] sm:$0xf] %vm4979, %v4869
  %5087 = vst.msk [vmem:[%s1 + $0x1ac] sm:$0xf] %vm4979, %v4870
  %5088 = vst.msk [vmem:[%s1 + $0x1b0] sm:$0xf] %vm4979, %v4871
  %5089 = vst.msk [vmem:[%s1 + $0x1b4] sm:$0xf] %vm4979, %v4872
  %5090 = vst.msk [vmem:[%s1 + $0x1b8] sm:$0xf] %vm4979, %v4873
  %5091 = vst.msk [vmem:[%s1 + $0x1bc] sm:$0xf] %vm4979, %v4874
  %5092 = vst.msk [vmem:[%s1 + $0x1c0] sm:$0xf] %vm4979, %v4875
  %5093 = vst.msk [vmem:[%s1 + $0x1c4] sm:$0xf] %vm4979, %v4876
  %5094 = vst.msk [vmem:[%s1 + $0x1c8] sm:$0xf] %vm4979, %v4877
  %5095 = vst.msk [vmem:[%s1 + $0x1cc] sm:$0xf] %vm4979, %v4878
  %5096 = vst.msk [vmem:[%s1 + $0x1d0] sm:$0xf] %vm4979, %v4879
  %5097 = vst.msk [vmem:[%s1 + $0x1d4] sm:$0xf] %vm4979, %v4880
  %5098 = vst.msk [vmem:[%s1 + $0x1d8] sm:$0xf] %vm4979, %v4881
  %5099 = vst.msk [vmem:[%s1 + $0x1dc] sm:$0xf] %vm4979, %v4882
  %5100 = vst.msk [vmem:[%s1 + $0x1e0] sm:$0xf] %vm4979, %v4883
  %5101 = vst.msk [vmem:[%s1 + $0x1e4] sm:$0xf] %vm4979, %v4884
  %5102 = vst.msk [vmem:[%s1 + $0x1e8] sm:$0xf] %vm4979, %v4885
  %5103 = vst.msk [vmem:[%s1 + $0x1ec] sm:$0xf] %vm4979, %v4886
  %5104 = vst.msk [vmem:[%s1 + $0x1f0] sm:$0xf] %vm4979, %v4887
  %5105 = vst.msk [vmem:[%s1 + $0x1f4] sm:$0xf] %vm4979, %v4888
  %5106 = vst.msk [vmem:[%s1 + $0x1f8] sm:$0xf] %vm4979, %v4889
  %5107 = vst.msk [vmem:[%s1 + $0x1fc] sm:$0xf] %vm4979, %v4890
  %5108 = vst.msk [vmem:[%s1 + $0x200] sm:$0xf] %vm4979, %v4891
  %5109 = vst.msk [vmem:[%s1 + $0x204] sm:$0xf] %vm4979, %v4892
  %5110 = vst.msk [vmem:[%s1 + $0x208] sm:$0xf] %vm4979, %v4893
  %5111 = vst.msk [vmem:[%s1 + $0x20c] sm:$0xf] %vm4979, %v4894
  %5112 = vst.msk [vmem:[%s1 + $0x210] sm:$0xf] %vm4979, %v4895
  %5113 = vst.msk [vmem:[%s1 + $0x214] sm:$0xf] %vm4979, %v4896
  %5114 = vst.msk [vmem:[%s1 + $0x218] sm:$0xf] %vm4979, %v4897
  %5115 = vst.msk [vmem:[%s1 + $0x21c] sm:$0xf] %vm4979, %v4898
  %5116 = vst.msk [vmem:[%s1 + $0x220] sm:$0xf] %vm4979, %v4899
  %5117 = vst.msk [vmem:[%s1 + $0x224] sm:$0xf] %vm4979, %v4900
  %5118 = vst.msk [vmem:[%s1 + $0x228] sm:$0xf] %vm4979, %v4901
  %5119 = vst.msk [vmem:[%s1 + $0x22c] sm:$0xf] %vm4979, %v4902
  %5120 = vst.msk [vmem:[%s1 + $0x230] sm:$0xf] %vm4979, %v4903
  %5121 = vst.msk [vmem:[%s1 + $0x234] sm:$0xf] %vm4979, %v4904
  %5122 = vst.msk [vmem:[%s1 + $0x238] sm:$0xf] %vm4979, %v4905
  %5123 = vst.msk [vmem:[%s1 + $0x23c] sm:$0xf] %vm4979, %v4906
  %5124 = vst.msk [vmem:[%s1 + $0x240] sm:$0xf] %vm4979, %v4907
  %5125 = vst.msk [vmem:[%s1 + $0x244] sm:$0xf] %vm4979, %v4908
  %5126 = vst.msk [vmem:[%s1 + $0x248] sm:$0xf] %vm4979, %v4909
  %5127 = vst.msk [vmem:[%s1 + $0x24c] sm:$0xf] %vm4979, %v4910
  %5128 = vst.msk [vmem:[%s1 + $0x250] sm:$0xf] %vm4979, %v4911
  %5129 = vst.msk [vmem:[%s1 + $0x254] sm:$0xf] %vm4979, %v4912
  %5130 = vst.msk [vmem:[%s1 + $0x258] sm:$0xf] %vm4979, %v4913
  %5131 = vst.msk [vmem:[%s1 + $0x25c] sm:$0xf] %vm4979, %v4914
  %5132 = vst.msk [vmem:[%s1 + $0x260] sm:$0xf] %vm4979, %v4915
  %5133 = vst.msk [vmem:[%s1 + $0x264] sm:$0xf] %vm4979, %v4916
  %5134 = vst.msk [vmem:[%s1 + $0x268] sm:$0xf] %vm4979, %v4917
  %5135 = vst.msk [vmem:[%s1 + $0x26c] sm:$0xf] %vm4979, %v4918
  %5136 = vst.msk [vmem:[%s1 + $0x270] sm:$0xf] %vm4979, %v4919
  %5137 = vst.msk [vmem:[%s1 + $0x274] sm:$0xf] %vm4979, %v4920
  %5138 = vst.msk [vmem:[%s1 + $0x278] sm:$0xf] %vm4979, %v4921
  %5139 = vst.msk [vmem:[%s1 + $0x27c] sm:$0xf] %vm4979, %v4922
  %5140 = vst.msk [vmem:[%s1 + $0x280] sm:$0xf] %vm4979, %v4923
  %5141 = vst.msk [vmem:[%s1 + $0x284] sm:$0xf] %vm4979, %v4924
  %5142 = vst.msk [vmem:[%s1 + $0x288] sm:$0xf] %vm4979, %v4925
  %5143 = vst.msk [vmem:[%s1 + $0x28c] sm:$0xf] %vm4979, %v4926
  %5144 = vst.msk [vmem:[%s1 + $0x290] sm:$0xf] %vm4979, %v4927
  %5145 = vst.msk [vmem:[%s1 + $0x294] sm:$0xf] %vm4979, %v4928
  %5146 = vst.msk [vmem:[%s1 + $0x298] sm:$0xf] %vm4979, %v4929
  %5147 = vst.msk [vmem:[%s1 + $0x29c] sm:$0xf] %vm4979, %v4930
  %5148 = vst.msk [vmem:[%s1 + $0x2a0] sm:$0xf] %vm4979, %v4931
  %5149 = vst.msk [vmem:[%s1 + $0x2a4] sm:$0xf] %vm4979, %v4932
  %5150 = vst.msk [vmem:[%s1 + $0x2a8] sm:$0xf] %vm4979, %v4933
  %5151 = vst.msk [vmem:[%s1 + $0x2ac] sm:$0xf] %vm4979, %v4934
  %5152 = vst.msk [vmem:[%s1 + $0x2b0] sm:$0xf] %vm4979, %v4935
  %5153 = vst.msk [vmem:[%s1 + $0x2b4] sm:$0xf] %vm4979, %v4936
  %5154 = vst.msk [vmem:[%s1 + $0x2b8] sm:$0xf] %vm4979, %v4937
  %5155 = vst.msk [vmem:[%s1 + $0x2bc] sm:$0xf] %vm4979, %v4938
  %5156 = vst.msk [vmem:[%s1 + $0x2c0] sm:$0xf] %vm4979, %v4939
  %5157 = vst.msk [vmem:[%s1 + $0x2c4] sm:$0xf] %vm4979, %v4940
  %5158 = vst.msk [vmem:[%s1 + $0x2c8] sm:$0xf] %vm4979, %v4941
  %5159 = vst.msk [vmem:[%s1 + $0x2cc] sm:$0xf] %vm4979, %v4942
  %5160 = vst.msk [vmem:[%s1 + $0x2d0] sm:$0xf] %vm4979, %v4943
  %5161 = vst.msk [vmem:[%s1 + $0x2d4] sm:$0xf] %vm4979, %v4944
  %5162 = vst.msk [vmem:[%s1 + $0x2d8] sm:$0xf] %vm4979, %v4945
  %5163 = vst.msk [vmem:[%s1 + $0x2dc] sm:$0xf] %vm4979, %v4946
  %5164 = vst.msk [vmem:[%s1 + $0x2e0] sm:$0xf] %vm4979, %v4947
  %5165 = vst.msk [vmem:[%s1 + $0x2e4] sm:$0xf] %vm4979, %v4948
  %5166 = vst.msk [vmem:[%s1 + $0x2e8] sm:$0xf] %vm4979, %v4949
  %5167 = vst.msk [vmem:[%s1 + $0x2ec] sm:$0xf] %vm4979, %v4950
  %5168 = vst.msk [vmem:[%s1 + $0x2f0] sm:$0xf] %vm4979, %v4951
  %5169 = vst.msk [vmem:[%s1 + $0x2f4] sm:$0xf] %vm4979, %v4952
  %5170 = vst.msk [vmem:[%s1 + $0x2f8] sm:$0xf] %vm4979, %v4953
  %5171 = vst.msk [vmem:[%s1 + $0x2fc] sm:$0xf] %vm4979, %v4954
  %5172 = vst.msk [vmem:[%s1 + $0x300] sm:$0xf] %vm4979, %v4955
  %5173 = vst.msk [vmem:[%s1 + $0x304] sm:$0xf] %vm4979, %v4956
  %5174 = vst.msk [vmem:[%s1 + $0x308] sm:$0xf] %vm4979, %v4957
  %5175 = vst.msk [vmem:[%s1 + $0x30c] sm:$0xf] %vm4979, %v4958
  %5176 = vst.msk [vmem:[%s1 + $0x310] sm:$0xf] %vm4979, %v4959
  %5177 = vst.msk [vmem:[%s1 + $0x314] sm:$0xf] %vm4979, %v4960
  %5178 = vst.msk [vmem:[%s1 + $0x318] sm:$0xf] %vm4979, %v4961
  %5179 = vst.msk [vmem:[%s1 + $0x31c] sm:$0xf] %vm4979, %v4962
  %5180 = vst.msk [vmem:[%s1 + $0x320] sm:$0xf] %vm4979, %v4963
  %5181 = vst.msk [vmem:[%s1 + $0x324] sm:$0xf] %vm4979, %v4964
  %5182 = vst.msk [vmem:[%s1 + $0x328] sm:$0xf] %vm4979, %v4965
  %5183 = vst.msk [vmem:[%s1 + $0x32c] sm:$0xf] %vm4979, %v4966
  %5184 = vst.msk [vmem:[%s1 + $0x330] sm:$0xf] %vm4979, %v4967
  %5185 = vst.msk [vmem:[%s1 + $0x334] sm:$0xf] %vm4979, %v4968
  %5186 = vst.msk [vmem:[%s1 + $0x338] sm:$0xf] %vm4979, %v4969
  %5187 = vst.msk [vmem:[%s1 + $0x33c] sm:$0xf] %vm4979, %v4970
  %5188 = vst.msk [vmem:[%s1 + $0x340] sm:$0xf] %vm4979, %v4971
  %5189 = vst.msk [vmem:[%s1 + $0x344] sm:$0xf] %vm4979, %v4972
  %5190 = vst.msk [vmem:[%s1 + $0x348] sm:$0xf] %vm4979, %v4973
  %5191 = vst.msk [vmem:[%s1 + $0x34c] sm:$0xf] %vm4979, %v4974
  %5192 = vst.msk [vmem:[%s1 + $0x350] sm:$0xf] %vm4979, %v4975
  %5193 = vst.msk [vmem:[%s1 + $0x354] sm:$0xf] %vm4979, %v4976
  %5194 = vst.msk [vmem:[%s1 + $0x358] sm:$0xf] %vm4979, %v4977
  %5195 = vst.msk [vmem:[%s1 + $0x35c] sm:$0xf] %vm4979, %v4978
  // Predicated region
  $region6: #{resnet_encoder3d_forward.9} parent=0 // pred_check
    _
  $region7: #{resnet_encoder3d_forward.9} parent=0 // pred_check_branch
    %5197 = sbr.rel (0) target = $region9
  $region8: #{resnet_encoder3d_forward.9} parent=0 // pred_region
    _
  $region9: #{resnet_encoder3d_forward.9} parent=0 // pred_fallthru
    _
  // Predicated region
  $region10: #{resnet_encoder3d_forward.9} parent=0 // pred_check
    _
  $region11: #{resnet_encoder3d_forward.9} parent=0 // pred_check_branch
    %5199 = sbr.rel (0) target = $region13
  $region12: #{resnet_encoder3d_forward.9} parent=0 // pred_region
    _
  $region13: #{resnet_encoder3d_forward.9} parent=0 // pred_fallthru
    _

// kernel: resnet_encoder3d_forward.11
$region0: #{resnet_encoder3d_forward.11}
  #allocation0 [shape = 'u32[]', space=smem, size = 0x4, offset = 0x4, fixed_abs, tag = 'smem constant byte address 0x4 - core index']
  #allocation1 [shape = 'u32[144,128]{1,0:T(1,128)}', space=vmem, size = 0x12000, scoped, tag = 'internal scratch']
  %s0 = inlined_call_operand.vmem [shape: bf16[2,3,8192], index: 0, kind: input, shape index: {}]
  %s1 = inlined_call_operand.vmem [shape: bf16[2,2,4096], index: 1, kind: output, shape index: {}]
  %s2 = sld [smem:[#allocation0]]
  $region14: #{resnet_encoder3d_forward.11} parent=0
    _
  %s4 = ssub.s32 1, %s2
  %s5 = scalar_select 0, %s4, %s2
  // Predicated region
  $region2: #{resnet_encoder3d_forward.11} parent=0 // pred_check
    _
  $region3: #{resnet_encoder3d_forward.11} parent=0 // pred_check_branch
    %7 = sbr.rel (0) target = $region5
  $region4: #{resnet_encoder3d_forward.11} parent=0 // pred_region
    _
  $region5: #{resnet_encoder3d_forward.11} parent=0 // pred_fallthru
    _
  %v8 = vld [vmem:[%s0] sm:$0xff]
  %v9 = vld [vmem:[%s0 + $0x8] sm:$0xff]
  %v10 = vld [vmem:[%s0 + $0x10] sm:$0xff]
  %v11 = vld [vmem:[%s0 + $0x18] sm:$0xff]
  %v12 = vld [vmem:[%s0 + $0x20] sm:$0xff]
  %v13 = vld [vmem:[%s0 + $0x28] sm:$0xff]
  %v14 = vld [vmem:[%s0 + $0x30] sm:$0xff]
  %v15 = vld [vmem:[%s0 + $0x38] sm:$0xff]
  %v16 = vld [vmem:[%s0 + $0x40] sm:$0xff]
  %v17 = vld [vmem:[%s0 + $0x48] sm:$0xff]
  %v18 = vld [vmem:[%s0 + $0x50] sm:$0xff]
  %v19 = vld [vmem:[%s0 + $0x58] sm:$0xff]
  %v20 = vld [vmem:[%s0 + $0x60] sm:$0xff]
  %v21 = vld [vmem:[%s0 + $0x68] sm:$0xff]
  %v22 = vld [vmem:[%s0 + $0x70] sm:$0xff]
  %v23 = vld [vmem:[%s0 + $0x78] sm:$0xff]
  %v24 = vld [vmem:[%s0 + $0x80] sm:$0xff]
  %v25 = vld [vmem:[%s0 + $0x88] sm:$0xff]
  %v26 = vld [vmem:[%s0 + $0x90] sm:$0xff]
  %v27 = vld [vmem:[%s0 + $0x98] sm:$0xff]
  %v28 = vld [vmem:[%s0 + $0xa0] sm:$0xff]
  %v29 = vld [vmem:[%s0 + $0xa8] sm:$0xff]
  %v30 = vld [vmem:[%s0 + $0xb0] sm:$0xff]
  %v31 = vld [vmem:[%s0 + $0xb8] sm:$0xff]
  %v32 = vld [vmem:[%s0 + $0xc0] sm:$0xff]
  %v33 = vld [vmem:[%s0 + $0xc8] sm:$0xff]
  %v34 = vld [vmem:[%s0 + $0xd0] sm:$0xff]
  %v35 = vld [vmem:[%s0 + $0xd8] sm:$0xff]
  %v36 = vld [vmem:[%s0 + $0xe0] sm:$0xff]
  %v37 = vld [vmem:[%s0 + $0xe8] sm:$0xff]
  %v38 = vld [vmem:[%s0 + $0xf0] sm:$0xff]
  %v39 = vld [vmem:[%s0 + $0xf8] sm:$0xff]
  %v40 = vmax.bf16 %v8, %v16
  %v41 = vmax.bf16 %v9, %v17
  %v42 = vmax.bf16 %v10, %v18
  %v43 = vmax.bf16 %v11, %v19
  %v44 = vmax.bf16 %v12, %v20
  %v45 = vmax.bf16 %v13, %v21
  %v46 = vmax.bf16 %v14, %v22
  %v47 = vmax.bf16 %v15, %v23
  %v48 = vmax.bf16 %v24, %v32
  %v49 = vmax.bf16 %v25, %v33
  %v50 = vmax.bf16 %v26, %v34
  %v51 = vmax.bf16 %v27, %v35
  %v52 = vmax.bf16 %v28, %v36
  %v53 = vmax.bf16 %v29, %v37
  %v54 = vmax.bf16 %v30, %v38
  %v55 = vmax.bf16 %v31, %v39
  %v57 = vshrl.u32 %v8, 16
  %v59 = vrot.slane %v57, 6
  %v60 = vshll.u32 %v8, 16
  %v62 = vrot.slane %v60, 7
  %v63 = vor.u32 %v59, %v62
  %v64 = vrot.slane %v63, 2
  %v66 = vshrl.u32 %v9, 16
  %v68 = vrot.slane %v66, 6
  %v69 = vshll.u32 %v9, 16
  %v71 = vrot.slane %v69, 7
  %v72 = vor.u32 %v68, %v71
  %v73 = vrot.slane %v72, 2
  %v75 = vshrl.u32 %v10, 16
  %v77 = vrot.slane %v75, 6
  %v78 = vshll.u32 %v10, 16
  %v80 = vrot.slane %v78, 7
  %v81 = vor.u32 %v77, %v80
  %v82 = vrot.slane %v81, 2
  %v84 = vshrl.u32 %v11, 16
  %v86 = vrot.slane %v84, 6
  %v87 = vshll.u32 %v11, 16
  %v89 = vrot.slane %v87, 7
  %v90 = vor.u32 %v86, %v89
  %v91 = vrot.slane %v90, 2
  %v93 = vshrl.u32 %v12, 16
  %v95 = vrot.slane %v93, 6
  %v96 = vshll.u32 %v12, 16
  %v98 = vrot.slane %v96, 7
  %v99 = vor.u32 %v95, %v98
  %v100 = vrot.slane %v99, 2
  %v102 = vshrl.u32 %v13, 16
  %v104 = vrot.slane %v102, 6
  %v105 = vshll.u32 %v13, 16
  %v107 = vrot.slane %v105, 7
  %v108 = vor.u32 %v104, %v107
  %v109 = vrot.slane %v108, 2
  %v111 = vshrl.u32 %v14, 16
  %v113 = vrot.slane %v111, 6
  %v114 = vshll.u32 %v14, 16
  %v116 = vrot.slane %v114, 7
  %v117 = vor.u32 %v113, %v116
  %v118 = vrot.slane %v117, 2
  %v120 = vshrl.u32 %v15, 16
  %v122 = vrot.slane %v120, 6
  %v123 = vshll.u32 %v15, 16
  %v125 = vrot.slane %v123, 7
  %v126 = vor.u32 %v122, %v125
  %v127 = vrot.slane %v126, 2
  %v129 = vshrl.u32 %v24, 16
  %v131 = vrot.slane %v129, 6
  %v132 = vshll.u32 %v24, 16
  %v134 = vrot.slane %v132, 7
  %v135 = vor.u32 %v131, %v134
  %v136 = vrot.slane %v135, 2
  %v138 = vshrl.u32 %v25, 16
  %v140 = vrot.slane %v138, 6
  %v141 = vshll.u32 %v25, 16
  %v143 = vrot.slane %v141, 7
  %v144 = vor.u32 %v140, %v143
  %v145 = vrot.slane %v144, 2
  %v147 = vshrl.u32 %v26, 16
  %v149 = vrot.slane %v147, 6
  %v150 = vshll.u32 %v26, 16
  %v152 = vrot.slane %v150, 7
  %v153 = vor.u32 %v149, %v152
  %v154 = vrot.slane %v153, 2
  %v156 = vshrl.u32 %v27, 16
  %v158 = vrot.slane %v156, 6
  %v159 = vshll.u32 %v27, 16
  %v161 = vrot.slane %v159, 7
  %v162 = vor.u32 %v158, %v161
  %v163 = vrot.slane %v162, 2
  %v165 = vshrl.u32 %v28, 16
  %v167 = vrot.slane %v165, 6
  %v168 = vshll.u32 %v28, 16
  %v170 = vrot.slane %v168, 7
  %v171 = vor.u32 %v167, %v170
  %v172 = vrot.slane %v171, 2
  %v174 = vshrl.u32 %v29, 16
  %v176 = vrot.slane %v174, 6
  %v177 = vshll.u32 %v29, 16
  %v179 = vrot.slane %v177, 7
  %v180 = vor.u32 %v176, %v179
  %v181 = vrot.slane %v180, 2
  %v183 = vshrl.u32 %v30, 16
  %v185 = vrot.slane %v183, 6
  %v186 = vshll.u32 %v30, 16
  %v188 = vrot.slane %v186, 7
  %v189 = vor.u32 %v185, %v188
  %v190 = vrot.slane %v189, 2
  %v192 = vshrl.u32 %v31, 16
  %v194 = vrot.slane %v192, 6
  %v195 = vshll.u32 %v31, 16
  %v197 = vrot.slane %v195, 7
  %v198 = vor.u32 %v194, %v197
  %v199 = vrot.slane %v198, 2
  %v216 = vmax.bf16 %v40, %v64
  %v217 = vmax.bf16 %v41, %v73
  %v218 = vmax.bf16 %v42, %v82
  %v219 = vmax.bf16 %v43, %v91
  %v220 = vmax.bf16 %v44, %v100
  %v221 = vmax.bf16 %v45, %v109
  %v222 = vmax.bf16 %v46, %v118
  %v223 = vmax.bf16 %v47, %v127
  %v224 = vmax.bf16 %v48, %v136
  %v225 = vmax.bf16 %v49, %v145
  %v226 = vmax.bf16 %v50, %v154
  %v227 = vmax.bf16 %v51, %v163
  %v228 = vmax.bf16 %v52, %v172
  %v229 = vmax.bf16 %v53, %v181
  %v230 = vmax.bf16 %v54, %v190
  %v231 = vmax.bf16 %v55, %v199
  %v249 = vunpack.c.l.s4 1966171168
  %v250 = vunpack.c.0.s8 %v249
  %v251 = vlaneseq
  %v252 = vshrl.u32 %v251, 7
  %v253 = vsub.s32 %v250, %v252
  %v254 = vrot.slane %v216, %v253
  %v256 = vunpack.c.l.s4 1966171168
  %v257 = vunpack.c.0.s8 %v256
  %v258 = vlaneseq
  %v259 = vshrl.u32 %v258, 7
  %v260 = vsub.s32 %v257, %v259
  %v261 = vrot.slane %v217, %v260
  %v262 = vcombine.low %v254, %v261
  %v264 = vunpack.c.l.s4 1966171168
  %v265 = vunpack.c.0.s8 %v264
  %v266 = vlaneseq
  %v267 = vshrl.u32 %v266, 7
  %v268 = vsub.s32 %v265, %v267
  %v269 = vrot.slane %v218, %v268
  %v271 = vunpack.c.l.s4 1966171168
  %v272 = vunpack.c.0.s8 %v271
  %v273 = vlaneseq
  %v274 = vshrl.u32 %v273, 7
  %v275 = vsub.s32 %v272, %v274
  %v276 = vrot.slane %v219, %v275
  %v277 = vcombine.low %v269, %v276
  %v279 = vunpack.c.l.s4 1966171168
  %v280 = vunpack.c.0.s8 %v279
  %v281 = vlaneseq
  %v282 = vshrl.u32 %v281, 7
  %v283 = vsub.s32 %v280, %v282
  %v284 = vrot.slane %v220, %v283
  %v286 = vunpack.c.l.s4 1966171168
  %v287 = vunpack.c.0.s8 %v286
  %v288 = vlaneseq
  %v289 = vshrl.u32 %v288, 7
  %v290 = vsub.s32 %v287, %v289
  %v291 = vrot.slane %v221, %v290
  %v292 = vcombine.low %v284, %v291
  %v294 = vunpack.c.l.s4 1966171168
  %v295 = vunpack.c.0.s8 %v294
  %v296 = vlaneseq
  %v297 = vshrl.u32 %v296, 7
  %v298 = vsub.s32 %v295, %v297
  %v299 = vrot.slane %v222, %v298
  %v301 = vunpack.c.l.s4 1966171168
  %v302 = vunpack.c.0.s8 %v301
  %v303 = vlaneseq
  %v304 = vshrl.u32 %v303, 7
  %v305 = vsub.s32 %v302, %v304
  %v306 = vrot.slane %v223, %v305
  %v307 = vcombine.low %v299, %v306
  %v309 = vunpack.c.l.s4 1966171168
  %v310 = vunpack.c.0.s8 %v309
  %v311 = vlaneseq
  %v312 = vshrl.u32 %v311, 7
  %v313 = vsub.s32 %v310, %v312
  %v314 = vrot.slane %v224, %v313
  %v316 = vunpack.c.l.s4 1966171168
  %v317 = vunpack.c.0.s8 %v316
  %v318 = vlaneseq
  %v319 = vshrl.u32 %v318, 7
  %v320 = vsub.s32 %v317, %v319
  %v321 = vrot.slane %v225, %v320
  %v322 = vcombine.low %v314, %v321
  %v324 = vunpack.c.l.s4 1966171168
  %v325 = vunpack.c.0.s8 %v324
  %v326 = vlaneseq
  %v327 = vshrl.u32 %v326, 7
  %v328 = vsub.s32 %v325, %v327
  %v329 = vrot.slane %v226, %v328
  %v331 = vunpack.c.l.s4 1966171168
  %v332 = vunpack.c.0.s8 %v331
  %v333 = vlaneseq
  %v334 = vshrl.u32 %v333, 7
  %v335 = vsub.s32 %v332, %v334
  %v336 = vrot.slane %v227, %v335
  %v337 = vcombine.low %v329, %v336
  %v339 = vunpack.c.l.s4 1966171168
  %v340 = vunpack.c.0.s8 %v339
  %v341 = vlaneseq
  %v342 = vshrl.u32 %v341, 7
  %v343 = vsub.s32 %v340, %v342
  %v344 = vrot.slane %v228, %v343
  %v346 = vunpack.c.l.s4 1966171168
  %v347 = vunpack.c.0.s8 %v346
  %v348 = vlaneseq
  %v349 = vshrl.u32 %v348, 7
  %v350 = vsub.s32 %v347, %v349
  %v351 = vrot.slane %v229, %v350
  %v352 = vcombine.low %v344, %v351
  %v354 = vunpack.c.l.s4 1966171168
  %v355 = vunpack.c.0.s8 %v354
  %v356 = vlaneseq
  %v357 = vshrl.u32 %v356, 7
  %v358 = vsub.s32 %v355, %v357
  %v359 = vrot.slane %v230, %v358
  %v361 = vunpack.c.l.s4 1966171168
  %v362 = vunpack.c.0.s8 %v361
  %v363 = vlaneseq
  %v364 = vshrl.u32 %v363, 7
  %v365 = vsub.s32 %v362, %v364
  %v366 = vrot.slane %v231, %v365
  %v367 = vcombine.low %v359, %v366
  %376 = vst [vmem:[%s1] sm:$0xff] %v262
  %377 = vst [vmem:[%s1 + $0x8] sm:$0xff] %v277
  %378 = vst [vmem:[%s1 + $0x10] sm:$0xff] %v292
  %379 = vst [vmem:[%s1 + $0x18] sm:$0xff] %v307
  %380 = vst [vmem:[%s1 + $0x20] sm:$0xff] %v322
  %381 = vst [vmem:[%s1 + $0x28] sm:$0xff] %v337
  %382 = vst [vmem:[%s1 + $0x30] sm:$0xff] %v352
  %383 = vst [vmem:[%s1 + $0x38] sm:$0xff] %v367
  // Predicated region
  $region6: #{resnet_encoder3d_forward.11} parent=0 // pred_check
    _
  $region7: #{resnet_encoder3d_forward.11} parent=0 // pred_check_branch
    %385 = sbr.rel (0) target = $region9
  $region8: #{resnet_encoder3d_forward.11} parent=0 // pred_region
    _
  $region9: #{resnet_encoder3d_forward.11} parent=0 // pred_fallthru
    _
  // Predicated region
  $region10: #{resnet_encoder3d_forward.11} parent=0 // pred_check
    _
  $region11: #{resnet_encoder3d_forward.11} parent=0 // pred_check_branch
    %387 = sbr.rel (0) target = $region13
  $region12: #{resnet_encoder3d_forward.11} parent=0 // pred_region
    _
  $region13: #{resnet_encoder3d_forward.11} parent=0 // pred_fallthru
    _

// kernel: resnet_encoder3d_forward.12
$region0: #{resnet_encoder3d_forward.12}
  #allocation0 [shape = 'u32[]', space=smem, size = 0x4, offset = 0x4, fixed_abs, tag = 'smem constant byte address 0x4 - core index']
  #allocation1 [shape = 'u32[144,128]{1,0:T(1,128)}', space=vmem, size = 0x12000, scoped, tag = 'internal scratch']
  #allocation2 [shape = 'f32[128,128]{1,0:T(8,128)}', space=vmem, size = 0x10000, scoped, tag = 'scratch operand']
  %s0 = inlined_call_operand.vmem [shape: bf16[256,1792], index: 0, kind: input, shape index: {}]
  %s1 = inlined_call_operand.vmem [shape: bf16[1792,128], index: 1, kind: input, shape index: {}]
  %s2 = inlined_call_operand.vmem [shape: f32[1,128], index: 2, kind: input, shape index: {}]
  %s3 = inlined_call_operand.vmem [shape: f32[1,128], index: 3, kind: input, shape index: {}]
  %s4 = inlined_call_operand.vmem [shape: bf16[256,128], index: 4, kind: output, shape index: {}]
  %s5 = sld [smem:[#allocation0]]
  $region57: #{resnet_encoder3d_forward.12} parent=0
    _
  %s7 = ssub.s32 1, %s5
  %s8 = scalar_select 0, %s7, %s5
  loop: start=0, step=1, limit=4
  $region2: #{resnet_encoder3d_forward.12} parent=0 // loop_pre_header
    _
  $region3: #{resnet_encoder3d_forward.12} parent=0 // loop_header
    %s10 = sphi 0, %s14
    %p11 = scmp.ge.s32.totalorder %s10, 4
    %s17 = sphi 0, %s36
    %s18 = sphi 0, %s32
    %s19 = sphi 0, %s28
    %s20 = sphi 0, %s17
    %s21 = sphi 0, %s18
    %s22 = sphi 0, %s19
    %s23 = sphi 0, %s20
    %s24 = sphi 0, %s21
    %s25 = sphi 0, %s22
    %s41 = sphi 0, %s43
    %s44 = sphi 0, %s41
    %s45 = sphi 0, %s44
    %s61 = sphi 0, %s45
    %s69 = sphi 0, %s71
    %s72 = sphi 0, %s69
    %s73 = sphi 0, %s72
    %s89 = sphi 0, %s73
    %s95 = sphi 0, %s97
    %s98 = sphi 0, %s95
    %s99 = sphi 0, %s98
    %s115 = sphi 0, %s99
    %s121 = sphi 0, %s123
    %s124 = sphi 0, %s121
    %s125 = sphi 0, %s124
    %s141 = sphi 0, %s125
    %s149 = sphi 0, %s151
    %s152 = sphi 0, %s149
    %s153 = sphi 0, %s152
    %s169 = sphi 0, %s153
  $region4: #{resnet_encoder3d_forward.12} parent=0 // loop_header_branch
    %13 = sbr.rel (%p11) target = $region8
  $region5: #{resnet_encoder3d_forward.12} parent=0 // loop_body
    %s15 = ssub.s32 %s10, 1
    %s16 = ssub.s32 %s10, 2
    %s26 = sadd.s32 1, %s19
    %p27 = scmp.ge.s32.totalorder %s26, 1
    %s28 = scalar_select %p27, 0, %s26
    %s29 = sadd.s32 1, %s18
    %s30 = scalar_select %p27, %s29, %s18
    %p31 = scmp.ge.s32.totalorder %s30, 1
    %s32 = scalar_select %p31, 0, %s30
    %s33 = sadd.s32 1, %s17
    %s34 = scalar_select %p31, %s33, %s17
    %p35 = scmp.ge.s32.totalorder %s34, 2
    %s36 = scalar_select %p35, 0, %s34
    %s37 = ssub.s32 %s17, %s36
    %s38 = ssub.s32 %s19, %s28
    %s39 = sor.u32 %s37, %s38
    %p40 = scmp.eq.s32.totalorder %s39, 0
    %s42 = sadd.s32 %s41, 1
    %s43 = scalar_select %p40, %s41, %s42
    %p46 = pneg %p40
    %p47 = scmp.eq.s32.totalorder %s10, 1
    %p48 = por %p46, %p47
    %p49 = scmp.ne.s32.totalorder %s41, %s44
    %p50 = scmp.eq.s32.totalorder %s10, 0
    %p51 = por %p49, %p50
    %p52 = scmp.ne.s32.totalorder %s41, %s44
    %p53 = scmp.eq.s32.totalorder %s15, 1
    %p54 = por %p52, %p53
    %p55 = scmp.ne.s32.totalorder %s44, %s45
    %p56 = scmp.eq.s32.totalorder %s15, 0
    %p57 = por %p55, %p56
    %p58 = scmp.ne.s32.totalorder %s44, %s45
    %p59 = scmp.eq.s32.totalorder %s16, 1
    %p60 = por %p58, %p59
    %p62 = scmp.ne.s32.totalorder %s45, %s61
    %p63 = scmp.eq.s32.totalorder %s16, 0
    %p64 = por %p62, %p63
    %s65 = ssub.s32 %s19, %s28
    %s66 = ssub.s32 %s18, %s32
    %s67 = sor.u32 %s65, %s66
    %p68 = scmp.eq.s32.totalorder %s67, 0
    %s70 = sadd.s32 %s69, 1
    %s71 = scalar_select %p68, %s69, %s70
    %p74 = pneg %p68
    %p75 = scmp.eq.s32.totalorder %s10, 1
    %p76 = por %p74, %p75
    %p77 = scmp.ne.s32.totalorder %s69, %s72
    %p78 = scmp.eq.s32.totalorder %s10, 0
    %p79 = por %p77, %p78
    %p80 = scmp.ne.s32.totalorder %s69, %s72
    %p81 = scmp.eq.s32.totalorder %s15, 1
    %p82 = por %p80, %p81
    %p83 = scmp.ne.s32.totalorder %s72, %s73
    %p84 = scmp.eq.s32.totalorder %s15, 0
    %p85 = por %p83, %p84
    %p86 = scmp.ne.s32.totalorder %s72, %s73
    %p87 = scmp.eq.s32.totalorder %s16, 1
    %p88 = por %p86, %p87
    %p90 = scmp.ne.s32.totalorder %s73, %s89
    %p91 = scmp.eq.s32.totalorder %s16, 0
    %p92 = por %p90, %p91
    %s93 = ssub.s32 %s18, %s32
    %p94 = scmp.eq.s32.totalorder %s93, 0
    %s96 = sadd.s32 %s95, 1
    %s97 = scalar_select %p94, %s95, %s96
    %p100 = pneg %p94
    %p101 = scmp.eq.s32.totalorder %s10, 1
    %p102 = por %p100, %p101
    %p103 = scmp.ne.s32.totalorder %s95, %s98
    %p104 = scmp.eq.s32.totalorder %s10, 0
    %p105 = por %p103, %p104
    %p106 = scmp.ne.s32.totalorder %s95, %s98
    %p107 = scmp.eq.s32.totalorder %s15, 1
    %p108 = por %p106, %p107
    %p109 = scmp.ne.s32.totalorder %s98, %s99
    %p110 = scmp.eq.s32.totalorder %s15, 0
    %p111 = por %p109, %p110
    %p112 = scmp.ne.s32.totalorder %s98, %s99
    %p113 = scmp.eq.s32.totalorder %s16, 1
    %p114 = por %p112, %p113
    %p116 = scmp.ne.s32.totalorder %s99, %s115
    %p117 = scmp.eq.s32.totalorder %s16, 0
    %p118 = por %p116, %p117
    %s119 = ssub.s32 %s18, %s32
    %p120 = scmp.eq.s32.totalorder %s119, 0
    %s122 = sadd.s32 %s121, 1
    %s123 = scalar_select %p120, %s121, %s122
    %p126 = pneg %p120
    %p127 = scmp.eq.s32.totalorder %s10, 1
    %p128 = por %p126, %p127
    %p129 = scmp.ne.s32.totalorder %s121, %s124
    %p130 = scmp.eq.s32.totalorder %s10, 0
    %p131 = por %p129, %p130
    %p132 = scmp.ne.s32.totalorder %s121, %s124
    %p133 = scmp.eq.s32.totalorder %s15, 1
    %p134 = por %p132, %p133
    %p135 = scmp.ne.s32.totalorder %s124, %s125
    %p136 = scmp.eq.s32.totalorder %s15, 0
    %p137 = por %p135, %p136
    %p138 = scmp.ne.s32.totalorder %s124, %s125
    %p139 = scmp.eq.s32.totalorder %s16, 1
    %p140 = por %p138, %p139
    %p142 = scmp.ne.s32.totalorder %s125, %s141
    %p143 = scmp.eq.s32.totalorder %s16, 0
    %p144 = por %p142, %p143
    %s145 = ssub.s32 %s17, %s36
    %s146 = ssub.s32 %s18, %s32
    %s147 = sor.u32 %s145, %s146
    %p148 = scmp.eq.s32.totalorder %s147, 0
    %s150 = sadd.s32 %s149, 1
    %s151 = scalar_select %p148, %s149, %s150
    %p154 = pneg %p148
    %p155 = scmp.eq.s32.totalorder %s10, 1
    %p156 = por %p154, %p155
    %p157 = scmp.ne.s32.totalorder %s149, %s152
    %p158 = scmp.eq.s32.totalorder %s10, 0
    %p159 = por %p157, %p158
    %p160 = scmp.ne.s32.totalorder %s149, %s152
    %p161 = scmp.eq.s32.totalorder %s15, 1
    %p162 = por %p160, %p161
    %p163 = scmp.ne.s32.totalorder %s152, %s153
    %p164 = scmp.eq.s32.totalorder %s15, 0
    %p165 = por %p163, %p164
    %p166 = scmp.ne.s32.totalorder %s152, %s153
    %p167 = scmp.eq.s32.totalorder %s16, 1
    %p168 = por %p166, %p167
    %p170 = scmp.ne.s32.totalorder %s153, %s169
    %p171 = scmp.eq.s32.totalorder %s16, 0
    %p172 = por %p170, %p171
    %p173 = scmp.le.s32.totalorder 1, %s10
    %p174 = scmp.lt.s32.totalorder %s10, 3
    %p175 = pnand %p173, %p174
    %p176 = pneg %p175
    // Predicated region
    $region9: #{resnet_encoder3d_forward.12} parent=5 // pred_check
      _
    $region10: #{resnet_encoder3d_forward.12} parent=5 // pred_check_branch
      %178 = sbr.rel (%p175) target = $region12
    $region11: #{resnet_encoder3d_forward.12} parent=5 // pred_region
      %s179 = ssub.s32 %s10, 1
      // Predicated region
      $region13: #{resnet_encoder3d_forward.12} parent=11 // pred_check
        %p180 = pneg %p85
      $region14: #{resnet_encoder3d_forward.12} parent=11 // pred_check_branch
        %182 = sbr.rel (%p180) target = $region16
      $region15: #{resnet_encoder3d_forward.12} parent=11 // pred_region
        %s183 = smul.u32 224, %s22
        %p184 = scmp.lt.s32.totalorder %s183, 223
        %s185 = scalar_select %p184, %s183, 223
        %p186 = scmp.lt.s32.totalorder %s21, 0
        %s187 = scalar_select %p186, %s21, 0
        %s188 = sadd.s32 %s187, %s185
        %s189 = smul.addr %s188, 4
        %s190 = scalar_lea.vmem %s1, %s189
        %s191 = smul.u32 224, %s22
      $region16: #{resnet_encoder3d_forward.12} parent=11 // pred_fallthru
        _
      // Predicated region
      $region17: #{resnet_encoder3d_forward.12} parent=11 // pred_check
        %p192 = pneg %p111
      $region18: #{resnet_encoder3d_forward.12} parent=11 // pred_check_branch
        %194 = sbr.rel (%p192) target = $region20
      $region19: #{resnet_encoder3d_forward.12} parent=11 // pred_region
        %p195 = scmp.lt.s32.totalorder %s21, 0
        %s196 = scalar_select %p195, %s21, 0
        %s197 = scalar_lea.vmem %s2, %s196
      $region20: #{resnet_encoder3d_forward.12} parent=11 // pred_fallthru
        _
      // Predicated region
      $region21: #{resnet_encoder3d_forward.12} parent=11 // pred_check
        %p198 = pneg %p137
      $region22: #{resnet_encoder3d_forward.12} parent=11 // pred_check_branch
        %200 = sbr.rel (%p198) target = $region24
      $region23: #{resnet_encoder3d_forward.12} parent=11 // pred_region
        %p201 = scmp.lt.s32.totalorder %s21, 0
        %s202 = scalar_select %p201, %s21, 0
        %s203 = scalar_lea.vmem %s3, %s202
      $region24: #{resnet_encoder3d_forward.12} parent=11 // pred_fallthru
        _
    $region12: #{resnet_encoder3d_forward.12} parent=5 // pred_fallthru
      _
    %p204 = scmp.lt.s32.totalorder %s10, 2
    // Predicated region
    $region25: #{resnet_encoder3d_forward.12} parent=5 // pred_check
      %p205 = pneg %p204
    $region26: #{resnet_encoder3d_forward.12} parent=5 // pred_check_branch
      %207 = sbr.rel (%p205) target = $region28
    $region27: #{resnet_encoder3d_forward.12} parent=5 // pred_region
      // Predicated region
      $region29: #{resnet_encoder3d_forward.12} parent=27 // pred_check
        %p208 = pneg %p51
      $region30: #{resnet_encoder3d_forward.12} parent=27 // pred_check_branch
        %210 = sbr.rel (%p208) target = $region32
      $region31: #{resnet_encoder3d_forward.12} parent=27 // pred_region
        %s211 = smul.u32 16, %s17
        %s212 = smul.u32 14, %s19
        %p213 = scmp.lt.s32.totalorder %s211, 31
        %s214 = scalar_select %p213, %s211, 31
        %p215 = scmp.lt.s32.totalorder %s212, 13
        %s216 = scalar_select %p215, %s212, 13
        %s217 = smul.addr %s214, 14
        %s218 = sadd.s32 %s216, %s217
        %s219 = smul.addr %s218, 4
        %s220 = scalar_lea.vmem %s0, %s219
        %s221 = smul.u32 16, %s17
        %s222 = smul.u32 14, %s19
      $region32: #{resnet_encoder3d_forward.12} parent=27 // pred_fallthru
        _
    $region28: #{resnet_encoder3d_forward.12} parent=5 // pred_fallthru
      _
    %p223 = scmp.le.s32.totalorder 1, %s10
    %p224 = scmp.lt.s32.totalorder %s10, 3
    %p225 = pnand %p223, %p224
    %p226 = pneg %p225
    // Predicated region
    $region33: #{resnet_encoder3d_forward.12} parent=5 // pred_check
      _
    $region34: #{resnet_encoder3d_forward.12} parent=5 // pred_check_branch
      %228 = sbr.rel (%p225) target = $region36
    $region35: #{resnet_encoder3d_forward.12} parent=5 // pred_region
      %s229 = ssub.s32 %s10, 1
      %s230 = smul.u32 16, %s20
      %s231 = smul.u32 14, %s22
      %p232 = scmp.lt.s32.totalorder %s230, 31
      %s233 = scalar_select %p232, %s230, 31
      %p234 = scmp.lt.s32.totalorder %s231, 13
      %s235 = scalar_select %p234, %s231, 13
      %s236 = smul.addr %s233, 14
      %s237 = sadd.s32 %s235, %s236
      %s238 = smul.addr %s237, 4
      %s239 = scalar_lea.vmem %s0, %s238
      %p240 = pneg %p57
      %p241 = pneg %p54
      %s242 = smul.u32 224, %s22
      %p243 = scmp.lt.s32.totalorder %s242, 223
      %s244 = scalar_select %p243, %s242, 223
      %p245 = scmp.lt.s32.totalorder %s21, 0
      %s246 = scalar_select %p245, %s21, 0
      %s247 = sadd.s32 %s246, %s244
      %s248 = smul.addr %s247, 4
      %s249 = scalar_lea.vmem %s1, %s248
      %p250 = pneg %p85
      %p251 = pneg %p82
      %p252 = scmp.lt.s32.totalorder %s21, 0
      %s253 = scalar_select %p252, %s21, 0
      %s254 = scalar_lea.vmem %s2, %s253
      %p255 = pneg %p111
      %p256 = pneg %p108
      %p257 = scmp.lt.s32.totalorder %s21, 0
      %s258 = scalar_select %p257, %s21, 0
      %s259 = scalar_lea.vmem %s3, %s258
      %p260 = pneg %p137
      %p261 = pneg %p134
      %p262 = pneg %p165
      %p263 = pneg %p162
      %s264 = smul.u32 16, %s20
      %p265 = scmp.lt.s32.totalorder %s264, 31
      %s266 = scalar_select %p265, %s264, 31
      %p267 = scmp.lt.s32.totalorder %s21, 0
      %s268 = scalar_select %p267, %s21, 0
      %s269 = sadd.s32 %s268, %s266
      %s270 = smul.addr %s269, 4
      %s271 = scalar_lea.vmem %s4, %s270
      %s272 = smul.u32 16, %s20
      %s273 = smul.u32 14, %s22
      %p274 = scmp.lt.s32.totalorder %s272, 31
      %s275 = scalar_select %p274, %s272, 31
      %p276 = scmp.lt.s32.totalorder %s273, 13
      %s277 = scalar_select %p276, %s273, 13
      %s278 = smul.addr %s275, 14
      %s279 = sadd.s32 %s277, %s278
      %s280 = smul.addr %s279, 4
      %s281 = scalar_lea.vmem %s0, %s280
      %s282 = smul.u32 16, %s20
      %s283 = smul.u32 14, %s22
      %s284 = smul.u32 224, %s22
      %p285 = scmp.lt.s32.totalorder %s284, 223
      %s286 = scalar_select %p285, %s284, 223
      %p287 = scmp.lt.s32.totalorder %s21, 0
      %s288 = scalar_select %p287, %s21, 0
      %s289 = sadd.s32 %s288, %s286
      %s290 = smul.addr %s289, 4
      %s291 = scalar_lea.vmem %s1, %s290
      %s292 = smul.u32 224, %s22
      %p293 = scmp.lt.s32.totalorder %s21, 0
      %s294 = scalar_select %p293, %s21, 0
      %s295 = scalar_lea.vmem %s2, %s294
      %p296 = scmp.lt.s32.totalorder %s21, 0
      %s297 = scalar_select %p296, %s21, 0
      %s298 = scalar_lea.vmem %s3, %s297
      %s299 = smul.u32 16, %s20
      %p300 = scmp.lt.s32.totalorder %s299, 31
      %s301 = scalar_select %p300, %s299, 31
      %p302 = scmp.lt.s32.totalorder %s21, 0
      %s303 = scalar_select %p302, %s21, 0
      %s304 = sadd.s32 %s303, %s301
      %s305 = smul.addr %s304, 4
      %s306 = scalar_lea.vmem %s4, %s305
      %s307 = smul.u32 16, %s20
      %p309 = scmp.eq.s32.totalorder %s22, 0
      // Predicated region
      $region37: #{resnet_encoder3d_forward.12} parent=35 // pred_check
        %p310 = pneg %p309
      $region38: #{resnet_encoder3d_forward.12} parent=35 // pred_check_branch
        %312 = sbr.rel (%p310) target = $region40
      $region39: #{resnet_encoder3d_forward.12} parent=35 // pred_region
        %313 = vst [vmem:[#allocation2] sm:$0xff] 0.0
        %314 = vst [vmem:[#allocation2 + $0x8] sm:$0xff] 0.0
        %315 = vst [vmem:[#allocation2 + $0x10] sm:$0xff] 0.0
        %316 = vst [vmem:[#allocation2 + $0x18] sm:$0xff] 0.0
        %317 = vst [vmem:[#allocation2 + $0x20] sm:$0xff] 0.0
        %318 = vst [vmem:[#allocation2 + $0x28] sm:$0xff] 0.0
        %319 = vst [vmem:[#allocation2 + $0x30] sm:$0xff] 0.0
        %320 = vst [vmem:[#allocation2 + $0x38] sm:$0xff] 0.0
        %321 = vst [vmem:[#allocation2 + $0x40] sm:$0xff] 0.0
        %322 = vst [vmem:[#allocation2 + $0x48] sm:$0xff] 0.0
        %323 = vst [vmem:[#allocation2 + $0x50] sm:$0xff] 0.0
        %324 = vst [vmem:[#allocation2 + $0x58] sm:$0xff] 0.0
        %325 = vst [vmem:[#allocation2 + $0x60] sm:$0xff] 0.0
        %326 = vst [vmem:[#allocation2 + $0x68] sm:$0xff] 0.0
        %327 = vst [vmem:[#allocation2 + $0x70] sm:$0xff] 0.0
        %328 = vst [vmem:[#allocation2 + $0x78] sm:$0xff] 0.0
      $region40: #{resnet_encoder3d_forward.12} parent=35 // pred_fallthru
        _
      %v329 = vld [vmem:[#allocation2] sm:$0xff]
      %v330 = vld [vmem:[#allocation2 + $0x8] sm:$0xff]
      %v331 = vld [vmem:[#allocation2 + $0x10] sm:$0xff]
      %v332 = vld [vmem:[#allocation2 + $0x18] sm:$0xff]
      %v333 = vld [vmem:[#allocation2 + $0x20] sm:$0xff]
      %v334 = vld [vmem:[#allocation2 + $0x28] sm:$0xff]
      %v335 = vld [vmem:[#allocation2 + $0x30] sm:$0xff]
      %v336 = vld [vmem:[#allocation2 + $0x38] sm:$0xff]
      %v337 = vld [vmem:[#allocation2 + $0x40] sm:$0xff]
      %v338 = vld [vmem:[#allocation2 + $0x48] sm:$0xff]
      %v339 = vld [vmem:[#allocation2 + $0x50] sm:$0xff]
      %v340 = vld [vmem:[#allocation2 + $0x58] sm:$0xff]
      %v341 = vld [vmem:[#allocation2 + $0x60] sm:$0xff]
      %v342 = vld [vmem:[#allocation2 + $0x68] sm:$0xff]
      %v343 = vld [vmem:[#allocation2 + $0x70] sm:$0xff]
      %v344 = vld [vmem:[#allocation2 + $0x78] sm:$0xff]
      %v345 = vld [vmem:[%s281] sm:$0xff]
      %v346 = vld [vmem:[%s281 + $0x8] sm:$0xff]
      %v347 = vld [vmem:[%s281 + $0x10] sm:$0xff]
      %v348 = vld [vmem:[%s281 + $0x18] sm:$0xff]
      %v349 = vld [vmem:[%s281 + $0x20] sm:$0xff]
      %v350 = vld [vmem:[%s281 + $0x28] sm:$0xff]
      %v351 = vld [vmem:[%s281 + $0x30] sm:$0xff]
      %v352 = vld [vmem:[%s281 + $0x38] sm:$0xff]
      %v353 = vld [vmem:[%s281 + $0x40] sm:$0xff]
      %v354 = vld [vmem:[%s281 + $0x48] sm:$0xff]
      %v355 = vld [vmem:[%s281 + $0x50] sm:$0xff]
      %v356 = vld [vmem:[%s281 + $0x58] sm:$0xff]
      %v357 = vld [vmem:[%s281 + $0x60] sm:$0xff]
      %v358 = vld [vmem:[%s281 + $0x68] sm:$0xff]
      %v359 = vld [vmem:[%s281 + $0x70] sm:$0xff]
      %v360 = vld [vmem:[%s281 + $0x78] sm:$0xff]
      %v361 = vld [vmem:[%s281 + $0x80] sm:$0xff]
      %v362 = vld [vmem:[%s281 + $0x88] sm:$0xff]
      %v363 = vld [vmem:[%s281 + $0x90] sm:$0xff]
      %v364 = vld [vmem:[%s281 + $0x98] sm:$0xff]
      %v365 = vld [vmem:[%s281 + $0xa0] sm:$0xff]
      %v366 = vld [vmem:[%s281 + $0xa8] sm:$0xff]
      %v367 = vld [vmem:[%s281 + $0xb0] sm:$0xff]
      %v368 = vld [vmem:[%s281 + $0xb8] sm:$0xff]
      %v369 = vld [vmem:[%s281 + $0xc0] sm:$0xff]
      %v370 = vld [vmem:[%s281 + $0xc8] sm:$0xff]
      %v371 = vld [vmem:[%s281 + $0xd0] sm:$0xff]
      %v372 = vld [vmem:[%s281 + $0xd8] sm:$0xff]
      %v373 = vld [vmem:[%s281 + $0xe0] sm:$0xff]
      %v374 = vld [vmem:[%s281 + $0xe8] sm:$0xff]
      %v375 = vld [vmem:[%s281 + $0xf0] sm:$0xff]
      %v376 = vld [vmem:[%s281 + $0xf8] sm:$0xff]
      %v377 = vld [vmem:[%s281 + $0x100] sm:$0xff]
      %v378 = vld [vmem:[%s281 + $0x108] sm:$0xff]
      %v379 = vld [vmem:[%s281 + $0x110] sm:$0xff]
      %v380 = vld [vmem:[%s281 + $0x118] sm:$0xff]
      %v381 = vld [vmem:[%s281 + $0x120] sm:$0xff]
      %v382 = vld [vmem:[%s281 + $0x128] sm:$0xff]
      %v383 = vld [vmem:[%s281 + $0x130] sm:$0xff]
      %v384 = vld [vmem:[%s281 + $0x138] sm:$0xff]
      %v385 = vld [vmem:[%s281 + $0x140] sm:$0xff]
      %v386 = vld [vmem:[%s281 + $0x148] sm:$0xff]
      %v387 = vld [vmem:[%s281 + $0x150] sm:$0xff]
      %v388 = vld [vmem:[%s281 + $0x158] sm:$0xff]
      %v389 = vld [vmem:[%s281 + $0x160] sm:$0xff]
      %v390 = vld [vmem:[%s281 + $0x168] sm:$0xff]
      %v391 = vld [vmem:[%s281 + $0x170] sm:$0xff]
      %v392 = vld [vmem:[%s281 + $0x178] sm:$0xff]
      %v393 = vld [vmem:[%s281 + $0x180] sm:$0xff]
      %v394 = vld [vmem:[%s281 + $0x188] sm:$0xff]
      %v395 = vld [vmem:[%s281 + $0x190] sm:$0xff]
      %v396 = vld [vmem:[%s281 + $0x198] sm:$0xff]
      %v397 = vld [vmem:[%s281 + $0x1a0] sm:$0xff]
      %v398 = vld [vmem:[%s281 + $0x1a8] sm:$0xff]
      %v399 = vld [vmem:[%s281 + $0x1b0] sm:$0xff]
      %v400 = vld [vmem:[%s281 + $0x1b8] sm:$0xff]
      %v401 = vld [vmem:[%s281 + $0x1c0] sm:$0xff]
      %v402 = vld [vmem:[%s281 + $0x1c8] sm:$0xff]
      %v403 = vld [vmem:[%s281 + $0x1d0] sm:$0xff]
      %v404 = vld [vmem:[%s281 + $0x1d8] sm:$0xff]
      %v405 = vld [vmem:[%s281 + $0x1e0] sm:$0xff]
      %v406 = vld [vmem:[%s281 + $0x1e8] sm:$0xff]
      %v407 = vld [vmem:[%s281 + $0x1f0] sm:$0xff]
      %v408 = vld [vmem:[%s281 + $0x1f8] sm:$0xff]
      %v409 = vld [vmem:[%s281 + $0x200] sm:$0xff]
      %v410 = vld [vmem:[%s281 + $0x208] sm:$0xff]
      %v411 = vld [vmem:[%s281 + $0x210] sm:$0xff]
      %v412 = vld [vmem:[%s281 + $0x218] sm:$0xff]
      %v413 = vld [vmem:[%s281 + $0x220] sm:$0xff]
      %v414 = vld [vmem:[%s281 + $0x228] sm:$0xff]
      %v415 = vld [vmem:[%s281 + $0x230] sm:$0xff]
      %v416 = vld [vmem:[%s281 + $0x238] sm:$0xff]
      %v417 = vld [vmem:[%s281 + $0x240] sm:$0xff]
      %v418 = vld [vmem:[%s281 + $0x248] sm:$0xff]
      %v419 = vld [vmem:[%s281 + $0x250] sm:$0xff]
      %v420 = vld [vmem:[%s281 + $0x258] sm:$0xff]
      %v421 = vld [vmem:[%s281 + $0x260] sm:$0xff]
      %v422 = vld [vmem:[%s281 + $0x268] sm:$0xff]
      %v423 = vld [vmem:[%s281 + $0x270] sm:$0xff]
      %v424 = vld [vmem:[%s281 + $0x278] sm:$0xff]
      %v425 = vld [vmem:[%s281 + $0x280] sm:$0xff]
      %v426 = vld [vmem:[%s281 + $0x288] sm:$0xff]
      %v427 = vld [vmem:[%s281 + $0x290] sm:$0xff]
      %v428 = vld [vmem:[%s281 + $0x298] sm:$0xff]
      %v429 = vld [vmem:[%s281 + $0x2a0] sm:$0xff]
      %v430 = vld [vmem:[%s281 + $0x2a8] sm:$0xff]
      %v431 = vld [vmem:[%s281 + $0x2b0] sm:$0xff]
      %v432 = vld [vmem:[%s281 + $0x2b8] sm:$0xff]
      %v433 = vld [vmem:[%s281 + $0x2c0] sm:$0xff]
      %v434 = vld [vmem:[%s281 + $0x2c8] sm:$0xff]
      %v435 = vld [vmem:[%s281 + $0x2d0] sm:$0xff]
      %v436 = vld [vmem:[%s281 + $0x2d8] sm:$0xff]
      %v437 = vld [vmem:[%s281 + $0x2e0] sm:$0xff]
      %v438 = vld [vmem:[%s281 + $0x2e8] sm:$0xff]
      %v439 = vld [vmem:[%s281 + $0x2f0] sm:$0xff]
      %v440 = vld [vmem:[%s281 + $0x2f8] sm:$0xff]
      %v441 = vld [vmem:[%s281 + $0x300] sm:$0xff]
      %v442 = vld [vmem:[%s281 + $0x308] sm:$0xff]
      %v443 = vld [vmem:[%s281 + $0x310] sm:$0xff]
      %v444 = vld [vmem:[%s281 + $0x318] sm:$0xff]
      %v445 = vld [vmem:[%s281 + $0x320] sm:$0xff]
      %v446 = vld [vmem:[%s281 + $0x328] sm:$0xff]
      %v447 = vld [vmem:[%s281 + $0x330] sm:$0xff]
      %v448 = vld [vmem:[%s281 + $0x338] sm:$0xff]
      %v449 = vld [vmem:[%s281 + $0x340] sm:$0xff]
      %v450 = vld [vmem:[%s281 + $0x348] sm:$0xff]
      %v451 = vld [vmem:[%s281 + $0x350] sm:$0xff]
      %v452 = vld [vmem:[%s281 + $0x358] sm:$0xff]
      %v453 = vld [vmem:[%s281 + $0x360] sm:$0xff]
      %v454 = vld [vmem:[%s281 + $0x368] sm:$0xff]
      %v455 = vld [vmem:[%s281 + $0x370] sm:$0xff]
      %v456 = vld [vmem:[%s281 + $0x378] sm:$0xff]
      %v457 = vld [vmem:[%s291] sm:$0xf]
      %v458 = vld [vmem:[%s291 + $0x4] sm:$0xf]
      %v459 = vld [vmem:[%s291 + $0x8] sm:$0xf]
      %v460 = vld [vmem:[%s291 + $0xc] sm:$0xf]
      %v461 = vld [vmem:[%s291 + $0x10] sm:$0xf]
      %v462 = vld [vmem:[%s291 + $0x14] sm:$0xf]
      %v463 = vld [vmem:[%s291 + $0x18] sm:$0xf]
      %v464 = vld [vmem:[%s291 + $0x1c] sm:$0xf]
      %v465 = vld [vmem:[%s291 + $0x20] sm:$0xf]
      %v466 = vld [vmem:[%s291 + $0x24] sm:$0xf]
      %v467 = vld [vmem:[%s291 + $0x28] sm:$0xf]
      %v468 = vld [vmem:[%s291 + $0x2c] sm:$0xf]
      %v469 = vld [vmem:[%s291 + $0x30] sm:$0xf]
      %v470 = vld [vmem:[%s291 + $0x34] sm:$0xf]
      %v471 = vld [vmem:[%s291 + $0x38] sm:$0xf]
      %v472 = vld [vmem:[%s291 + $0x3c] sm:$0xf]
      %v473 = vld [vmem:[%s291 + $0x40] sm:$0xf]
      %v474 = vld [vmem:[%s291 + $0x44] sm:$0xf]
      %v475 = vld [vmem:[%s291 + $0x48] sm:$0xf]
      %v476 = vld [vmem:[%s291 + $0x4c] sm:$0xf]
      %v477 = vld [vmem:[%s291 + $0x50] sm:$0xf]
      %v478 = vld [vmem:[%s291 + $0x54] sm:$0xf]
      %v479 = vld [vmem:[%s291 + $0x58] sm:$0xf]
      %v480 = vld [vmem:[%s291 + $0x5c] sm:$0xf]
      %v481 = vld [vmem:[%s291 + $0x60] sm:$0xf]
      %v482 = vld [vmem:[%s291 + $0x64] sm:$0xf]
      %v483 = vld [vmem:[%s291 + $0x68] sm:$0xf]
      %v484 = vld [vmem:[%s291 + $0x6c] sm:$0xf]
      %v485 = vld [vmem:[%s291 + $0x70] sm:$0xf]
      %v486 = vld [vmem:[%s291 + $0x74] sm:$0xf]
      %v487 = vld [vmem:[%s291 + $0x78] sm:$0xf]
      %v488 = vld [vmem:[%s291 + $0x7c] sm:$0xf]
      %v489 = vld [vmem:[%s291 + $0x80] sm:$0xf]
      %v490 = vld [vmem:[%s291 + $0x84] sm:$0xf]
      %v491 = vld [vmem:[%s291 + $0x88] sm:$0xf]
      %v492 = vld [vmem:[%s291 + $0x8c] sm:$0xf]
      %v493 = vld [vmem:[%s291 + $0x90] sm:$0xf]
      %v494 = vld [vmem:[%s291 + $0x94] sm:$0xf]
      %v495 = vld [vmem:[%s291 + $0x98] sm:$0xf]
      %v496 = vld [vmem:[%s291 + $0x9c] sm:$0xf]
      %v497 = vld [vmem:[%s291 + $0xa0] sm:$0xf]
      %v498 = vld [vmem:[%s291 + $0xa4] sm:$0xf]
      %v499 = vld [vmem:[%s291 + $0xa8] sm:$0xf]
      %v500 = vld [vmem:[%s291 + $0xac] sm:$0xf]
      %v501 = vld [vmem:[%s291 + $0xb0] sm:$0xf]
      %v502 = vld [vmem:[%s291 + $0xb4] sm:$0xf]
      %v503 = vld [vmem:[%s291 + $0xb8] sm:$0xf]
      %v504 = vld [vmem:[%s291 + $0xbc] sm:$0xf]
      %v505 = vld [vmem:[%s291 + $0xc0] sm:$0xf]
      %v506 = vld [vmem:[%s291 + $0xc4] sm:$0xf]
      %v507 = vld [vmem:[%s291 + $0xc8] sm:$0xf]
      %v508 = vld [vmem:[%s291 + $0xcc] sm:$0xf]
      %v509 = vld [vmem:[%s291 + $0xd0] sm:$0xf]
      %v510 = vld [vmem:[%s291 + $0xd4] sm:$0xf]
      %v511 = vld [vmem:[%s291 + $0xd8] sm:$0xf]
      %v512 = vld [vmem:[%s291 + $0xdc] sm:$0xf]
      %v513 = vld [vmem:[%s291 + $0xe0] sm:$0xf]
      %v514 = vld [vmem:[%s291 + $0xe4] sm:$0xf]
      %v515 = vld [vmem:[%s291 + $0xe8] sm:$0xf]
      %v516 = vld [vmem:[%s291 + $0xec] sm:$0xf]
      %v517 = vld [vmem:[%s291 + $0xf0] sm:$0xf]
      %v518 = vld [vmem:[%s291 + $0xf4] sm:$0xf]
      %v519 = vld [vmem:[%s291 + $0xf8] sm:$0xf]
      %v520 = vld [vmem:[%s291 + $0xfc] sm:$0xf]
      %v521 = vld [vmem:[%s291 + $0x100] sm:$0xf]
      %v522 = vld [vmem:[%s291 + $0x104] sm:$0xf]
      %v523 = vld [vmem:[%s291 + $0x108] sm:$0xf]
      %v524 = vld [vmem:[%s291 + $0x10c] sm:$0xf]
      %v525 = vld [vmem:[%s291 + $0x110] sm:$0xf]
      %v526 = vld [vmem:[%s291 + $0x114] sm:$0xf]
      %v527 = vld [vmem:[%s291 + $0x118] sm:$0xf]
      %v528 = vld [vmem:[%s291 + $0x11c] sm:$0xf]
      %v529 = vld [vmem:[%s291 + $0x120] sm:$0xf]
      %v530 = vld [vmem:[%s291 + $0x124] sm:$0xf]
      %v531 = vld [vmem:[%s291 + $0x128] sm:$0xf]
      %v532 = vld [vmem:[%s291 + $0x12c] sm:$0xf]
      %v533 = vld [vmem:[%s291 + $0x130] sm:$0xf]
      %v534 = vld [vmem:[%s291 + $0x134] sm:$0xf]
      %v535 = vld [vmem:[%s291 + $0x138] sm:$0xf]
      %v536 = vld [vmem:[%s291 + $0x13c] sm:$0xf]
      %v537 = vld [vmem:[%s291 + $0x140] sm:$0xf]
      %v538 = vld [vmem:[%s291 + $0x144] sm:$0xf]
      %v539 = vld [vmem:[%s291 + $0x148] sm:$0xf]
      %v540 = vld [vmem:[%s291 + $0x14c] sm:$0xf]
      %v541 = vld [vmem:[%s291 + $0x150] sm:$0xf]
      %v542 = vld [vmem:[%s291 + $0x154] sm:$0xf]
      %v543 = vld [vmem:[%s291 + $0x158] sm:$0xf]
      %v544 = vld [vmem:[%s291 + $0x15c] sm:$0xf]
      %v545 = vld [vmem:[%s291 + $0x160] sm:$0xf]
      %v546 = vld [vmem:[%s291 + $0x164] sm:$0xf]
      %v547 = vld [vmem:[%s291 + $0x168] sm:$0xf]
      %v548 = vld [vmem:[%s291 + $0x16c] sm:$0xf]
      %v549 = vld [vmem:[%s291 + $0x170] sm:$0xf]
      %v550 = vld [vmem:[%s291 + $0x174] sm:$0xf]
      %v551 = vld [vmem:[%s291 + $0x178] sm:$0xf]
      %v552 = vld [vmem:[%s291 + $0x17c] sm:$0xf]
      %v553 = vld [vmem:[%s291 + $0x180] sm:$0xf]
      %v554 = vld [vmem:[%s291 + $0x184] sm:$0xf]
      %v555 = vld [vmem:[%s291 + $0x188] sm:$0xf]
      %v556 = vld [vmem:[%s291 + $0x18c] sm:$0xf]
      %v557 = vld [vmem:[%s291 + $0x190] sm:$0xf]
      %v558 = vld [vmem:[%s291 + $0x194] sm:$0xf]
      %v559 = vld [vmem:[%s291 + $0x198] sm:$0xf]
      %v560 = vld [vmem:[%s291 + $0x19c] sm:$0xf]
      %v561 = vld [vmem:[%s291 + $0x1a0] sm:$0xf]
      %v562 = vld [vmem:[%s291 + $0x1a4] sm:$0xf]
      %v563 = vld [vmem:[%s291 + $0x1a8] sm:$0xf]
      %v564 = vld [vmem:[%s291 + $0x1ac] sm:$0xf]
      %v565 = vld [vmem:[%s291 + $0x1b0] sm:$0xf]
      %v566 = vld [vmem:[%s291 + $0x1b4] sm:$0xf]
      %v567 = vld [vmem:[%s291 + $0x1b8] sm:$0xf]
      %v568 = vld [vmem:[%s291 + $0x1bc] sm:$0xf]
      %v569 = vld [vmem:[%s291 + $0x1c0] sm:$0xf]
      %v570 = vld [vmem:[%s291 + $0x1c4] sm:$0xf]
      %v571 = vld [vmem:[%s291 + $0x1c8] sm:$0xf]
      %v572 = vld [vmem:[%s291 + $0x1cc] sm:$0xf]
      %v573 = vld [vmem:[%s291 + $0x1d0] sm:$0xf]
      %v574 = vld [vmem:[%s291 + $0x1d4] sm:$0xf]
      %v575 = vld [vmem:[%s291 + $0x1d8] sm:$0xf]
      %v576 = vld [vmem:[%s291 + $0x1dc] sm:$0xf]
      %v577 = vld [vmem:[%s291 + $0x1e0] sm:$0xf]
      %v578 = vld [vmem:[%s291 + $0x1e4] sm:$0xf]
      %v579 = vld [vmem:[%s291 + $0x1e8] sm:$0xf]
      %v580 = vld [vmem:[%s291 + $0x1ec] sm:$0xf]
      %v581 = vld [vmem:[%s291 + $0x1f0] sm:$0xf]
      %v582 = vld [vmem:[%s291 + $0x1f4] sm:$0xf]
      %v583 = vld [vmem:[%s291 + $0x1f8] sm:$0xf]
      %v584 = vld [vmem:[%s291 + $0x1fc] sm:$0xf]
      %v585 = vld [vmem:[%s291 + $0x200] sm:$0xf]
      %v586 = vld [vmem:[%s291 + $0x204] sm:$0xf]
      %v587 = vld [vmem:[%s291 + $0x208] sm:$0xf]
      %v588 = vld [vmem:[%s291 + $0x20c] sm:$0xf]
      %v589 = vld [vmem:[%s291 + $0x210] sm:$0xf]
      %v590 = vld [vmem:[%s291 + $0x214] sm:$0xf]
      %v591 = vld [vmem:[%s291 + $0x218] sm:$0xf]
      %v592 = vld [vmem:[%s291 + $0x21c] sm:$0xf]
      %v593 = vld [vmem:[%s291 + $0x220] sm:$0xf]
      %v594 = vld [vmem:[%s291 + $0x224] sm:$0xf]
      %v595 = vld [vmem:[%s291 + $0x228] sm:$0xf]
      %v596 = vld [vmem:[%s291 + $0x22c] sm:$0xf]
      %v597 = vld [vmem:[%s291 + $0x230] sm:$0xf]
      %v598 = vld [vmem:[%s291 + $0x234] sm:$0xf]
      %v599 = vld [vmem:[%s291 + $0x238] sm:$0xf]
      %v600 = vld [vmem:[%s291 + $0x23c] sm:$0xf]
      %v601 = vld [vmem:[%s291 + $0x240] sm:$0xf]
      %v602 = vld [vmem:[%s291 + $0x244] sm:$0xf]
      %v603 = vld [vmem:[%s291 + $0x248] sm:$0xf]
      %v604 = vld [vmem:[%s291 + $0x24c] sm:$0xf]
      %v605 = vld [vmem:[%s291 + $0x250] sm:$0xf]
      %v606 = vld [vmem:[%s291 + $0x254] sm:$0xf]
      %v607 = vld [vmem:[%s291 + $0x258] sm:$0xf]
      %v608 = vld [vmem:[%s291 + $0x25c] sm:$0xf]
      %v609 = vld [vmem:[%s291 + $0x260] sm:$0xf]
      %v610 = vld [vmem:[%s291 + $0x264] sm:$0xf]
      %v611 = vld [vmem:[%s291 + $0x268] sm:$0xf]
      %v612 = vld [vmem:[%s291 + $0x26c] sm:$0xf]
      %v613 = vld [vmem:[%s291 + $0x270] sm:$0xf]
      %v614 = vld [vmem:[%s291 + $0x274] sm:$0xf]
      %v615 = vld [vmem:[%s291 + $0x278] sm:$0xf]
      %v616 = vld [vmem:[%s291 + $0x27c] sm:$0xf]
      %v617 = vld [vmem:[%s291 + $0x280] sm:$0xf]
      %v618 = vld [vmem:[%s291 + $0x284] sm:$0xf]
      %v619 = vld [vmem:[%s291 + $0x288] sm:$0xf]
      %v620 = vld [vmem:[%s291 + $0x28c] sm:$0xf]
      %v621 = vld [vmem:[%s291 + $0x290] sm:$0xf]
      %v622 = vld [vmem:[%s291 + $0x294] sm:$0xf]
      %v623 = vld [vmem:[%s291 + $0x298] sm:$0xf]
      %v624 = vld [vmem:[%s291 + $0x29c] sm:$0xf]
      %v625 = vld [vmem:[%s291 + $0x2a0] sm:$0xf]
      %v626 = vld [vmem:[%s291 + $0x2a4] sm:$0xf]
      %v627 = vld [vmem:[%s291 + $0x2a8] sm:$0xf]
      %v628 = vld [vmem:[%s291 + $0x2ac] sm:$0xf]
      %v629 = vld [vmem:[%s291 + $0x2b0] sm:$0xf]
      %v630 = vld [vmem:[%s291 + $0x2b4] sm:$0xf]
      %v631 = vld [vmem:[%s291 + $0x2b8] sm:$0xf]
      %v632 = vld [vmem:[%s291 + $0x2bc] sm:$0xf]
      %v633 = vld [vmem:[%s291 + $0x2c0] sm:$0xf]
      %v634 = vld [vmem:[%s291 + $0x2c4] sm:$0xf]
      %v635 = vld [vmem:[%s291 + $0x2c8] sm:$0xf]
      %v636 = vld [vmem:[%s291 + $0x2cc] sm:$0xf]
      %v637 = vld [vmem:[%s291 + $0x2d0] sm:$0xf]
      %v638 = vld [vmem:[%s291 + $0x2d4] sm:$0xf]
      %v639 = vld [vmem:[%s291 + $0x2d8] sm:$0xf]
      %v640 = vld [vmem:[%s291 + $0x2dc] sm:$0xf]
      %v641 = vld [vmem:[%s291 + $0x2e0] sm:$0xf]
      %v642 = vld [vmem:[%s291 + $0x2e4] sm:$0xf]
      %v643 = vld [vmem:[%s291 + $0x2e8] sm:$0xf]
      %v644 = vld [vmem:[%s291 + $0x2ec] sm:$0xf]
      %v645 = vld [vmem:[%s291 + $0x2f0] sm:$0xf]
      %v646 = vld [vmem:[%s291 + $0x2f4] sm:$0xf]
      %v647 = vld [vmem:[%s291 + $0x2f8] sm:$0xf]
      %v648 = vld [vmem:[%s291 + $0x2fc] sm:$0xf]
      %v649 = vld [vmem:[%s291 + $0x300] sm:$0xf]
      %v650 = vld [vmem:[%s291 + $0x304] sm:$0xf]
      %v651 = vld [vmem:[%s291 + $0x308] sm:$0xf]
      %v652 = vld [vmem:[%s291 + $0x30c] sm:$0xf]
      %v653 = vld [vmem:[%s291 + $0x310] sm:$0xf]
      %v654 = vld [vmem:[%s291 + $0x314] sm:$0xf]
      %v655 = vld [vmem:[%s291 + $0x318] sm:$0xf]
      %v656 = vld [vmem:[%s291 + $0x31c] sm:$0xf]
      %v657 = vld [vmem:[%s291 + $0x320] sm:$0xf]
      %v658 = vld [vmem:[%s291 + $0x324] sm:$0xf]
      %v659 = vld [vmem:[%s291 + $0x328] sm:$0xf]
      %v660 = vld [vmem:[%s291 + $0x32c] sm:$0xf]
      %v661 = vld [vmem:[%s291 + $0x330] sm:$0xf]
      %v662 = vld [vmem:[%s291 + $0x334] sm:$0xf]
      %v663 = vld [vmem:[%s291 + $0x338] sm:$0xf]
      %v664 = vld [vmem:[%s291 + $0x33c] sm:$0xf]
      %v665 = vld [vmem:[%s291 + $0x340] sm:$0xf]
      %v666 = vld [vmem:[%s291 + $0x344] sm:$0xf]
      %v667 = vld [vmem:[%s291 + $0x348] sm:$0xf]
      %v668 = vld [vmem:[%s291 + $0x34c] sm:$0xf]
      %v669 = vld [vmem:[%s291 + $0x350] sm:$0xf]
      %v670 = vld [vmem:[%s291 + $0x354] sm:$0xf]
      %v671 = vld [vmem:[%s291 + $0x358] sm:$0xf]
      %v672 = vld [vmem:[%s291 + $0x35c] sm:$0xf]
      %v673 = vld [vmem:[%s291 + $0x360] sm:$0xf]
      %v674 = vld [vmem:[%s291 + $0x364] sm:$0xf]
      %v675 = vld [vmem:[%s291 + $0x368] sm:$0xf]
      %v676 = vld [vmem:[%s291 + $0x36c] sm:$0xf]
      %v677 = vld [vmem:[%s291 + $0x370] sm:$0xf]
      %v678 = vld [vmem:[%s291 + $0x374] sm:$0xf]
      %v679 = vld [vmem:[%s291 + $0x378] sm:$0xf]
      %v680 = vld [vmem:[%s291 + $0x37c] sm:$0xf]
      %v793 = vunpack.c.l.b16 %v345
      %v794 = vunpack.c.h.b16 %v345
      %v795 = vunpack.c.l.b16 %v346
      %v796 = vunpack.c.h.b16 %v346
      %v797 = vunpack.c.l.b16 %v347
      %v798 = vunpack.c.h.b16 %v347
      %v799 = vunpack.c.l.b16 %v348
      %v800 = vunpack.c.h.b16 %v348
      %v801 = vunpack.c.l.b16 %v349
      %v802 = vunpack.c.h.b16 %v349
      %v803 = vunpack.c.l.b16 %v350
      %v804 = vunpack.c.h.b16 %v350
      %v805 = vunpack.c.l.b16 %v351
      %v806 = vunpack.c.h.b16 %v351
      %v807 = vunpack.c.l.b16 %v352
      %v808 = vunpack.c.h.b16 %v352
      %v809 = vunpack.c.l.b16 %v353
      %v810 = vunpack.c.h.b16 %v353
      %v811 = vunpack.c.l.b16 %v354
      %v812 = vunpack.c.h.b16 %v354
      %v813 = vunpack.c.l.b16 %v355
      %v814 = vunpack.c.h.b16 %v355
      %v815 = vunpack.c.l.b16 %v356
      %v816 = vunpack.c.h.b16 %v356
      %v817 = vunpack.c.l.b16 %v357
      %v818 = vunpack.c.h.b16 %v357
      %v819 = vunpack.c.l.b16 %v358
      %v820 = vunpack.c.h.b16 %v358
      %v821 = vunpack.c.l.b16 %v359
      %v822 = vunpack.c.h.b16 %v359
      %v823 = vunpack.c.l.b16 %v360
      %v824 = vunpack.c.h.b16 %v360
      %v825 = vunpack.c.l.b16 %v361
      %v826 = vunpack.c.h.b16 %v361
      %v827 = vunpack.c.l.b16 %v362
      %v828 = vunpack.c.h.b16 %v362
      %v829 = vunpack.c.l.b16 %v363
      %v830 = vunpack.c.h.b16 %v363
      %v831 = vunpack.c.l.b16 %v364
      %v832 = vunpack.c.h.b16 %v364
      %v833 = vunpack.c.l.b16 %v365
      %v834 = vunpack.c.h.b16 %v365
      %v835 = vunpack.c.l.b16 %v366
      %v836 = vunpack.c.h.b16 %v366
      %v837 = vunpack.c.l.b16 %v367
      %v838 = vunpack.c.h.b16 %v367
      %v839 = vunpack.c.l.b16 %v368
      %v840 = vunpack.c.h.b16 %v368
      %v841 = vunpack.c.l.b16 %v369
      %v842 = vunpack.c.h.b16 %v369
      %v843 = vunpack.c.l.b16 %v370
      %v844 = vunpack.c.h.b16 %v370
      %v845 = vunpack.c.l.b16 %v371
      %v846 = vunpack.c.h.b16 %v371
      %v847 = vunpack.c.l.b16 %v372
      %v848 = vunpack.c.h.b16 %v372
      %v849 = vunpack.c.l.b16 %v373
      %v850 = vunpack.c.h.b16 %v373
      %v851 = vunpack.c.l.b16 %v374
      %v852 = vunpack.c.h.b16 %v374
      %v853 = vunpack.c.l.b16 %v375
      %v854 = vunpack.c.h.b16 %v375
      %v855 = vunpack.c.l.b16 %v376
      %v856 = vunpack.c.h.b16 %v376
      %v857 = vunpack.c.l.b16 %v377
      %v858 = vunpack.c.h.b16 %v377
      %v859 = vunpack.c.l.b16 %v378
      %v860 = vunpack.c.h.b16 %v378
      %v861 = vunpack.c.l.b16 %v379
      %v862 = vunpack.c.h.b16 %v379
      %v863 = vunpack.c.l.b16 %v380
      %v864 = vunpack.c.h.b16 %v380
      %v865 = vunpack.c.l.b16 %v381
      %v866 = vunpack.c.h.b16 %v381
      %v867 = vunpack.c.l.b16 %v382
      %v868 = vunpack.c.h.b16 %v382
      %v869 = vunpack.c.l.b16 %v383
      %v870 = vunpack.c.h.b16 %v383
      %v871 = vunpack.c.l.b16 %v384
      %v872 = vunpack.c.h.b16 %v384
      %v873 = vunpack.c.l.b16 %v385
      %v874 = vunpack.c.h.b16 %v385
      %v875 = vunpack.c.l.b16 %v386
      %v876 = vunpack.c.h.b16 %v386
      %v877 = vunpack.c.l.b16 %v387
      %v878 = vunpack.c.h.b16 %v387
      %v879 = vunpack.c.l.b16 %v388
      %v880 = vunpack.c.h.b16 %v388
      %v881 = vunpack.c.l.b16 %v389
      %v882 = vunpack.c.h.b16 %v389
      %v883 = vunpack.c.l.b16 %v390
      %v884 = vunpack.c.h.b16 %v390
      %v885 = vunpack.c.l.b16 %v391
      %v886 = vunpack.c.h.b16 %v391
      %v887 = vunpack.c.l.b16 %v392
      %v888 = vunpack.c.h.b16 %v392
      %v889 = vunpack.c.l.b16 %v393
      %v890 = vunpack.c.h.b16 %v393
      %v891 = vunpack.c.l.b16 %v394
      %v892 = vunpack.c.h.b16 %v394
      %v893 = vunpack.c.l.b16 %v395
      %v894 = vunpack.c.h.b16 %v395
      %v895 = vunpack.c.l.b16 %v396
      %v896 = vunpack.c.h.b16 %v396
      %v897 = vunpack.c.l.b16 %v397
      %v898 = vunpack.c.h.b16 %v397
      %v899 = vunpack.c.l.b16 %v398
      %v900 = vunpack.c.h.b16 %v398
      %v901 = vunpack.c.l.b16 %v399
      %v902 = vunpack.c.h.b16 %v399
      %v903 = vunpack.c.l.b16 %v400
      %v904 = vunpack.c.h.b16 %v400
      %v905 = vunpack.c.l.b16 %v401
      %v906 = vunpack.c.h.b16 %v401
      %v907 = vunpack.c.l.b16 %v402
      %v908 = vunpack.c.h.b16 %v402
      %v909 = vunpack.c.l.b16 %v403
      %v910 = vunpack.c.h.b16 %v403
      %v911 = vunpack.c.l.b16 %v404
      %v912 = vunpack.c.h.b16 %v404
      %v913 = vunpack.c.l.b16 %v405
      %v914 = vunpack.c.h.b16 %v405
      %v915 = vunpack.c.l.b16 %v406
      %v916 = vunpack.c.h.b16 %v406
      %v917 = vunpack.c.l.b16 %v407
      %v918 = vunpack.c.h.b16 %v407
      %v919 = vunpack.c.l.b16 %v408
      %v920 = vunpack.c.h.b16 %v408
      %v921 = vunpack.c.l.b16 %v409
      %v922 = vunpack.c.h.b16 %v409
      %v923 = vunpack.c.l.b16 %v410
      %v924 = vunpack.c.h.b16 %v410
      %v925 = vunpack.c.l.b16 %v411
      %v926 = vunpack.c.h.b16 %v411
      %v927 = vunpack.c.l.b16 %v412
      %v928 = vunpack.c.h.b16 %v412
      %v929 = vunpack.c.l.b16 %v413
      %v930 = vunpack.c.h.b16 %v413
      %v931 = vunpack.c.l.b16 %v414
      %v932 = vunpack.c.h.b16 %v414
      %v933 = vunpack.c.l.b16 %v415
      %v934 = vunpack.c.h.b16 %v415
      %v935 = vunpack.c.l.b16 %v416
      %v936 = vunpack.c.h.b16 %v416
      %v937 = vunpack.c.l.b16 %v417
      %v938 = vunpack.c.h.b16 %v417
      %v939 = vunpack.c.l.b16 %v418
      %v940 = vunpack.c.h.b16 %v418
      %v941 = vunpack.c.l.b16 %v419
      %v942 = vunpack.c.h.b16 %v419
      %v943 = vunpack.c.l.b16 %v420
      %v944 = vunpack.c.h.b16 %v420
      %v945 = vunpack.c.l.b16 %v421
      %v946 = vunpack.c.h.b16 %v421
      %v947 = vunpack.c.l.b16 %v422
      %v948 = vunpack.c.h.b16 %v422
      %v949 = vunpack.c.l.b16 %v423
      %v950 = vunpack.c.h.b16 %v423
      %v951 = vunpack.c.l.b16 %v424
      %v952 = vunpack.c.h.b16 %v424
      %v953 = vunpack.c.l.b16 %v425
      %v954 = vunpack.c.h.b16 %v425
      %v955 = vunpack.c.l.b16 %v426
      %v956 = vunpack.c.h.b16 %v426
      %v957 = vunpack.c.l.b16 %v427
      %v958 = vunpack.c.h.b16 %v427
      %v959 = vunpack.c.l.b16 %v428
      %v960 = vunpack.c.h.b16 %v428
      %v961 = vunpack.c.l.b16 %v429
      %v962 = vunpack.c.h.b16 %v429
      %v963 = vunpack.c.l.b16 %v430
      %v964 = vunpack.c.h.b16 %v430
      %v965 = vunpack.c.l.b16 %v431
      %v966 = vunpack.c.h.b16 %v431
      %v967 = vunpack.c.l.b16 %v432
      %v968 = vunpack.c.h.b16 %v432
      %v969 = vunpack.c.l.b16 %v433
      %v970 = vunpack.c.h.b16 %v433
      %v971 = vunpack.c.l.b16 %v434
      %v972 = vunpack.c.h.b16 %v434
      %v973 = vunpack.c.l.b16 %v435
      %v974 = vunpack.c.h.b16 %v435
      %v975 = vunpack.c.l.b16 %v436
      %v976 = vunpack.c.h.b16 %v436
      %v977 = vunpack.c.l.b16 %v437
      %v978 = vunpack.c.h.b16 %v437
      %v979 = vunpack.c.l.b16 %v438
      %v980 = vunpack.c.h.b16 %v438
      %v981 = vunpack.c.l.b16 %v439
      %v982 = vunpack.c.h.b16 %v439
      %v983 = vunpack.c.l.b16 %v440
      %v984 = vunpack.c.h.b16 %v440
      %v985 = vunpack.c.l.b16 %v441
      %v986 = vunpack.c.h.b16 %v441
      %v987 = vunpack.c.l.b16 %v442
      %v988 = vunpack.c.h.b16 %v442
      %v989 = vunpack.c.l.b16 %v443
      %v990 = vunpack.c.h.b16 %v443
      %v991 = vunpack.c.l.b16 %v444
      %v992 = vunpack.c.h.b16 %v444
      %v993 = vunpack.c.l.b16 %v445
      %v994 = vunpack.c.h.b16 %v445
      %v995 = vunpack.c.l.b16 %v446
      %v996 = vunpack.c.h.b16 %v446
      %v997 = vunpack.c.l.b16 %v447
      %v998 = vunpack.c.h.b16 %v447
      %v999 = vunpack.c.l.b16 %v448
      %v1000 = vunpack.c.h.b16 %v448
      %v1001 = vunpack.c.l.b16 %v449
      %v1002 = vunpack.c.h.b16 %v449
      %v1003 = vunpack.c.l.b16 %v450
      %v1004 = vunpack.c.h.b16 %v450
      %v1005 = vunpack.c.l.b16 %v451
      %v1006 = vunpack.c.h.b16 %v451
      %v1007 = vunpack.c.l.b16 %v452
      %v1008 = vunpack.c.h.b16 %v452
      %v1009 = vunpack.c.l.b16 %v453
      %v1010 = vunpack.c.h.b16 %v453
      %v1011 = vunpack.c.l.b16 %v454
      %v1012 = vunpack.c.h.b16 %v454
      %v1013 = vunpack.c.l.b16 %v455
      %v1014 = vunpack.c.h.b16 %v455
      %v1015 = vunpack.c.l.b16 %v456
      %v1016 = vunpack.c.h.b16 %v456
      %v1017 = vpack.c.b16 %v807, %v793
      %v1018 = vpack.c.b16 %v808, %v794
      %v1019 = vpack.c.b16 %v809, %v795
      %v1020 = vpack.c.b16 %v810, %v796
      %v1021 = vpack.c.b16 %v811, %v797
      %v1022 = vpack.c.b16 %v812, %v798
      %v1023 = vpack.c.b16 %v813, %v799
      %v1024 = vpack.c.b16 %v814, %v800
      %v1025 = vpack.c.b16 %v815, %v801
      %v1026 = vpack.c.b16 %v816, %v802
      %v1027 = vpack.c.b16 %v817, %v803
      %v1028 = vpack.c.b16 %v818, %v804
      %v1029 = vpack.c.b16 %v819, %v805
      %v1030 = vpack.c.b16 %v820, %v806
      %v1031 = vpack.c.b16 %v835, %v821
      %v1032 = vpack.c.b16 %v836, %v822
      %v1033 = vpack.c.b16 %v837, %v823
      %v1034 = vpack.c.b16 %v838, %v824
      %v1035 = vpack.c.b16 %v839, %v825
      %v1036 = vpack.c.b16 %v840, %v826
      %v1037 = vpack.c.b16 %v841, %v827
      %v1038 = vpack.c.b16 %v842, %v828
      %v1039 = vpack.c.b16 %v843, %v829
      %v1040 = vpack.c.b16 %v844, %v830
      %v1041 = vpack.c.b16 %v845, %v831
      %v1042 = vpack.c.b16 %v846, %v832
      %v1043 = vpack.c.b16 %v847, %v833
      %v1044 = vpack.c.b16 %v848, %v834
      %v1045 = vpack.c.b16 %v863, %v849
      %v1046 = vpack.c.b16 %v864, %v850
      %v1047 = vpack.c.b16 %v865, %v851
      %v1048 = vpack.c.b16 %v866, %v852
      %v1049 = vpack.c.b16 %v867, %v853
      %v1050 = vpack.c.b16 %v868, %v854
      %v1051 = vpack.c.b16 %v869, %v855
      %v1052 = vpack.c.b16 %v870, %v856
      %v1053 = vpack.c.b16 %v871, %v857
      %v1054 = vpack.c.b16 %v872, %v858
      %v1055 = vpack.c.b16 %v873, %v859
      %v1056 = vpack.c.b16 %v874, %v860
      %v1057 = vpack.c.b16 %v875, %v861
      %v1058 = vpack.c.b16 %v876, %v862
      %v1059 = vpack.c.b16 %v891, %v877
      %v1060 = vpack.c.b16 %v892, %v878
      %v1061 = vpack.c.b16 %v893, %v879
      %v1062 = vpack.c.b16 %v894, %v880
      %v1063 = vpack.c.b16 %v895, %v881
      %v1064 = vpack.c.b16 %v896, %v882
      %v1065 = vpack.c.b16 %v897, %v883
      %v1066 = vpack.c.b16 %v898, %v884
      %v1067 = vpack.c.b16 %v899, %v885
      %v1068 = vpack.c.b16 %v900, %v886
      %v1069 = vpack.c.b16 %v901, %v887
      %v1070 = vpack.c.b16 %v902, %v888
      %v1071 = vpack.c.b16 %v903, %v889
      %v1072 = vpack.c.b16 %v904, %v890
      %v1073 = vpack.c.b16 %v919, %v905
      %v1074 = vpack.c.b16 %v920, %v906
      %v1075 = vpack.c.b16 %v921, %v907
      %v1076 = vpack.c.b16 %v922, %v908
      %v1077 = vpack.c.b16 %v923, %v909
      %v1078 = vpack.c.b16 %v924, %v910
      %v1079 = vpack.c.b16 %v925, %v911
      %v1080 = vpack.c.b16 %v926, %v912
      %v1081 = vpack.c.b16 %v927, %v913
      %v1082 = vpack.c.b16 %v928, %v914
      %v1083 = vpack.c.b16 %v929, %v915
      %v1084 = vpack.c.b16 %v930, %v916
      %v1085 = vpack.c.b16 %v931, %v917
      %v1086 = vpack.c.b16 %v932, %v918
      %v1087 = vpack.c.b16 %v947, %v933
      %v1088 = vpack.c.b16 %v948, %v934
      %v1089 = vpack.c.b16 %v949, %v935
      %v1090 = vpack.c.b16 %v950, %v936
      %v1091 = vpack.c.b16 %v951, %v937
      %v1092 = vpack.c.b16 %v952, %v938
      %v1093 = vpack.c.b16 %v953, %v939
      %v1094 = vpack.c.b16 %v954, %v940
      %v1095 = vpack.c.b16 %v955, %v941
      %v1096 = vpack.c.b16 %v956, %v942
      %v1097 = vpack.c.b16 %v957, %v943
      %v1098 = vpack.c.b16 %v958, %v944
      %v1099 = vpack.c.b16 %v959, %v945
      %v1100 = vpack.c.b16 %v960, %v946
      %v1101 = vpack.c.b16 %v975, %v961
      %v1102 = vpack.c.b16 %v976, %v962
      %v1103 = vpack.c.b16 %v977, %v963
      %v1104 = vpack.c.b16 %v978, %v964
      %v1105 = vpack.c.b16 %v979, %v965
      %v1106 = vpack.c.b16 %v980, %v966
      %v1107 = vpack.c.b16 %v981, %v967
      %v1108 = vpack.c.b16 %v982, %v968
      %v1109 = vpack.c.b16 %v983, %v969
      %v1110 = vpack.c.b16 %v984, %v970
      %v1111 = vpack.c.b16 %v985, %v971
      %v1112 = vpack.c.b16 %v986, %v972
      %v1113 = vpack.c.b16 %v987, %v973
      %v1114 = vpack.c.b16 %v988, %v974
      %v1115 = vpack.c.b16 %v1003, %v989
      %v1116 = vpack.c.b16 %v1004, %v990
      %v1117 = vpack.c.b16 %v1005, %v991
      %v1118 = vpack.c.b16 %v1006, %v992
      %v1119 = vpack.c.b16 %v1007, %v993
      %v1120 = vpack.c.b16 %v1008, %v994
      %v1121 = vpack.c.b16 %v1009, %v995
      %v1122 = vpack.c.b16 %v1010, %v996
      %v1123 = vpack.c.b16 %v1011, %v997
      %v1124 = vpack.c.b16 %v1012, %v998
      %v1125 = vpack.c.b16 %v1013, %v999
      %v1126 = vpack.c.b16 %v1014, %v1000
      %v1127 = vpack.c.b16 %v1015, %v1001
      %v1128 = vpack.c.b16 %v1016, %v1002
      %v1465 = vunpack.c.l.b16 %v457
      %v1466 = vunpack.c.l.b16 %v458
      %v1467 = vunpack.c.l.b16 %v459
      %v1468 = vunpack.c.l.b16 %v460
      %v1469 = vunpack.c.l.b16 %v461
      %v1470 = vunpack.c.l.b16 %v462
      %v1471 = vunpack.c.l.b16 %v463
      %v1472 = vunpack.c.l.b16 %v464
      %v1473 = vunpack.c.l.b16 %v465
      %v1474 = vunpack.c.l.b16 %v466
      %v1475 = vunpack.c.l.b16 %v467
      %v1476 = vunpack.c.l.b16 %v468
      %v1477 = vunpack.c.l.b16 %v469
      %v1478 = vunpack.c.l.b16 %v470
      %v1479 = vunpack.c.l.b16 %v471
      %v1480 = vunpack.c.l.b16 %v472
      %v1481 = vunpack.c.l.b16 %v473
      %v1482 = vunpack.c.l.b16 %v474
      %v1483 = vunpack.c.l.b16 %v475
      %v1484 = vunpack.c.l.b16 %v476
      %v1485 = vunpack.c.l.b16 %v477
      %v1486 = vunpack.c.l.b16 %v478
      %v1487 = vunpack.c.l.b16 %v479
      %v1488 = vunpack.c.l.b16 %v480
      %v1489 = vunpack.c.l.b16 %v481
      %v1490 = vunpack.c.l.b16 %v482
      %v1491 = vunpack.c.l.b16 %v483
      %v1492 = vunpack.c.l.b16 %v484
      %v1493 = vunpack.c.l.b16 %v485
      %v1494 = vunpack.c.l.b16 %v486
      %v1495 = vunpack.c.l.b16 %v487
      %v1496 = vunpack.c.l.b16 %v488
      %v1497 = vunpack.c.l.b16 %v489
      %v1498 = vunpack.c.l.b16 %v490
      %v1499 = vunpack.c.l.b16 %v491
      %v1500 = vunpack.c.l.b16 %v492
      %v1501 = vunpack.c.l.b16 %v493
      %v1502 = vunpack.c.l.b16 %v494
      %v1503 = vunpack.c.l.b16 %v495
      %v1504 = vunpack.c.l.b16 %v496
      %v1505 = vunpack.c.l.b16 %v497
      %v1506 = vunpack.c.l.b16 %v498
      %v1507 = vunpack.c.l.b16 %v499
      %v1508 = vunpack.c.l.b16 %v500
      %v1509 = vunpack.c.l.b16 %v501
      %v1510 = vunpack.c.l.b16 %v502
      %v1511 = vunpack.c.l.b16 %v503
      %v1512 = vunpack.c.l.b16 %v504
      %v1513 = vunpack.c.l.b16 %v505
      %v1514 = vunpack.c.l.b16 %v506
      %v1515 = vunpack.c.l.b16 %v507
      %v1516 = vunpack.c.l.b16 %v508
      %v1517 = vunpack.c.l.b16 %v509
      %v1518 = vunpack.c.l.b16 %v510
      %v1519 = vunpack.c.l.b16 %v511
      %v1520 = vunpack.c.l.b16 %v512
      %v1521 = vunpack.c.l.b16 %v513
      %v1522 = vunpack.c.l.b16 %v514
      %v1523 = vunpack.c.l.b16 %v515
      %v1524 = vunpack.c.l.b16 %v516
      %v1525 = vunpack.c.l.b16 %v517
      %v1526 = vunpack.c.l.b16 %v518
      %v1527 = vunpack.c.l.b16 %v519
      %v1528 = vunpack.c.l.b16 %v520
      %v1529 = vunpack.c.l.b16 %v521
      %v1530 = vunpack.c.l.b16 %v522
      %v1531 = vunpack.c.l.b16 %v523
      %v1532 = vunpack.c.l.b16 %v524
      %v1533 = vunpack.c.l.b16 %v525
      %v1534 = vunpack.c.l.b16 %v526
      %v1535 = vunpack.c.l.b16 %v527
      %v1536 = vunpack.c.l.b16 %v528
      %v1537 = vunpack.c.l.b16 %v529
      %v1538 = vunpack.c.l.b16 %v530
      %v1539 = vunpack.c.l.b16 %v531
      %v1540 = vunpack.c.l.b16 %v532
      %v1541 = vunpack.c.l.b16 %v533
      %v1542 = vunpack.c.l.b16 %v534
      %v1543 = vunpack.c.l.b16 %v535
      %v1544 = vunpack.c.l.b16 %v536
      %v1545 = vunpack.c.l.b16 %v537
      %v1546 = vunpack.c.l.b16 %v538
      %v1547 = vunpack.c.l.b16 %v539
      %v1548 = vunpack.c.l.b16 %v540
      %v1549 = vunpack.c.l.b16 %v541
      %v1550 = vunpack.c.l.b16 %v542
      %v1551 = vunpack.c.l.b16 %v543
      %v1552 = vunpack.c.l.b16 %v544
      %v1553 = vunpack.c.l.b16 %v545
      %v1554 = vunpack.c.l.b16 %v546
      %v1555 = vunpack.c.l.b16 %v547
      %v1556 = vunpack.c.l.b16 %v548
      %v1557 = vunpack.c.l.b16 %v549
      %v1558 = vunpack.c.l.b16 %v550
      %v1559 = vunpack.c.l.b16 %v551
      %v1560 = vunpack.c.l.b16 %v552
      %v1561 = vunpack.c.l.b16 %v553
      %v1562 = vunpack.c.l.b16 %v554
      %v1563 = vunpack.c.l.b16 %v555
      %v1564 = vunpack.c.l.b16 %v556
      %v1565 = vunpack.c.l.b16 %v557
      %v1566 = vunpack.c.l.b16 %v558
      %v1567 = vunpack.c.l.b16 %v559
      %v1568 = vunpack.c.l.b16 %v560
      %v1569 = vunpack.c.l.b16 %v561
      %v1570 = vunpack.c.l.b16 %v562
      %v1571 = vunpack.c.l.b16 %v563
      %v1572 = vunpack.c.l.b16 %v564
      %v1573 = vunpack.c.l.b16 %v565
      %v1574 = vunpack.c.l.b16 %v566
      %v1575 = vunpack.c.l.b16 %v567
      %v1576 = vunpack.c.l.b16 %v568
      %v1577 = vunpack.c.l.b16 %v569
      %v1578 = vunpack.c.l.b16 %v570
      %v1579 = vunpack.c.l.b16 %v571
      %v1580 = vunpack.c.l.b16 %v572
      %v1581 = vunpack.c.l.b16 %v573
      %v1582 = vunpack.c.l.b16 %v574
      %v1583 = vunpack.c.l.b16 %v575
      %v1584 = vunpack.c.l.b16 %v576
      %v1585 = vunpack.c.l.b16 %v577
      %v1586 = vunpack.c.l.b16 %v578
      %v1587 = vunpack.c.l.b16 %v579
      %v1588 = vunpack.c.l.b16 %v580
      %v1589 = vunpack.c.l.b16 %v581
      %v1590 = vunpack.c.l.b16 %v582
      %v1591 = vunpack.c.l.b16 %v583
      %v1592 = vunpack.c.l.b16 %v584
      %v1593 = vunpack.c.l.b16 %v585
      %v1594 = vunpack.c.l.b16 %v586
      %v1595 = vunpack.c.l.b16 %v587
      %v1596 = vunpack.c.l.b16 %v588
      %v1597 = vunpack.c.l.b16 %v589
      %v1598 = vunpack.c.l.b16 %v590
      %v1599 = vunpack.c.l.b16 %v591
      %v1600 = vunpack.c.l.b16 %v592
      %v1601 = vunpack.c.l.b16 %v593
      %v1602 = vunpack.c.l.b16 %v594
      %v1603 = vunpack.c.l.b16 %v595
      %v1604 = vunpack.c.l.b16 %v596
      %v1605 = vunpack.c.l.b16 %v597
      %v1606 = vunpack.c.l.b16 %v598
      %v1607 = vunpack.c.l.b16 %v599
      %v1608 = vunpack.c.l.b16 %v600
      %v1609 = vunpack.c.l.b16 %v601
      %v1610 = vunpack.c.l.b16 %v602
      %v1611 = vunpack.c.l.b16 %v603
      %v1612 = vunpack.c.l.b16 %v604
      %v1613 = vunpack.c.l.b16 %v605
      %v1614 = vunpack.c.l.b16 %v606
      %v1615 = vunpack.c.l.b16 %v607
      %v1616 = vunpack.c.l.b16 %v608
      %v1617 = vunpack.c.l.b16 %v609
      %v1618 = vunpack.c.l.b16 %v610
      %v1619 = vunpack.c.l.b16 %v611
      %v1620 = vunpack.c.l.b16 %v612
      %v1621 = vunpack.c.l.b16 %v613
      %v1622 = vunpack.c.l.b16 %v614
      %v1623 = vunpack.c.l.b16 %v615
      %v1624 = vunpack.c.l.b16 %v616
      %v1625 = vunpack.c.l.b16 %v617
      %v1626 = vunpack.c.l.b16 %v618
      %v1627 = vunpack.c.l.b16 %v619
      %v1628 = vunpack.c.l.b16 %v620
      %v1629 = vunpack.c.l.b16 %v621
      %v1630 = vunpack.c.l.b16 %v622
      %v1631 = vunpack.c.l.b16 %v623
      %v1632 = vunpack.c.l.b16 %v624
      %v1633 = vunpack.c.l.b16 %v625
      %v1634 = vunpack.c.l.b16 %v626
      %v1635 = vunpack.c.l.b16 %v627
      %v1636 = vunpack.c.l.b16 %v628
      %v1637 = vunpack.c.l.b16 %v629
      %v1638 = vunpack.c.l.b16 %v630
      %v1639 = vunpack.c.l.b16 %v631
      %v1640 = vunpack.c.l.b16 %v632
      %v1641 = vunpack.c.l.b16 %v633
      %v1642 = vunpack.c.l.b16 %v634
      %v1643 = vunpack.c.l.b16 %v635
      %v1644 = vunpack.c.l.b16 %v636
      %v1645 = vunpack.c.l.b16 %v637
      %v1646 = vunpack.c.l.b16 %v638
      %v1647 = vunpack.c.l.b16 %v639
      %v1648 = vunpack.c.l.b16 %v640
      %v1649 = vunpack.c.l.b16 %v641
      %v1650 = vunpack.c.l.b16 %v642
      %v1651 = vunpack.c.l.b16 %v643
      %v1652 = vunpack.c.l.b16 %v644
      %v1653 = vunpack.c.l.b16 %v645
      %v1654 = vunpack.c.l.b16 %v646
      %v1655 = vunpack.c.l.b16 %v647
      %v1656 = vunpack.c.l.b16 %v648
      %v1657 = vunpack.c.l.b16 %v649
      %v1658 = vunpack.c.l.b16 %v650
      %v1659 = vunpack.c.l.b16 %v651
      %v1660 = vunpack.c.l.b16 %v652
      %v1661 = vunpack.c.l.b16 %v653
      %v1662 = vunpack.c.l.b16 %v654
      %v1663 = vunpack.c.l.b16 %v655
      %v1664 = vunpack.c.l.b16 %v656
      %v1665 = vunpack.c.l.b16 %v657
      %v1666 = vunpack.c.l.b16 %v658
      %v1667 = vunpack.c.l.b16 %v659
      %v1668 = vunpack.c.l.b16 %v660
      %v1669 = vunpack.c.l.b16 %v661
      %v1670 = vunpack.c.l.b16 %v662
      %v1671 = vunpack.c.l.b16 %v663
      %v1672 = vunpack.c.l.b16 %v664
      %v1673 = vunpack.c.l.b16 %v665
      %v1674 = vunpack.c.l.b16 %v666
      %v1675 = vunpack.c.l.b16 %v667
      %v1676 = vunpack.c.l.b16 %v668
      %v1677 = vunpack.c.l.b16 %v669
      %v1678 = vunpack.c.l.b16 %v670
      %v1679 = vunpack.c.l.b16 %v671
      %v1680 = vunpack.c.l.b16 %v672
      %v1681 = vunpack.c.l.b16 %v673
      %v1682 = vunpack.c.l.b16 %v674
      %v1683 = vunpack.c.l.b16 %v675
      %v1684 = vunpack.c.l.b16 %v676
      %v1685 = vunpack.c.l.b16 %v677
      %v1686 = vunpack.c.l.b16 %v678
      %v1687 = vunpack.c.l.b16 %v679
      %v1688 = vunpack.c.l.b16 %v680
      %v1689 = vpack.c.b16 %v1466, %v1465
      %v1690 = vpack.c.b16 %v1468, %v1467
      %v1691 = vpack.c.b16 %v1470, %v1469
      %v1692 = vpack.c.b16 %v1472, %v1471
      %v1693 = vpack.c.b16 %v1474, %v1473
      %v1694 = vpack.c.b16 %v1476, %v1475
      %v1695 = vpack.c.b16 %v1478, %v1477
      %v1696 = vpack.c.b16 %v1480, %v1479
      %v1697 = vpack.c.b16 %v1482, %v1481
      %v1698 = vpack.c.b16 %v1484, %v1483
      %v1699 = vpack.c.b16 %v1486, %v1485
      %v1700 = vpack.c.b16 %v1488, %v1487
      %v1701 = vpack.c.b16 %v1490, %v1489
      %v1702 = vpack.c.b16 %v1492, %v1491
      %v1703 = vpack.c.b16 %v1494, %v1493
      %v1704 = vpack.c.b16 %v1496, %v1495
      %v1705 = vpack.c.b16 %v1498, %v1497
      %v1706 = vpack.c.b16 %v1500, %v1499
      %v1707 = vpack.c.b16 %v1502, %v1501
      %v1708 = vpack.c.b16 %v1504, %v1503
      %v1709 = vpack.c.b16 %v1506, %v1505
      %v1710 = vpack.c.b16 %v1508, %v1507
      %v1711 = vpack.c.b16 %v1510, %v1509
      %v1712 = vpack.c.b16 %v1512, %v1511
      %v1713 = vpack.c.b16 %v1514, %v1513
      %v1714 = vpack.c.b16 %v1516, %v1515
      %v1715 = vpack.c.b16 %v1518, %v1517
      %v1716 = vpack.c.b16 %v1520, %v1519
      %v1717 = vpack.c.b16 %v1522, %v1521
      %v1718 = vpack.c.b16 %v1524, %v1523
      %v1719 = vpack.c.b16 %v1526, %v1525
      %v1720 = vpack.c.b16 %v1528, %v1527
      %v1721 = vpack.c.b16 %v1530, %v1529
      %v1722 = vpack.c.b16 %v1532, %v1531
      %v1723 = vpack.c.b16 %v1534, %v1533
      %v1724 = vpack.c.b16 %v1536, %v1535
      %v1725 = vpack.c.b16 %v1538, %v1537
      %v1726 = vpack.c.b16 %v1540, %v1539
      %v1727 = vpack.c.b16 %v1542, %v1541
      %v1728 = vpack.c.b16 %v1544, %v1543
      %v1729 = vpack.c.b16 %v1546, %v1545
      %v1730 = vpack.c.b16 %v1548, %v1547
      %v1731 = vpack.c.b16 %v1550, %v1549
      %v1732 = vpack.c.b16 %v1552, %v1551
      %v1733 = vpack.c.b16 %v1554, %v1553
      %v1734 = vpack.c.b16 %v1556, %v1555
      %v1735 = vpack.c.b16 %v1558, %v1557
      %v1736 = vpack.c.b16 %v1560, %v1559
      %v1737 = vpack.c.b16 %v1562, %v1561
      %v1738 = vpack.c.b16 %v1564, %v1563
      %v1739 = vpack.c.b16 %v1566, %v1565
      %v1740 = vpack.c.b16 %v1568, %v1567
      %v1741 = vpack.c.b16 %v1570, %v1569
      %v1742 = vpack.c.b16 %v1572, %v1571
      %v1743 = vpack.c.b16 %v1574, %v1573
      %v1744 = vpack.c.b16 %v1576, %v1575
      %v1745 = vpack.c.b16 %v1578, %v1577
      %v1746 = vpack.c.b16 %v1580, %v1579
      %v1747 = vpack.c.b16 %v1582, %v1581
      %v1748 = vpack.c.b16 %v1584, %v1583
      %v1749 = vpack.c.b16 %v1586, %v1585
      %v1750 = vpack.c.b16 %v1588, %v1587
      %v1751 = vpack.c.b16 %v1590, %v1589
      %v1752 = vpack.c.b16 %v1592, %v1591
      %v1753 = vpack.c.b16 %v1594, %v1593
      %v1754 = vpack.c.b16 %v1596, %v1595
      %v1755 = vpack.c.b16 %v1598, %v1597
      %v1756 = vpack.c.b16 %v1600, %v1599
      %v1757 = vpack.c.b16 %v1602, %v1601
      %v1758 = vpack.c.b16 %v1604, %v1603
      %v1759 = vpack.c.b16 %v1606, %v1605
      %v1760 = vpack.c.b16 %v1608, %v1607
      %v1761 = vpack.c.b16 %v1610, %v1609
      %v1762 = vpack.c.b16 %v1612, %v1611
      %v1763 = vpack.c.b16 %v1614, %v1613
      %v1764 = vpack.c.b16 %v1616, %v1615
      %v1765 = vpack.c.b16 %v1618, %v1617
      %v1766 = vpack.c.b16 %v1620, %v1619
      %v1767 = vpack.c.b16 %v1622, %v1621
      %v1768 = vpack.c.b16 %v1624, %v1623
      %v1769 = vpack.c.b16 %v1626, %v1625
      %v1770 = vpack.c.b16 %v1628, %v1627
      %v1771 = vpack.c.b16 %v1630, %v1629
      %v1772 = vpack.c.b16 %v1632, %v1631
      %v1773 = vpack.c.b16 %v1634, %v1633
      %v1774 = vpack.c.b16 %v1636, %v1635
      %v1775 = vpack.c.b16 %v1638, %v1637
      %v1776 = vpack.c.b16 %v1640, %v1639
      %v1777 = vpack.c.b16 %v1642, %v1641
      %v1778 = vpack.c.b16 %v1644, %v1643
      %v1779 = vpack.c.b16 %v1646, %v1645
      %v1780 = vpack.c.b16 %v1648, %v1647
      %v1781 = vpack.c.b16 %v1650, %v1649
      %v1782 = vpack.c.b16 %v1652, %v1651
      %v1783 = vpack.c.b16 %v1654, %v1653
      %v1784 = vpack.c.b16 %v1656, %v1655
      %v1785 = vpack.c.b16 %v1658, %v1657
      %v1786 = vpack.c.b16 %v1660, %v1659
      %v1787 = vpack.c.b16 %v1662, %v1661
      %v1788 = vpack.c.b16 %v1664, %v1663
      %v1789 = vpack.c.b16 %v1666, %v1665
      %v1790 = vpack.c.b16 %v1668, %v1667
      %v1791 = vpack.c.b16 %v1670, %v1669
      %v1792 = vpack.c.b16 %v1672, %v1671
      %v1793 = vpack.c.b16 %v1674, %v1673
      %v1794 = vpack.c.b16 %v1676, %v1675
      %v1795 = vpack.c.b16 %v1678, %v1677
      %v1796 = vpack.c.b16 %v1680, %v1679
      %v1797 = vpack.c.b16 %v1682, %v1681
      %v1798 = vpack.c.b16 %v1684, %v1683
      %v1799 = vpack.c.b16 %v1686, %v1685
      %v1800 = vpack.c.b16 %v1688, %v1687
      %1913 = vmatprep.subr.bf16.mxu0 0
      %1914 = vmatpush1.bf16.msra.mxu0 %v1696
      %1915 = vmatprep.subr.bf16.mxu0 0
      %1916 = vmatpush1.bf16.msra.mxu0 %v1695
      %1917 = vmatprep.subr.bf16.mxu0 0
      %1918 = vmatpush1.bf16.msra.mxu0 %v1694
      %1919 = vmatprep.subr.bf16.mxu0 0
      %1920 = vmatpush1.bf16.msra.mxu0 %v1693
      %1921 = vmatprep.subr.bf16.mxu0 0
      %1922 = vmatpush1.bf16.msra.mxu0 %v1692
      %1923 = vmatprep.subr.bf16.mxu0 0
      %1924 = vmatpush1.bf16.msra.mxu0 %v1691
      %1925 = vmatprep.subr.bf16.mxu0 0
      %1926 = vmatpush1.bf16.msra.mxu0 %v1690
      %1927 = vmatprep.subr.bf16.mxu0 0
      %1928 = vmatpush1.bf16.msra.mxu0 %v1689
      %1929 = vmatprep.subr.bf16.mxu0 0
      %1930 = vmatpush2.bf16.msra.mxu0 %v1704
      %1931 = vmatprep.subr.bf16.mxu0 0
      %1932 = vmatpush2.bf16.msra.mxu0 %v1703
      %1933 = vmatprep.subr.bf16.mxu0 0
      %1934 = vmatpush2.bf16.msra.mxu0 %v1702
      %1935 = vmatprep.subr.bf16.mxu0 0
      %1936 = vmatpush2.bf16.msra.mxu0 %v1701
      %1937 = vmatprep.subr.bf16.mxu0 0
      %1938 = vmatpush2.bf16.msra.mxu0 %v1700
      %1939 = vmatprep.subr.bf16.mxu0 0
      %1940 = vmatpush2.bf16.msra.mxu0 %v1699
      %1941 = vmatprep.subr.bf16.mxu0 0
      %1942 = vmatpush2.bf16.msra.mxu0 %v1698
      %1943 = vmatprep.subr.bf16.mxu0 0
      %1944 = vmatpush2.bf16.msra.mxu0 %v1697
      %1945 = vmatprep.mubr.bf16.mxu0 %v1018
      %1946 = vmatmul.mubr.bf16.gmra.mxu0 %v1017
      %v1947 = vpop.f32.mrf.mxu0
      %v1948 = vadd.f32 0.0, %v1947
      %v1949 = vpop.f32.mrf.mxu0
      %v1950 = vpop.f32.mrf.mxu0
      %v1951 = vadd.f32 0.0, %v1950
      %v1952 = vpop.f32.mrf.mxu0
      %1953 = vmatprep.mubr.bf16.mxu0 %v1032
      %1954 = vmatmul.mubr.bf16.gmra.mxu0 %v1031
      %v1955 = vpop.f32.mrf.mxu0
      %v1956 = vadd.f32 0.0, %v1955
      %v1957 = vpop.f32.mrf.mxu0
      %v1958 = vpop.f32.mrf.mxu0
      %v1959 = vadd.f32 0.0, %v1958
      %v1960 = vpop.f32.mrf.mxu0
      %1961 = vmatprep.mubr.bf16.mxu0 %v1046
      %1962 = vmatmul.mubr.bf16.gmra.mxu0 %v1045
      %v1963 = vpop.f32.mrf.mxu0
      %v1964 = vadd.f32 0.0, %v1963
      %v1965 = vpop.f32.mrf.mxu0
      %v1966 = vpop.f32.mrf.mxu0
      %v1967 = vadd.f32 0.0, %v1966
      %v1968 = vpop.f32.mrf.mxu0
      %1969 = vmatprep.mubr.bf16.mxu0 %v1060
      %1970 = vmatmul.mubr.bf16.gmra.mxu0 %v1059
      %v1971 = vpop.f32.mrf.mxu0
      %v1972 = vadd.f32 0.0, %v1971
      %v1973 = vpop.f32.mrf.mxu0
      %v1974 = vpop.f32.mrf.mxu0
      %v1975 = vadd.f32 0.0, %v1974
      %v1976 = vpop.f32.mrf.mxu0
      %1977 = vmatprep.mubr.bf16.mxu0 %v1074
      %1978 = vmatmul.mubr.bf16.gmra.mxu0 %v1073
      %v1979 = vpop.f32.mrf.mxu0
      %v1980 = vadd.f32 0.0, %v1979
      %v1981 = vpop.f32.mrf.mxu0
      %v1982 = vpop.f32.mrf.mxu0
      %v1983 = vadd.f32 0.0, %v1982
      %v1984 = vpop.f32.mrf.mxu0
      %1985 = vmatprep.mubr.bf16.mxu0 %v1088
      %1986 = vmatmul.mubr.bf16.gmra.mxu0 %v1087
      %v1987 = vpop.f32.mrf.mxu0
      %v1988 = vadd.f32 0.0, %v1987
      %v1989 = vpop.f32.mrf.mxu0
      %v1990 = vpop.f32.mrf.mxu0
      %v1991 = vadd.f32 0.0, %v1990
      %v1992 = vpop.f32.mrf.mxu0
      %1993 = vmatprep.mubr.bf16.mxu0 %v1102
      %1994 = vmatmul.mubr.bf16.gmra.mxu0 %v1101
      %v1995 = vpop.f32.mrf.mxu0
      %v1996 = vadd.f32 0.0, %v1995
      %v1997 = vpop.f32.mrf.mxu0
      %v1998 = vpop.f32.mrf.mxu0
      %v1999 = vadd.f32 0.0, %v1998
      %v2000 = vpop.f32.mrf.mxu0
      %2001 = vmatprep.mubr.bf16.mxu0 %v1116
      %2002 = vmatmul.mubr.bf16.gmra.mxu0 %v1115
      %v2003 = vpop.f32.mrf.mxu0
      %v2004 = vadd.f32 0.0, %v2003
      %v2005 = vpop.f32.mrf.mxu0
      %v2006 = vpop.f32.mrf.mxu0
      %v2007 = vadd.f32 0.0, %v2006
      %v2008 = vpop.f32.mrf.mxu0
      %2009 = vdwg.mxu0
      %2010 = vmatprep.subr.bf16.mxu0 0
      %2011 = vmatpush1.bf16.msra.mxu0 %v1712
      %2012 = vmatprep.subr.bf16.mxu0 0
      %2013 = vmatpush1.bf16.msra.mxu0 %v1711
      %2014 = vmatprep.subr.bf16.mxu0 0
      %2015 = vmatpush1.bf16.msra.mxu0 %v1710
      %2016 = vmatprep.subr.bf16.mxu0 0
      %2017 = vmatpush1.bf16.msra.mxu0 %v1709
      %2018 = vmatprep.subr.bf16.mxu0 0
      %2019 = vmatpush1.bf16.msra.mxu0 %v1708
      %2020 = vmatprep.subr.bf16.mxu0 0
      %2021 = vmatpush1.bf16.msra.mxu0 %v1707
      %2022 = vmatprep.subr.bf16.mxu0 0
      %2023 = vmatpush1.bf16.msra.mxu0 %v1706
      %2024 = vmatprep.subr.bf16.mxu0 0
      %2025 = vmatpush1.bf16.msra.mxu0 %v1705
      %2026 = vmatprep.subr.bf16.mxu0 0
      %2027 = vmatpush2.bf16.msra.mxu0 %v1720
      %2028 = vmatprep.subr.bf16.mxu0 0
      %2029 = vmatpush2.bf16.msra.mxu0 %v1719
      %2030 = vmatprep.subr.bf16.mxu0 0
      %2031 = vmatpush2.bf16.msra.mxu0 %v1718
      %2032 = vmatprep.subr.bf16.mxu0 0
      %2033 = vmatpush2.bf16.msra.mxu0 %v1717
      %2034 = vmatprep.subr.bf16.mxu0 0
      %2035 = vmatpush2.bf16.msra.mxu0 %v1716
      %2036 = vmatprep.subr.bf16.mxu0 0
      %2037 = vmatpush2.bf16.msra.mxu0 %v1715
      %2038 = vmatprep.subr.bf16.mxu0 0
      %2039 = vmatpush2.bf16.msra.mxu0 %v1714
      %2040 = vmatprep.subr.bf16.mxu0 0
      %2041 = vmatpush2.bf16.msra.mxu0 %v1713
      %2042 = vmatprep.mubr.bf16.mxu0 %v1020
      %2043 = vmatmul.mubr.bf16.gmra.mxu0 %v1019
      %v2044 = vpop.f32.mrf.mxu0
      %v2045 = vadd.f32 %v1948, %v2044
      %v2046 = vpop.f32.mrf.mxu0
      %v2047 = vpop.f32.mrf.mxu0
      %v2048 = vadd.f32 %v1951, %v2047
      %v2049 = vpop.f32.mrf.mxu0
      %2050 = vmatprep.mubr.bf16.mxu0 %v1034
      %2051 = vmatmul.mubr.bf16.gmra.mxu0 %v1033
      %v2052 = vpop.f32.mrf.mxu0
      %v2053 = vadd.f32 %v1956, %v2052
      %v2054 = vpop.f32.mrf.mxu0
      %v2055 = vpop.f32.mrf.mxu0
      %v2056 = vadd.f32 %v1959, %v2055
      %v2057 = vpop.f32.mrf.mxu0
      %2058 = vmatprep.mubr.bf16.mxu0 %v1048
      %2059 = vmatmul.mubr.bf16.gmra.mxu0 %v1047
      %v2060 = vpop.f32.mrf.mxu0
      %v2061 = vadd.f32 %v1964, %v2060
      %v2062 = vpop.f32.mrf.mxu0
      %v2063 = vpop.f32.mrf.mxu0
      %v2064 = vadd.f32 %v1967, %v2063
      %v2065 = vpop.f32.mrf.mxu0
      %2066 = vmatprep.mubr.bf16.mxu0 %v1062
      %2067 = vmatmul.mubr.bf16.gmra.mxu0 %v1061
      %v2068 = vpop.f32.mrf.mxu0
      %v2069 = vadd.f32 %v1972, %v2068
      %v2070 = vpop.f32.mrf.mxu0
      %v2071 = vpop.f32.mrf.mxu0
      %v2072 = vadd.f32 %v1975, %v2071
      %v2073 = vpop.f32.mrf.mxu0
      %2074 = vmatprep.mubr.bf16.mxu0 %v1076
      %2075 = vmatmul.mubr.bf16.gmra.mxu0 %v1075
      %v2076 = vpop.f32.mrf.mxu0
      %v2077 = vadd.f32 %v1980, %v2076
      %v2078 = vpop.f32.mrf.mxu0
      %v2079 = vpop.f32.mrf.mxu0
      %v2080 = vadd.f32 %v1983, %v2079
      %v2081 = vpop.f32.mrf.mxu0
      %2082 = vmatprep.mubr.bf16.mxu0 %v1090
      %2083 = vmatmul.mubr.bf16.gmra.mxu0 %v1089
      %v2084 = vpop.f32.mrf.mxu0
      %v2085 = vadd.f32 %v1988, %v2084
      %v2086 = vpop.f32.mrf.mxu0
      %v2087 = vpop.f32.mrf.mxu0
      %v2088 = vadd.f32 %v1991, %v2087
      %v2089 = vpop.f32.mrf.mxu0
      %2090 = vmatprep.mubr.bf16.mxu0 %v1104
      %2091 = vmatmul.mubr.bf16.gmra.mxu0 %v1103
      %v2092 = vpop.f32.mrf.mxu0
      %v2093 = vadd.f32 %v1996, %v2092
      %v2094 = vpop.f32.mrf.mxu0
      %v2095 = vpop.f32.mrf.mxu0
      %v2096 = vadd.f32 %v1999, %v2095
      %v2097 = vpop.f32.mrf.mxu0
      %2098 = vmatprep.mubr.bf16.mxu0 %v1118
      %2099 = vmatmul.mubr.bf16.gmra.mxu0 %v1117
      %v2100 = vpop.f32.mrf.mxu0
      %v2101 = vadd.f32 %v2004, %v2100
      %v2102 = vpop.f32.mrf.mxu0
      %v2103 = vpop.f32.mrf.mxu0
      %v2104 = vadd.f32 %v2007, %v2103
      %v2105 = vpop.f32.mrf.mxu0
      %2106 = vdwg.mxu0
      %2107 = vmatprep.subr.bf16.mxu0 0
      %2108 = vmatpush1.bf16.msra.mxu0 %v1728
      %2109 = vmatprep.subr.bf16.mxu0 0
      %2110 = vmatpush1.bf16.msra.mxu0 %v1727
      %2111 = vmatprep.subr.bf16.mxu0 0
      %2112 = vmatpush1.bf16.msra.mxu0 %v1726
      %2113 = vmatprep.subr.bf16.mxu0 0
      %2114 = vmatpush1.bf16.msra.mxu0 %v1725
      %2115 = vmatprep.subr.bf16.mxu0 0
      %2116 = vmatpush1.bf16.msra.mxu0 %v1724
      %2117 = vmatprep.subr.bf16.mxu0 0
      %2118 = vmatpush1.bf16.msra.mxu0 %v1723
      %2119 = vmatprep.subr.bf16.mxu0 0
      %2120 = vmatpush1.bf16.msra.mxu0 %v1722
      %2121 = vmatprep.subr.bf16.mxu0 0
      %2122 = vmatpush1.bf16.msra.mxu0 %v1721
      %2123 = vmatprep.subr.bf16.mxu0 0
      %2124 = vmatpush2.bf16.msra.mxu0 %v1736
      %2125 = vmatprep.subr.bf16.mxu0 0
      %2126 = vmatpush2.bf16.msra.mxu0 %v1735
      %2127 = vmatprep.subr.bf16.mxu0 0
      %2128 = vmatpush2.bf16.msra.mxu0 %v1734
      %2129 = vmatprep.subr.bf16.mxu0 0
      %2130 = vmatpush2.bf16.msra.mxu0 %v1733
      %2131 = vmatprep.subr.bf16.mxu0 0
      %2132 = vmatpush2.bf16.msra.mxu0 %v1732
      %2133 = vmatprep.subr.bf16.mxu0 0
      %2134 = vmatpush2.bf16.msra.mxu0 %v1731
      %2135 = vmatprep.subr.bf16.mxu0 0
      %2136 = vmatpush2.bf16.msra.mxu0 %v1730
      %2137 = vmatprep.subr.bf16.mxu0 0
      %2138 = vmatpush2.bf16.msra.mxu0 %v1729
      %2139 = vmatprep.mubr.bf16.mxu0 %v1022
      %2140 = vmatmul.mubr.bf16.gmra.mxu0 %v1021
      %v2141 = vpop.f32.mrf.mxu0
      %v2142 = vadd.f32 %v2045, %v2141
      %v2143 = vpop.f32.mrf.mxu0
      %v2144 = vpop.f32.mrf.mxu0
      %v2145 = vadd.f32 %v2048, %v2144
      %v2146 = vpop.f32.mrf.mxu0
      %2147 = vmatprep.mubr.bf16.mxu0 %v1036
      %2148 = vmatmul.mubr.bf16.gmra.mxu0 %v1035
      %v2149 = vpop.f32.mrf.mxu0
      %v2150 = vadd.f32 %v2053, %v2149
      %v2151 = vpop.f32.mrf.mxu0
      %v2152 = vpop.f32.mrf.mxu0
      %v2153 = vadd.f32 %v2056, %v2152
      %v2154 = vpop.f32.mrf.mxu0
      %2155 = vmatprep.mubr.bf16.mxu0 %v1050
      %2156 = vmatmul.mubr.bf16.gmra.mxu0 %v1049
      %v2157 = vpop.f32.mrf.mxu0
      %v2158 = vadd.f32 %v2061, %v2157
      %v2159 = vpop.f32.mrf.mxu0
      %v2160 = vpop.f32.mrf.mxu0
      %v2161 = vadd.f32 %v2064, %v2160
      %v2162 = vpop.f32.mrf.mxu0
      %2163 = vmatprep.mubr.bf16.mxu0 %v1064
      %2164 = vmatmul.mubr.bf16.gmra.mxu0 %v1063
      %v2165 = vpop.f32.mrf.mxu0
      %v2166 = vadd.f32 %v2069, %v2165
      %v2167 = vpop.f32.mrf.mxu0
      %v2168 = vpop.f32.mrf.mxu0
      %v2169 = vadd.f32 %v2072, %v2168
      %v2170 = vpop.f32.mrf.mxu0
      %2171 = vmatprep.mubr.bf16.mxu0 %v1078
      %2172 = vmatmul.mubr.bf16.gmra.mxu0 %v1077
      %v2173 = vpop.f32.mrf.mxu0
      %v2174 = vadd.f32 %v2077, %v2173
      %v2175 = vpop.f32.mrf.mxu0
      %v2176 = vpop.f32.mrf.mxu0
      %v2177 = vadd.f32 %v2080, %v2176
      %v2178 = vpop.f32.mrf.mxu0
      %2179 = vmatprep.mubr.bf16.mxu0 %v1092
      %2180 = vmatmul.mubr.bf16.gmra.mxu0 %v1091
      %v2181 = vpop.f32.mrf.mxu0
      %v2182 = vadd.f32 %v2085, %v2181
      %v2183 = vpop.f32.mrf.mxu0
      %v2184 = vpop.f32.mrf.mxu0
      %v2185 = vadd.f32 %v2088, %v2184
      %v2186 = vpop.f32.mrf.mxu0
      %2187 = vmatprep.mubr.bf16.mxu0 %v1106
      %2188 = vmatmul.mubr.bf16.gmra.mxu0 %v1105
      %v2189 = vpop.f32.mrf.mxu0
      %v2190 = vadd.f32 %v2093, %v2189
      %v2191 = vpop.f32.mrf.mxu0
      %v2192 = vpop.f32.mrf.mxu0
      %v2193 = vadd.f32 %v2096, %v2192
      %v2194 = vpop.f32.mrf.mxu0
      %2195 = vmatprep.mubr.bf16.mxu0 %v1120
      %2196 = vmatmul.mubr.bf16.gmra.mxu0 %v1119
      %v2197 = vpop.f32.mrf.mxu0
      %v2198 = vadd.f32 %v2101, %v2197
      %v2199 = vpop.f32.mrf.mxu0
      %v2200 = vpop.f32.mrf.mxu0
      %v2201 = vadd.f32 %v2104, %v2200
      %v2202 = vpop.f32.mrf.mxu0
      %2203 = vdwg.mxu0
      %2204 = vmatprep.subr.bf16.mxu0 0
      %2205 = vmatpush1.bf16.msra.mxu0 %v1744
      %2206 = vmatprep.subr.bf16.mxu0 0
      %2207 = vmatpush1.bf16.msra.mxu0 %v1743
      %2208 = vmatprep.subr.bf16.mxu0 0
      %2209 = vmatpush1.bf16.msra.mxu0 %v1742
      %2210 = vmatprep.subr.bf16.mxu0 0
      %2211 = vmatpush1.bf16.msra.mxu0 %v1741
      %2212 = vmatprep.subr.bf16.mxu0 0
      %2213 = vmatpush1.bf16.msra.mxu0 %v1740
      %2214 = vmatprep.subr.bf16.mxu0 0
      %2215 = vmatpush1.bf16.msra.mxu0 %v1739
      %2216 = vmatprep.subr.bf16.mxu0 0
      %2217 = vmatpush1.bf16.msra.mxu0 %v1738
      %2218 = vmatprep.subr.bf16.mxu0 0
      %2219 = vmatpush1.bf16.msra.mxu0 %v1737
      %2220 = vmatprep.subr.bf16.mxu0 0
      %2221 = vmatpush2.bf16.msra.mxu0 %v1752
      %2222 = vmatprep.subr.bf16.mxu0 0
      %2223 = vmatpush2.bf16.msra.mxu0 %v1751
      %2224 = vmatprep.subr.bf16.mxu0 0
      %2225 = vmatpush2.bf16.msra.mxu0 %v1750
      %2226 = vmatprep.subr.bf16.mxu0 0
      %2227 = vmatpush2.bf16.msra.mxu0 %v1749
      %2228 = vmatprep.subr.bf16.mxu0 0
      %2229 = vmatpush2.bf16.msra.mxu0 %v1748
      %2230 = vmatprep.subr.bf16.mxu0 0
      %2231 = vmatpush2.bf16.msra.mxu0 %v1747
      %2232 = vmatprep.subr.bf16.mxu0 0
      %2233 = vmatpush2.bf16.msra.mxu0 %v1746
      %2234 = vmatprep.subr.bf16.mxu0 0
      %2235 = vmatpush2.bf16.msra.mxu0 %v1745
      %2236 = vmatprep.mubr.bf16.mxu0 %v1024
      %2237 = vmatmul.mubr.bf16.gmra.mxu0 %v1023
      %v2238 = vpop.f32.mrf.mxu0
      %v2239 = vadd.f32 %v2142, %v2238
      %v2240 = vpop.f32.mrf.mxu0
      %v2241 = vpop.f32.mrf.mxu0
      %v2242 = vadd.f32 %v2145, %v2241
      %v2243 = vpop.f32.mrf.mxu0
      %2244 = vmatprep.mubr.bf16.mxu0 %v1038
      %2245 = vmatmul.mubr.bf16.gmra.mxu0 %v1037
      %v2246 = vpop.f32.mrf.mxu0
      %v2247 = vadd.f32 %v2150, %v2246
      %v2248 = vpop.f32.mrf.mxu0
      %v2249 = vpop.f32.mrf.mxu0
      %v2250 = vadd.f32 %v2153, %v2249
      %v2251 = vpop.f32.mrf.mxu0
      %2252 = vmatprep.mubr.bf16.mxu0 %v1052
      %2253 = vmatmul.mubr.bf16.gmra.mxu0 %v1051
      %v2254 = vpop.f32.mrf.mxu0
      %v2255 = vadd.f32 %v2158, %v2254
      %v2256 = vpop.f32.mrf.mxu0
      %v2257 = vpop.f32.mrf.mxu0
      %v2258 = vadd.f32 %v2161, %v2257
      %v2259 = vpop.f32.mrf.mxu0
      %2260 = vmatprep.mubr.bf16.mxu0 %v1066
      %2261 = vmatmul.mubr.bf16.gmra.mxu0 %v1065
      %v2262 = vpop.f32.mrf.mxu0
      %v2263 = vadd.f32 %v2166, %v2262
      %v2264 = vpop.f32.mrf.mxu0
      %v2265 = vpop.f32.mrf.mxu0
      %v2266 = vadd.f32 %v2169, %v2265
      %v2267 = vpop.f32.mrf.mxu0
      %2268 = vmatprep.mubr.bf16.mxu0 %v1080
      %2269 = vmatmul.mubr.bf16.gmra.mxu0 %v1079
      %v2270 = vpop.f32.mrf.mxu0
      %v2271 = vadd.f32 %v2174, %v2270
      %v2272 = vpop.f32.mrf.mxu0
      %v2273 = vpop.f32.mrf.mxu0
      %v2274 = vadd.f32 %v2177, %v2273
      %v2275 = vpop.f32.mrf.mxu0
      %2276 = vmatprep.mubr.bf16.mxu0 %v1094
      %2277 = vmatmul.mubr.bf16.gmra.mxu0 %v1093
      %v2278 = vpop.f32.mrf.mxu0
      %v2279 = vadd.f32 %v2182, %v2278
      %v2280 = vpop.f32.mrf.mxu0
      %v2281 = vpop.f32.mrf.mxu0
      %v2282 = vadd.f32 %v2185, %v2281
      %v2283 = vpop.f32.mrf.mxu0
      %2284 = vmatprep.mubr.bf16.mxu0 %v1108
      %2285 = vmatmul.mubr.bf16.gmra.mxu0 %v1107
      %v2286 = vpop.f32.mrf.mxu0
      %v2287 = vadd.f32 %v2190, %v2286
      %v2288 = vpop.f32.mrf.mxu0
      %v2289 = vpop.f32.mrf.mxu0
      %v2290 = vadd.f32 %v2193, %v2289
      %v2291 = vpop.f32.mrf.mxu0
      %2292 = vmatprep.mubr.bf16.mxu0 %v1122
      %2293 = vmatmul.mubr.bf16.gmra.mxu0 %v1121
      %v2294 = vpop.f32.mrf.mxu0
      %v2295 = vadd.f32 %v2198, %v2294
      %v2296 = vpop.f32.mrf.mxu0
      %v2297 = vpop.f32.mrf.mxu0
      %v2298 = vadd.f32 %v2201, %v2297
      %v2299 = vpop.f32.mrf.mxu0
      %2300 = vdwg.mxu0
      %2301 = vmatprep.subr.bf16.mxu0 0
      %2302 = vmatpush1.bf16.msra.mxu0 %v1760
      %2303 = vmatprep.subr.bf16.mxu0 0
      %2304 = vmatpush1.bf16.msra.mxu0 %v1759
      %2305 = vmatprep.subr.bf16.mxu0 0
      %2306 = vmatpush1.bf16.msra.mxu0 %v1758
      %2307 = vmatprep.subr.bf16.mxu0 0
      %2308 = vmatpush1.bf16.msra.mxu0 %v1757
      %2309 = vmatprep.subr.bf16.mxu0 0
      %2310 = vmatpush1.bf16.msra.mxu0 %v1756
      %2311 = vmatprep.subr.bf16.mxu0 0
      %2312 = vmatpush1.bf16.msra.mxu0 %v1755
      %2313 = vmatprep.subr.bf16.mxu0 0
      %2314 = vmatpush1.bf16.msra.mxu0 %v1754
      %2315 = vmatprep.subr.bf16.mxu0 0
      %2316 = vmatpush1.bf16.msra.mxu0 %v1753
      %2317 = vmatprep.subr.bf16.mxu0 0
      %2318 = vmatpush2.bf16.msra.mxu0 %v1768
      %2319 = vmatprep.subr.bf16.mxu0 0
      %2320 = vmatpush2.bf16.msra.mxu0 %v1767
      %2321 = vmatprep.subr.bf16.mxu0 0
      %2322 = vmatpush2.bf16.msra.mxu0 %v1766
      %2323 = vmatprep.subr.bf16.mxu0 0
      %2324 = vmatpush2.bf16.msra.mxu0 %v1765
      %2325 = vmatprep.subr.bf16.mxu0 0
      %2326 = vmatpush2.bf16.msra.mxu0 %v1764
      %2327 = vmatprep.subr.bf16.mxu0 0
      %2328 = vmatpush2.bf16.msra.mxu0 %v1763
      %2329 = vmatprep.subr.bf16.mxu0 0
      %2330 = vmatpush2.bf16.msra.mxu0 %v1762
      %2331 = vmatprep.subr.bf16.mxu0 0
      %2332 = vmatpush2.bf16.msra.mxu0 %v1761
      %2333 = vmatprep.mubr.bf16.mxu0 %v1026
      %2334 = vmatmul.mubr.bf16.gmra.mxu0 %v1025
      %v2335 = vpop.f32.mrf.mxu0
      %v2336 = vadd.f32 %v2239, %v2335
      %v2337 = vpop.f32.mrf.mxu0
      %v2338 = vpop.f32.mrf.mxu0
      %v2339 = vadd.f32 %v2242, %v2338
      %v2340 = vpop.f32.mrf.mxu0
      %2341 = vmatprep.mubr.bf16.mxu0 %v1040
      %2342 = vmatmul.mubr.bf16.gmra.mxu0 %v1039
      %v2343 = vpop.f32.mrf.mxu0
      %v2344 = vadd.f32 %v2247, %v2343
      %v2345 = vpop.f32.mrf.mxu0
      %v2346 = vpop.f32.mrf.mxu0
      %v2347 = vadd.f32 %v2250, %v2346
      %v2348 = vpop.f32.mrf.mxu0
      %2349 = vmatprep.mubr.bf16.mxu0 %v1054
      %2350 = vmatmul.mubr.bf16.gmra.mxu0 %v1053
      %v2351 = vpop.f32.mrf.mxu0
      %v2352 = vadd.f32 %v2255, %v2351
      %v2353 = vpop.f32.mrf.mxu0
      %v2354 = vpop.f32.mrf.mxu0
      %v2355 = vadd.f32 %v2258, %v2354
      %v2356 = vpop.f32.mrf.mxu0
      %2357 = vmatprep.mubr.bf16.mxu0 %v1068
      %2358 = vmatmul.mubr.bf16.gmra.mxu0 %v1067
      %v2359 = vpop.f32.mrf.mxu0
      %v2360 = vadd.f32 %v2263, %v2359
      %v2361 = vpop.f32.mrf.mxu0
      %v2362 = vpop.f32.mrf.mxu0
      %v2363 = vadd.f32 %v2266, %v2362
      %v2364 = vpop.f32.mrf.mxu0
      %2365 = vmatprep.mubr.bf16.mxu0 %v1082
      %2366 = vmatmul.mubr.bf16.gmra.mxu0 %v1081
      %v2367 = vpop.f32.mrf.mxu0
      %v2368 = vadd.f32 %v2271, %v2367
      %v2369 = vpop.f32.mrf.mxu0
      %v2370 = vpop.f32.mrf.mxu0
      %v2371 = vadd.f32 %v2274, %v2370
      %v2372 = vpop.f32.mrf.mxu0
      %2373 = vmatprep.mubr.bf16.mxu0 %v1096
      %2374 = vmatmul.mubr.bf16.gmra.mxu0 %v1095
      %v2375 = vpop.f32.mrf.mxu0
      %v2376 = vadd.f32 %v2279, %v2375
      %v2377 = vpop.f32.mrf.mxu0
      %v2378 = vpop.f32.mrf.mxu0
      %v2379 = vadd.f32 %v2282, %v2378
      %v2380 = vpop.f32.mrf.mxu0
      %2381 = vmatprep.mubr.bf16.mxu0 %v1110
      %2382 = vmatmul.mubr.bf16.gmra.mxu0 %v1109
      %v2383 = vpop.f32.mrf.mxu0
      %v2384 = vadd.f32 %v2287, %v2383
      %v2385 = vpop.f32.mrf.mxu0
      %v2386 = vpop.f32.mrf.mxu0
      %v2387 = vadd.f32 %v2290, %v2386
      %v2388 = vpop.f32.mrf.mxu0
      %2389 = vmatprep.mubr.bf16.mxu0 %v1124
      %2390 = vmatmul.mubr.bf16.gmra.mxu0 %v1123
      %v2391 = vpop.f32.mrf.mxu0
      %v2392 = vadd.f32 %v2295, %v2391
      %v2393 = vpop.f32.mrf.mxu0
      %v2394 = vpop.f32.mrf.mxu0
      %v2395 = vadd.f32 %v2298, %v2394
      %v2396 = vpop.f32.mrf.mxu0
      %2397 = vdwg.mxu0
      %2398 = vmatprep.subr.bf16.mxu0 0
      %2399 = vmatpush1.bf16.msra.mxu0 %v1776
      %2400 = vmatprep.subr.bf16.mxu0 0
      %2401 = vmatpush1.bf16.msra.mxu0 %v1775
      %2402 = vmatprep.subr.bf16.mxu0 0
      %2403 = vmatpush1.bf16.msra.mxu0 %v1774
      %2404 = vmatprep.subr.bf16.mxu0 0
      %2405 = vmatpush1.bf16.msra.mxu0 %v1773
      %2406 = vmatprep.subr.bf16.mxu0 0
      %2407 = vmatpush1.bf16.msra.mxu0 %v1772
      %2408 = vmatprep.subr.bf16.mxu0 0
      %2409 = vmatpush1.bf16.msra.mxu0 %v1771
      %2410 = vmatprep.subr.bf16.mxu0 0
      %2411 = vmatpush1.bf16.msra.mxu0 %v1770
      %2412 = vmatprep.subr.bf16.mxu0 0
      %2413 = vmatpush1.bf16.msra.mxu0 %v1769
      %2414 = vmatprep.subr.bf16.mxu0 0
      %2415 = vmatpush2.bf16.msra.mxu0 %v1784
      %2416 = vmatprep.subr.bf16.mxu0 0
      %2417 = vmatpush2.bf16.msra.mxu0 %v1783
      %2418 = vmatprep.subr.bf16.mxu0 0
      %2419 = vmatpush2.bf16.msra.mxu0 %v1782
      %2420 = vmatprep.subr.bf16.mxu0 0
      %2421 = vmatpush2.bf16.msra.mxu0 %v1781
      %2422 = vmatprep.subr.bf16.mxu0 0
      %2423 = vmatpush2.bf16.msra.mxu0 %v1780
      %2424 = vmatprep.subr.bf16.mxu0 0
      %2425 = vmatpush2.bf16.msra.mxu0 %v1779
      %2426 = vmatprep.subr.bf16.mxu0 0
      %2427 = vmatpush2.bf16.msra.mxu0 %v1778
      %2428 = vmatprep.subr.bf16.mxu0 0
      %2429 = vmatpush2.bf16.msra.mxu0 %v1777
      %2430 = vmatprep.mubr.bf16.mxu0 %v1028
      %2431 = vmatmul.mubr.bf16.gmra.mxu0 %v1027
      %v2432 = vpop.f32.mrf.mxu0
      %v2433 = vadd.f32 %v2336, %v2432
      %v2434 = vpop.f32.mrf.mxu0
      %v2435 = vpop.f32.mrf.mxu0
      %v2436 = vadd.f32 %v2339, %v2435
      %v2437 = vpop.f32.mrf.mxu0
      %2438 = vmatprep.mubr.bf16.mxu0 %v1042
      %2439 = vmatmul.mubr.bf16.gmra.mxu0 %v1041
      %v2440 = vpop.f32.mrf.mxu0
      %v2441 = vadd.f32 %v2344, %v2440
      %v2442 = vpop.f32.mrf.mxu0
      %v2443 = vpop.f32.mrf.mxu0
      %v2444 = vadd.f32 %v2347, %v2443
      %v2445 = vpop.f32.mrf.mxu0
      %2446 = vmatprep.mubr.bf16.mxu0 %v1056
      %2447 = vmatmul.mubr.bf16.gmra.mxu0 %v1055
      %v2448 = vpop.f32.mrf.mxu0
      %v2449 = vadd.f32 %v2352, %v2448
      %v2450 = vpop.f32.mrf.mxu0
      %v2451 = vpop.f32.mrf.mxu0
      %v2452 = vadd.f32 %v2355, %v2451
      %v2453 = vpop.f32.mrf.mxu0
      %2454 = vmatprep.mubr.bf16.mxu0 %v1070
      %2455 = vmatmul.mubr.bf16.gmra.mxu0 %v1069
      %v2456 = vpop.f32.mrf.mxu0
      %v2457 = vadd.f32 %v2360, %v2456
      %v2458 = vpop.f32.mrf.mxu0
      %v2459 = vpop.f32.mrf.mxu0
      %v2460 = vadd.f32 %v2363, %v2459
      %v2461 = vpop.f32.mrf.mxu0
      %2462 = vmatprep.mubr.bf16.mxu0 %v1084
      %2463 = vmatmul.mubr.bf16.gmra.mxu0 %v1083
      %v2464 = vpop.f32.mrf.mxu0
      %v2465 = vadd.f32 %v2368, %v2464
      %v2466 = vpop.f32.mrf.mxu0
      %v2467 = vpop.f32.mrf.mxu0
      %v2468 = vadd.f32 %v2371, %v2467
      %v2469 = vpop.f32.mrf.mxu0
      %2470 = vmatprep.mubr.bf16.mxu0 %v1098
      %2471 = vmatmul.mubr.bf16.gmra.mxu0 %v1097
      %v2472 = vpop.f32.mrf.mxu0
      %v2473 = vadd.f32 %v2376, %v2472
      %v2474 = vpop.f32.mrf.mxu0
      %v2475 = vpop.f32.mrf.mxu0
      %v2476 = vadd.f32 %v2379, %v2475
      %v2477 = vpop.f32.mrf.mxu0
      %2478 = vmatprep.mubr.bf16.mxu0 %v1112
      %2479 = vmatmul.mubr.bf16.gmra.mxu0 %v1111
      %v2480 = vpop.f32.mrf.mxu0
      %v2481 = vadd.f32 %v2384, %v2480
      %v2482 = vpop.f32.mrf.mxu0
      %v2483 = vpop.f32.mrf.mxu0
      %v2484 = vadd.f32 %v2387, %v2483
      %v2485 = vpop.f32.mrf.mxu0
      %2486 = vmatprep.mubr.bf16.mxu0 %v1126
      %2487 = vmatmul.mubr.bf16.gmra.mxu0 %v1125
      %v2488 = vpop.f32.mrf.mxu0
      %v2489 = vadd.f32 %v2392, %v2488
      %v2490 = vpop.f32.mrf.mxu0
      %v2491 = vpop.f32.mrf.mxu0
      %v2492 = vadd.f32 %v2395, %v2491
      %v2493 = vpop.f32.mrf.mxu0
      %2494 = vdwg.mxu0
      %2495 = vmatprep.subr.bf16.mxu0 0
      %2496 = vmatpush1.bf16.msra.mxu0 %v1792
      %2497 = vmatprep.subr.bf16.mxu0 0
      %2498 = vmatpush1.bf16.msra.mxu0 %v1791
      %2499 = vmatprep.subr.bf16.mxu0 0
      %2500 = vmatpush1.bf16.msra.mxu0 %v1790
      %2501 = vmatprep.subr.bf16.mxu0 0
      %2502 = vmatpush1.bf16.msra.mxu0 %v1789
      %2503 = vmatprep.subr.bf16.mxu0 0
      %2504 = vmatpush1.bf16.msra.mxu0 %v1788
      %2505 = vmatprep.subr.bf16.mxu0 0
      %2506 = vmatpush1.bf16.msra.mxu0 %v1787
      %2507 = vmatprep.subr.bf16.mxu0 0
      %2508 = vmatpush1.bf16.msra.mxu0 %v1786
      %2509 = vmatprep.subr.bf16.mxu0 0
      %2510 = vmatpush1.bf16.msra.mxu0 %v1785
      %2511 = vmatprep.subr.bf16.mxu0 0
      %2512 = vmatpush2.bf16.msra.mxu0 %v1800
      %2513 = vmatprep.subr.bf16.mxu0 0
      %2514 = vmatpush2.bf16.msra.mxu0 %v1799
      %2515 = vmatprep.subr.bf16.mxu0 0
      %2516 = vmatpush2.bf16.msra.mxu0 %v1798
      %2517 = vmatprep.subr.bf16.mxu0 0
      %2518 = vmatpush2.bf16.msra.mxu0 %v1797
      %2519 = vmatprep.subr.bf16.mxu0 0
      %2520 = vmatpush2.bf16.msra.mxu0 %v1796
      %2521 = vmatprep.subr.bf16.mxu0 0
      %2522 = vmatpush2.bf16.msra.mxu0 %v1795
      %2523 = vmatprep.subr.bf16.mxu0 0
      %2524 = vmatpush2.bf16.msra.mxu0 %v1794
      %2525 = vmatprep.subr.bf16.mxu0 0
      %2526 = vmatpush2.bf16.msra.mxu0 %v1793
      %2527 = vmatprep.mubr.bf16.mxu0 %v1030
      %2528 = vmatmul.mubr.bf16.gmra.mxu0 %v1029
      %v2529 = vpop.f32.mrf.mxu0
      %v2530 = vadd.f32 %v2433, %v2529
      %v2531 = vpop.f32.mrf.mxu0
      %v2532 = vpop.f32.mrf.mxu0
      %v2533 = vadd.f32 %v2436, %v2532
      %v2534 = vpop.f32.mrf.mxu0
      %2535 = vmatprep.mubr.bf16.mxu0 %v1044
      %2536 = vmatmul.mubr.bf16.gmra.mxu0 %v1043
      %v2537 = vpop.f32.mrf.mxu0
      %v2538 = vadd.f32 %v2441, %v2537
      %v2539 = vpop.f32.mrf.mxu0
      %v2540 = vpop.f32.mrf.mxu0
      %v2541 = vadd.f32 %v2444, %v2540
      %v2542 = vpop.f32.mrf.mxu0
      %2543 = vmatprep.mubr.bf16.mxu0 %v1058
      %2544 = vmatmul.mubr.bf16.gmra.mxu0 %v1057
      %v2545 = vpop.f32.mrf.mxu0
      %v2546 = vadd.f32 %v2449, %v2545
      %v2547 = vpop.f32.mrf.mxu0
      %v2548 = vpop.f32.mrf.mxu0
      %v2549 = vadd.f32 %v2452, %v2548
      %v2550 = vpop.f32.mrf.mxu0
      %2551 = vmatprep.mubr.bf16.mxu0 %v1072
      %2552 = vmatmul.mubr.bf16.gmra.mxu0 %v1071
      %v2553 = vpop.f32.mrf.mxu0
      %v2554 = vadd.f32 %v2457, %v2553
      %v2555 = vpop.f32.mrf.mxu0
      %v2556 = vpop.f32.mrf.mxu0
      %v2557 = vadd.f32 %v2460, %v2556
      %v2558 = vpop.f32.mrf.mxu0
      %2559 = vmatprep.mubr.bf16.mxu0 %v1086
      %2560 = vmatmul.mubr.bf16.gmra.mxu0 %v1085
      %v2561 = vpop.f32.mrf.mxu0
      %v2562 = vadd.f32 %v2465, %v2561
      %v2563 = vpop.f32.mrf.mxu0
      %v2564 = vpop.f32.mrf.mxu0
      %v2565 = vadd.f32 %v2468, %v2564
      %v2566 = vpop.f32.mrf.mxu0
      %2567 = vmatprep.mubr.bf16.mxu0 %v1100
      %2568 = vmatmul.mubr.bf16.gmra.mxu0 %v1099
      %v2569 = vpop.f32.mrf.mxu0
      %v2570 = vadd.f32 %v2473, %v2569
      %v2571 = vpop.f32.mrf.mxu0
      %v2572 = vpop.f32.mrf.mxu0
      %v2573 = vadd.f32 %v2476, %v2572
      %v2574 = vpop.f32.mrf.mxu0
      %2575 = vmatprep.mubr.bf16.mxu0 %v1114
      %2576 = vmatmul.mubr.bf16.gmra.mxu0 %v1113
      %v2577 = vpop.f32.mrf.mxu0
      %v2578 = vadd.f32 %v2481, %v2577
      %v2579 = vpop.f32.mrf.mxu0
      %v2580 = vpop.f32.mrf.mxu0
      %v2581 = vadd.f32 %v2484, %v2580
      %v2582 = vpop.f32.mrf.mxu0
      %2583 = vmatprep.mubr.bf16.mxu0 %v1128
      %2584 = vmatmul.mubr.bf16.gmra.mxu0 %v1127
      %v2585 = vpop.f32.mrf.mxu0
      %v2586 = vadd.f32 %v2489, %v2585
      %v2587 = vpop.f32.mrf.mxu0
      %v2588 = vpop.f32.mrf.mxu0
      %v2589 = vadd.f32 %v2492, %v2588
      %v2590 = vpop.f32.mrf.mxu0
      %2591 = vdwg.mxu0
      %v2592 = vadd.f32 %v329, %v2530
      %v2593 = vadd.f32 %v330, %v2533
      %v2594 = vadd.f32 %v331, %v2538
      %v2595 = vadd.f32 %v332, %v2541
      %v2596 = vadd.f32 %v333, %v2546
      %v2597 = vadd.f32 %v334, %v2549
      %v2598 = vadd.f32 %v335, %v2554
      %v2599 = vadd.f32 %v336, %v2557
      %v2600 = vadd.f32 %v337, %v2562
      %v2601 = vadd.f32 %v338, %v2565
      %v2602 = vadd.f32 %v339, %v2570
      %v2603 = vadd.f32 %v340, %v2573
      %v2604 = vadd.f32 %v341, %v2578
      %v2605 = vadd.f32 %v342, %v2581
      %v2606 = vadd.f32 %v343, %v2586
      %v2607 = vadd.f32 %v344, %v2589
      %2608 = vst [vmem:[#allocation2] sm:$0xff] %v2592
      %2609 = vst [vmem:[#allocation2 + $0x8] sm:$0xff] %v2593
      %2610 = vst [vmem:[#allocation2 + $0x10] sm:$0xff] %v2594
      %2611 = vst [vmem:[#allocation2 + $0x18] sm:$0xff] %v2595
      %2612 = vst [vmem:[#allocation2 + $0x20] sm:$0xff] %v2596
      %2613 = vst [vmem:[#allocation2 + $0x28] sm:$0xff] %v2597
      %2614 = vst [vmem:[#allocation2 + $0x30] sm:$0xff] %v2598
      %2615 = vst [vmem:[#allocation2 + $0x38] sm:$0xff] %v2599
      %2616 = vst [vmem:[#allocation2 + $0x40] sm:$0xff] %v2600
      %2617 = vst [vmem:[#allocation2 + $0x48] sm:$0xff] %v2601
      %2618 = vst [vmem:[#allocation2 + $0x50] sm:$0xff] %v2602
      %2619 = vst [vmem:[#allocation2 + $0x58] sm:$0xff] %v2603
      %2620 = vst [vmem:[#allocation2 + $0x60] sm:$0xff] %v2604
      %2621 = vst [vmem:[#allocation2 + $0x68] sm:$0xff] %v2605
      %2622 = vst [vmem:[#allocation2 + $0x70] sm:$0xff] %v2606
      %2623 = vst [vmem:[#allocation2 + $0x78] sm:$0xff] %v2607
      // Predicated region
      $region41: #{resnet_encoder3d_forward.12} parent=35 // pred_check
        %p2624 = pneg %p309
      $region42: #{resnet_encoder3d_forward.12} parent=35 // pred_check_branch
        %2626 = sbr.rel (%p2624) target = $region44
      $region43: #{resnet_encoder3d_forward.12} parent=35 // pred_region
        %v2627 = vld [vmem:[#allocation2] sm:$0xff]
        %v2628 = vld [vmem:[#allocation2 + $0x8] sm:$0xff]
        %v2629 = vld [vmem:[#allocation2 + $0x10] sm:$0xff]
        %v2630 = vld [vmem:[#allocation2 + $0x18] sm:$0xff]
        %v2631 = vld [vmem:[#allocation2 + $0x20] sm:$0xff]
        %v2632 = vld [vmem:[#allocation2 + $0x28] sm:$0xff]
        %v2633 = vld [vmem:[#allocation2 + $0x30] sm:$0xff]
        %v2634 = vld [vmem:[#allocation2 + $0x38] sm:$0xff]
        %v2635 = vld [vmem:[#allocation2 + $0x40] sm:$0xff]
        %v2636 = vld [vmem:[#allocation2 + $0x48] sm:$0xff]
        %v2637 = vld [vmem:[#allocation2 + $0x50] sm:$0xff]
        %v2638 = vld [vmem:[#allocation2 + $0x58] sm:$0xff]
        %v2639 = vld [vmem:[#allocation2 + $0x60] sm:$0xff]
        %v2640 = vld [vmem:[#allocation2 + $0x68] sm:$0xff]
        %v2641 = vld [vmem:[#allocation2 + $0x70] sm:$0xff]
        %v2642 = vld [vmem:[#allocation2 + $0x78] sm:$0xff]
        %v2643 = vld [vmem:[%s295] sm:$0x1]
        %v2645 = vlaneseq
        %v2646 = vshrl.u32 %v2645, 7
        %v2647 = vsub.s32 0, %v2646
        %v2648 = vrot.slane %v2643, %v2647
        %v2650 = vmul.f32 %v2627, %v2648
        %v2651 = vmul.f32 %v2628, %v2648
        %v2652 = vmul.f32 %v2629, %v2648
        %v2653 = vmul.f32 %v2630, %v2648
        %v2654 = vmul.f32 %v2631, %v2648
        %v2655 = vmul.f32 %v2632, %v2648
        %v2656 = vmul.f32 %v2633, %v2648
        %v2657 = vmul.f32 %v2634, %v2648
        %v2658 = vmul.f32 %v2635, %v2648
        %v2659 = vmul.f32 %v2636, %v2648
        %v2660 = vmul.f32 %v2637, %v2648
        %v2661 = vmul.f32 %v2638, %v2648
        %v2662 = vmul.f32 %v2639, %v2648
        %v2663 = vmul.f32 %v2640, %v2648
        %v2664 = vmul.f32 %v2641, %v2648
        %v2665 = vmul.f32 %v2642, %v2648
        %v2666 = vld [vmem:[%s298] sm:$0x1]
        %v2668 = vlaneseq
        %v2669 = vshrl.u32 %v2668, 7
        %v2670 = vsub.s32 0, %v2669
        %v2671 = vrot.slane %v2666, %v2670
        %v2673 = vadd.f32 %v2650, %v2671
        %v2674 = vadd.f32 %v2651, %v2671
        %v2675 = vadd.f32 %v2652, %v2671
        %v2676 = vadd.f32 %v2653, %v2671
        %v2677 = vadd.f32 %v2654, %v2671
        %v2678 = vadd.f32 %v2655, %v2671
        %v2679 = vadd.f32 %v2656, %v2671
        %v2680 = vadd.f32 %v2657, %v2671
        %v2681 = vadd.f32 %v2658, %v2671
        %v2682 = vadd.f32 %v2659, %v2671
        %v2683 = vadd.f32 %v2660, %v2671
        %v2684 = vadd.f32 %v2661, %v2671
        %v2685 = vadd.f32 %v2662, %v2671
        %v2686 = vadd.f32 %v2663, %v2671
        %v2687 = vadd.f32 %v2664, %v2671
        %v2688 = vadd.f32 %v2665, %v2671
        %v2689 = vmax.f32 %v2673, 0.0
        %v2690 = vmax.f32 %v2674, 0.0
        %v2691 = vmax.f32 %v2675, 0.0
        %v2692 = vmax.f32 %v2676, 0.0
        %v2693 = vmax.f32 %v2677, 0.0
        %v2694 = vmax.f32 %v2678, 0.0
        %v2695 = vmax.f32 %v2679, 0.0
        %v2696 = vmax.f32 %v2680, 0.0
        %v2697 = vmax.f32 %v2681, 0.0
        %v2698 = vmax.f32 %v2682, 0.0
        %v2699 = vmax.f32 %v2683, 0.0
        %v2700 = vmax.f32 %v2684, 0.0
        %v2701 = vmax.f32 %v2685, 0.0
        %v2702 = vmax.f32 %v2686, 0.0
        %v2703 = vmax.f32 %v2687, 0.0
        %v2704 = vmax.f32 %v2688, 0.0
        %v2705 = vpack.c.bf16 %v2690, %v2689
        %v2706 = vpack.c.bf16 %v2692, %v2691
        %v2707 = vpack.c.bf16 %v2694, %v2693
        %v2708 = vpack.c.bf16 %v2696, %v2695
        %v2709 = vpack.c.bf16 %v2698, %v2697
        %v2710 = vpack.c.bf16 %v2700, %v2699
        %v2711 = vpack.c.bf16 %v2702, %v2701
        %v2712 = vpack.c.bf16 %v2704, %v2703
        %v2721 = vunpack.c.l.b16 %v2705
        %v2722 = vunpack.c.h.b16 %v2705
        %v2723 = vunpack.c.l.b16 %v2706
        %v2724 = vunpack.c.h.b16 %v2706
        %v2725 = vunpack.c.l.b16 %v2707
        %v2726 = vunpack.c.h.b16 %v2707
        %v2727 = vunpack.c.l.b16 %v2708
        %v2728 = vunpack.c.h.b16 %v2708
        %v2729 = vunpack.c.l.b16 %v2709
        %v2730 = vunpack.c.h.b16 %v2709
        %v2731 = vunpack.c.l.b16 %v2710
        %v2732 = vunpack.c.h.b16 %v2710
        %v2733 = vunpack.c.l.b16 %v2711
        %v2734 = vunpack.c.h.b16 %v2711
        %v2735 = vunpack.c.l.b16 %v2712
        %v2736 = vunpack.c.h.b16 %v2712
        %v2737 = vpack.c.b16 %v2721, %v2721
        %v2738 = vpack.c.b16 %v2722, %v2722
        %v2739 = vpack.c.b16 %v2723, %v2723
        %v2740 = vpack.c.b16 %v2724, %v2724
        %v2741 = vpack.c.b16 %v2725, %v2725
        %v2742 = vpack.c.b16 %v2726, %v2726
        %v2743 = vpack.c.b16 %v2727, %v2727
        %v2744 = vpack.c.b16 %v2728, %v2728
        %v2745 = vpack.c.b16 %v2729, %v2729
        %v2746 = vpack.c.b16 %v2730, %v2730
        %v2747 = vpack.c.b16 %v2731, %v2731
        %v2748 = vpack.c.b16 %v2732, %v2732
        %v2749 = vpack.c.b16 %v2733, %v2733
        %v2750 = vpack.c.b16 %v2734, %v2734
        %v2751 = vpack.c.b16 %v2735, %v2735
        %v2752 = vpack.c.b16 %v2736, %v2736
        %2769 = vst [vmem:[%s306] sm:$0xf] %v2737
        %2770 = vst [vmem:[%s306 + $0x4] sm:$0xf] %v2738
        %2771 = vst [vmem:[%s306 + $0x8] sm:$0xf] %v2739
        %2772 = vst [vmem:[%s306 + $0xc] sm:$0xf] %v2740
        %2773 = vst [vmem:[%s306 + $0x10] sm:$0xf] %v2741
        %2774 = vst [vmem:[%s306 + $0x14] sm:$0xf] %v2742
        %2775 = vst [vmem:[%s306 + $0x18] sm:$0xf] %v2743
        %2776 = vst [vmem:[%s306 + $0x1c] sm:$0xf] %v2744
        %2777 = vst [vmem:[%s306 + $0x20] sm:$0xf] %v2745
        %2778 = vst [vmem:[%s306 + $0x24] sm:$0xf] %v2746
        %2779 = vst [vmem:[%s306 + $0x28] sm:$0xf] %v2747
        %2780 = vst [vmem:[%s306 + $0x2c] sm:$0xf] %v2748
        %2781 = vst [vmem:[%s306 + $0x30] sm:$0xf] %v2749
        %2782 = vst [vmem:[%s306 + $0x34] sm:$0xf] %v2750
        %2783 = vst [vmem:[%s306 + $0x38] sm:$0xf] %v2751
        %2784 = vst [vmem:[%s306 + $0x3c] sm:$0xf] %v2752
      $region44: #{resnet_encoder3d_forward.12} parent=35 // pred_fallthru
        _
      %s2785 = smul.u32 16, %s20
      %p2786 = scmp.lt.s32.totalorder %s2785, 31
      %s2787 = scalar_select %p2786, %s2785, 31
      %p2788 = scmp.lt.s32.totalorder %s21, 0
      %s2789 = scalar_select %p2788, %s21, 0
      %s2790 = sadd.s32 %s2789, %s2787
      %s2791 = smul.addr %s2790, 4
      %s2792 = scalar_lea.vmem %s4, %s2791
      // Predicated region
      $region45: #{resnet_encoder3d_forward.12} parent=35 // pred_check
        %p2793 = pneg %p162
      $region46: #{resnet_encoder3d_forward.12} parent=35 // pred_check_branch
        %2795 = sbr.rel (%p2793) target = $region48
      $region47: #{resnet_encoder3d_forward.12} parent=35 // pred_region
        %s2796 = smul.u32 16, %s20
      $region48: #{resnet_encoder3d_forward.12} parent=35 // pred_fallthru
        _
    $region36: #{resnet_encoder3d_forward.12} parent=5 // pred_fallthru
      _
    %p2797 = scmp.le.s32.totalorder 2, %s10
    // Predicated region
    $region49: #{resnet_encoder3d_forward.12} parent=5 // pred_check
      %p2798 = pneg %p2797
    $region50: #{resnet_encoder3d_forward.12} parent=5 // pred_check_branch
      %2800 = sbr.rel (%p2798) target = $region52
    $region51: #{resnet_encoder3d_forward.12} parent=5 // pred_region
      %s2801 = ssub.s32 %s10, 2
      // Predicated region
      $region53: #{resnet_encoder3d_forward.12} parent=51 // pred_check
        %p2802 = pneg %p168
      $region54: #{resnet_encoder3d_forward.12} parent=51 // pred_check_branch
        %2804 = sbr.rel (%p2802) target = $region56
      $region55: #{resnet_encoder3d_forward.12} parent=51 // pred_region
        %s2805 = smul.u32 16, %s23
        %p2806 = scmp.lt.s32.totalorder %s2805, 31
        %s2807 = scalar_select %p2806, %s2805, 31
        %p2808 = scmp.lt.s32.totalorder %s24, 0
        %s2809 = scalar_select %p2808, %s24, 0
        %s2810 = sadd.s32 %s2809, %s2807
        %s2811 = smul.addr %s2810, 4
        %s2812 = scalar_lea.vmem %s4, %s2811
      $region56: #{resnet_encoder3d_forward.12} parent=51 // pred_fallthru
        _
    $region52: #{resnet_encoder3d_forward.12} parent=5 // pred_fallthru
      _
  $region6: #{resnet_encoder3d_forward.12} parent=0 // loop_footer
    %s14 = sadd.s32 1, %s10
  $region7: #{resnet_encoder3d_forward.12} parent=0 // loop_footer_branch
    %9 = sbr.rel target = $region3
  $region8: #{resnet_encoder3d_forward.12} parent=0 // loop_exit
    _

// kernel: resnet_encoder3d_forward.13
$region0: #{resnet_encoder3d_forward.13}
  #allocation0 [shape = 'u32[]', space=smem, size = 0x4, offset = 0x4, fixed_abs, tag = 'smem constant byte address 0x4 - core index']
  #allocation1 [shape = 'u32[144,128]{1,0:T(1,128)}', space=vmem, size = 0x12000, scoped, tag = 'internal scratch']
  #allocation2 [shape = 'f32[128,128]{1,0:T(8,128)}', space=vmem, size = 0x10000, scoped, tag = 'scratch operand']
  %s0 = inlined_call_operand.vmem [shape: bf16[256,1792], index: 0, kind: input, shape index: {}]
  %s1 = inlined_call_operand.vmem [shape: bf16[1792,128], index: 1, kind: input, shape index: {}]
  %s2 = inlined_call_operand.vmem [shape: f32[1,128], index: 2, kind: input, shape index: {}]
  %s3 = inlined_call_operand.vmem [shape: f32[1,128], index: 3, kind: input, shape index: {}]
  %s4 = inlined_call_operand.vmem [shape: bf16[256,128], index: 4, kind: input, shape index: {}]
  %s5 = inlined_call_operand.vmem [shape: bf16[256,128], index: 5, kind: output, shape index: {}]
  %s6 = sld [smem:[#allocation0]]
  $region61: #{resnet_encoder3d_forward.13} parent=0
    _
  %s8 = ssub.s32 1, %s6
  %s9 = scalar_select 0, %s8, %s6
  loop: start=0, step=1, limit=4
  $region2: #{resnet_encoder3d_forward.13} parent=0 // loop_pre_header
    _
  $region3: #{resnet_encoder3d_forward.13} parent=0 // loop_header
    %s11 = sphi 0, %s15
    %p12 = scmp.ge.s32.totalorder %s11, 4
    %s18 = sphi 0, %s37
    %s19 = sphi 0, %s33
    %s20 = sphi 0, %s29
    %s21 = sphi 0, %s18
    %s22 = sphi 0, %s19
    %s23 = sphi 0, %s20
    %s24 = sphi 0, %s21
    %s25 = sphi 0, %s22
    %s26 = sphi 0, %s23
    %s42 = sphi 0, %s44
    %s45 = sphi 0, %s42
    %s46 = sphi 0, %s45
    %s62 = sphi 0, %s46
    %s70 = sphi 0, %s72
    %s73 = sphi 0, %s70
    %s74 = sphi 0, %s73
    %s90 = sphi 0, %s74
    %s96 = sphi 0, %s98
    %s99 = sphi 0, %s96
    %s100 = sphi 0, %s99
    %s116 = sphi 0, %s100
    %s122 = sphi 0, %s124
    %s125 = sphi 0, %s122
    %s126 = sphi 0, %s125
    %s142 = sphi 0, %s126
    %s150 = sphi 0, %s152
    %s153 = sphi 0, %s150
    %s154 = sphi 0, %s153
    %s170 = sphi 0, %s154
    %s178 = sphi 0, %s180
    %s181 = sphi 0, %s178
    %s182 = sphi 0, %s181
    %s198 = sphi 0, %s182
  $region4: #{resnet_encoder3d_forward.13} parent=0 // loop_header_branch
    %14 = sbr.rel (%p12) target = $region8
  $region5: #{resnet_encoder3d_forward.13} parent=0 // loop_body
    %s16 = ssub.s32 %s11, 1
    %s17 = ssub.s32 %s11, 2
    %s27 = sadd.s32 1, %s20
    %p28 = scmp.ge.s32.totalorder %s27, 1
    %s29 = scalar_select %p28, 0, %s27
    %s30 = sadd.s32 1, %s19
    %s31 = scalar_select %p28, %s30, %s19
    %p32 = scmp.ge.s32.totalorder %s31, 1
    %s33 = scalar_select %p32, 0, %s31
    %s34 = sadd.s32 1, %s18
    %s35 = scalar_select %p32, %s34, %s18
    %p36 = scmp.ge.s32.totalorder %s35, 2
    %s37 = scalar_select %p36, 0, %s35
    %s38 = ssub.s32 %s18, %s37
    %s39 = ssub.s32 %s20, %s29
    %s40 = sor.u32 %s38, %s39
    %p41 = scmp.eq.s32.totalorder %s40, 0
    %s43 = sadd.s32 %s42, 1
    %s44 = scalar_select %p41, %s42, %s43
    %p47 = pneg %p41
    %p48 = scmp.eq.s32.totalorder %s11, 1
    %p49 = por %p47, %p48
    %p50 = scmp.ne.s32.totalorder %s42, %s45
    %p51 = scmp.eq.s32.totalorder %s11, 0
    %p52 = por %p50, %p51
    %p53 = scmp.ne.s32.totalorder %s42, %s45
    %p54 = scmp.eq.s32.totalorder %s16, 1
    %p55 = por %p53, %p54
    %p56 = scmp.ne.s32.totalorder %s45, %s46
    %p57 = scmp.eq.s32.totalorder %s16, 0
    %p58 = por %p56, %p57
    %p59 = scmp.ne.s32.totalorder %s45, %s46
    %p60 = scmp.eq.s32.totalorder %s17, 1
    %p61 = por %p59, %p60
    %p63 = scmp.ne.s32.totalorder %s46, %s62
    %p64 = scmp.eq.s32.totalorder %s17, 0
    %p65 = por %p63, %p64
    %s66 = ssub.s32 %s20, %s29
    %s67 = ssub.s32 %s19, %s33
    %s68 = sor.u32 %s66, %s67
    %p69 = scmp.eq.s32.totalorder %s68, 0
    %s71 = sadd.s32 %s70, 1
    %s72 = scalar_select %p69, %s70, %s71
    %p75 = pneg %p69
    %p76 = scmp.eq.s32.totalorder %s11, 1
    %p77 = por %p75, %p76
    %p78 = scmp.ne.s32.totalorder %s70, %s73
    %p79 = scmp.eq.s32.totalorder %s11, 0
    %p80 = por %p78, %p79
    %p81 = scmp.ne.s32.totalorder %s70, %s73
    %p82 = scmp.eq.s32.totalorder %s16, 1
    %p83 = por %p81, %p82
    %p84 = scmp.ne.s32.totalorder %s73, %s74
    %p85 = scmp.eq.s32.totalorder %s16, 0
    %p86 = por %p84, %p85
    %p87 = scmp.ne.s32.totalorder %s73, %s74
    %p88 = scmp.eq.s32.totalorder %s17, 1
    %p89 = por %p87, %p88
    %p91 = scmp.ne.s32.totalorder %s74, %s90
    %p92 = scmp.eq.s32.totalorder %s17, 0
    %p93 = por %p91, %p92
    %s94 = ssub.s32 %s19, %s33
    %p95 = scmp.eq.s32.totalorder %s94, 0
    %s97 = sadd.s32 %s96, 1
    %s98 = scalar_select %p95, %s96, %s97
    %p101 = pneg %p95
    %p102 = scmp.eq.s32.totalorder %s11, 1
    %p103 = por %p101, %p102
    %p104 = scmp.ne.s32.totalorder %s96, %s99
    %p105 = scmp.eq.s32.totalorder %s11, 0
    %p106 = por %p104, %p105
    %p107 = scmp.ne.s32.totalorder %s96, %s99
    %p108 = scmp.eq.s32.totalorder %s16, 1
    %p109 = por %p107, %p108
    %p110 = scmp.ne.s32.totalorder %s99, %s100
    %p111 = scmp.eq.s32.totalorder %s16, 0
    %p112 = por %p110, %p111
    %p113 = scmp.ne.s32.totalorder %s99, %s100
    %p114 = scmp.eq.s32.totalorder %s17, 1
    %p115 = por %p113, %p114
    %p117 = scmp.ne.s32.totalorder %s100, %s116
    %p118 = scmp.eq.s32.totalorder %s17, 0
    %p119 = por %p117, %p118
    %s120 = ssub.s32 %s19, %s33
    %p121 = scmp.eq.s32.totalorder %s120, 0
    %s123 = sadd.s32 %s122, 1
    %s124 = scalar_select %p121, %s122, %s123
    %p127 = pneg %p121
    %p128 = scmp.eq.s32.totalorder %s11, 1
    %p129 = por %p127, %p128
    %p130 = scmp.ne.s32.totalorder %s122, %s125
    %p131 = scmp.eq.s32.totalorder %s11, 0
    %p132 = por %p130, %p131
    %p133 = scmp.ne.s32.totalorder %s122, %s125
    %p134 = scmp.eq.s32.totalorder %s16, 1
    %p135 = por %p133, %p134
    %p136 = scmp.ne.s32.totalorder %s125, %s126
    %p137 = scmp.eq.s32.totalorder %s16, 0
    %p138 = por %p136, %p137
    %p139 = scmp.ne.s32.totalorder %s125, %s126
    %p140 = scmp.eq.s32.totalorder %s17, 1
    %p141 = por %p139, %p140
    %p143 = scmp.ne.s32.totalorder %s126, %s142
    %p144 = scmp.eq.s32.totalorder %s17, 0
    %p145 = por %p143, %p144
    %s146 = ssub.s32 %s18, %s37
    %s147 = ssub.s32 %s19, %s33
    %s148 = sor.u32 %s146, %s147
    %p149 = scmp.eq.s32.totalorder %s148, 0
    %s151 = sadd.s32 %s150, 1
    %s152 = scalar_select %p149, %s150, %s151
    %p155 = pneg %p149
    %p156 = scmp.eq.s32.totalorder %s11, 1
    %p157 = por %p155, %p156
    %p158 = scmp.ne.s32.totalorder %s150, %s153
    %p159 = scmp.eq.s32.totalorder %s11, 0
    %p160 = por %p158, %p159
    %p161 = scmp.ne.s32.totalorder %s150, %s153
    %p162 = scmp.eq.s32.totalorder %s16, 1
    %p163 = por %p161, %p162
    %p164 = scmp.ne.s32.totalorder %s153, %s154
    %p165 = scmp.eq.s32.totalorder %s16, 0
    %p166 = por %p164, %p165
    %p167 = scmp.ne.s32.totalorder %s153, %s154
    %p168 = scmp.eq.s32.totalorder %s17, 1
    %p169 = por %p167, %p168
    %p171 = scmp.ne.s32.totalorder %s154, %s170
    %p172 = scmp.eq.s32.totalorder %s17, 0
    %p173 = por %p171, %p172
    %s174 = ssub.s32 %s18, %s37
    %s175 = ssub.s32 %s19, %s33
    %s176 = sor.u32 %s174, %s175
    %p177 = scmp.eq.s32.totalorder %s176, 0
    %s179 = sadd.s32 %s178, 1
    %s180 = scalar_select %p177, %s178, %s179
    %p183 = pneg %p177
    %p184 = scmp.eq.s32.totalorder %s11, 1
    %p185 = por %p183, %p184
    %p186 = scmp.ne.s32.totalorder %s178, %s181
    %p187 = scmp.eq.s32.totalorder %s11, 0
    %p188 = por %p186, %p187
    %p189 = scmp.ne.s32.totalorder %s178, %s181
    %p190 = scmp.eq.s32.totalorder %s16, 1
    %p191 = por %p189, %p190
    %p192 = scmp.ne.s32.totalorder %s181, %s182
    %p193 = scmp.eq.s32.totalorder %s16, 0
    %p194 = por %p192, %p193
    %p195 = scmp.ne.s32.totalorder %s181, %s182
    %p196 = scmp.eq.s32.totalorder %s17, 1
    %p197 = por %p195, %p196
    %p199 = scmp.ne.s32.totalorder %s182, %s198
    %p200 = scmp.eq.s32.totalorder %s17, 0
    %p201 = por %p199, %p200
    %p202 = scmp.le.s32.totalorder 1, %s11
    %p203 = scmp.lt.s32.totalorder %s11, 3
    %p204 = pnand %p202, %p203
    %p205 = pneg %p204
    // Predicated region
    $region9: #{resnet_encoder3d_forward.13} parent=5 // pred_check
      _
    $region10: #{resnet_encoder3d_forward.13} parent=5 // pred_check_branch
      %207 = sbr.rel (%p204) target = $region12
    $region11: #{resnet_encoder3d_forward.13} parent=5 // pred_region
      %s208 = ssub.s32 %s11, 1
      // Predicated region
      $region13: #{resnet_encoder3d_forward.13} parent=11 // pred_check
        %p209 = pneg %p86
      $region14: #{resnet_encoder3d_forward.13} parent=11 // pred_check_branch
        %211 = sbr.rel (%p209) target = $region16
      $region15: #{resnet_encoder3d_forward.13} parent=11 // pred_region
        %s212 = smul.u32 224, %s23
        %p213 = scmp.lt.s32.totalorder %s212, 223
        %s214 = scalar_select %p213, %s212, 223
        %p215 = scmp.lt.s32.totalorder %s22, 0
        %s216 = scalar_select %p215, %s22, 0
        %s217 = sadd.s32 %s216, %s214
        %s218 = smul.addr %s217, 4
        %s219 = scalar_lea.vmem %s1, %s218
        %s220 = smul.u32 224, %s23
      $region16: #{resnet_encoder3d_forward.13} parent=11 // pred_fallthru
        _
      // Predicated region
      $region17: #{resnet_encoder3d_forward.13} parent=11 // pred_check
        %p221 = pneg %p112
      $region18: #{resnet_encoder3d_forward.13} parent=11 // pred_check_branch
        %223 = sbr.rel (%p221) target = $region20
      $region19: #{resnet_encoder3d_forward.13} parent=11 // pred_region
        %p224 = scmp.lt.s32.totalorder %s22, 0
        %s225 = scalar_select %p224, %s22, 0
        %s226 = scalar_lea.vmem %s2, %s225
      $region20: #{resnet_encoder3d_forward.13} parent=11 // pred_fallthru
        _
      // Predicated region
      $region21: #{resnet_encoder3d_forward.13} parent=11 // pred_check
        %p227 = pneg %p138
      $region22: #{resnet_encoder3d_forward.13} parent=11 // pred_check_branch
        %229 = sbr.rel (%p227) target = $region24
      $region23: #{resnet_encoder3d_forward.13} parent=11 // pred_region
        %p230 = scmp.lt.s32.totalorder %s22, 0
        %s231 = scalar_select %p230, %s22, 0
        %s232 = scalar_lea.vmem %s3, %s231
      $region24: #{resnet_encoder3d_forward.13} parent=11 // pred_fallthru
        _
    $region12: #{resnet_encoder3d_forward.13} parent=5 // pred_fallthru
      _
    %p233 = scmp.lt.s32.totalorder %s11, 2
    // Predicated region
    $region25: #{resnet_encoder3d_forward.13} parent=5 // pred_check
      %p234 = pneg %p233
    $region26: #{resnet_encoder3d_forward.13} parent=5 // pred_check_branch
      %236 = sbr.rel (%p234) target = $region28
    $region27: #{resnet_encoder3d_forward.13} parent=5 // pred_region
      // Predicated region
      $region29: #{resnet_encoder3d_forward.13} parent=27 // pred_check
        %p237 = pneg %p52
      $region30: #{resnet_encoder3d_forward.13} parent=27 // pred_check_branch
        %239 = sbr.rel (%p237) target = $region32
      $region31: #{resnet_encoder3d_forward.13} parent=27 // pred_region
        %s240 = smul.u32 16, %s18
        %s241 = smul.u32 14, %s20
        %p242 = scmp.lt.s32.totalorder %s240, 31
        %s243 = scalar_select %p242, %s240, 31
        %p244 = scmp.lt.s32.totalorder %s241, 13
        %s245 = scalar_select %p244, %s241, 13
        %s246 = smul.addr %s243, 14
        %s247 = sadd.s32 %s245, %s246
        %s248 = smul.addr %s247, 4
        %s249 = scalar_lea.vmem %s0, %s248
        %s250 = smul.u32 16, %s18
        %s251 = smul.u32 14, %s20
      $region32: #{resnet_encoder3d_forward.13} parent=27 // pred_fallthru
        _
      // Predicated region
      $region33: #{resnet_encoder3d_forward.13} parent=27 // pred_check
        %p252 = pneg %p160
      $region34: #{resnet_encoder3d_forward.13} parent=27 // pred_check_branch
        %254 = sbr.rel (%p252) target = $region36
      $region35: #{resnet_encoder3d_forward.13} parent=27 // pred_region
        %s255 = smul.u32 16, %s18
        %p256 = scmp.lt.s32.totalorder %s255, 31
        %s257 = scalar_select %p256, %s255, 31
        %p258 = scmp.lt.s32.totalorder %s19, 0
        %s259 = scalar_select %p258, %s19, 0
        %s260 = sadd.s32 %s259, %s257
        %s261 = smul.addr %s260, 4
        %s262 = scalar_lea.vmem %s4, %s261
        %s263 = smul.u32 16, %s18
      $region36: #{resnet_encoder3d_forward.13} parent=27 // pred_fallthru
        _
    $region28: #{resnet_encoder3d_forward.13} parent=5 // pred_fallthru
      _
    %p264 = scmp.le.s32.totalorder 1, %s11
    %p265 = scmp.lt.s32.totalorder %s11, 3
    %p266 = pnand %p264, %p265
    %p267 = pneg %p266
    // Predicated region
    $region37: #{resnet_encoder3d_forward.13} parent=5 // pred_check
      _
    $region38: #{resnet_encoder3d_forward.13} parent=5 // pred_check_branch
      %269 = sbr.rel (%p266) target = $region40
    $region39: #{resnet_encoder3d_forward.13} parent=5 // pred_region
      %s270 = ssub.s32 %s11, 1
      %s271 = smul.u32 16, %s21
      %s272 = smul.u32 14, %s23
      %p273 = scmp.lt.s32.totalorder %s271, 31
      %s274 = scalar_select %p273, %s271, 31
      %p275 = scmp.lt.s32.totalorder %s272, 13
      %s276 = scalar_select %p275, %s272, 13
      %s277 = smul.addr %s274, 14
      %s278 = sadd.s32 %s276, %s277
      %s279 = smul.addr %s278, 4
      %s280 = scalar_lea.vmem %s0, %s279
      %p281 = pneg %p58
      %p282 = pneg %p55
      %s283 = smul.u32 224, %s23
      %p284 = scmp.lt.s32.totalorder %s283, 223
      %s285 = scalar_select %p284, %s283, 223
      %p286 = scmp.lt.s32.totalorder %s22, 0
      %s287 = scalar_select %p286, %s22, 0
      %s288 = sadd.s32 %s287, %s285
      %s289 = smul.addr %s288, 4
      %s290 = scalar_lea.vmem %s1, %s289
      %p291 = pneg %p86
      %p292 = pneg %p83
      %p293 = scmp.lt.s32.totalorder %s22, 0
      %s294 = scalar_select %p293, %s22, 0
      %s295 = scalar_lea.vmem %s2, %s294
      %p296 = pneg %p112
      %p297 = pneg %p109
      %p298 = scmp.lt.s32.totalorder %s22, 0
      %s299 = scalar_select %p298, %s22, 0
      %s300 = scalar_lea.vmem %s3, %s299
      %p301 = pneg %p138
      %p302 = pneg %p135
      %s303 = smul.u32 16, %s21
      %p304 = scmp.lt.s32.totalorder %s303, 31
      %s305 = scalar_select %p304, %s303, 31
      %p306 = scmp.lt.s32.totalorder %s22, 0
      %s307 = scalar_select %p306, %s22, 0
      %s308 = sadd.s32 %s307, %s305
      %s309 = smul.addr %s308, 4
      %s310 = scalar_lea.vmem %s4, %s309
      %p311 = pneg %p166
      %p312 = pneg %p163
      %p313 = pneg %p194
      %p314 = pneg %p191
      %s315 = smul.u32 16, %s21
      %p316 = scmp.lt.s32.totalorder %s315, 31
      %s317 = scalar_select %p316, %s315, 31
      %p318 = scmp.lt.s32.totalorder %s22, 0
      %s319 = scalar_select %p318, %s22, 0
      %s320 = sadd.s32 %s319, %s317
      %s321 = smul.addr %s320, 4
      %s322 = scalar_lea.vmem %s5, %s321
      %s323 = smul.u32 16, %s21
      %s324 = smul.u32 14, %s23
      %p325 = scmp.lt.s32.totalorder %s323, 31
      %s326 = scalar_select %p325, %s323, 31
      %p327 = scmp.lt.s32.totalorder %s324, 13
      %s328 = scalar_select %p327, %s324, 13
      %s329 = smul.addr %s326, 14
      %s330 = sadd.s32 %s328, %s329
      %s331 = smul.addr %s330, 4
      %s332 = scalar_lea.vmem %s0, %s331
      %s333 = smul.u32 16, %s21
      %s334 = smul.u32 14, %s23
      %s335 = smul.u32 224, %s23
      %p336 = scmp.lt.s32.totalorder %s335, 223
      %s337 = scalar_select %p336, %s335, 223
      %p338 = scmp.lt.s32.totalorder %s22, 0
      %s339 = scalar_select %p338, %s22, 0
      %s340 = sadd.s32 %s339, %s337
      %s341 = smul.addr %s340, 4
      %s342 = scalar_lea.vmem %s1, %s341
      %s343 = smul.u32 224, %s23
      %p344 = scmp.lt.s32.totalorder %s22, 0
      %s345 = scalar_select %p344, %s22, 0
      %s346 = scalar_lea.vmem %s2, %s345
      %p347 = scmp.lt.s32.totalorder %s22, 0
      %s348 = scalar_select %p347, %s22, 0
      %s349 = scalar_lea.vmem %s3, %s348
      %s350 = smul.u32 16, %s21
      %p351 = scmp.lt.s32.totalorder %s350, 31
      %s352 = scalar_select %p351, %s350, 31
      %p353 = scmp.lt.s32.totalorder %s22, 0
      %s354 = scalar_select %p353, %s22, 0
      %s355 = sadd.s32 %s354, %s352
      %s356 = smul.addr %s355, 4
      %s357 = scalar_lea.vmem %s4, %s356
      %s358 = smul.u32 16, %s21
      %s359 = smul.u32 16, %s21
      %p360 = scmp.lt.s32.totalorder %s359, 31
      %s361 = scalar_select %p360, %s359, 31
      %p362 = scmp.lt.s32.totalorder %s22, 0
      %s363 = scalar_select %p362, %s22, 0
      %s364 = sadd.s32 %s363, %s361
      %s365 = smul.addr %s364, 4
      %s366 = scalar_lea.vmem %s5, %s365
      %s367 = smul.u32 16, %s21
      %p369 = scmp.eq.s32.totalorder %s23, 0
      // Predicated region
      $region41: #{resnet_encoder3d_forward.13} parent=39 // pred_check
        %p370 = pneg %p369
      $region42: #{resnet_encoder3d_forward.13} parent=39 // pred_check_branch
        %372 = sbr.rel (%p370) target = $region44
      $region43: #{resnet_encoder3d_forward.13} parent=39 // pred_region
        %373 = vst [vmem:[#allocation2] sm:$0xff] 0.0
        %374 = vst [vmem:[#allocation2 + $0x8] sm:$0xff] 0.0
        %375 = vst [vmem:[#allocation2 + $0x10] sm:$0xff] 0.0
        %376 = vst [vmem:[#allocation2 + $0x18] sm:$0xff] 0.0
        %377 = vst [vmem:[#allocation2 + $0x20] sm:$0xff] 0.0
        %378 = vst [vmem:[#allocation2 + $0x28] sm:$0xff] 0.0
        %379 = vst [vmem:[#allocation2 + $0x30] sm:$0xff] 0.0
        %380 = vst [vmem:[#allocation2 + $0x38] sm:$0xff] 0.0
        %381 = vst [vmem:[#allocation2 + $0x40] sm:$0xff] 0.0
        %382 = vst [vmem:[#allocation2 + $0x48] sm:$0xff] 0.0
        %383 = vst [vmem:[#allocation2 + $0x50] sm:$0xff] 0.0
        %384 = vst [vmem:[#allocation2 + $0x58] sm:$0xff] 0.0
        %385 = vst [vmem:[#allocation2 + $0x60] sm:$0xff] 0.0
        %386 = vst [vmem:[#allocation2 + $0x68] sm:$0xff] 0.0
        %387 = vst [vmem:[#allocation2 + $0x70] sm:$0xff] 0.0
        %388 = vst [vmem:[#allocation2 + $0x78] sm:$0xff] 0.0
      $region44: #{resnet_encoder3d_forward.13} parent=39 // pred_fallthru
        _
      %v389 = vld [vmem:[#allocation2] sm:$0xff]
      %v390 = vld [vmem:[#allocation2 + $0x8] sm:$0xff]
      %v391 = vld [vmem:[#allocation2 + $0x10] sm:$0xff]
      %v392 = vld [vmem:[#allocation2 + $0x18] sm:$0xff]
      %v393 = vld [vmem:[#allocation2 + $0x20] sm:$0xff]
      %v394 = vld [vmem:[#allocation2 + $0x28] sm:$0xff]
      %v395 = vld [vmem:[#allocation2 + $0x30] sm:$0xff]
      %v396 = vld [vmem:[#allocation2 + $0x38] sm:$0xff]
      %v397 = vld [vmem:[#allocation2 + $0x40] sm:$0xff]
      %v398 = vld [vmem:[#allocation2 + $0x48] sm:$0xff]
      %v399 = vld [vmem:[#allocation2 + $0x50] sm:$0xff]
      %v400 = vld [vmem:[#allocation2 + $0x58] sm:$0xff]
      %v401 = vld [vmem:[#allocation2 + $0x60] sm:$0xff]
      %v402 = vld [vmem:[#allocation2 + $0x68] sm:$0xff]
      %v403 = vld [vmem:[#allocation2 + $0x70] sm:$0xff]
      %v404 = vld [vmem:[#allocation2 + $0x78] sm:$0xff]
      %v405 = vld [vmem:[%s332] sm:$0xff]
      %v406 = vld [vmem:[%s332 + $0x8] sm:$0xff]
      %v407 = vld [vmem:[%s332 + $0x10] sm:$0xff]
      %v408 = vld [vmem:[%s332 + $0x18] sm:$0xff]
      %v409 = vld [vmem:[%s332 + $0x20] sm:$0xff]
      %v410 = vld [vmem:[%s332 + $0x28] sm:$0xff]
      %v411 = vld [vmem:[%s332 + $0x30] sm:$0xff]
      %v412 = vld [vmem:[%s332 + $0x38] sm:$0xff]
      %v413 = vld [vmem:[%s332 + $0x40] sm:$0xff]
      %v414 = vld [vmem:[%s332 + $0x48] sm:$0xff]
      %v415 = vld [vmem:[%s332 + $0x50] sm:$0xff]
      %v416 = vld [vmem:[%s332 + $0x58] sm:$0xff]
      %v417 = vld [vmem:[%s332 + $0x60] sm:$0xff]
      %v418 = vld [vmem:[%s332 + $0x68] sm:$0xff]
      %v419 = vld [vmem:[%s332 + $0x70] sm:$0xff]
      %v420 = vld [vmem:[%s332 + $0x78] sm:$0xff]
      %v421 = vld [vmem:[%s332 + $0x80] sm:$0xff]
      %v422 = vld [vmem:[%s332 + $0x88] sm:$0xff]
      %v423 = vld [vmem:[%s332 + $0x90] sm:$0xff]
      %v424 = vld [vmem:[%s332 + $0x98] sm:$0xff]
      %v425 = vld [vmem:[%s332 + $0xa0] sm:$0xff]
      %v426 = vld [vmem:[%s332 + $0xa8] sm:$0xff]
      %v427 = vld [vmem:[%s332 + $0xb0] sm:$0xff]
      %v428 = vld [vmem:[%s332 + $0xb8] sm:$0xff]
      %v429 = vld [vmem:[%s332 + $0xc0] sm:$0xff]
      %v430 = vld [vmem:[%s332 + $0xc8] sm:$0xff]
      %v431 = vld [vmem:[%s332 + $0xd0] sm:$0xff]
      %v432 = vld [vmem:[%s332 + $0xd8] sm:$0xff]
      %v433 = vld [vmem:[%s332 + $0xe0] sm:$0xff]
      %v434 = vld [vmem:[%s332 + $0xe8] sm:$0xff]
      %v435 = vld [vmem:[%s332 + $0xf0] sm:$0xff]
      %v436 = vld [vmem:[%s332 + $0xf8] sm:$0xff]
      %v437 = vld [vmem:[%s332 + $0x100] sm:$0xff]
      %v438 = vld [vmem:[%s332 + $0x108] sm:$0xff]
      %v439 = vld [vmem:[%s332 + $0x110] sm:$0xff]
      %v440 = vld [vmem:[%s332 + $0x118] sm:$0xff]
      %v441 = vld [vmem:[%s332 + $0x120] sm:$0xff]
      %v442 = vld [vmem:[%s332 + $0x128] sm:$0xff]
      %v443 = vld [vmem:[%s332 + $0x130] sm:$0xff]
      %v444 = vld [vmem:[%s332 + $0x138] sm:$0xff]
      %v445 = vld [vmem:[%s332 + $0x140] sm:$0xff]
      %v446 = vld [vmem:[%s332 + $0x148] sm:$0xff]
      %v447 = vld [vmem:[%s332 + $0x150] sm:$0xff]
      %v448 = vld [vmem:[%s332 + $0x158] sm:$0xff]
      %v449 = vld [vmem:[%s332 + $0x160] sm:$0xff]
      %v450 = vld [vmem:[%s332 + $0x168] sm:$0xff]
      %v451 = vld [vmem:[%s332 + $0x170] sm:$0xff]
      %v452 = vld [vmem:[%s332 + $0x178] sm:$0xff]
      %v453 = vld [vmem:[%s332 + $0x180] sm:$0xff]
      %v454 = vld [vmem:[%s332 + $0x188] sm:$0xff]
      %v455 = vld [vmem:[%s332 + $0x190] sm:$0xff]
      %v456 = vld [vmem:[%s332 + $0x198] sm:$0xff]
      %v457 = vld [vmem:[%s332 + $0x1a0] sm:$0xff]
      %v458 = vld [vmem:[%s332 + $0x1a8] sm:$0xff]
      %v459 = vld [vmem:[%s332 + $0x1b0] sm:$0xff]
      %v460 = vld [vmem:[%s332 + $0x1b8] sm:$0xff]
      %v461 = vld [vmem:[%s332 + $0x1c0] sm:$0xff]
      %v462 = vld [vmem:[%s332 + $0x1c8] sm:$0xff]
      %v463 = vld [vmem:[%s332 + $0x1d0] sm:$0xff]
      %v464 = vld [vmem:[%s332 + $0x1d8] sm:$0xff]
      %v465 = vld [vmem:[%s332 + $0x1e0] sm:$0xff]
      %v466 = vld [vmem:[%s332 + $0x1e8] sm:$0xff]
      %v467 = vld [vmem:[%s332 + $0x1f0] sm:$0xff]
      %v468 = vld [vmem:[%s332 + $0x1f8] sm:$0xff]
      %v469 = vld [vmem:[%s332 + $0x200] sm:$0xff]
      %v470 = vld [vmem:[%s332 + $0x208] sm:$0xff]
      %v471 = vld [vmem:[%s332 + $0x210] sm:$0xff]
      %v472 = vld [vmem:[%s332 + $0x218] sm:$0xff]
      %v473 = vld [vmem:[%s332 + $0x220] sm:$0xff]
      %v474 = vld [vmem:[%s332 + $0x228] sm:$0xff]
      %v475 = vld [vmem:[%s332 + $0x230] sm:$0xff]
      %v476 = vld [vmem:[%s332 + $0x238] sm:$0xff]
      %v477 = vld [vmem:[%s332 + $0x240] sm:$0xff]
      %v478 = vld [vmem:[%s332 + $0x248] sm:$0xff]
      %v479 = vld [vmem:[%s332 + $0x250] sm:$0xff]
      %v480 = vld [vmem:[%s332 + $0x258] sm:$0xff]
      %v481 = vld [vmem:[%s332 + $0x260] sm:$0xff]
      %v482 = vld [vmem:[%s332 + $0x268] sm:$0xff]
      %v483 = vld [vmem:[%s332 + $0x270] sm:$0xff]
      %v484 = vld [vmem:[%s332 + $0x278] sm:$0xff]
      %v485 = vld [vmem:[%s332 + $0x280] sm:$0xff]
      %v486 = vld [vmem:[%s332 + $0x288] sm:$0xff]
      %v487 = vld [vmem:[%s332 + $0x290] sm:$0xff]
      %v488 = vld [vmem:[%s332 + $0x298] sm:$0xff]
      %v489 = vld [vmem:[%s332 + $0x2a0] sm:$0xff]
      %v490 = vld [vmem:[%s332 + $0x2a8] sm:$0xff]
      %v491 = vld [vmem:[%s332 + $0x2b0] sm:$0xff]
      %v492 = vld [vmem:[%s332 + $0x2b8] sm:$0xff]
      %v493 = vld [vmem:[%s332 + $0x2c0] sm:$0xff]
      %v494 = vld [vmem:[%s332 + $0x2c8] sm:$0xff]
      %v495 = vld [vmem:[%s332 + $0x2d0] sm:$0xff]
      %v496 = vld [vmem:[%s332 + $0x2d8] sm:$0xff]
      %v497 = vld [vmem:[%s332 + $0x2e0] sm:$0xff]
      %v498 = vld [vmem:[%s332 + $0x2e8] sm:$0xff]
      %v499 = vld [vmem:[%s332 + $0x2f0] sm:$0xff]
      %v500 = vld [vmem:[%s332 + $0x2f8] sm:$0xff]
      %v501 = vld [vmem:[%s332 + $0x300] sm:$0xff]
      %v502 = vld [vmem:[%s332 + $0x308] sm:$0xff]
      %v503 = vld [vmem:[%s332 + $0x310] sm:$0xff]
      %v504 = vld [vmem:[%s332 + $0x318] sm:$0xff]
      %v505 = vld [vmem:[%s332 + $0x320] sm:$0xff]
      %v506 = vld [vmem:[%s332 + $0x328] sm:$0xff]
      %v507 = vld [vmem:[%s332 + $0x330] sm:$0xff]
      %v508 = vld [vmem:[%s332 + $0x338] sm:$0xff]
      %v509 = vld [vmem:[%s332 + $0x340] sm:$0xff]
      %v510 = vld [vmem:[%s332 + $0x348] sm:$0xff]
      %v511 = vld [vmem:[%s332 + $0x350] sm:$0xff]
      %v512 = vld [vmem:[%s332 + $0x358] sm:$0xff]
      %v513 = vld [vmem:[%s332 + $0x360] sm:$0xff]
      %v514 = vld [vmem:[%s332 + $0x368] sm:$0xff]
      %v515 = vld [vmem:[%s332 + $0x370] sm:$0xff]
      %v516 = vld [vmem:[%s332 + $0x378] sm:$0xff]
      %v517 = vld [vmem:[%s342] sm:$0xf]
      %v518 = vld [vmem:[%s342 + $0x4] sm:$0xf]
      %v519 = vld [vmem:[%s342 + $0x8] sm:$0xf]
      %v520 = vld [vmem:[%s342 + $0xc] sm:$0xf]
      %v521 = vld [vmem:[%s342 + $0x10] sm:$0xf]
      %v522 = vld [vmem:[%s342 + $0x14] sm:$0xf]
      %v523 = vld [vmem:[%s342 + $0x18] sm:$0xf]
      %v524 = vld [vmem:[%s342 + $0x1c] sm:$0xf]
      %v525 = vld [vmem:[%s342 + $0x20] sm:$0xf]
      %v526 = vld [vmem:[%s342 + $0x24] sm:$0xf]
      %v527 = vld [vmem:[%s342 + $0x28] sm:$0xf]
      %v528 = vld [vmem:[%s342 + $0x2c] sm:$0xf]
      %v529 = vld [vmem:[%s342 + $0x30] sm:$0xf]
      %v530 = vld [vmem:[%s342 + $0x34] sm:$0xf]
      %v531 = vld [vmem:[%s342 + $0x38] sm:$0xf]
      %v532 = vld [vmem:[%s342 + $0x3c] sm:$0xf]
      %v533 = vld [vmem:[%s342 + $0x40] sm:$0xf]
      %v534 = vld [vmem:[%s342 + $0x44] sm:$0xf]
      %v535 = vld [vmem:[%s342 + $0x48] sm:$0xf]
      %v536 = vld [vmem:[%s342 + $0x4c] sm:$0xf]
      %v537 = vld [vmem:[%s342 + $0x50] sm:$0xf]
      %v538 = vld [vmem:[%s342 + $0x54] sm:$0xf]
      %v539 = vld [vmem:[%s342 + $0x58] sm:$0xf]
      %v540 = vld [vmem:[%s342 + $0x5c] sm:$0xf]
      %v541 = vld [vmem:[%s342 + $0x60] sm:$0xf]
      %v542 = vld [vmem:[%s342 + $0x64] sm:$0xf]
      %v543 = vld [vmem:[%s342 + $0x68] sm:$0xf]
      %v544 = vld [vmem:[%s342 + $0x6c] sm:$0xf]
      %v545 = vld [vmem:[%s342 + $0x70] sm:$0xf]
      %v546 = vld [vmem:[%s342 + $0x74] sm:$0xf]
      %v547 = vld [vmem:[%s342 + $0x78] sm:$0xf]
      %v548 = vld [vmem:[%s342 + $0x7c] sm:$0xf]
      %v549 = vld [vmem:[%s342 + $0x80] sm:$0xf]
      %v550 = vld [vmem:[%s342 + $0x84] sm:$0xf]
      %v551 = vld [vmem:[%s342 + $0x88] sm:$0xf]
      %v552 = vld [vmem:[%s342 + $0x8c] sm:$0xf]
      %v553 = vld [vmem:[%s342 + $0x90] sm:$0xf]
      %v554 = vld [vmem:[%s342 + $0x94] sm:$0xf]
      %v555 = vld [vmem:[%s342 + $0x98] sm:$0xf]
      %v556 = vld [vmem:[%s342 + $0x9c] sm:$0xf]
      %v557 = vld [vmem:[%s342 + $0xa0] sm:$0xf]
      %v558 = vld [vmem:[%s342 + $0xa4] sm:$0xf]
      %v559 = vld [vmem:[%s342 + $0xa8] sm:$0xf]
      %v560 = vld [vmem:[%s342 + $0xac] sm:$0xf]
      %v561 = vld [vmem:[%s342 + $0xb0] sm:$0xf]
      %v562 = vld [vmem:[%s342 + $0xb4] sm:$0xf]
      %v563 = vld [vmem:[%s342 + $0xb8] sm:$0xf]
      %v564 = vld [vmem:[%s342 + $0xbc] sm:$0xf]
      %v565 = vld [vmem:[%s342 + $0xc0] sm:$0xf]
      %v566 = vld [vmem:[%s342 + $0xc4] sm:$0xf]
      %v567 = vld [vmem:[%s342 + $0xc8] sm:$0xf]
      %v568 = vld [vmem:[%s342 + $0xcc] sm:$0xf]
      %v569 = vld [vmem:[%s342 + $0xd0] sm:$0xf]
      %v570 = vld [vmem:[%s342 + $0xd4] sm:$0xf]
      %v571 = vld [vmem:[%s342 + $0xd8] sm:$0xf]
      %v572 = vld [vmem:[%s342 + $0xdc] sm:$0xf]
      %v573 = vld [vmem:[%s342 + $0xe0] sm:$0xf]
      %v574 = vld [vmem:[%s342 + $0xe4] sm:$0xf]
      %v575 = vld [vmem:[%s342 + $0xe8] sm:$0xf]
      %v576 = vld [vmem:[%s342 + $0xec] sm:$0xf]
      %v577 = vld [vmem:[%s342 + $0xf0] sm:$0xf]
      %v578 = vld [vmem:[%s342 + $0xf4] sm:$0xf]
      %v579 = vld [vmem:[%s342 + $0xf8] sm:$0xf]
      %v580 = vld [vmem:[%s342 + $0xfc] sm:$0xf]
      %v581 = vld [vmem:[%s342 + $0x100] sm:$0xf]
      %v582 = vld [vmem:[%s342 + $0x104] sm:$0xf]
      %v583 = vld [vmem:[%s342 + $0x108] sm:$0xf]
      %v584 = vld [vmem:[%s342 + $0x10c] sm:$0xf]
      %v585 = vld [vmem:[%s342 + $0x110] sm:$0xf]
      %v586 = vld [vmem:[%s342 + $0x114] sm:$0xf]
      %v587 = vld [vmem:[%s342 + $0x118] sm:$0xf]
      %v588 = vld [vmem:[%s342 + $0x11c] sm:$0xf]
      %v589 = vld [vmem:[%s342 + $0x120] sm:$0xf]
      %v590 = vld [vmem:[%s342 + $0x124] sm:$0xf]
      %v591 = vld [vmem:[%s342 + $0x128] sm:$0xf]
      %v592 = vld [vmem:[%s342 + $0x12c] sm:$0xf]
      %v593 = vld [vmem:[%s342 + $0x130] sm:$0xf]
      %v594 = vld [vmem:[%s342 + $0x134] sm:$0xf]
      %v595 = vld [vmem:[%s342 + $0x138] sm:$0xf]
      %v596 = vld [vmem:[%s342 + $0x13c] sm:$0xf]
      %v597 = vld [vmem:[%s342 + $0x140] sm:$0xf]
      %v598 = vld [vmem:[%s342 + $0x144] sm:$0xf]
      %v599 = vld [vmem:[%s342 + $0x148] sm:$0xf]
      %v600 = vld [vmem:[%s342 + $0x14c] sm:$0xf]
      %v601 = vld [vmem:[%s342 + $0x150] sm:$0xf]
      %v602 = vld [vmem:[%s342 + $0x154] sm:$0xf]
      %v603 = vld [vmem:[%s342 + $0x158] sm:$0xf]
      %v604 = vld [vmem:[%s342 + $0x15c] sm:$0xf]
      %v605 = vld [vmem:[%s342 + $0x160] sm:$0xf]
      %v606 = vld [vmem:[%s342 + $0x164] sm:$0xf]
      %v607 = vld [vmem:[%s342 + $0x168] sm:$0xf]
      %v608 = vld [vmem:[%s342 + $0x16c] sm:$0xf]
      %v609 = vld [vmem:[%s342 + $0x170] sm:$0xf]
      %v610 = vld [vmem:[%s342 + $0x174] sm:$0xf]
      %v611 = vld [vmem:[%s342 + $0x178] sm:$0xf]
      %v612 = vld [vmem:[%s342 + $0x17c] sm:$0xf]
      %v613 = vld [vmem:[%s342 + $0x180] sm:$0xf]
      %v614 = vld [vmem:[%s342 + $0x184] sm:$0xf]
      %v615 = vld [vmem:[%s342 + $0x188] sm:$0xf]
      %v616 = vld [vmem:[%s342 + $0x18c] sm:$0xf]
      %v617 = vld [vmem:[%s342 + $0x190] sm:$0xf]
      %v618 = vld [vmem:[%s342 + $0x194] sm:$0xf]
      %v619 = vld [vmem:[%s342 + $0x198] sm:$0xf]
      %v620 = vld [vmem:[%s342 + $0x19c] sm:$0xf]
      %v621 = vld [vmem:[%s342 + $0x1a0] sm:$0xf]
      %v622 = vld [vmem:[%s342 + $0x1a4] sm:$0xf]
      %v623 = vld [vmem:[%s342 + $0x1a8] sm:$0xf]
      %v624 = vld [vmem:[%s342 + $0x1ac] sm:$0xf]
      %v625 = vld [vmem:[%s342 + $0x1b0] sm:$0xf]
      %v626 = vld [vmem:[%s342 + $0x1b4] sm:$0xf]
      %v627 = vld [vmem:[%s342 + $0x1b8] sm:$0xf]
      %v628 = vld [vmem:[%s342 + $0x1bc] sm:$0xf]
      %v629 = vld [vmem:[%s342 + $0x1c0] sm:$0xf]
      %v630 = vld [vmem:[%s342 + $0x1c4] sm:$0xf]
      %v631 = vld [vmem:[%s342 + $0x1c8] sm:$0xf]
      %v632 = vld [vmem:[%s342 + $0x1cc] sm:$0xf]
      %v633 = vld [vmem:[%s342 + $0x1d0] sm:$0xf]
      %v634 = vld [vmem:[%s342 + $0x1d4] sm:$0xf]
      %v635 = vld [vmem:[%s342 + $0x1d8] sm:$0xf]
      %v636 = vld [vmem:[%s342 + $0x1dc] sm:$0xf]
      %v637 = vld [vmem:[%s342 + $0x1e0] sm:$0xf]
      %v638 = vld [vmem:[%s342 + $0x1e4] sm:$0xf]
      %v639 = vld [vmem:[%s342 + $0x1e8] sm:$0xf]
      %v640 = vld [vmem:[%s342 + $0x1ec] sm:$0xf]
      %v641 = vld [vmem:[%s342 + $0x1f0] sm:$0xf]
      %v642 = vld [vmem:[%s342 + $0x1f4] sm:$0xf]
      %v643 = vld [vmem:[%s342 + $0x1f8] sm:$0xf]
      %v644 = vld [vmem:[%s342 + $0x1fc] sm:$0xf]
      %v645 = vld [vmem:[%s342 + $0x200] sm:$0xf]
      %v646 = vld [vmem:[%s342 + $0x204] sm:$0xf]
      %v647 = vld [vmem:[%s342 + $0x208] sm:$0xf]
      %v648 = vld [vmem:[%s342 + $0x20c] sm:$0xf]
      %v649 = vld [vmem:[%s342 + $0x210] sm:$0xf]
      %v650 = vld [vmem:[%s342 + $0x214] sm:$0xf]
      %v651 = vld [vmem:[%s342 + $0x218] sm:$0xf]
      %v652 = vld [vmem:[%s342 + $0x21c] sm:$0xf]
      %v653 = vld [vmem:[%s342 + $0x220] sm:$0xf]
      %v654 = vld [vmem:[%s342 + $0x224] sm:$0xf]
      %v655 = vld [vmem:[%s342 + $0x228] sm:$0xf]
      %v656 = vld [vmem:[%s342 + $0x22c] sm:$0xf]
      %v657 = vld [vmem:[%s342 + $0x230] sm:$0xf]
      %v658 = vld [vmem:[%s342 + $0x234] sm:$0xf]
      %v659 = vld [vmem:[%s342 + $0x238] sm:$0xf]
      %v660 = vld [vmem:[%s342 + $0x23c] sm:$0xf]
      %v661 = vld [vmem:[%s342 + $0x240] sm:$0xf]
      %v662 = vld [vmem:[%s342 + $0x244] sm:$0xf]
      %v663 = vld [vmem:[%s342 + $0x248] sm:$0xf]
      %v664 = vld [vmem:[%s342 + $0x24c] sm:$0xf]
      %v665 = vld [vmem:[%s342 + $0x250] sm:$0xf]
      %v666 = vld [vmem:[%s342 + $0x254] sm:$0xf]
      %v667 = vld [vmem:[%s342 + $0x258] sm:$0xf]
      %v668 = vld [vmem:[%s342 + $0x25c] sm:$0xf]
      %v669 = vld [vmem:[%s342 + $0x260] sm:$0xf]
      %v670 = vld [vmem:[%s342 + $0x264] sm:$0xf]
      %v671 = vld [vmem:[%s342 + $0x268] sm:$0xf]
      %v672 = vld [vmem:[%s342 + $0x26c] sm:$0xf]
      %v673 = vld [vmem:[%s342 + $0x270] sm:$0xf]
      %v674 = vld [vmem:[%s342 + $0x274] sm:$0xf]
      %v675 = vld [vmem:[%s342 + $0x278] sm:$0xf]
      %v676 = vld [vmem:[%s342 + $0x27c] sm:$0xf]
      %v677 = vld [vmem:[%s342 + $0x280] sm:$0xf]
      %v678 = vld [vmem:[%s342 + $0x284] sm:$0xf]
      %v679 = vld [vmem:[%s342 + $0x288] sm:$0xf]
      %v680 = vld [vmem:[%s342 + $0x28c] sm:$0xf]
      %v681 = vld [vmem:[%s342 + $0x290] sm:$0xf]
      %v682 = vld [vmem:[%s342 + $0x294] sm:$0xf]
      %v683 = vld [vmem:[%s342 + $0x298] sm:$0xf]
      %v684 = vld [vmem:[%s342 + $0x29c] sm:$0xf]
      %v685 = vld [vmem:[%s342 + $0x2a0] sm:$0xf]
      %v686 = vld [vmem:[%s342 + $0x2a4] sm:$0xf]
      %v687 = vld [vmem:[%s342 + $0x2a8] sm:$0xf]
      %v688 = vld [vmem:[%s342 + $0x2ac] sm:$0xf]
      %v689 = vld [vmem:[%s342 + $0x2b0] sm:$0xf]
      %v690 = vld [vmem:[%s342 + $0x2b4] sm:$0xf]
      %v691 = vld [vmem:[%s342 + $0x2b8] sm:$0xf]
      %v692 = vld [vmem:[%s342 + $0x2bc] sm:$0xf]
      %v693 = vld [vmem:[%s342 + $0x2c0] sm:$0xf]
      %v694 = vld [vmem:[%s342 + $0x2c4] sm:$0xf]
      %v695 = vld [vmem:[%s342 + $0x2c8] sm:$0xf]
      %v696 = vld [vmem:[%s342 + $0x2cc] sm:$0xf]
      %v697 = vld [vmem:[%s342 + $0x2d0] sm:$0xf]
      %v698 = vld [vmem:[%s342 + $0x2d4] sm:$0xf]
      %v699 = vld [vmem:[%s342 + $0x2d8] sm:$0xf]
      %v700 = vld [vmem:[%s342 + $0x2dc] sm:$0xf]
      %v701 = vld [vmem:[%s342 + $0x2e0] sm:$0xf]
      %v702 = vld [vmem:[%s342 + $0x2e4] sm:$0xf]
      %v703 = vld [vmem:[%s342 + $0x2e8] sm:$0xf]
      %v704 = vld [vmem:[%s342 + $0x2ec] sm:$0xf]
      %v705 = vld [vmem:[%s342 + $0x2f0] sm:$0xf]
      %v706 = vld [vmem:[%s342 + $0x2f4] sm:$0xf]
      %v707 = vld [vmem:[%s342 + $0x2f8] sm:$0xf]
      %v708 = vld [vmem:[%s342 + $0x2fc] sm:$0xf]
      %v709 = vld [vmem:[%s342 + $0x300] sm:$0xf]
      %v710 = vld [vmem:[%s342 + $0x304] sm:$0xf]
      %v711 = vld [vmem:[%s342 + $0x308] sm:$0xf]
      %v712 = vld [vmem:[%s342 + $0x30c] sm:$0xf]
      %v713 = vld [vmem:[%s342 + $0x310] sm:$0xf]
      %v714 = vld [vmem:[%s342 + $0x314] sm:$0xf]
      %v715 = vld [vmem:[%s342 + $0x318] sm:$0xf]
      %v716 = vld [vmem:[%s342 + $0x31c] sm:$0xf]
      %v717 = vld [vmem:[%s342 + $0x320] sm:$0xf]
      %v718 = vld [vmem:[%s342 + $0x324] sm:$0xf]
      %v719 = vld [vmem:[%s342 + $0x328] sm:$0xf]
      %v720 = vld [vmem:[%s342 + $0x32c] sm:$0xf]
      %v721 = vld [vmem:[%s342 + $0x330] sm:$0xf]
      %v722 = vld [vmem:[%s342 + $0x334] sm:$0xf]
      %v723 = vld [vmem:[%s342 + $0x338] sm:$0xf]
      %v724 = vld [vmem:[%s342 + $0x33c] sm:$0xf]
      %v725 = vld [vmem:[%s342 + $0x340] sm:$0xf]
      %v726 = vld [vmem:[%s342 + $0x344] sm:$0xf]
      %v727 = vld [vmem:[%s342 + $0x348] sm:$0xf]
      %v728 = vld [vmem:[%s342 + $0x34c] sm:$0xf]
      %v729 = vld [vmem:[%s342 + $0x350] sm:$0xf]
      %v730 = vld [vmem:[%s342 + $0x354] sm:$0xf]
      %v731 = vld [vmem:[%s342 + $0x358] sm:$0xf]
      %v732 = vld [vmem:[%s342 + $0x35c] sm:$0xf]
      %v733 = vld [vmem:[%s342 + $0x360] sm:$0xf]
      %v734 = vld [vmem:[%s342 + $0x364] sm:$0xf]
      %v735 = vld [vmem:[%s342 + $0x368] sm:$0xf]
      %v736 = vld [vmem:[%s342 + $0x36c] sm:$0xf]
      %v737 = vld [vmem:[%s342 + $0x370] sm:$0xf]
      %v738 = vld [vmem:[%s342 + $0x374] sm:$0xf]
      %v739 = vld [vmem:[%s342 + $0x378] sm:$0xf]
      %v740 = vld [vmem:[%s342 + $0x37c] sm:$0xf]
      %v853 = vunpack.c.l.b16 %v405
      %v854 = vunpack.c.h.b16 %v405
      %v855 = vunpack.c.l.b16 %v406
      %v856 = vunpack.c.h.b16 %v406
      %v857 = vunpack.c.l.b16 %v407
      %v858 = vunpack.c.h.b16 %v407
      %v859 = vunpack.c.l.b16 %v408
      %v860 = vunpack.c.h.b16 %v408
      %v861 = vunpack.c.l.b16 %v409
      %v862 = vunpack.c.h.b16 %v409
      %v863 = vunpack.c.l.b16 %v410
      %v864 = vunpack.c.h.b16 %v410
      %v865 = vunpack.c.l.b16 %v411
      %v866 = vunpack.c.h.b16 %v411
      %v867 = vunpack.c.l.b16 %v412
      %v868 = vunpack.c.h.b16 %v412
      %v869 = vunpack.c.l.b16 %v413
      %v870 = vunpack.c.h.b16 %v413
      %v871 = vunpack.c.l.b16 %v414
      %v872 = vunpack.c.h.b16 %v414
      %v873 = vunpack.c.l.b16 %v415
      %v874 = vunpack.c.h.b16 %v415
      %v875 = vunpack.c.l.b16 %v416
      %v876 = vunpack.c.h.b16 %v416
      %v877 = vunpack.c.l.b16 %v417
      %v878 = vunpack.c.h.b16 %v417
      %v879 = vunpack.c.l.b16 %v418
      %v880 = vunpack.c.h.b16 %v418
      %v881 = vunpack.c.l.b16 %v419
      %v882 = vunpack.c.h.b16 %v419
      %v883 = vunpack.c.l.b16 %v420
      %v884 = vunpack.c.h.b16 %v420
      %v885 = vunpack.c.l.b16 %v421
      %v886 = vunpack.c.h.b16 %v421
      %v887 = vunpack.c.l.b16 %v422
      %v888 = vunpack.c.h.b16 %v422
      %v889 = vunpack.c.l.b16 %v423
      %v890 = vunpack.c.h.b16 %v423
      %v891 = vunpack.c.l.b16 %v424
      %v892 = vunpack.c.h.b16 %v424
      %v893 = vunpack.c.l.b16 %v425
      %v894 = vunpack.c.h.b16 %v425
      %v895 = vunpack.c.l.b16 %v426
      %v896 = vunpack.c.h.b16 %v426
      %v897 = vunpack.c.l.b16 %v427
      %v898 = vunpack.c.h.b16 %v427
      %v899 = vunpack.c.l.b16 %v428
      %v900 = vunpack.c.h.b16 %v428
      %v901 = vunpack.c.l.b16 %v429
      %v902 = vunpack.c.h.b16 %v429
      %v903 = vunpack.c.l.b16 %v430
      %v904 = vunpack.c.h.b16 %v430
      %v905 = vunpack.c.l.b16 %v431
      %v906 = vunpack.c.h.b16 %v431
      %v907 = vunpack.c.l.b16 %v432
      %v908 = vunpack.c.h.b16 %v432
      %v909 = vunpack.c.l.b16 %v433
      %v910 = vunpack.c.h.b16 %v433
      %v911 = vunpack.c.l.b16 %v434
      %v912 = vunpack.c.h.b16 %v434
      %v913 = vunpack.c.l.b16 %v435
      %v914 = vunpack.c.h.b16 %v435
      %v915 = vunpack.c.l.b16 %v436
      %v916 = vunpack.c.h.b16 %v436
      %v917 = vunpack.c.l.b16 %v437
      %v918 = vunpack.c.h.b16 %v437
      %v919 = vunpack.c.l.b16 %v438
      %v920 = vunpack.c.h.b16 %v438
      %v921 = vunpack.c.l.b16 %v439
      %v922 = vunpack.c.h.b16 %v439
      %v923 = vunpack.c.l.b16 %v440
      %v924 = vunpack.c.h.b16 %v440
      %v925 = vunpack.c.l.b16 %v441
      %v926 = vunpack.c.h.b16 %v441
      %v927 = vunpack.c.l.b16 %v442
      %v928 = vunpack.c.h.b16 %v442
      %v929 = vunpack.c.l.b16 %v443
      %v930 = vunpack.c.h.b16 %v443
      %v931 = vunpack.c.l.b16 %v444
      %v932 = vunpack.c.h.b16 %v444
      %v933 = vunpack.c.l.b16 %v445
      %v934 = vunpack.c.h.b16 %v445
      %v935 = vunpack.c.l.b16 %v446
      %v936 = vunpack.c.h.b16 %v446
      %v937 = vunpack.c.l.b16 %v447
      %v938 = vunpack.c.h.b16 %v447
      %v939 = vunpack.c.l.b16 %v448
      %v940 = vunpack.c.h.b16 %v448
      %v941 = vunpack.c.l.b16 %v449
      %v942 = vunpack.c.h.b16 %v449
      %v943 = vunpack.c.l.b16 %v450
      %v944 = vunpack.c.h.b16 %v450
      %v945 = vunpack.c.l.b16 %v451
      %v946 = vunpack.c.h.b16 %v451
      %v947 = vunpack.c.l.b16 %v452
      %v948 = vunpack.c.h.b16 %v452
      %v949 = vunpack.c.l.b16 %v453
      %v950 = vunpack.c.h.b16 %v453
      %v951 = vunpack.c.l.b16 %v454
      %v952 = vunpack.c.h.b16 %v454
      %v953 = vunpack.c.l.b16 %v455
      %v954 = vunpack.c.h.b16 %v455
      %v955 = vunpack.c.l.b16 %v456
      %v956 = vunpack.c.h.b16 %v456
      %v957 = vunpack.c.l.b16 %v457
      %v958 = vunpack.c.h.b16 %v457
      %v959 = vunpack.c.l.b16 %v458
      %v960 = vunpack.c.h.b16 %v458
      %v961 = vunpack.c.l.b16 %v459
      %v962 = vunpack.c.h.b16 %v459
      %v963 = vunpack.c.l.b16 %v460
      %v964 = vunpack.c.h.b16 %v460
      %v965 = vunpack.c.l.b16 %v461
      %v966 = vunpack.c.h.b16 %v461
      %v967 = vunpack.c.l.b16 %v462
      %v968 = vunpack.c.h.b16 %v462
      %v969 = vunpack.c.l.b16 %v463
      %v970 = vunpack.c.h.b16 %v463
      %v971 = vunpack.c.l.b16 %v464
      %v972 = vunpack.c.h.b16 %v464
      %v973 = vunpack.c.l.b16 %v465
      %v974 = vunpack.c.h.b16 %v465
      %v975 = vunpack.c.l.b16 %v466
      %v976 = vunpack.c.h.b16 %v466
      %v977 = vunpack.c.l.b16 %v467
      %v978 = vunpack.c.h.b16 %v467
      %v979 = vunpack.c.l.b16 %v468
      %v980 = vunpack.c.h.b16 %v468
      %v981 = vunpack.c.l.b16 %v469
      %v982 = vunpack.c.h.b16 %v469
      %v983 = vunpack.c.l.b16 %v470
      %v984 = vunpack.c.h.b16 %v470
      %v985 = vunpack.c.l.b16 %v471
      %v986 = vunpack.c.h.b16 %v471
      %v987 = vunpack.c.l.b16 %v472
      %v988 = vunpack.c.h.b16 %v472
      %v989 = vunpack.c.l.b16 %v473
      %v990 = vunpack.c.h.b16 %v473
      %v991 = vunpack.c.l.b16 %v474
      %v992 = vunpack.c.h.b16 %v474
      %v993 = vunpack.c.l.b16 %v475
      %v994 = vunpack.c.h.b16 %v475
      %v995 = vunpack.c.l.b16 %v476
      %v996 = vunpack.c.h.b16 %v476
      %v997 = vunpack.c.l.b16 %v477
      %v998 = vunpack.c.h.b16 %v477
      %v999 = vunpack.c.l.b16 %v478
      %v1000 = vunpack.c.h.b16 %v478
      %v1001 = vunpack.c.l.b16 %v479
      %v1002 = vunpack.c.h.b16 %v479
      %v1003 = vunpack.c.l.b16 %v480
      %v1004 = vunpack.c.h.b16 %v480
      %v1005 = vunpack.c.l.b16 %v481
      %v1006 = vunpack.c.h.b16 %v481
      %v1007 = vunpack.c.l.b16 %v482
      %v1008 = vunpack.c.h.b16 %v482
      %v1009 = vunpack.c.l.b16 %v483
      %v1010 = vunpack.c.h.b16 %v483
      %v1011 = vunpack.c.l.b16 %v484
      %v1012 = vunpack.c.h.b16 %v484
      %v1013 = vunpack.c.l.b16 %v485
      %v1014 = vunpack.c.h.b16 %v485
      %v1015 = vunpack.c.l.b16 %v486
      %v1016 = vunpack.c.h.b16 %v486
      %v1017 = vunpack.c.l.b16 %v487
      %v1018 = vunpack.c.h.b16 %v487
      %v1019 = vunpack.c.l.b16 %v488
      %v1020 = vunpack.c.h.b16 %v488
      %v1021 = vunpack.c.l.b16 %v489
      %v1022 = vunpack.c.h.b16 %v489
      %v1023 = vunpack.c.l.b16 %v490
      %v1024 = vunpack.c.h.b16 %v490
      %v1025 = vunpack.c.l.b16 %v491
      %v1026 = vunpack.c.h.b16 %v491
      %v1027 = vunpack.c.l.b16 %v492
      %v1028 = vunpack.c.h.b16 %v492
      %v1029 = vunpack.c.l.b16 %v493
      %v1030 = vunpack.c.h.b16 %v493
      %v1031 = vunpack.c.l.b16 %v494
      %v1032 = vunpack.c.h.b16 %v494
      %v1033 = vunpack.c.l.b16 %v495
      %v1034 = vunpack.c.h.b16 %v495
      %v1035 = vunpack.c.l.b16 %v496
      %v1036 = vunpack.c.h.b16 %v496
      %v1037 = vunpack.c.l.b16 %v497
      %v1038 = vunpack.c.h.b16 %v497
      %v1039 = vunpack.c.l.b16 %v498
      %v1040 = vunpack.c.h.b16 %v498
      %v1041 = vunpack.c.l.b16 %v499
      %v1042 = vunpack.c.h.b16 %v499
      %v1043 = vunpack.c.l.b16 %v500
      %v1044 = vunpack.c.h.b16 %v500
      %v1045 = vunpack.c.l.b16 %v501
      %v1046 = vunpack.c.h.b16 %v501
      %v1047 = vunpack.c.l.b16 %v502
      %v1048 = vunpack.c.h.b16 %v502
      %v1049 = vunpack.c.l.b16 %v503
      %v1050 = vunpack.c.h.b16 %v503
      %v1051 = vunpack.c.l.b16 %v504
      %v1052 = vunpack.c.h.b16 %v504
      %v1053 = vunpack.c.l.b16 %v505
      %v1054 = vunpack.c.h.b16 %v505
      %v1055 = vunpack.c.l.b16 %v506
      %v1056 = vunpack.c.h.b16 %v506
      %v1057 = vunpack.c.l.b16 %v507
      %v1058 = vunpack.c.h.b16 %v507
      %v1059 = vunpack.c.l.b16 %v508
      %v1060 = vunpack.c.h.b16 %v508
      %v1061 = vunpack.c.l.b16 %v509
      %v1062 = vunpack.c.h.b16 %v509
      %v1063 = vunpack.c.l.b16 %v510
      %v1064 = vunpack.c.h.b16 %v510
      %v1065 = vunpack.c.l.b16 %v511
      %v1066 = vunpack.c.h.b16 %v511
      %v1067 = vunpack.c.l.b16 %v512
      %v1068 = vunpack.c.h.b16 %v512
      %v1069 = vunpack.c.l.b16 %v513
      %v1070 = vunpack.c.h.b16 %v513
      %v1071 = vunpack.c.l.b16 %v514
      %v1072 = vunpack.c.h.b16 %v514
      %v1073 = vunpack.c.l.b16 %v515
      %v1074 = vunpack.c.h.b16 %v515
      %v1075 = vunpack.c.l.b16 %v516
      %v1076 = vunpack.c.h.b16 %v516
      %v1077 = vpack.c.b16 %v867, %v853
      %v1078 = vpack.c.b16 %v868, %v854
      %v1079 = vpack.c.b16 %v869, %v855
      %v1080 = vpack.c.b16 %v870, %v856
      %v1081 = vpack.c.b16 %v871, %v857
      %v1082 = vpack.c.b16 %v872, %v858
      %v1083 = vpack.c.b16 %v873, %v859
      %v1084 = vpack.c.b16 %v874, %v860
      %v1085 = vpack.c.b16 %v875, %v861
      %v1086 = vpack.c.b16 %v876, %v862
      %v1087 = vpack.c.b16 %v877, %v863
      %v1088 = vpack.c.b16 %v878, %v864
      %v1089 = vpack.c.b16 %v879, %v865
      %v1090 = vpack.c.b16 %v880, %v866
      %v1091 = vpack.c.b16 %v895, %v881
      %v1092 = vpack.c.b16 %v896, %v882
      %v1093 = vpack.c.b16 %v897, %v883
      %v1094 = vpack.c.b16 %v898, %v884
      %v1095 = vpack.c.b16 %v899, %v885
      %v1096 = vpack.c.b16 %v900, %v886
      %v1097 = vpack.c.b16 %v901, %v887
      %v1098 = vpack.c.b16 %v902, %v888
      %v1099 = vpack.c.b16 %v903, %v889
      %v1100 = vpack.c.b16 %v904, %v890
      %v1101 = vpack.c.b16 %v905, %v891
      %v1102 = vpack.c.b16 %v906, %v892
      %v1103 = vpack.c.b16 %v907, %v893
      %v1104 = vpack.c.b16 %v908, %v894
      %v1105 = vpack.c.b16 %v923, %v909
      %v1106 = vpack.c.b16 %v924, %v910
      %v1107 = vpack.c.b16 %v925, %v911
      %v1108 = vpack.c.b16 %v926, %v912
      %v1109 = vpack.c.b16 %v927, %v913
      %v1110 = vpack.c.b16 %v928, %v914
      %v1111 = vpack.c.b16 %v929, %v915
      %v1112 = vpack.c.b16 %v930, %v916
      %v1113 = vpack.c.b16 %v931, %v917
      %v1114 = vpack.c.b16 %v932, %v918
      %v1115 = vpack.c.b16 %v933, %v919
      %v1116 = vpack.c.b16 %v934, %v920
      %v1117 = vpack.c.b16 %v935, %v921
      %v1118 = vpack.c.b16 %v936, %v922
      %v1119 = vpack.c.b16 %v951, %v937
      %v1120 = vpack.c.b16 %v952, %v938
      %v1121 = vpack.c.b16 %v953, %v939
      %v1122 = vpack.c.b16 %v954, %v940
      %v1123 = vpack.c.b16 %v955, %v941
      %v1124 = vpack.c.b16 %v956, %v942
      %v1125 = vpack.c.b16 %v957, %v943
      %v1126 = vpack.c.b16 %v958, %v944
      %v1127 = vpack.c.b16 %v959, %v945
      %v1128 = vpack.c.b16 %v960, %v946
      %v1129 = vpack.c.b16 %v961, %v947
      %v1130 = vpack.c.b16 %v962, %v948
      %v1131 = vpack.c.b16 %v963, %v949
      %v1132 = vpack.c.b16 %v964, %v950
      %v1133 = vpack.c.b16 %v979, %v965
      %v1134 = vpack.c.b16 %v980, %v966
      %v1135 = vpack.c.b16 %v981, %v967
      %v1136 = vpack.c.b16 %v982, %v968
      %v1137 = vpack.c.b16 %v983, %v969
      %v1138 = vpack.c.b16 %v984, %v970
      %v1139 = vpack.c.b16 %v985, %v971
      %v1140 = vpack.c.b16 %v986, %v972
      %v1141 = vpack.c.b16 %v987, %v973
      %v1142 = vpack.c.b16 %v988, %v974
      %v1143 = vpack.c.b16 %v989, %v975
      %v1144 = vpack.c.b16 %v990, %v976
      %v1145 = vpack.c.b16 %v991, %v977
      %v1146 = vpack.c.b16 %v992, %v978
      %v1147 = vpack.c.b16 %v1007, %v993
      %v1148 = vpack.c.b16 %v1008, %v994
      %v1149 = vpack.c.b16 %v1009, %v995
      %v1150 = vpack.c.b16 %v1010, %v996
      %v1151 = vpack.c.b16 %v1011, %v997
      %v1152 = vpack.c.b16 %v1012, %v998
      %v1153 = vpack.c.b16 %v1013, %v999
      %v1154 = vpack.c.b16 %v1014, %v1000
      %v1155 = vpack.c.b16 %v1015, %v1001
      %v1156 = vpack.c.b16 %v1016, %v1002
      %v1157 = vpack.c.b16 %v1017, %v1003
      %v1158 = vpack.c.b16 %v1018, %v1004
      %v1159 = vpack.c.b16 %v1019, %v1005
      %v1160 = vpack.c.b16 %v1020, %v1006
      %v1161 = vpack.c.b16 %v1035, %v1021
      %v1162 = vpack.c.b16 %v1036, %v1022
      %v1163 = vpack.c.b16 %v1037, %v1023
      %v1164 = vpack.c.b16 %v1038, %v1024
      %v1165 = vpack.c.b16 %v1039, %v1025
      %v1166 = vpack.c.b16 %v1040, %v1026
      %v1167 = vpack.c.b16 %v1041, %v1027
      %v1168 = vpack.c.b16 %v1042, %v1028
      %v1169 = vpack.c.b16 %v1043, %v1029
      %v1170 = vpack.c.b16 %v1044, %v1030
      %v1171 = vpack.c.b16 %v1045, %v1031
      %v1172 = vpack.c.b16 %v1046, %v1032
      %v1173 = vpack.c.b16 %v1047, %v1033
      %v1174 = vpack.c.b16 %v1048, %v1034
      %v1175 = vpack.c.b16 %v1063, %v1049
      %v1176 = vpack.c.b16 %v1064, %v1050
      %v1177 = vpack.c.b16 %v1065, %v1051
      %v1178 = vpack.c.b16 %v1066, %v1052
      %v1179 = vpack.c.b16 %v1067, %v1053
      %v1180 = vpack.c.b16 %v1068, %v1054
      %v1181 = vpack.c.b16 %v1069, %v1055
      %v1182 = vpack.c.b16 %v1070, %v1056
      %v1183 = vpack.c.b16 %v1071, %v1057
      %v1184 = vpack.c.b16 %v1072, %v1058
      %v1185 = vpack.c.b16 %v1073, %v1059
      %v1186 = vpack.c.b16 %v1074, %v1060
      %v1187 = vpack.c.b16 %v1075, %v1061
      %v1188 = vpack.c.b16 %v1076, %v1062
      %v1525 = vunpack.c.l.b16 %v517
      %v1526 = vunpack.c.l.b16 %v518
      %v1527 = vunpack.c.l.b16 %v519
      %v1528 = vunpack.c.l.b16 %v520
      %v1529 = vunpack.c.l.b16 %v521
      %v1530 = vunpack.c.l.b16 %v522
      %v1531 = vunpack.c.l.b16 %v523
      %v1532 = vunpack.c.l.b16 %v524
      %v1533 = vunpack.c.l.b16 %v525
      %v1534 = vunpack.c.l.b16 %v526
      %v1535 = vunpack.c.l.b16 %v527
      %v1536 = vunpack.c.l.b16 %v528
      %v1537 = vunpack.c.l.b16 %v529
      %v1538 = vunpack.c.l.b16 %v530
      %v1539 = vunpack.c.l.b16 %v531
      %v1540 = vunpack.c.l.b16 %v532
      %v1541 = vunpack.c.l.b16 %v533
      %v1542 = vunpack.c.l.b16 %v534
      %v1543 = vunpack.c.l.b16 %v535
      %v1544 = vunpack.c.l.b16 %v536
      %v1545 = vunpack.c.l.b16 %v537
      %v1546 = vunpack.c.l.b16 %v538
      %v1547 = vunpack.c.l.b16 %v539
      %v1548 = vunpack.c.l.b16 %v540
      %v1549 = vunpack.c.l.b16 %v541
      %v1550 = vunpack.c.l.b16 %v542
      %v1551 = vunpack.c.l.b16 %v543
      %v1552 = vunpack.c.l.b16 %v544
      %v1553 = vunpack.c.l.b16 %v545
      %v1554 = vunpack.c.l.b16 %v546
      %v1555 = vunpack.c.l.b16 %v547
      %v1556 = vunpack.c.l.b16 %v548
      %v1557 = vunpack.c.l.b16 %v549
      %v1558 = vunpack.c.l.b16 %v550
      %v1559 = vunpack.c.l.b16 %v551
      %v1560 = vunpack.c.l.b16 %v552
      %v1561 = vunpack.c.l.b16 %v553
      %v1562 = vunpack.c.l.b16 %v554
      %v1563 = vunpack.c.l.b16 %v555
      %v1564 = vunpack.c.l.b16 %v556
      %v1565 = vunpack.c.l.b16 %v557
      %v1566 = vunpack.c.l.b16 %v558
      %v1567 = vunpack.c.l.b16 %v559
      %v1568 = vunpack.c.l.b16 %v560
      %v1569 = vunpack.c.l.b16 %v561
      %v1570 = vunpack.c.l.b16 %v562
      %v1571 = vunpack.c.l.b16 %v563
      %v1572 = vunpack.c.l.b16 %v564
      %v1573 = vunpack.c.l.b16 %v565
      %v1574 = vunpack.c.l.b16 %v566
      %v1575 = vunpack.c.l.b16 %v567
      %v1576 = vunpack.c.l.b16 %v568
      %v1577 = vunpack.c.l.b16 %v569
      %v1578 = vunpack.c.l.b16 %v570
      %v1579 = vunpack.c.l.b16 %v571
      %v1580 = vunpack.c.l.b16 %v572
      %v1581 = vunpack.c.l.b16 %v573
      %v1582 = vunpack.c.l.b16 %v574
      %v1583 = vunpack.c.l.b16 %v575
      %v1584 = vunpack.c.l.b16 %v576
      %v1585 = vunpack.c.l.b16 %v577
      %v1586 = vunpack.c.l.b16 %v578
      %v1587 = vunpack.c.l.b16 %v579
      %v1588 = vunpack.c.l.b16 %v580
      %v1589 = vunpack.c.l.b16 %v581
      %v1590 = vunpack.c.l.b16 %v582
      %v1591 = vunpack.c.l.b16 %v583
      %v1592 = vunpack.c.l.b16 %v584
      %v1593 = vunpack.c.l.b16 %v585
      %v1594 = vunpack.c.l.b16 %v586
      %v1595 = vunpack.c.l.b16 %v587
      %v1596 = vunpack.c.l.b16 %v588
      %v1597 = vunpack.c.l.b16 %v589
      %v1598 = vunpack.c.l.b16 %v590
      %v1599 = vunpack.c.l.b16 %v591
      %v1600 = vunpack.c.l.b16 %v592
      %v1601 = vunpack.c.l.b16 %v593
      %v1602 = vunpack.c.l.b16 %v594
      %v1603 = vunpack.c.l.b16 %v595
      %v1604 = vunpack.c.l.b16 %v596
      %v1605 = vunpack.c.l.b16 %v597
      %v1606 = vunpack.c.l.b16 %v598
      %v1607 = vunpack.c.l.b16 %v599
      %v1608 = vunpack.c.l.b16 %v600
      %v1609 = vunpack.c.l.b16 %v601
      %v1610 = vunpack.c.l.b16 %v602
      %v1611 = vunpack.c.l.b16 %v603
      %v1612 = vunpack.c.l.b16 %v604
      %v1613 = vunpack.c.l.b16 %v605
      %v1614 = vunpack.c.l.b16 %v606
      %v1615 = vunpack.c.l.b16 %v607
      %v1616 = vunpack.c.l.b16 %v608
      %v1617 = vunpack.c.l.b16 %v609
      %v1618 = vunpack.c.l.b16 %v610
      %v1619 = vunpack.c.l.b16 %v611
      %v1620 = vunpack.c.l.b16 %v612
      %v1621 = vunpack.c.l.b16 %v613
      %v1622 = vunpack.c.l.b16 %v614
      %v1623 = vunpack.c.l.b16 %v615
      %v1624 = vunpack.c.l.b16 %v616
      %v1625 = vunpack.c.l.b16 %v617
      %v1626 = vunpack.c.l.b16 %v618
      %v1627 = vunpack.c.l.b16 %v619
      %v1628 = vunpack.c.l.b16 %v620
      %v1629 = vunpack.c.l.b16 %v621
      %v1630 = vunpack.c.l.b16 %v622
      %v1631 = vunpack.c.l.b16 %v623
      %v1632 = vunpack.c.l.b16 %v624
      %v1633 = vunpack.c.l.b16 %v625
      %v1634 = vunpack.c.l.b16 %v626
      %v1635 = vunpack.c.l.b16 %v627
      %v1636 = vunpack.c.l.b16 %v628
      %v1637 = vunpack.c.l.b16 %v629
      %v1638 = vunpack.c.l.b16 %v630
      %v1639 = vunpack.c.l.b16 %v631
      %v1640 = vunpack.c.l.b16 %v632
      %v1641 = vunpack.c.l.b16 %v633
      %v1642 = vunpack.c.l.b16 %v634
      %v1643 = vunpack.c.l.b16 %v635
      %v1644 = vunpack.c.l.b16 %v636
      %v1645 = vunpack.c.l.b16 %v637
      %v1646 = vunpack.c.l.b16 %v638
      %v1647 = vunpack.c.l.b16 %v639
      %v1648 = vunpack.c.l.b16 %v640
      %v1649 = vunpack.c.l.b16 %v641
      %v1650 = vunpack.c.l.b16 %v642
      %v1651 = vunpack.c.l.b16 %v643
      %v1652 = vunpack.c.l.b16 %v644
      %v1653 = vunpack.c.l.b16 %v645
      %v1654 = vunpack.c.l.b16 %v646
      %v1655 = vunpack.c.l.b16 %v647
      %v1656 = vunpack.c.l.b16 %v648
      %v1657 = vunpack.c.l.b16 %v649
      %v1658 = vunpack.c.l.b16 %v650
      %v1659 = vunpack.c.l.b16 %v651
      %v1660 = vunpack.c.l.b16 %v652
      %v1661 = vunpack.c.l.b16 %v653
      %v1662 = vunpack.c.l.b16 %v654
      %v1663 = vunpack.c.l.b16 %v655
      %v1664 = vunpack.c.l.b16 %v656
      %v1665 = vunpack.c.l.b16 %v657
      %v1666 = vunpack.c.l.b16 %v658
      %v1667 = vunpack.c.l.b16 %v659
      %v1668 = vunpack.c.l.b16 %v660
      %v1669 = vunpack.c.l.b16 %v661
      %v1670 = vunpack.c.l.b16 %v662
      %v1671 = vunpack.c.l.b16 %v663
      %v1672 = vunpack.c.l.b16 %v664
      %v1673 = vunpack.c.l.b16 %v665
      %v1674 = vunpack.c.l.b16 %v666
      %v1675 = vunpack.c.l.b16 %v667
      %v1676 = vunpack.c.l.b16 %v668
      %v1677 = vunpack.c.l.b16 %v669
      %v1678 = vunpack.c.l.b16 %v670
      %v1679 = vunpack.c.l.b16 %v671
      %v1680 = vunpack.c.l.b16 %v672
      %v1681 = vunpack.c.l.b16 %v673
      %v1682 = vunpack.c.l.b16 %v674
      %v1683 = vunpack.c.l.b16 %v675
      %v1684 = vunpack.c.l.b16 %v676
      %v1685 = vunpack.c.l.b16 %v677
      %v1686 = vunpack.c.l.b16 %v678
      %v1687 = vunpack.c.l.b16 %v679
      %v1688 = vunpack.c.l.b16 %v680
      %v1689 = vunpack.c.l.b16 %v681
      %v1690 = vunpack.c.l.b16 %v682
      %v1691 = vunpack.c.l.b16 %v683
      %v1692 = vunpack.c.l.b16 %v684
      %v1693 = vunpack.c.l.b16 %v685
      %v1694 = vunpack.c.l.b16 %v686
      %v1695 = vunpack.c.l.b16 %v687
      %v1696 = vunpack.c.l.b16 %v688
      %v1697 = vunpack.c.l.b16 %v689
      %v1698 = vunpack.c.l.b16 %v690
      %v1699 = vunpack.c.l.b16 %v691
      %v1700 = vunpack.c.l.b16 %v692
      %v1701 = vunpack.c.l.b16 %v693
      %v1702 = vunpack.c.l.b16 %v694
      %v1703 = vunpack.c.l.b16 %v695
      %v1704 = vunpack.c.l.b16 %v696
      %v1705 = vunpack.c.l.b16 %v697
      %v1706 = vunpack.c.l.b16 %v698
      %v1707 = vunpack.c.l.b16 %v699
      %v1708 = vunpack.c.l.b16 %v700
      %v1709 = vunpack.c.l.b16 %v701
      %v1710 = vunpack.c.l.b16 %v702
      %v1711 = vunpack.c.l.b16 %v703
      %v1712 = vunpack.c.l.b16 %v704
      %v1713 = vunpack.c.l.b16 %v705
      %v1714 = vunpack.c.l.b16 %v706
      %v1715 = vunpack.c.l.b16 %v707
      %v1716 = vunpack.c.l.b16 %v708
      %v1717 = vunpack.c.l.b16 %v709
      %v1718 = vunpack.c.l.b16 %v710
      %v1719 = vunpack.c.l.b16 %v711
      %v1720 = vunpack.c.l.b16 %v712
      %v1721 = vunpack.c.l.b16 %v713
      %v1722 = vunpack.c.l.b16 %v714
      %v1723 = vunpack.c.l.b16 %v715
      %v1724 = vunpack.c.l.b16 %v716
      %v1725 = vunpack.c.l.b16 %v717
      %v1726 = vunpack.c.l.b16 %v718
      %v1727 = vunpack.c.l.b16 %v719
      %v1728 = vunpack.c.l.b16 %v720
      %v1729 = vunpack.c.l.b16 %v721
      %v1730 = vunpack.c.l.b16 %v722
      %v1731 = vunpack.c.l.b16 %v723
      %v1732 = vunpack.c.l.b16 %v724
      %v1733 = vunpack.c.l.b16 %v725
      %v1734 = vunpack.c.l.b16 %v726
      %v1735 = vunpack.c.l.b16 %v727
      %v1736 = vunpack.c.l.b16 %v728
      %v1737 = vunpack.c.l.b16 %v729
      %v1738 = vunpack.c.l.b16 %v730
      %v1739 = vunpack.c.l.b16 %v731
      %v1740 = vunpack.c.l.b16 %v732
      %v1741 = vunpack.c.l.b16 %v733
      %v1742 = vunpack.c.l.b16 %v734
      %v1743 = vunpack.c.l.b16 %v735
      %v1744 = vunpack.c.l.b16 %v736
      %v1745 = vunpack.c.l.b16 %v737
      %v1746 = vunpack.c.l.b16 %v738
      %v1747 = vunpack.c.l.b16 %v739
      %v1748 = vunpack.c.l.b16 %v740
      %v1749 = vpack.c.b16 %v1526, %v1525
      %v1750 = vpack.c.b16 %v1528, %v1527
      %v1751 = vpack.c.b16 %v1530, %v1529
      %v1752 = vpack.c.b16 %v1532, %v1531
      %v1753 = vpack.c.b16 %v1534, %v1533
      %v1754 = vpack.c.b16 %v1536, %v1535
      %v1755 = vpack.c.b16 %v1538, %v1537
      %v1756 = vpack.c.b16 %v1540, %v1539
      %v1757 = vpack.c.b16 %v1542, %v1541
      %v1758 = vpack.c.b16 %v1544, %v1543
      %v1759 = vpack.c.b16 %v1546, %v1545
      %v1760 = vpack.c.b16 %v1548, %v1547
      %v1761 = vpack.c.b16 %v1550, %v1549
      %v1762 = vpack.c.b16 %v1552, %v1551
      %v1763 = vpack.c.b16 %v1554, %v1553
      %v1764 = vpack.c.b16 %v1556, %v1555
      %v1765 = vpack.c.b16 %v1558, %v1557
      %v1766 = vpack.c.b16 %v1560, %v1559
      %v1767 = vpack.c.b16 %v1562, %v1561
      %v1768 = vpack.c.b16 %v1564, %v1563
      %v1769 = vpack.c.b16 %v1566, %v1565
      %v1770 = vpack.c.b16 %v1568, %v1567
      %v1771 = vpack.c.b16 %v1570, %v1569
      %v1772 = vpack.c.b16 %v1572, %v1571
      %v1773 = vpack.c.b16 %v1574, %v1573
      %v1774 = vpack.c.b16 %v1576, %v1575
      %v1775 = vpack.c.b16 %v1578, %v1577
      %v1776 = vpack.c.b16 %v1580, %v1579
      %v1777 = vpack.c.b16 %v1582, %v1581
      %v1778 = vpack.c.b16 %v1584, %v1583
      %v1779 = vpack.c.b16 %v1586, %v1585
      %v1780 = vpack.c.b16 %v1588, %v1587
      %v1781 = vpack.c.b16 %v1590, %v1589
      %v1782 = vpack.c.b16 %v1592, %v1591
      %v1783 = vpack.c.b16 %v1594, %v1593
      %v1784 = vpack.c.b16 %v1596, %v1595
      %v1785 = vpack.c.b16 %v1598, %v1597
      %v1786 = vpack.c.b16 %v1600, %v1599
      %v1787 = vpack.c.b16 %v1602, %v1601
      %v1788 = vpack.c.b16 %v1604, %v1603
      %v1789 = vpack.c.b16 %v1606, %v1605
      %v1790 = vpack.c.b16 %v1608, %v1607
      %v1791 = vpack.c.b16 %v1610, %v1609
      %v1792 = vpack.c.b16 %v1612, %v1611
      %v1793 = vpack.c.b16 %v1614, %v1613
      %v1794 = vpack.c.b16 %v1616, %v1615
      %v1795 = vpack.c.b16 %v1618, %v1617
      %v1796 = vpack.c.b16 %v1620, %v1619
      %v1797 = vpack.c.b16 %v1622, %v1621
      %v1798 = vpack.c.b16 %v1624, %v1623
      %v1799 = vpack.c.b16 %v1626, %v1625
      %v1800 = vpack.c.b16 %v1628, %v1627
      %v1801 = vpack.c.b16 %v1630, %v1629
      %v1802 = vpack.c.b16 %v1632, %v1631
      %v1803 = vpack.c.b16 %v1634, %v1633
      %v1804 = vpack.c.b16 %v1636, %v1635
      %v1805 = vpack.c.b16 %v1638, %v1637
      %v1806 = vpack.c.b16 %v1640, %v1639
      %v1807 = vpack.c.b16 %v1642, %v1641
      %v1808 = vpack.c.b16 %v1644, %v1643
      %v1809 = vpack.c.b16 %v1646, %v1645
      %v1810 = vpack.c.b16 %v1648, %v1647
      %v1811 = vpack.c.b16 %v1650, %v1649
      %v1812 = vpack.c.b16 %v1652, %v1651
      %v1813 = vpack.c.b16 %v1654, %v1653
      %v1814 = vpack.c.b16 %v1656, %v1655
      %v1815 = vpack.c.b16 %v1658, %v1657
      %v1816 = vpack.c.b16 %v1660, %v1659
      %v1817 = vpack.c.b16 %v1662, %v1661
      %v1818 = vpack.c.b16 %v1664, %v1663
      %v1819 = vpack.c.b16 %v1666, %v1665
      %v1820 = vpack.c.b16 %v1668, %v1667
      %v1821 = vpack.c.b16 %v1670, %v1669
      %v1822 = vpack.c.b16 %v1672, %v1671
      %v1823 = vpack.c.b16 %v1674, %v1673
      %v1824 = vpack.c.b16 %v1676, %v1675
      %v1825 = vpack.c.b16 %v1678, %v1677
      %v1826 = vpack.c.b16 %v1680, %v1679
      %v1827 = vpack.c.b16 %v1682, %v1681
      %v1828 = vpack.c.b16 %v1684, %v1683
      %v1829 = vpack.c.b16 %v1686, %v1685
      %v1830 = vpack.c.b16 %v1688, %v1687
      %v1831 = vpack.c.b16 %v1690, %v1689
      %v1832 = vpack.c.b16 %v1692, %v1691
      %v1833 = vpack.c.b16 %v1694, %v1693
      %v1834 = vpack.c.b16 %v1696, %v1695
      %v1835 = vpack.c.b16 %v1698, %v1697
      %v1836 = vpack.c.b16 %v1700, %v1699
      %v1837 = vpack.c.b16 %v1702, %v1701
      %v1838 = vpack.c.b16 %v1704, %v1703
      %v1839 = vpack.c.b16 %v1706, %v1705
      %v1840 = vpack.c.b16 %v1708, %v1707
      %v1841 = vpack.c.b16 %v1710, %v1709
      %v1842 = vpack.c.b16 %v1712, %v1711
      %v1843 = vpack.c.b16 %v1714, %v1713
      %v1844 = vpack.c.b16 %v1716, %v1715
      %v1845 = vpack.c.b16 %v1718, %v1717
      %v1846 = vpack.c.b16 %v1720, %v1719
      %v1847 = vpack.c.b16 %v1722, %v1721
      %v1848 = vpack.c.b16 %v1724, %v1723
      %v1849 = vpack.c.b16 %v1726, %v1725
      %v1850 = vpack.c.b16 %v1728, %v1727
      %v1851 = vpack.c.b16 %v1730, %v1729
      %v1852 = vpack.c.b16 %v1732, %v1731
      %v1853 = vpack.c.b16 %v1734, %v1733
      %v1854 = vpack.c.b16 %v1736, %v1735
      %v1855 = vpack.c.b16 %v1738, %v1737
      %v1856 = vpack.c.b16 %v1740, %v1739
      %v1857 = vpack.c.b16 %v1742, %v1741
      %v1858 = vpack.c.b16 %v1744, %v1743
      %v1859 = vpack.c.b16 %v1746, %v1745
      %v1860 = vpack.c.b16 %v1748, %v1747
      %1973 = vmatprep.subr.bf16.mxu0 0
      %1974 = vmatpush1.bf16.msra.mxu0 %v1756
      %1975 = vmatprep.subr.bf16.mxu0 0
      %1976 = vmatpush1.bf16.msra.mxu0 %v1755
      %1977 = vmatprep.subr.bf16.mxu0 0
      %1978 = vmatpush1.bf16.msra.mxu0 %v1754
      %1979 = vmatprep.subr.bf16.mxu0 0
      %1980 = vmatpush1.bf16.msra.mxu0 %v1753
      %1981 = vmatprep.subr.bf16.mxu0 0
      %1982 = vmatpush1.bf16.msra.mxu0 %v1752
      %1983 = vmatprep.subr.bf16.mxu0 0
      %1984 = vmatpush1.bf16.msra.mxu0 %v1751
      %1985 = vmatprep.subr.bf16.mxu0 0
      %1986 = vmatpush1.bf16.msra.mxu0 %v1750
      %1987 = vmatprep.subr.bf16.mxu0 0
      %1988 = vmatpush1.bf16.msra.mxu0 %v1749
      %1989 = vmatprep.subr.bf16.mxu0 0
      %1990 = vmatpush2.bf16.msra.mxu0 %v1764
      %1991 = vmatprep.subr.bf16.mxu0 0
      %1992 = vmatpush2.bf16.msra.mxu0 %v1763
      %1993 = vmatprep.subr.bf16.mxu0 0
      %1994 = vmatpush2.bf16.msra.mxu0 %v1762
      %1995 = vmatprep.subr.bf16.mxu0 0
      %1996 = vmatpush2.bf16.msra.mxu0 %v1761
      %1997 = vmatprep.subr.bf16.mxu0 0
      %1998 = vmatpush2.bf16.msra.mxu0 %v1760
      %1999 = vmatprep.subr.bf16.mxu0 0
      %2000 = vmatpush2.bf16.msra.mxu0 %v1759
      %2001 = vmatprep.subr.bf16.mxu0 0
      %2002 = vmatpush2.bf16.msra.mxu0 %v1758
      %2003 = vmatprep.subr.bf16.mxu0 0
      %2004 = vmatpush2.bf16.msra.mxu0 %v1757
      %2005 = vmatprep.mubr.bf16.mxu0 %v1078
      %2006 = vmatmul.mubr.bf16.gmra.mxu0 %v1077
      %v2007 = vpop.f32.mrf.mxu0
      %v2008 = vadd.f32 0.0, %v2007
      %v2009 = vpop.f32.mrf.mxu0
      %v2010 = vpop.f32.mrf.mxu0
      %v2011 = vadd.f32 0.0, %v2010
      %v2012 = vpop.f32.mrf.mxu0
      %2013 = vmatprep.mubr.bf16.mxu0 %v1092
      %2014 = vmatmul.mubr.bf16.gmra.mxu0 %v1091
      %v2015 = vpop.f32.mrf.mxu0
      %v2016 = vadd.f32 0.0, %v2015
      %v2017 = vpop.f32.mrf.mxu0
      %v2018 = vpop.f32.mrf.mxu0
      %v2019 = vadd.f32 0.0, %v2018
      %v2020 = vpop.f32.mrf.mxu0
      %2021 = vmatprep.mubr.bf16.mxu0 %v1106
      %2022 = vmatmul.mubr.bf16.gmra.mxu0 %v1105
      %v2023 = vpop.f32.mrf.mxu0
      %v2024 = vadd.f32 0.0, %v2023
      %v2025 = vpop.f32.mrf.mxu0
      %v2026 = vpop.f32.mrf.mxu0
      %v2027 = vadd.f32 0.0, %v2026
      %v2028 = vpop.f32.mrf.mxu0
      %2029 = vmatprep.mubr.bf16.mxu0 %v1120
      %2030 = vmatmul.mubr.bf16.gmra.mxu0 %v1119
      %v2031 = vpop.f32.mrf.mxu0
      %v2032 = vadd.f32 0.0, %v2031
      %v2033 = vpop.f32.mrf.mxu0
      %v2034 = vpop.f32.mrf.mxu0
      %v2035 = vadd.f32 0.0, %v2034
      %v2036 = vpop.f32.mrf.mxu0
      %2037 = vmatprep.mubr.bf16.mxu0 %v1134
      %2038 = vmatmul.mubr.bf16.gmra.mxu0 %v1133
      %v2039 = vpop.f32.mrf.mxu0
      %v2040 = vadd.f32 0.0, %v2039
      %v2041 = vpop.f32.mrf.mxu0
      %v2042 = vpop.f32.mrf.mxu0
      %v2043 = vadd.f32 0.0, %v2042
      %v2044 = vpop.f32.mrf.mxu0
      %2045 = vmatprep.mubr.bf16.mxu0 %v1148
      %2046 = vmatmul.mubr.bf16.gmra.mxu0 %v1147
      %v2047 = vpop.f32.mrf.mxu0
      %v2048 = vadd.f32 0.0, %v2047
      %v2049 = vpop.f32.mrf.mxu0
      %v2050 = vpop.f32.mrf.mxu0
      %v2051 = vadd.f32 0.0, %v2050
      %v2052 = vpop.f32.mrf.mxu0
      %2053 = vmatprep.mubr.bf16.mxu0 %v1162
      %2054 = vmatmul.mubr.bf16.gmra.mxu0 %v1161
      %v2055 = vpop.f32.mrf.mxu0
      %v2056 = vadd.f32 0.0, %v2055
      %v2057 = vpop.f32.mrf.mxu0
      %v2058 = vpop.f32.mrf.mxu0
      %v2059 = vadd.f32 0.0, %v2058
      %v2060 = vpop.f32.mrf.mxu0
      %2061 = vmatprep.mubr.bf16.mxu0 %v1176
      %2062 = vmatmul.mubr.bf16.gmra.mxu0 %v1175
      %v2063 = vpop.f32.mrf.mxu0
      %v2064 = vadd.f32 0.0, %v2063
      %v2065 = vpop.f32.mrf.mxu0
      %v2066 = vpop.f32.mrf.mxu0
      %v2067 = vadd.f32 0.0, %v2066
      %v2068 = vpop.f32.mrf.mxu0
      %2069 = vdwg.mxu0
      %2070 = vmatprep.subr.bf16.mxu0 0
      %2071 = vmatpush1.bf16.msra.mxu0 %v1772
      %2072 = vmatprep.subr.bf16.mxu0 0
      %2073 = vmatpush1.bf16.msra.mxu0 %v1771
      %2074 = vmatprep.subr.bf16.mxu0 0
      %2075 = vmatpush1.bf16.msra.mxu0 %v1770
      %2076 = vmatprep.subr.bf16.mxu0 0
      %2077 = vmatpush1.bf16.msra.mxu0 %v1769
      %2078 = vmatprep.subr.bf16.mxu0 0
      %2079 = vmatpush1.bf16.msra.mxu0 %v1768
      %2080 = vmatprep.subr.bf16.mxu0 0
      %2081 = vmatpush1.bf16.msra.mxu0 %v1767
      %2082 = vmatprep.subr.bf16.mxu0 0
      %2083 = vmatpush1.bf16.msra.mxu0 %v1766
      %2084 = vmatprep.subr.bf16.mxu0 0
      %2085 = vmatpush1.bf16.msra.mxu0 %v1765
      %2086 = vmatprep.subr.bf16.mxu0 0
      %2087 = vmatpush2.bf16.msra.mxu0 %v1780
      %2088 = vmatprep.subr.bf16.mxu0 0
      %2089 = vmatpush2.bf16.msra.mxu0 %v1779
      %2090 = vmatprep.subr.bf16.mxu0 0
      %2091 = vmatpush2.bf16.msra.mxu0 %v1778
      %2092 = vmatprep.subr.bf16.mxu0 0
      %2093 = vmatpush2.bf16.msra.mxu0 %v1777
      %2094 = vmatprep.subr.bf16.mxu0 0
      %2095 = vmatpush2.bf16.msra.mxu0 %v1776
      %2096 = vmatprep.subr.bf16.mxu0 0
      %2097 = vmatpush2.bf16.msra.mxu0 %v1775
      %2098 = vmatprep.subr.bf16.mxu0 0
      %2099 = vmatpush2.bf16.msra.mxu0 %v1774
      %2100 = vmatprep.subr.bf16.mxu0 0
      %2101 = vmatpush2.bf16.msra.mxu0 %v1773
      %2102 = vmatprep.mubr.bf16.mxu0 %v1080
      %2103 = vmatmul.mubr.bf16.gmra.mxu0 %v1079
      %v2104 = vpop.f32.mrf.mxu0
      %v2105 = vadd.f32 %v2008, %v2104
      %v2106 = vpop.f32.mrf.mxu0
      %v2107 = vpop.f32.mrf.mxu0
      %v2108 = vadd.f32 %v2011, %v2107
      %v2109 = vpop.f32.mrf.mxu0
      %2110 = vmatprep.mubr.bf16.mxu0 %v1094
      %2111 = vmatmul.mubr.bf16.gmra.mxu0 %v1093
      %v2112 = vpop.f32.mrf.mxu0
      %v2113 = vadd.f32 %v2016, %v2112
      %v2114 = vpop.f32.mrf.mxu0
      %v2115 = vpop.f32.mrf.mxu0
      %v2116 = vadd.f32 %v2019, %v2115
      %v2117 = vpop.f32.mrf.mxu0
      %2118 = vmatprep.mubr.bf16.mxu0 %v1108
      %2119 = vmatmul.mubr.bf16.gmra.mxu0 %v1107
      %v2120 = vpop.f32.mrf.mxu0
      %v2121 = vadd.f32 %v2024, %v2120
      %v2122 = vpop.f32.mrf.mxu0
      %v2123 = vpop.f32.mrf.mxu0
      %v2124 = vadd.f32 %v2027, %v2123
      %v2125 = vpop.f32.mrf.mxu0
      %2126 = vmatprep.mubr.bf16.mxu0 %v1122
      %2127 = vmatmul.mubr.bf16.gmra.mxu0 %v1121
      %v2128 = vpop.f32.mrf.mxu0
      %v2129 = vadd.f32 %v2032, %v2128
      %v2130 = vpop.f32.mrf.mxu0
      %v2131 = vpop.f32.mrf.mxu0
      %v2132 = vadd.f32 %v2035, %v2131
      %v2133 = vpop.f32.mrf.mxu0
      %2134 = vmatprep.mubr.bf16.mxu0 %v1136
      %2135 = vmatmul.mubr.bf16.gmra.mxu0 %v1135
      %v2136 = vpop.f32.mrf.mxu0
      %v2137 = vadd.f32 %v2040, %v2136
      %v2138 = vpop.f32.mrf.mxu0
      %v2139 = vpop.f32.mrf.mxu0
      %v2140 = vadd.f32 %v2043, %v2139
      %v2141 = vpop.f32.mrf.mxu0
      %2142 = vmatprep.mubr.bf16.mxu0 %v1150
      %2143 = vmatmul.mubr.bf16.gmra.mxu0 %v1149
      %v2144 = vpop.f32.mrf.mxu0
      %v2145 = vadd.f32 %v2048, %v2144
      %v2146 = vpop.f32.mrf.mxu0
      %v2147 = vpop.f32.mrf.mxu0
      %v2148 = vadd.f32 %v2051, %v2147
      %v2149 = vpop.f32.mrf.mxu0
      %2150 = vmatprep.mubr.bf16.mxu0 %v1164
      %2151 = vmatmul.mubr.bf16.gmra.mxu0 %v1163
      %v2152 = vpop.f32.mrf.mxu0
      %v2153 = vadd.f32 %v2056, %v2152
      %v2154 = vpop.f32.mrf.mxu0
      %v2155 = vpop.f32.mrf.mxu0
      %v2156 = vadd.f32 %v2059, %v2155
      %v2157 = vpop.f32.mrf.mxu0
      %2158 = vmatprep.mubr.bf16.mxu0 %v1178
      %2159 = vmatmul.mubr.bf16.gmra.mxu0 %v1177
      %v2160 = vpop.f32.mrf.mxu0
      %v2161 = vadd.f32 %v2064, %v2160
      %v2162 = vpop.f32.mrf.mxu0
      %v2163 = vpop.f32.mrf.mxu0
      %v2164 = vadd.f32 %v2067, %v2163
      %v2165 = vpop.f32.mrf.mxu0
      %2166 = vdwg.mxu0
      %2167 = vmatprep.subr.bf16.mxu0 0
      %2168 = vmatpush1.bf16.msra.mxu0 %v1788
      %2169 = vmatprep.subr.bf16.mxu0 0
      %2170 = vmatpush1.bf16.msra.mxu0 %v1787
      %2171 = vmatprep.subr.bf16.mxu0 0
      %2172 = vmatpush1.bf16.msra.mxu0 %v1786
      %2173 = vmatprep.subr.bf16.mxu0 0
      %2174 = vmatpush1.bf16.msra.mxu0 %v1785
      %2175 = vmatprep.subr.bf16.mxu0 0
      %2176 = vmatpush1.bf16.msra.mxu0 %v1784
      %2177 = vmatprep.subr.bf16.mxu0 0
      %2178 = vmatpush1.bf16.msra.mxu0 %v1783
      %2179 = vmatprep.subr.bf16.mxu0 0
      %2180 = vmatpush1.bf16.msra.mxu0 %v1782
      %2181 = vmatprep.subr.bf16.mxu0 0
      %2182 = vmatpush1.bf16.msra.mxu0 %v1781
      %2183 = vmatprep.subr.bf16.mxu0 0
      %2184 = vmatpush2.bf16.msra.mxu0 %v1796
      %2185 = vmatprep.subr.bf16.mxu0 0
      %2186 = vmatpush2.bf16.msra.mxu0 %v1795
      %2187 = vmatprep.subr.bf16.mxu0 0
      %2188 = vmatpush2.bf16.msra.mxu0 %v1794
      %2189 = vmatprep.subr.bf16.mxu0 0
      %2190 = vmatpush2.bf16.msra.mxu0 %v1793
      %2191 = vmatprep.subr.bf16.mxu0 0
      %2192 = vmatpush2.bf16.msra.mxu0 %v1792
      %2193 = vmatprep.subr.bf16.mxu0 0
      %2194 = vmatpush2.bf16.msra.mxu0 %v1791
      %2195 = vmatprep.subr.bf16.mxu0 0
      %2196 = vmatpush2.bf16.msra.mxu0 %v1790
      %2197 = vmatprep.subr.bf16.mxu0 0
      %2198 = vmatpush2.bf16.msra.mxu0 %v1789
      %2199 = vmatprep.mubr.bf16.mxu0 %v1082
      %2200 = vmatmul.mubr.bf16.gmra.mxu0 %v1081
      %v2201 = vpop.f32.mrf.mxu0
      %v2202 = vadd.f32 %v2105, %v2201
      %v2203 = vpop.f32.mrf.mxu0
      %v2204 = vpop.f32.mrf.mxu0
      %v2205 = vadd.f32 %v2108, %v2204
      %v2206 = vpop.f32.mrf.mxu0
      %2207 = vmatprep.mubr.bf16.mxu0 %v1096
      %2208 = vmatmul.mubr.bf16.gmra.mxu0 %v1095
      %v2209 = vpop.f32.mrf.mxu0
      %v2210 = vadd.f32 %v2113, %v2209
      %v2211 = vpop.f32.mrf.mxu0
      %v2212 = vpop.f32.mrf.mxu0
      %v2213 = vadd.f32 %v2116, %v2212
      %v2214 = vpop.f32.mrf.mxu0
      %2215 = vmatprep.mubr.bf16.mxu0 %v1110
      %2216 = vmatmul.mubr.bf16.gmra.mxu0 %v1109
      %v2217 = vpop.f32.mrf.mxu0
      %v2218 = vadd.f32 %v2121, %v2217
      %v2219 = vpop.f32.mrf.mxu0
      %v2220 = vpop.f32.mrf.mxu0
      %v2221 = vadd.f32 %v2124, %v2220
      %v2222 = vpop.f32.mrf.mxu0
      %2223 = vmatprep.mubr.bf16.mxu0 %v1124
      %2224 = vmatmul.mubr.bf16.gmra.mxu0 %v1123
      %v2225 = vpop.f32.mrf.mxu0
      %v2226 = vadd.f32 %v2129, %v2225
      %v2227 = vpop.f32.mrf.mxu0
      %v2228 = vpop.f32.mrf.mxu0
      %v2229 = vadd.f32 %v2132, %v2228
      %v2230 = vpop.f32.mrf.mxu0
      %2231 = vmatprep.mubr.bf16.mxu0 %v1138
      %2232 = vmatmul.mubr.bf16.gmra.mxu0 %v1137
      %v2233 = vpop.f32.mrf.mxu0
      %v2234 = vadd.f32 %v2137, %v2233
      %v2235 = vpop.f32.mrf.mxu0
      %v2236 = vpop.f32.mrf.mxu0
      %v2237 = vadd.f32 %v2140, %v2236
      %v2238 = vpop.f32.mrf.mxu0
      %2239 = vmatprep.mubr.bf16.mxu0 %v1152
      %2240 = vmatmul.mubr.bf16.gmra.mxu0 %v1151
      %v2241 = vpop.f32.mrf.mxu0
      %v2242 = vadd.f32 %v2145, %v2241
      %v2243 = vpop.f32.mrf.mxu0
      %v2244 = vpop.f32.mrf.mxu0
      %v2245 = vadd.f32 %v2148, %v2244
      %v2246 = vpop.f32.mrf.mxu0
      %2247 = vmatprep.mubr.bf16.mxu0 %v1166
      %2248 = vmatmul.mubr.bf16.gmra.mxu0 %v1165
      %v2249 = vpop.f32.mrf.mxu0
      %v2250 = vadd.f32 %v2153, %v2249
      %v2251 = vpop.f32.mrf.mxu0
      %v2252 = vpop.f32.mrf.mxu0
      %v2253 = vadd.f32 %v2156, %v2252
      %v2254 = vpop.f32.mrf.mxu0
      %2255 = vmatprep.mubr.bf16.mxu0 %v1180
      %2256 = vmatmul.mubr.bf16.gmra.mxu0 %v1179
      %v2257 = vpop.f32.mrf.mxu0
      %v2258 = vadd.f32 %v2161, %v2257
      %v2259 = vpop.f32.mrf.mxu0
      %v2260 = vpop.f32.mrf.mxu0
      %v2261 = vadd.f32 %v2164, %v2260
      %v2262 = vpop.f32.mrf.mxu0
      %2263 = vdwg.mxu0
      %2264 = vmatprep.subr.bf16.mxu0 0
      %2265 = vmatpush1.bf16.msra.mxu0 %v1804
      %2266 = vmatprep.subr.bf16.mxu0 0
      %2267 = vmatpush1.bf16.msra.mxu0 %v1803
      %2268 = vmatprep.subr.bf16.mxu0 0
      %2269 = vmatpush1.bf16.msra.mxu0 %v1802
      %2270 = vmatprep.subr.bf16.mxu0 0
      %2271 = vmatpush1.bf16.msra.mxu0 %v1801
      %2272 = vmatprep.subr.bf16.mxu0 0
      %2273 = vmatpush1.bf16.msra.mxu0 %v1800
      %2274 = vmatprep.subr.bf16.mxu0 0
      %2275 = vmatpush1.bf16.msra.mxu0 %v1799
      %2276 = vmatprep.subr.bf16.mxu0 0
      %2277 = vmatpush1.bf16.msra.mxu0 %v1798
      %2278 = vmatprep.subr.bf16.mxu0 0
      %2279 = vmatpush1.bf16.msra.mxu0 %v1797
      %2280 = vmatprep.subr.bf16.mxu0 0
      %2281 = vmatpush2.bf16.msra.mxu0 %v1812
      %2282 = vmatprep.subr.bf16.mxu0 0
      %2283 = vmatpush2.bf16.msra.mxu0 %v1811
      %2284 = vmatprep.subr.bf16.mxu0 0
      %2285 = vmatpush2.bf16.msra.mxu0 %v1810
      %2286 = vmatprep.subr.bf16.mxu0 0
      %2287 = vmatpush2.bf16.msra.mxu0 %v1809
      %2288 = vmatprep.subr.bf16.mxu0 0
      %2289 = vmatpush2.bf16.msra.mxu0 %v1808
      %2290 = vmatprep.subr.bf16.mxu0 0
      %2291 = vmatpush2.bf16.msra.mxu0 %v1807
      %2292 = vmatprep.subr.bf16.mxu0 0
      %2293 = vmatpush2.bf16.msra.mxu0 %v1806
      %2294 = vmatprep.subr.bf16.mxu0 0
      %2295 = vmatpush2.bf16.msra.mxu0 %v1805
      %2296 = vmatprep.mubr.bf16.mxu0 %v1084
      %2297 = vmatmul.mubr.bf16.gmra.mxu0 %v1083
      %v2298 = vpop.f32.mrf.mxu0
      %v2299 = vadd.f32 %v2202, %v2298
      %v2300 = vpop.f32.mrf.mxu0
      %v2301 = vpop.f32.mrf.mxu0
      %v2302 = vadd.f32 %v2205, %v2301
      %v2303 = vpop.f32.mrf.mxu0
      %2304 = vmatprep.mubr.bf16.mxu0 %v1098
      %2305 = vmatmul.mubr.bf16.gmra.mxu0 %v1097
      %v2306 = vpop.f32.mrf.mxu0
      %v2307 = vadd.f32 %v2210, %v2306
      %v2308 = vpop.f32.mrf.mxu0
      %v2309 = vpop.f32.mrf.mxu0
      %v2310 = vadd.f32 %v2213, %v2309
      %v2311 = vpop.f32.mrf.mxu0
      %2312 = vmatprep.mubr.bf16.mxu0 %v1112
      %2313 = vmatmul.mubr.bf16.gmra.mxu0 %v1111
      %v2314 = vpop.f32.mrf.mxu0
      %v2315 = vadd.f32 %v2218, %v2314
      %v2316 = vpop.f32.mrf.mxu0
      %v2317 = vpop.f32.mrf.mxu0
      %v2318 = vadd.f32 %v2221, %v2317
      %v2319 = vpop.f32.mrf.mxu0
      %2320 = vmatprep.mubr.bf16.mxu0 %v1126
      %2321 = vmatmul.mubr.bf16.gmra.mxu0 %v1125
      %v2322 = vpop.f32.mrf.mxu0
      %v2323 = vadd.f32 %v2226, %v2322
      %v2324 = vpop.f32.mrf.mxu0
      %v2325 = vpop.f32.mrf.mxu0
      %v2326 = vadd.f32 %v2229, %v2325
      %v2327 = vpop.f32.mrf.mxu0
      %2328 = vmatprep.mubr.bf16.mxu0 %v1140
      %2329 = vmatmul.mubr.bf16.gmra.mxu0 %v1139
      %v2330 = vpop.f32.mrf.mxu0
      %v2331 = vadd.f32 %v2234, %v2330
      %v2332 = vpop.f32.mrf.mxu0
      %v2333 = vpop.f32.mrf.mxu0
      %v2334 = vadd.f32 %v2237, %v2333
      %v2335 = vpop.f32.mrf.mxu0
      %2336 = vmatprep.mubr.bf16.mxu0 %v1154
      %2337 = vmatmul.mubr.bf16.gmra.mxu0 %v1153
      %v2338 = vpop.f32.mrf.mxu0
      %v2339 = vadd.f32 %v2242, %v2338
      %v2340 = vpop.f32.mrf.mxu0
      %v2341 = vpop.f32.mrf.mxu0
      %v2342 = vadd.f32 %v2245, %v2341
      %v2343 = vpop.f32.mrf.mxu0
      %2344 = vmatprep.mubr.bf16.mxu0 %v1168
      %2345 = vmatmul.mubr.bf16.gmra.mxu0 %v1167
      %v2346 = vpop.f32.mrf.mxu0
      %v2347 = vadd.f32 %v2250, %v2346
      %v2348 = vpop.f32.mrf.mxu0
      %v2349 = vpop.f32.mrf.mxu0
      %v2350 = vadd.f32 %v2253, %v2349
      %v2351 = vpop.f32.mrf.mxu0
      %2352 = vmatprep.mubr.bf16.mxu0 %v1182
      %2353 = vmatmul.mubr.bf16.gmra.mxu0 %v1181
      %v2354 = vpop.f32.mrf.mxu0
      %v2355 = vadd.f32 %v2258, %v2354
      %v2356 = vpop.f32.mrf.mxu0
      %v2357 = vpop.f32.mrf.mxu0
      %v2358 = vadd.f32 %v2261, %v2357
      %v2359 = vpop.f32.mrf.mxu0
      %2360 = vdwg.mxu0
      %2361 = vmatprep.subr.bf16.mxu0 0
      %2362 = vmatpush1.bf16.msra.mxu0 %v1820
      %2363 = vmatprep.subr.bf16.mxu0 0
      %2364 = vmatpush1.bf16.msra.mxu0 %v1819
      %2365 = vmatprep.subr.bf16.mxu0 0
      %2366 = vmatpush1.bf16.msra.mxu0 %v1818
      %2367 = vmatprep.subr.bf16.mxu0 0
      %2368 = vmatpush1.bf16.msra.mxu0 %v1817
      %2369 = vmatprep.subr.bf16.mxu0 0
      %2370 = vmatpush1.bf16.msra.mxu0 %v1816
      %2371 = vmatprep.subr.bf16.mxu0 0
      %2372 = vmatpush1.bf16.msra.mxu0 %v1815
      %2373 = vmatprep.subr.bf16.mxu0 0
      %2374 = vmatpush1.bf16.msra.mxu0 %v1814
      %2375 = vmatprep.subr.bf16.mxu0 0
      %2376 = vmatpush1.bf16.msra.mxu0 %v1813
      %2377 = vmatprep.subr.bf16.mxu0 0
      %2378 = vmatpush2.bf16.msra.mxu0 %v1828
      %2379 = vmatprep.subr.bf16.mxu0 0
      %2380 = vmatpush2.bf16.msra.mxu0 %v1827
      %2381 = vmatprep.subr.bf16.mxu0 0
      %2382 = vmatpush2.bf16.msra.mxu0 %v1826
      %2383 = vmatprep.subr.bf16.mxu0 0
      %2384 = vmatpush2.bf16.msra.mxu0 %v1825
      %2385 = vmatprep.subr.bf16.mxu0 0
      %2386 = vmatpush2.bf16.msra.mxu0 %v1824
      %2387 = vmatprep.subr.bf16.mxu0 0
      %2388 = vmatpush2.bf16.msra.mxu0 %v1823
      %2389 = vmatprep.subr.bf16.mxu0 0
      %2390 = vmatpush2.bf16.msra.mxu0 %v1822
      %2391 = vmatprep.subr.bf16.mxu0 0
      %2392 = vmatpush2.bf16.msra.mxu0 %v1821
      %2393 = vmatprep.mubr.bf16.mxu0 %v1086
      %2394 = vmatmul.mubr.bf16.gmra.mxu0 %v1085
      %v2395 = vpop.f32.mrf.mxu0
      %v2396 = vadd.f32 %v2299, %v2395
      %v2397 = vpop.f32.mrf.mxu0
      %v2398 = vpop.f32.mrf.mxu0
      %v2399 = vadd.f32 %v2302, %v2398
      %v2400 = vpop.f32.mrf.mxu0
      %2401 = vmatprep.mubr.bf16.mxu0 %v1100
      %2402 = vmatmul.mubr.bf16.gmra.mxu0 %v1099
      %v2403 = vpop.f32.mrf.mxu0
      %v2404 = vadd.f32 %v2307, %v2403
      %v2405 = vpop.f32.mrf.mxu0
      %v2406 = vpop.f32.mrf.mxu0
      %v2407 = vadd.f32 %v2310, %v2406
      %v2408 = vpop.f32.mrf.mxu0
      %2409 = vmatprep.mubr.bf16.mxu0 %v1114
      %2410 = vmatmul.mubr.bf16.gmra.mxu0 %v1113
      %v2411 = vpop.f32.mrf.mxu0
      %v2412 = vadd.f32 %v2315, %v2411
      %v2413 = vpop.f32.mrf.mxu0
      %v2414 = vpop.f32.mrf.mxu0
      %v2415 = vadd.f32 %v2318, %v2414
      %v2416 = vpop.f32.mrf.mxu0
      %2417 = vmatprep.mubr.bf16.mxu0 %v1128
      %2418 = vmatmul.mubr.bf16.gmra.mxu0 %v1127
      %v2419 = vpop.f32.mrf.mxu0
      %v2420 = vadd.f32 %v2323, %v2419
      %v2421 = vpop.f32.mrf.mxu0
      %v2422 = vpop.f32.mrf.mxu0
      %v2423 = vadd.f32 %v2326, %v2422
      %v2424 = vpop.f32.mrf.mxu0
      %2425 = vmatprep.mubr.bf16.mxu0 %v1142
      %2426 = vmatmul.mubr.bf16.gmra.mxu0 %v1141
      %v2427 = vpop.f32.mrf.mxu0
      %v2428 = vadd.f32 %v2331, %v2427
      %v2429 = vpop.f32.mrf.mxu0
      %v2430 = vpop.f32.mrf.mxu0
      %v2431 = vadd.f32 %v2334, %v2430
      %v2432 = vpop.f32.mrf.mxu0
      %2433 = vmatprep.mubr.bf16.mxu0 %v1156
      %2434 = vmatmul.mubr.bf16.gmra.mxu0 %v1155
      %v2435 = vpop.f32.mrf.mxu0
      %v2436 = vadd.f32 %v2339, %v2435
      %v2437 = vpop.f32.mrf.mxu0
      %v2438 = vpop.f32.mrf.mxu0
      %v2439 = vadd.f32 %v2342, %v2438
      %v2440 = vpop.f32.mrf.mxu0
      %2441 = vmatprep.mubr.bf16.mxu0 %v1170
      %2442 = vmatmul.mubr.bf16.gmra.mxu0 %v1169
      %v2443 = vpop.f32.mrf.mxu0
      %v2444 = vadd.f32 %v2347, %v2443
      %v2445 = vpop.f32.mrf.mxu0
      %v2446 = vpop.f32.mrf.mxu0
      %v2447 = vadd.f32 %v2350, %v2446
      %v2448 = vpop.f32.mrf.mxu0
      %2449 = vmatprep.mubr.bf16.mxu0 %v1184
      %2450 = vmatmul.mubr.bf16.gmra.mxu0 %v1183
      %v2451 = vpop.f32.mrf.mxu0
      %v2452 = vadd.f32 %v2355, %v2451
      %v2453 = vpop.f32.mrf.mxu0
      %v2454 = vpop.f32.mrf.mxu0
      %v2455 = vadd.f32 %v2358, %v2454
      %v2456 = vpop.f32.mrf.mxu0
      %2457 = vdwg.mxu0
      %2458 = vmatprep.subr.bf16.mxu0 0
      %2459 = vmatpush1.bf16.msra.mxu0 %v1836
      %2460 = vmatprep.subr.bf16.mxu0 0
      %2461 = vmatpush1.bf16.msra.mxu0 %v1835
      %2462 = vmatprep.subr.bf16.mxu0 0
      %2463 = vmatpush1.bf16.msra.mxu0 %v1834
      %2464 = vmatprep.subr.bf16.mxu0 0
      %2465 = vmatpush1.bf16.msra.mxu0 %v1833
      %2466 = vmatprep.subr.bf16.mxu0 0
      %2467 = vmatpush1.bf16.msra.mxu0 %v1832
      %2468 = vmatprep.subr.bf16.mxu0 0
      %2469 = vmatpush1.bf16.msra.mxu0 %v1831
      %2470 = vmatprep.subr.bf16.mxu0 0
      %2471 = vmatpush1.bf16.msra.mxu0 %v1830
      %2472 = vmatprep.subr.bf16.mxu0 0
      %2473 = vmatpush1.bf16.msra.mxu0 %v1829
      %2474 = vmatprep.subr.bf16.mxu0 0
      %2475 = vmatpush2.bf16.msra.mxu0 %v1844
      %2476 = vmatprep.subr.bf16.mxu0 0
      %2477 = vmatpush2.bf16.msra.mxu0 %v1843
      %2478 = vmatprep.subr.bf16.mxu0 0
      %2479 = vmatpush2.bf16.msra.mxu0 %v1842
      %2480 = vmatprep.subr.bf16.mxu0 0
      %2481 = vmatpush2.bf16.msra.mxu0 %v1841
      %2482 = vmatprep.subr.bf16.mxu0 0
      %2483 = vmatpush2.bf16.msra.mxu0 %v1840
      %2484 = vmatprep.subr.bf16.mxu0 0
      %2485 = vmatpush2.bf16.msra.mxu0 %v1839
      %2486 = vmatprep.subr.bf16.mxu0 0
      %2487 = vmatpush2.bf16.msra.mxu0 %v1838
      %2488 = vmatprep.subr.bf16.mxu0 0
      %2489 = vmatpush2.bf16.msra.mxu0 %v1837
      %2490 = vmatprep.mubr.bf16.mxu0 %v1088
      %2491 = vmatmul.mubr.bf16.gmra.mxu0 %v1087
      %v2492 = vpop.f32.mrf.mxu0
      %v2493 = vadd.f32 %v2396, %v2492
      %v2494 = vpop.f32.mrf.mxu0
      %v2495 = vpop.f32.mrf.mxu0
      %v2496 = vadd.f32 %v2399, %v2495
      %v2497 = vpop.f32.mrf.mxu0
      %2498 = vmatprep.mubr.bf16.mxu0 %v1102
      %2499 = vmatmul.mubr.bf16.gmra.mxu0 %v1101
      %v2500 = vpop.f32.mrf.mxu0
      %v2501 = vadd.f32 %v2404, %v2500
      %v2502 = vpop.f32.mrf.mxu0
      %v2503 = vpop.f32.mrf.mxu0
      %v2504 = vadd.f32 %v2407, %v2503
      %v2505 = vpop.f32.mrf.mxu0
      %2506 = vmatprep.mubr.bf16.mxu0 %v1116
      %2507 = vmatmul.mubr.bf16.gmra.mxu0 %v1115
      %v2508 = vpop.f32.mrf.mxu0
      %v2509 = vadd.f32 %v2412, %v2508
      %v2510 = vpop.f32.mrf.mxu0
      %v2511 = vpop.f32.mrf.mxu0
      %v2512 = vadd.f32 %v2415, %v2511
      %v2513 = vpop.f32.mrf.mxu0
      %2514 = vmatprep.mubr.bf16.mxu0 %v1130
      %2515 = vmatmul.mubr.bf16.gmra.mxu0 %v1129
      %v2516 = vpop.f32.mrf.mxu0
      %v2517 = vadd.f32 %v2420, %v2516
      %v2518 = vpop.f32.mrf.mxu0
      %v2519 = vpop.f32.mrf.mxu0
      %v2520 = vadd.f32 %v2423, %v2519
      %v2521 = vpop.f32.mrf.mxu0
      %2522 = vmatprep.mubr.bf16.mxu0 %v1144
      %2523 = vmatmul.mubr.bf16.gmra.mxu0 %v1143
      %v2524 = vpop.f32.mrf.mxu0
      %v2525 = vadd.f32 %v2428, %v2524
      %v2526 = vpop.f32.mrf.mxu0
      %v2527 = vpop.f32.mrf.mxu0
      %v2528 = vadd.f32 %v2431, %v2527
      %v2529 = vpop.f32.mrf.mxu0
      %2530 = vmatprep.mubr.bf16.mxu0 %v1158
      %2531 = vmatmul.mubr.bf16.gmra.mxu0 %v1157
      %v2532 = vpop.f32.mrf.mxu0
      %v2533 = vadd.f32 %v2436, %v2532
      %v2534 = vpop.f32.mrf.mxu0
      %v2535 = vpop.f32.mrf.mxu0
      %v2536 = vadd.f32 %v2439, %v2535
      %v2537 = vpop.f32.mrf.mxu0
      %2538 = vmatprep.mubr.bf16.mxu0 %v1172
      %2539 = vmatmul.mubr.bf16.gmra.mxu0 %v1171
      %v2540 = vpop.f32.mrf.mxu0
      %v2541 = vadd.f32 %v2444, %v2540
      %v2542 = vpop.f32.mrf.mxu0
      %v2543 = vpop.f32.mrf.mxu0
      %v2544 = vadd.f32 %v2447, %v2543
      %v2545 = vpop.f32.mrf.mxu0
      %2546 = vmatprep.mubr.bf16.mxu0 %v1186
      %2547 = vmatmul.mubr.bf16.gmra.mxu0 %v1185
      %v2548 = vpop.f32.mrf.mxu0
      %v2549 = vadd.f32 %v2452, %v2548
      %v2550 = vpop.f32.mrf.mxu0
      %v2551 = vpop.f32.mrf.mxu0
      %v2552 = vadd.f32 %v2455, %v2551
      %v2553 = vpop.f32.mrf.mxu0
      %2554 = vdwg.mxu0
      %2555 = vmatprep.subr.bf16.mxu0 0
      %2556 = vmatpush1.bf16.msra.mxu0 %v1852
      %2557 = vmatprep.subr.bf16.mxu0 0
      %2558 = vmatpush1.bf16.msra.mxu0 %v1851
      %2559 = vmatprep.subr.bf16.mxu0 0
      %2560 = vmatpush1.bf16.msra.mxu0 %v1850
      %2561 = vmatprep.subr.bf16.mxu0 0
      %2562 = vmatpush1.bf16.msra.mxu0 %v1849
      %2563 = vmatprep.subr.bf16.mxu0 0
      %2564 = vmatpush1.bf16.msra.mxu0 %v1848
      %2565 = vmatprep.subr.bf16.mxu0 0
      %2566 = vmatpush1.bf16.msra.mxu0 %v1847
      %2567 = vmatprep.subr.bf16.mxu0 0
      %2568 = vmatpush1.bf16.msra.mxu0 %v1846
      %2569 = vmatprep.subr.bf16.mxu0 0
      %2570 = vmatpush1.bf16.msra.mxu0 %v1845
      %2571 = vmatprep.subr.bf16.mxu0 0
      %2572 = vmatpush2.bf16.msra.mxu0 %v1860
      %2573 = vmatprep.subr.bf16.mxu0 0
      %2574 = vmatpush2.bf16.msra.mxu0 %v1859
      %2575 = vmatprep.subr.bf16.mxu0 0
      %2576 = vmatpush2.bf16.msra.mxu0 %v1858
      %2577 = vmatprep.subr.bf16.mxu0 0
      %2578 = vmatpush2.bf16.msra.mxu0 %v1857
      %2579 = vmatprep.subr.bf16.mxu0 0
      %2580 = vmatpush2.bf16.msra.mxu0 %v1856
      %2581 = vmatprep.subr.bf16.mxu0 0
      %2582 = vmatpush2.bf16.msra.mxu0 %v1855
      %2583 = vmatprep.subr.bf16.mxu0 0
      %2584 = vmatpush2.bf16.msra.mxu0 %v1854
      %2585 = vmatprep.subr.bf16.mxu0 0
      %2586 = vmatpush2.bf16.msra.mxu0 %v1853
      %2587 = vmatprep.mubr.bf16.mxu0 %v1090
      %2588 = vmatmul.mubr.bf16.gmra.mxu0 %v1089
      %v2589 = vpop.f32.mrf.mxu0
      %v2590 = vadd.f32 %v2493, %v2589
      %v2591 = vpop.f32.mrf.mxu0
      %v2592 = vpop.f32.mrf.mxu0
      %v2593 = vadd.f32 %v2496, %v2592
      %v2594 = vpop.f32.mrf.mxu0
      %2595 = vmatprep.mubr.bf16.mxu0 %v1104
      %2596 = vmatmul.mubr.bf16.gmra.mxu0 %v1103
      %v2597 = vpop.f32.mrf.mxu0
      %v2598 = vadd.f32 %v2501, %v2597
      %v2599 = vpop.f32.mrf.mxu0
      %v2600 = vpop.f32.mrf.mxu0
      %v2601 = vadd.f32 %v2504, %v2600
      %v2602 = vpop.f32.mrf.mxu0
      %2603 = vmatprep.mubr.bf16.mxu0 %v1118
      %2604 = vmatmul.mubr.bf16.gmra.mxu0 %v1117
      %v2605 = vpop.f32.mrf.mxu0
      %v2606 = vadd.f32 %v2509, %v2605
      %v2607 = vpop.f32.mrf.mxu0
      %v2608 = vpop.f32.mrf.mxu0
      %v2609 = vadd.f32 %v2512, %v2608
      %v2610 = vpop.f32.mrf.mxu0
      %2611 = vmatprep.mubr.bf16.mxu0 %v1132
      %2612 = vmatmul.mubr.bf16.gmra.mxu0 %v1131
      %v2613 = vpop.f32.mrf.mxu0
      %v2614 = vadd.f32 %v2517, %v2613
      %v2615 = vpop.f32.mrf.mxu0
      %v2616 = vpop.f32.mrf.mxu0
      %v2617 = vadd.f32 %v2520, %v2616
      %v2618 = vpop.f32.mrf.mxu0
      %2619 = vmatprep.mubr.bf16.mxu0 %v1146
      %2620 = vmatmul.mubr.bf16.gmra.mxu0 %v1145
      %v2621 = vpop.f32.mrf.mxu0
      %v2622 = vadd.f32 %v2525, %v2621
      %v2623 = vpop.f32.mrf.mxu0
      %v2624 = vpop.f32.mrf.mxu0
      %v2625 = vadd.f32 %v2528, %v2624
      %v2626 = vpop.f32.mrf.mxu0
      %2627 = vmatprep.mubr.bf16.mxu0 %v1160
      %2628 = vmatmul.mubr.bf16.gmra.mxu0 %v1159
      %v2629 = vpop.f32.mrf.mxu0
      %v2630 = vadd.f32 %v2533, %v2629
      %v2631 = vpop.f32.mrf.mxu0
      %v2632 = vpop.f32.mrf.mxu0
      %v2633 = vadd.f32 %v2536, %v2632
      %v2634 = vpop.f32.mrf.mxu0
      %2635 = vmatprep.mubr.bf16.mxu0 %v1174
      %2636 = vmatmul.mubr.bf16.gmra.mxu0 %v1173
      %v2637 = vpop.f32.mrf.mxu0
      %v2638 = vadd.f32 %v2541, %v2637
      %v2639 = vpop.f32.mrf.mxu0
      %v2640 = vpop.f32.mrf.mxu0
      %v2641 = vadd.f32 %v2544, %v2640
      %v2642 = vpop.f32.mrf.mxu0
      %2643 = vmatprep.mubr.bf16.mxu0 %v1188
      %2644 = vmatmul.mubr.bf16.gmra.mxu0 %v1187
      %v2645 = vpop.f32.mrf.mxu0
      %v2646 = vadd.f32 %v2549, %v2645
      %v2647 = vpop.f32.mrf.mxu0
      %v2648 = vpop.f32.mrf.mxu0
      %v2649 = vadd.f32 %v2552, %v2648
      %v2650 = vpop.f32.mrf.mxu0
      %2651 = vdwg.mxu0
      %v2652 = vadd.f32 %v389, %v2590
      %v2653 = vadd.f32 %v390, %v2593
      %v2654 = vadd.f32 %v391, %v2598
      %v2655 = vadd.f32 %v392, %v2601
      %v2656 = vadd.f32 %v393, %v2606
      %v2657 = vadd.f32 %v394, %v2609
      %v2658 = vadd.f32 %v395, %v2614
      %v2659 = vadd.f32 %v396, %v2617
      %v2660 = vadd.f32 %v397, %v2622
      %v2661 = vadd.f32 %v398, %v2625
      %v2662 = vadd.f32 %v399, %v2630
      %v2663 = vadd.f32 %v400, %v2633
      %v2664 = vadd.f32 %v401, %v2638
      %v2665 = vadd.f32 %v402, %v2641
      %v2666 = vadd.f32 %v403, %v2646
      %v2667 = vadd.f32 %v404, %v2649
      %2668 = vst [vmem:[#allocation2] sm:$0xff] %v2652
      %2669 = vst [vmem:[#allocation2 + $0x8] sm:$0xff] %v2653
      %2670 = vst [vmem:[#allocation2 + $0x10] sm:$0xff] %v2654
      %2671 = vst [vmem:[#allocation2 + $0x18] sm:$0xff] %v2655
      %2672 = vst [vmem:[#allocation2 + $0x20] sm:$0xff] %v2656
      %2673 = vst [vmem:[#allocation2 + $0x28] sm:$0xff] %v2657
      %2674 = vst [vmem:[#allocation2 + $0x30] sm:$0xff] %v2658
      %2675 = vst [vmem:[#allocation2 + $0x38] sm:$0xff] %v2659
      %2676 = vst [vmem:[#allocation2 + $0x40] sm:$0xff] %v2660
      %2677 = vst [vmem:[#allocation2 + $0x48] sm:$0xff] %v2661
      %2678 = vst [vmem:[#allocation2 + $0x50] sm:$0xff] %v2662
      %2679 = vst [vmem:[#allocation2 + $0x58] sm:$0xff] %v2663
      %2680 = vst [vmem:[#allocation2 + $0x60] sm:$0xff] %v2664
      %2681 = vst [vmem:[#allocation2 + $0x68] sm:$0xff] %v2665
      %2682 = vst [vmem:[#allocation2 + $0x70] sm:$0xff] %v2666
      %2683 = vst [vmem:[#allocation2 + $0x78] sm:$0xff] %v2667
      // Predicated region
      $region45: #{resnet_encoder3d_forward.13} parent=39 // pred_check
        %p2684 = pneg %p369
      $region46: #{resnet_encoder3d_forward.13} parent=39 // pred_check_branch
        %2686 = sbr.rel (%p2684) target = $region48
      $region47: #{resnet_encoder3d_forward.13} parent=39 // pred_region
        %v2687 = vld [vmem:[#allocation2] sm:$0xff]
        %v2688 = vld [vmem:[#allocation2 + $0x8] sm:$0xff]
        %v2689 = vld [vmem:[#allocation2 + $0x10] sm:$0xff]
        %v2690 = vld [vmem:[#allocation2 + $0x18] sm:$0xff]
        %v2691 = vld [vmem:[#allocation2 + $0x20] sm:$0xff]
        %v2692 = vld [vmem:[#allocation2 + $0x28] sm:$0xff]
        %v2693 = vld [vmem:[#allocation2 + $0x30] sm:$0xff]
        %v2694 = vld [vmem:[#allocation2 + $0x38] sm:$0xff]
        %v2695 = vld [vmem:[#allocation2 + $0x40] sm:$0xff]
        %v2696 = vld [vmem:[#allocation2 + $0x48] sm:$0xff]
        %v2697 = vld [vmem:[#allocation2 + $0x50] sm:$0xff]
        %v2698 = vld [vmem:[#allocation2 + $0x58] sm:$0xff]
        %v2699 = vld [vmem:[#allocation2 + $0x60] sm:$0xff]
        %v2700 = vld [vmem:[#allocation2 + $0x68] sm:$0xff]
        %v2701 = vld [vmem:[#allocation2 + $0x70] sm:$0xff]
        %v2702 = vld [vmem:[#allocation2 + $0x78] sm:$0xff]
        %v2703 = vld [vmem:[%s346] sm:$0x1]
        %v2705 = vlaneseq
        %v2706 = vshrl.u32 %v2705, 7
        %v2707 = vsub.s32 0, %v2706
        %v2708 = vrot.slane %v2703, %v2707
        %v2710 = vmul.f32 %v2687, %v2708
        %v2711 = vmul.f32 %v2688, %v2708
        %v2712 = vmul.f32 %v2689, %v2708
        %v2713 = vmul.f32 %v2690, %v2708
        %v2714 = vmul.f32 %v2691, %v2708
        %v2715 = vmul.f32 %v2692, %v2708
        %v2716 = vmul.f32 %v2693, %v2708
        %v2717 = vmul.f32 %v2694, %v2708
        %v2718 = vmul.f32 %v2695, %v2708
        %v2719 = vmul.f32 %v2696, %v2708
        %v2720 = vmul.f32 %v2697, %v2708
        %v2721 = vmul.f32 %v2698, %v2708
        %v2722 = vmul.f32 %v2699, %v2708
        %v2723 = vmul.f32 %v2700, %v2708
        %v2724 = vmul.f32 %v2701, %v2708
        %v2725 = vmul.f32 %v2702, %v2708
        %v2726 = vld [vmem:[%s349] sm:$0x1]
        %v2728 = vlaneseq
        %v2729 = vshrl.u32 %v2728, 7
        %v2730 = vsub.s32 0, %v2729
        %v2731 = vrot.slane %v2726, %v2730
        %v2733 = vadd.f32 %v2710, %v2731
        %v2734 = vadd.f32 %v2711, %v2731
        %v2735 = vadd.f32 %v2712, %v2731
        %v2736 = vadd.f32 %v2713, %v2731
        %v2737 = vadd.f32 %v2714, %v2731
        %v2738 = vadd.f32 %v2715, %v2731
        %v2739 = vadd.f32 %v2716, %v2731
        %v2740 = vadd.f32 %v2717, %v2731
        %v2741 = vadd.f32 %v2718, %v2731
        %v2742 = vadd.f32 %v2719, %v2731
        %v2743 = vadd.f32 %v2720, %v2731
        %v2744 = vadd.f32 %v2721, %v2731
        %v2745 = vadd.f32 %v2722, %v2731
        %v2746 = vadd.f32 %v2723, %v2731
        %v2747 = vadd.f32 %v2724, %v2731
        %v2748 = vadd.f32 %v2725, %v2731
        %v2749 = vld [vmem:[%s357] sm:$0xf]
        %v2750 = vld [vmem:[%s357 + $0x4] sm:$0xf]
        %v2751 = vld [vmem:[%s357 + $0x8] sm:$0xf]
        %v2752 = vld [vmem:[%s357 + $0xc] sm:$0xf]
        %v2753 = vld [vmem:[%s357 + $0x10] sm:$0xf]
        %v2754 = vld [vmem:[%s357 + $0x14] sm:$0xf]
        %v2755 = vld [vmem:[%s357 + $0x18] sm:$0xf]
        %v2756 = vld [vmem:[%s357 + $0x1c] sm:$0xf]
        %v2757 = vld [vmem:[%s357 + $0x20] sm:$0xf]
        %v2758 = vld [vmem:[%s357 + $0x24] sm:$0xf]
        %v2759 = vld [vmem:[%s357 + $0x28] sm:$0xf]
        %v2760 = vld [vmem:[%s357 + $0x2c] sm:$0xf]
        %v2761 = vld [vmem:[%s357 + $0x30] sm:$0xf]
        %v2762 = vld [vmem:[%s357 + $0x34] sm:$0xf]
        %v2763 = vld [vmem:[%s357 + $0x38] sm:$0xf]
        %v2764 = vld [vmem:[%s357 + $0x3c] sm:$0xf]
        %v2765 = vunpack.c.l.bf16 %v2749
        %v2766 = vunpack.c.l.bf16 %v2750
        %v2767 = vunpack.c.l.bf16 %v2751
        %v2768 = vunpack.c.l.bf16 %v2752
        %v2769 = vunpack.c.l.bf16 %v2753
        %v2770 = vunpack.c.l.bf16 %v2754
        %v2771 = vunpack.c.l.bf16 %v2755
        %v2772 = vunpack.c.l.bf16 %v2756
        %v2773 = vunpack.c.l.bf16 %v2757
        %v2774 = vunpack.c.l.bf16 %v2758
        %v2775 = vunpack.c.l.bf16 %v2759
        %v2776 = vunpack.c.l.bf16 %v2760
        %v2777 = vunpack.c.l.bf16 %v2761
        %v2778 = vunpack.c.l.bf16 %v2762
        %v2779 = vunpack.c.l.bf16 %v2763
        %v2780 = vunpack.c.l.bf16 %v2764
        %v2781 = vadd.f32 %v2733, %v2765
        %v2782 = vadd.f32 %v2734, %v2766
        %v2783 = vadd.f32 %v2735, %v2767
        %v2784 = vadd.f32 %v2736, %v2768
        %v2785 = vadd.f32 %v2737, %v2769
        %v2786 = vadd.f32 %v2738, %v2770
        %v2787 = vadd.f32 %v2739, %v2771
        %v2788 = vadd.f32 %v2740, %v2772
        %v2789 = vadd.f32 %v2741, %v2773
        %v2790 = vadd.f32 %v2742, %v2774
        %v2791 = vadd.f32 %v2743, %v2775
        %v2792 = vadd.f32 %v2744, %v2776
        %v2793 = vadd.f32 %v2745, %v2777
        %v2794 = vadd.f32 %v2746, %v2778
        %v2795 = vadd.f32 %v2747, %v2779
        %v2796 = vadd.f32 %v2748, %v2780
        %v2797 = vmax.f32 %v2781, 0.0
        %v2798 = vmax.f32 %v2782, 0.0
        %v2799 = vmax.f32 %v2783, 0.0
        %v2800 = vmax.f32 %v2784, 0.0
        %v2801 = vmax.f32 %v2785, 0.0
        %v2802 = vmax.f32 %v2786, 0.0
        %v2803 = vmax.f32 %v2787, 0.0
        %v2804 = vmax.f32 %v2788, 0.0
        %v2805 = vmax.f32 %v2789, 0.0
        %v2806 = vmax.f32 %v2790, 0.0
        %v2807 = vmax.f32 %v2791, 0.0
        %v2808 = vmax.f32 %v2792, 0.0
        %v2809 = vmax.f32 %v2793, 0.0
        %v2810 = vmax.f32 %v2794, 0.0
        %v2811 = vmax.f32 %v2795, 0.0
        %v2812 = vmax.f32 %v2796, 0.0
        %v2813 = vpack.c.bf16 %v2798, %v2797
        %v2814 = vpack.c.bf16 %v2800, %v2799
        %v2815 = vpack.c.bf16 %v2802, %v2801
        %v2816 = vpack.c.bf16 %v2804, %v2803
        %v2817 = vpack.c.bf16 %v2806, %v2805
        %v2818 = vpack.c.bf16 %v2808, %v2807
        %v2819 = vpack.c.bf16 %v2810, %v2809
        %v2820 = vpack.c.bf16 %v2812, %v2811
        %v2829 = vunpack.c.l.b16 %v2813
        %v2830 = vunpack.c.h.b16 %v2813
        %v2831 = vunpack.c.l.b16 %v2814
        %v2832 = vunpack.c.h.b16 %v2814
        %v2833 = vunpack.c.l.b16 %v2815
        %v2834 = vunpack.c.h.b16 %v2815
        %v2835 = vunpack.c.l.b16 %v2816
        %v2836 = vunpack.c.h.b16 %v2816
        %v2837 = vunpack.c.l.b16 %v2817
        %v2838 = vunpack.c.h.b16 %v2817
        %v2839 = vunpack.c.l.b16 %v2818
        %v2840 = vunpack.c.h.b16 %v2818
        %v2841 = vunpack.c.l.b16 %v2819
        %v2842 = vunpack.c.h.b16 %v2819
        %v2843 = vunpack.c.l.b16 %v2820
        %v2844 = vunpack.c.h.b16 %v2820
        %v2845 = vpack.c.b16 %v2829, %v2829
        %v2846 = vpack.c.b16 %v2830, %v2830
        %v2847 = vpack.c.b16 %v2831, %v2831
        %v2848 = vpack.c.b16 %v2832, %v2832
        %v2849 = vpack.c.b16 %v2833, %v2833
        %v2850 = vpack.c.b16 %v2834, %v2834
        %v2851 = vpack.c.b16 %v2835, %v2835
        %v2852 = vpack.c.b16 %v2836, %v2836
        %v2853 = vpack.c.b16 %v2837, %v2837
        %v2854 = vpack.c.b16 %v2838, %v2838
        %v2855 = vpack.c.b16 %v2839, %v2839
        %v2856 = vpack.c.b16 %v2840, %v2840
        %v2857 = vpack.c.b16 %v2841, %v2841
        %v2858 = vpack.c.b16 %v2842, %v2842
        %v2859 = vpack.c.b16 %v2843, %v2843
        %v2860 = vpack.c.b16 %v2844, %v2844
        %2877 = vst [vmem:[%s366] sm:$0xf] %v2845
        %2878 = vst [vmem:[%s366 + $0x4] sm:$0xf] %v2846
        %2879 = vst [vmem:[%s366 + $0x8] sm:$0xf] %v2847
        %2880 = vst [vmem:[%s366 + $0xc] sm:$0xf] %v2848
        %2881 = vst [vmem:[%s366 + $0x10] sm:$0xf] %v2849
        %2882 = vst [vmem:[%s366 + $0x14] sm:$0xf] %v2850
        %2883 = vst [vmem:[%s366 + $0x18] sm:$0xf] %v2851
        %2884 = vst [vmem:[%s366 + $0x1c] sm:$0xf] %v2852
        %2885 = vst [vmem:[%s366 + $0x20] sm:$0xf] %v2853
        %2886 = vst [vmem:[%s366 + $0x24] sm:$0xf] %v2854
        %2887 = vst [vmem:[%s366 + $0x28] sm:$0xf] %v2855
        %2888 = vst [vmem:[%s366 + $0x2c] sm:$0xf] %v2856
        %2889 = vst [vmem:[%s366 + $0x30] sm:$0xf] %v2857
        %2890 = vst [vmem:[%s366 + $0x34] sm:$0xf] %v2858
        %2891 = vst [vmem:[%s366 + $0x38] sm:$0xf] %v2859
        %2892 = vst [vmem:[%s366 + $0x3c] sm:$0xf] %v2860
      $region48: #{resnet_encoder3d_forward.13} parent=39 // pred_fallthru
        _
      %s2893 = smul.u32 16, %s21
      %p2894 = scmp.lt.s32.totalorder %s2893, 31
      %s2895 = scalar_select %p2894, %s2893, 31
      %p2896 = scmp.lt.s32.totalorder %s22, 0
      %s2897 = scalar_select %p2896, %s22, 0
      %s2898 = sadd.s32 %s2897, %s2895
      %s2899 = smul.addr %s2898, 4
      %s2900 = scalar_lea.vmem %s5, %s2899
      // Predicated region
      $region49: #{resnet_encoder3d_forward.13} parent=39 // pred_check
        %p2901 = pneg %p191
      $region50: #{resnet_encoder3d_forward.13} parent=39 // pred_check_branch
        %2903 = sbr.rel (%p2901) target = $region52
      $region51: #{resnet_encoder3d_forward.13} parent=39 // pred_region
        %s2904 = smul.u32 16, %s21
      $region52: #{resnet_encoder3d_forward.13} parent=39 // pred_fallthru
        _
    $region40: #{resnet_encoder3d_forward.13} parent=5 // pred_fallthru
      _
    %p2905 = scmp.le.s32.totalorder 2, %s11
    // Predicated region
    $region53: #{resnet_encoder3d_forward.13} parent=5 // pred_check
      %p2906 = pneg %p2905
    $region54: #{resnet_encoder3d_forward.13} parent=5 // pred_check_branch
      %2908 = sbr.rel (%p2906) target = $region56
    $region55: #{resnet_encoder3d_forward.13} parent=5 // pred_region
      %s2909 = ssub.s32 %s11, 2
      // Predicated region
      $region57: #{resnet_encoder3d_forward.13} parent=55 // pred_check
        %p2910 = pneg %p197
      $region58: #{resnet_encoder3d_forward.13} parent=55 // pred_check_branch
        %2912 = sbr.rel (%p2910) target = $region60
      $region59: #{resnet_encoder3d_forward.13} parent=55 // pred_region
        %s2913 = smul.u32 16, %s24
        %p2914 = scmp.lt.s32.totalorder %s2913, 31
        %s2915 = scalar_select %p2914, %s2913, 31
        %p2916 = scmp.lt.s32.totalorder %s25, 0
        %s2917 = scalar_select %p2916, %s25, 0
        %s2918 = sadd.s32 %s2917, %s2915
        %s2919 = smul.addr %s2918, 4
        %s2920 = scalar_lea.vmem %s5, %s2919
      $region60: #{resnet_encoder3d_forward.13} parent=55 // pred_fallthru
        _
    $region56: #{resnet_encoder3d_forward.13} parent=5 // pred_fallthru
      _
  $region6: #{resnet_encoder3d_forward.13} parent=0 // loop_footer
    %s15 = sadd.s32 1, %s11
  $region7: #{resnet_encoder3d_forward.13} parent=0 // loop_footer_branch
    %10 = sbr.rel target = $region3
  $region8: #{resnet_encoder3d_forward.13} parent=0 // loop_exit
    _

</llo_original>
